<compile_context>
chip_gen: v5e
topology: v5e:2x2
jax: 0.10.0
libtpu: 0.0.40
codegen_flags: <defaults>
</compile_context>

<pallas_src>
import functools
import math

import jax
import jax.numpy as jnp
from jax import lax
from jax.experimental import pallas as pl
from jax.experimental.pallas import tpu as pltpu

LEAKY_SLOPE = 0.01   # nn.LeakyReLU default negative_slope
CONV_K = 10
CONV_PAD = 5

GP = 128             # per-gate lane-padded width (one vreg of lanes)
NG = 4               # gates (i, f, o, g) in kernel layout
G4 = NG * GP         # 512: one direction's padded gate width
BP = 8               # batch padded to one sublane tile
CP = 128             # conv channels padded to one lane tile
KP = 16              # conv im2col K padded to a sublane multiple

GATE_ORDER = (0, 1, 3, 2)   # torch (i, f, g, o) -> kernel (i, f, o, g)


def _full_spec(shape):
    # whole-array block, single grid point
    return pl.BlockSpec(shape, lambda i: (0,) * len(shape))


# ------------------------------- kernel ------------------------------------ #

def tae_fused_kernel(patches_ref, wc_ref, bc_ref,
                     wx1_ref, bx1_ref, whf1_ref, whr1_ref,
                     bx2_ref, wx2_hbm, whf2_hbm, whr2_hbm,
                     out_ref,
                     gx_ref, s1_ref, wx2_v, whf2_v, whr2_v, dma_sem,
                     *, T, pooling):
    """Fused TAE encoder forward.

    patches : (pooling*T*BP, KP) rows ordered (p, t, b)  [im2col, time-major]
    wc      : (KP, CP)   bc: (1, CP)
    wx1     : (CP, 2*G4) x-projection fwd|rev (gate order i,f,o,g per dir)
    wx2     : (GP, 2*G4) -- lives in HBM (pl.ANY), DMA'd in-kernel
    wh*     : (GP, G4)   recurrent weights, rows/cols zero-padded
    b*      : (1, 2*G4)  fused b_ih + b_hh for fwd|rev
    out     : (T*BP, GP) rows ordered (t, b); lanes [H2:GP) stay 0
    """
    TB = T * BP

    # Kick off LSTM2 weight DMAs (HBM -> VMEM); waited right before LSTM2.
    cps = (pltpu.make_async_copy(wx2_hbm, wx2_v, dma_sem.at[0]),
           pltpu.make_async_copy(whf2_hbm, whf2_v, dma_sem.at[1]),
           pltpu.make_async_copy(whr2_hbm, whr2_v, dma_sem.at[2]))
    for cp in cps:
        cp.start()

    # ---- Conv1d (im2col matmul) + LeakyReLU + MaxPool1d, all rows at once ----
    y = jnp.dot(patches_ref[...], wc_ref[...],
                preferred_element_type=jnp.float32) + bc_ref[...]
    y = jnp.where(y > 0, y, LEAKY_SLOPE * y)                 # LeakyReLU
    acc = y[0:TB]                                            # pooling window p=0
    for p in range(1, pooling):                              # MaxPool1d(pooling)
        acc = jnp.maximum(acc, y[p * TB:(p + 1) * TB])       # (T*BP, CP)

    # ---- LSTM1 x-gates for both directions and all timesteps, one matmul ----
    gx_ref[...] = jnp.dot(acc, wx1_ref[...],
                          preferred_element_type=jnp.float32) + bx1_ref[...]

    def cell(gates, c):
        # gate layout (i, f, o, g), each GP lanes; pad lanes stay exactly 0
        # because all pad weight/bias columns are 0 => gates_pad == 0,
        # c_pad' = 0.5*c_pad, h_pad = 0.5*tanh(0) = 0.
        sg = jax.nn.sigmoid(gates[:, 0:3 * GP])              # i, f, o only
        gg = jnp.tanh(gates[:, 3 * GP:4 * GP])               # g gate
        c_new = sg[:, GP:2 * GP] * c + sg[:, 0:GP] * gg
        h_new = sg[:, 2 * GP:3 * GP] * jnp.tanh(c_new)
        return h_new, c_new

    def run_bilstm(whf, whr, dst_ref):
        # Both directions interleaved in ONE unrolled time loop; their matmul
        # + EUP chains are independent and overlap.  Reverse results accumulate
        # into dst_ref (first half of the loop: plain stores; second half: RMW).
        h_f = jnp.zeros((BP, GP), jnp.float32); c_f = h_f
        h_r = jnp.zeros((BP, GP), jnp.float32); c_r = h_r
        for t in range(T):
            tr = T - 1 - t
            rf, rr = t * BP, tr * BP
            gates_f = gx_ref[rf:rf + BP, 0:G4] + jnp.dot(
                h_f, whf, preferred_element_type=jnp.float32)
            gates_r = gx_ref[rr:rr + BP, G4:2 * G4] + jnp.dot(
                h_r, whr, preferred_element_type=jnp.float32)
            h_f, c_f = cell(gates_f, c_f)
            h_r, c_r = cell(gates_r, c_r)
            if t < tr:                               # rows untouched so far
                dst_ref[rf:rf + BP] = h_f
                dst_ref[rr:rr + BP] = h_r
            elif t == tr:                            # middle step (odd T)
                dst_ref[rf:rf + BP] = h_f + h_r
            else:                                    # rows already hold the
                dst_ref[rf:rf + BP] = dst_ref[rf:rf + BP] + h_f   # other dir
                dst_ref[rr:rr + BP] = dst_ref[rr:rr + BP] + h_r

    # ---- LSTM1 ----
    run_bilstm(whf1_ref[...], whr1_ref[...], s1_ref)

    # LSTM2 weights must be resident now.
    for cp in cps:
        cp.wait()

    # ---- LSTM2: hoisted x-projection on summed LSTM1 output ----
    gx_ref[...] = jnp.dot(s1_ref[...], wx2_v[...],
                          preferred_element_type=jnp.float32) + bx2_ref[...]
    run_bilstm(whf2_v[...], whr2_v[...], out_ref)


# ------------------------------ wrapper ------------------------------------ #

def tae_encoder_forward(x, kp, *, pooling, h2):
    """x: (B, 1, L) NCW.  Returns (B, T, h2) like the PyTorch module."""
    B, _, L = x.shape
    assert B <= BP
    x_pad = jnp.pad(x[:, 0, :], ((0, 0), (CONV_PAD, CONV_PAD)))
    L_out = L + 2 * CONV_PAD - CONV_K + 1
    T = L_out // pooling                       # MaxPool1d floor semantics
    L_used = T * pooling
    # im2col glue, re-ordered so kernel rows are (pool_pos, time, batch);
    # batch padded to 8 sublanes, K padded to 16 (zero columns).
    idx = jnp.arange(L_used)[:, None] + jnp.arange(CONV_K)[None, :]
    patches = x_pad[:, idx]                                       # (B, L_used, K)
    patches = jnp.transpose(patches.reshape(B, T, pooling, CONV_K), (2, 1, 0, 3))
    patches = jnp.pad(patches, ((0, 0), (0, 0), (0, BP - B), (0, KP - CONV_K)))
    patches = patches.reshape(pooling * T * BP, KP)               # rows (p, t, b)

    kernel = functools.partial(tae_fused_kernel, T=T, pooling=pooling)
    dense_args = (patches, kp["conv_w"], kp["conv_b"],
                  kp["wx1"], kp["bx1"], kp["whf1"], kp["whr1"], kp["bx2"])
    any_args = (kp["wx2"], kp["whf2"], kp["whr2"])      # DMA'd inside the kernel

    out = pl.pallas_call(
        kernel,
        out_shape=jax.ShapeDtypeStruct((T * BP, GP), jnp.float32),
        grid=(1,),
        in_specs=[_full_spec(a.shape) for a in dense_args]
                 + [pl.BlockSpec(memory_space=pl.ANY)] * len(any_args),
        out_specs=_full_spec((T * BP, GP)),
        scratch_shapes=[pltpu.VMEM((T * BP, 2 * G4), jnp.float32),  # x-gates
                        pltpu.VMEM((T * BP, GP), jnp.float32),      # LSTM1 sum
                        pltpu.VMEM((GP, 2 * G4), jnp.float32),      # wx2
                        pltpu.VMEM((GP, G4), jnp.float32),          # whf2
                        pltpu.VMEM((GP, G4), jnp.float32),          # whr2
                        pltpu.SemaphoreType.DMA((3,))],
        compiler_params=pltpu.CompilerParams(
            dimension_semantics=("arbitrary",),
            vmem_limit_bytes=32 * 1024 * 1024),
    )(*dense_args, *any_args)

    # Single transpose + slice at the very end: (T*BP, GP) -> (B, T, h2)
    # TODO(synk): PyTorch module also caches self.n_hidden = features.shape[1]
    # (stateful side effect, not representable in a functional kernel).
    return jnp.transpose(out.reshape(T, BP, GP), (1, 0, 2))[:B, :, :h2]


# ----------------------------- parameters ----------------------------------- #

def init_torch_params(key, filter_1, filter_lstm):
    """Torch-layout parameters (used by the pure-JAX reference)."""
    H1, H2 = filter_lstm
    keys = jax.random.split(key, 18)

    def unif(k, shape, fan):
        bound = 1.0 / math.sqrt(fan)
        return jax.random.uniform(k, shape, jnp.float32, -bound, bound)

    conv_w = unif(keys[0], (filter_1, 1, CONV_K), CONV_K)   # (Cout, Cin, K)
    conv_b = unif(keys[1], (filter_1,), CONV_K)

    def lstm_dir(ks, D, H):
        return (unif(ks[0], (4 * H, D), H),     # weight_ih (4H, D), gates i,f,g,o
                unif(ks[1], (4 * H, H), H),     # weight_hh (4H, H)
                unif(ks[2], (4 * H,), H),       # bias_ih
                unif(ks[3], (4 * H,), H))       # bias_hh

    return {
        "conv_w": conv_w, "conv_b": conv_b,
        "lstm1_f": lstm_dir(keys[2:6], 50, H1),
        "lstm1_r": lstm_dir(keys[6:10], 50, H1),
        "lstm2_f": lstm_dir(keys[10:14], H1, H2),
        "lstm2_r": lstm_dir(keys[14:18], H1, H2),
    }


def pack_params(tp, filter_lstm):
    """Repack torch-layout params into the lane/sublane-aligned kernel layout."""
    H1, H2 = filter_lstm

    def pad_gate_cols(w_t, H):       # (X, 4H) torch (i,f,g,o) -> (X, G4) (i,f,o,g)
        X = w_t.shape[0]
        out = jnp.zeros((X, G4), jnp.float32)
        for gi, src in enumerate(GATE_ORDER):
            out = out.at[:, gi * GP:gi * GP + H].set(w_t[:, src * H:(src + 1) * H])
        return out

    def pack_dir(w_ih, w_hh, b_ih, b_hh, H, d_pad):
        wi = pad_gate_cols(w_ih.T, H)                                   # (D, G4)
        if d_pad != wi.shape[0]:
            wi = jnp.zeros((d_pad, G4), jnp.float32).at[:wi.shape[0]].set(wi)
        wh = jnp.zeros((GP, G4), jnp.float32).at[:H].set(pad_gate_cols(w_hh.T, H))
        b = pad_gate_cols((b_ih + b_hh).reshape(1, 4 * H), H)           # (1, G4)
        return wi, wh, b

    wi1f, wh1f, b1f = pack_dir(*tp["lstm1_f"], H=H1, d_pad=CP)   # conv-chan padded
    wi1r, wh1r, b1r = pack_dir(*tp["lstm1_r"], H=H1, d_pad=CP)
    wi2f, wh2f, b2f = pack_dir(*tp["lstm2_f"], H=H2, d_pad=GP)   # input is 128-padded
    wi2r, wh2r, b2r = pack_dir(*tp["lstm2_r"], H=H2, d_pad=GP)

    C = tp["conv_w"].shape[0]
    conv_w = jnp.zeros((KP, CP), jnp.float32).at[:CONV_K, :C].set(
        jnp.transpose(tp["conv_w"][:, 0, :]))                    # (KP, CP)
    conv_b = jnp.zeros((1, CP), jnp.float32).at[0, :C].set(tp["conv_b"])
    return {
        "conv_w": conv_w, "conv_b": conv_b,
        "wx1": jnp.concatenate([wi1f, wi1r], axis=1),            # (CP, 2*G4)
        "bx1": jnp.concatenate([b1f, b1r], axis=1),              # (1, 2*G4)
        "whf1": wh1f, "whr1": wh1r,                              # (GP, G4)
        "wx2": jnp.concatenate([wi2f, wi2r], axis=1),            # (GP, 2*G4)
        "bx2": jnp.concatenate([b2f, b2r], axis=1),
        "whf2": wh2f, "whr2": wh2r,
    }


# ----------------------------- reference ------------------------------------ #

def _lstm_dir_ref(x_btd, w_ih, w_hh, b_ih, b_hh, reverse):
    B = x_btd.shape[0]
    H = w_hh.shape[1]
    xs = jnp.transpose(x_btd, (1, 0, 2))
    if reverse:
        xs = xs[::-1]

    def cell(carry, x_t):
        h, c = carry
        gates = x_t @ w_ih.T + h @ w_hh.T + b_ih + b_hh
        i, f, g, o = jnp.split(gates, 4, axis=-1)
        c = jax.nn.sigmoid(f) * c + jax.nn.sigmoid(i) * jnp.tanh(g)
        h = jax.nn.sigmoid(o) * jnp.tanh(c)
        return (h, c), h

    init = (jnp.zeros((B, H), jnp.float32), jnp.zeros((B, H), jnp.float32))
    _, hs = lax.scan(cell, init, xs)
    if reverse:
        hs = hs[::-1]
    return jnp.transpose(hs, (1, 0, 2))


def tae_encoder_reference(x, tp, pooling):
    B, _, L = x.shape
    w, b = tp["conv_w"], tp["conv_b"]
    x_pad = jnp.pad(x[:, 0, :], ((0, 0), (CONV_PAD, CONV_PAD)))
    L_out = L + 2 * CONV_PAD - CONV_K + 1
    idx = jnp.arange(L_out)[:, None] + jnp.arange(CONV_K)[None, :]
    y = jnp.einsum('blk,ck->blc', x_pad[:, idx], w[:, 0, :]) + b
    y = jnp.where(y > 0, y, LEAKY_SLOPE * y)
    T = L_out // pooling
    y = jnp.max(y[:, :T * pooling].reshape(B, T, pooling, -1), axis=2)
    o1 = (_lstm_dir_ref(y, *tp["lstm1_f"], reverse=False)
          + _lstm_dir_ref(y, *tp["lstm1_r"], reverse=True))
    o2 = (_lstm_dir_ref(o1, *tp["lstm2_f"], reverse=False)
          + _lstm_dir_ref(o1, *tp["lstm2_r"], reverse=True))
    return o2


# -------------------------------- main --------------------------------------- #

if __name__ == "__main__":
    filter_1 = 50               # must be 50 (lstm_1 input_size=50 in the module)
    filter_lstm = [50, 10]      # filter_lstm[0] must be 50 (lstm_2 input_size=50)
    pooling = 10
    B, L = 2, 99                # conv output length = L + 1 = 100 -> T = 10

    key = jax.random.PRNGKey(0)
    k_x, k_p = jax.random.split(key)
    x = jax.random.normal(k_x, (B, 1, L), jnp.float32)       # NCW, in_channels=1
    tp = init_torch_params(k_p, filter_1, filter_lstm)
    kp = pack_params(tp, filter_lstm)

    fwd = jax.jit(functools.partial(tae_encoder_forward,
                                    pooling=pooling, h2=filter_lstm[1]))
    features = jax.block_until_ready(fwd(x, kp))

    T = (L + 2 * CONV_PAD - CONV_K + 1) // pooling
    assert features.shape == (B, T, filter_lstm[1]), features.shape
    assert bool(jnp.all(jnp.isfinite(features)))

    ref = tae_encoder_reference(x, tp, pooling)
    err = float(jnp.max(jnp.abs(features - ref)))
    # Both kernel and reference use default TPU matmul precision (bf16 pass);
    # tolerance covers the small bf16-rounding divergence through 2x10 LSTM steps.
    assert err < 5e-3, f"max abs error vs reference: {err}"

    print("KERNEL_OK")
</pallas_src>

<mosaic_0001>
module attributes {stable_mosaic.version = 11 : i64} {
  func.func @tae_fused_kernel(%arg0: i32, %arg1: memref<800x16xf32, #tpu.memory_space<vmem>>, %arg2: memref<16x128xf32, #tpu.memory_space<vmem>>, %arg3: memref<1x128xf32, #tpu.memory_space<vmem>>, %arg4: memref<128x1024xf32, #tpu.memory_space<vmem>>, %arg5: memref<1x1024xf32, #tpu.memory_space<vmem>>, %arg6: memref<128x512xf32, #tpu.memory_space<vmem>>, %arg7: memref<128x512xf32, #tpu.memory_space<vmem>>, %arg8: memref<1x1024xf32, #tpu.memory_space<vmem>>, %arg9: memref<128x1024xf32, #tpu.memory_space<any>>, %arg10: memref<128x512xf32, #tpu.memory_space<any>>, %arg11: memref<128x512xf32, #tpu.memory_space<any>>, %arg12: memref<80x128xf32, #tpu.memory_space<vmem>>, %arg13: memref<80x1024xf32, #tpu.memory_space<vmem>>, %arg14: memref<80x128xf32, #tpu.memory_space<vmem>>, %arg15: memref<128x1024xf32, #tpu.memory_space<vmem>>, %arg16: memref<128x512xf32, #tpu.memory_space<vmem>>, %arg17: memref<128x512xf32, #tpu.memory_space<vmem>>, %arg18: memref<3x!tpu.dma_semaphore, #tpu.memory_space<semaphore_mem>>) attributes {dimension_semantics = [#tpu.dimension_semantics<arbitrary>], iteration_bounds = array<i64: 1>, scalar_prefetch = 0 : i64, scratch_operands = 6 : i64, tpu.core_type = #tpu.core_type<tc>, window_params = [{pipeline_mode = #tpu.pipeline_mode<synchronous>, transform_indices = @transform_0, window_bounds = array<i64: 800, 16>}, {pipeline_mode = #tpu.pipeline_mode<synchronous>, transform_indices = @transform_1, window_bounds = array<i64: 16, 128>}, {pipeline_mode = #tpu.pipeline_mode<synchronous>, transform_indices = @transform_2, window_bounds = array<i64: 1, 128>}, {pipeline_mode = #tpu.pipeline_mode<synchronous>, transform_indices = @transform_3, window_bounds = array<i64: 128, 1024>}, {pipeline_mode = #tpu.pipeline_mode<synchronous>, transform_indices = @transform_4, window_bounds = array<i64: 1, 1024>}, {pipeline_mode = #tpu.pipeline_mode<synchronous>, transform_indices = @transform_5, window_bounds = array<i64: 128, 512>}, {pipeline_mode = #tpu.pipeline_mode<synchronous>, transform_indices = @transform_6, window_bounds = array<i64: 128, 512>}, {pipeline_mode = #tpu.pipeline_mode<synchronous>, transform_indices = @transform_7, window_bounds = array<i64: 1, 1024>}, {}, {}, {}, {pipeline_mode = #tpu.pipeline_mode<synchronous>, transform_indices = @transform_11, window_bounds = array<i64: 80, 128>}]} {
    %c0_i32 = arith.constant 0 : i32
    %0 = tpu.memref_slice %arg18[%c0_i32] : memref<3x!tpu.dma_semaphore, #tpu.memory_space<semaphore_mem>> -> memref<1x!tpu.dma_semaphore, #tpu.memory_space<semaphore_mem>>
    %1 = tpu.memref_squeeze %0 : memref<1x!tpu.dma_semaphore, #tpu.memory_space<semaphore_mem>> -> memref<!tpu.dma_semaphore, #tpu.memory_space<semaphore_mem>>
    tpu.enqueue_dma source(%arg9 : memref<128x1024xf32, #tpu.memory_space<any>>) target(%arg15 : memref<128x1024xf32, #tpu.memory_space<vmem>>) target_semaphore(%1 : memref<!tpu.dma_semaphore, #tpu.memory_space<semaphore_mem>>)
    %c1_i32 = arith.constant 1 : i32
    %2 = tpu.memref_slice %arg18[%c1_i32] : memref<3x!tpu.dma_semaphore, #tpu.memory_space<semaphore_mem>> -> memref<1x!tpu.dma_semaphore, #tpu.memory_space<semaphore_mem>>
    %3 = tpu.memref_squeeze %2 : memref<1x!tpu.dma_semaphore, #tpu.memory_space<semaphore_mem>> -> memref<!tpu.dma_semaphore, #tpu.memory_space<semaphore_mem>>
    tpu.enqueue_dma source(%arg10 : memref<128x512xf32, #tpu.memory_space<any>>) target(%arg16 : memref<128x512xf32, #tpu.memory_space<vmem>>) target_semaphore(%3 : memref<!tpu.dma_semaphore, #tpu.memory_space<semaphore_mem>>)
    %c2_i32 = arith.constant 2 : i32
    %4 = tpu.memref_slice %arg18[%c2_i32] : memref<3x!tpu.dma_semaphore, #tpu.memory_space<semaphore_mem>> -> memref<1x!tpu.dma_semaphore, #tpu.memory_space<semaphore_mem>>
    %5 = tpu.memref_squeeze %4 : memref<1x!tpu.dma_semaphore, #tpu.memory_space<semaphore_mem>> -> memref<!tpu.dma_semaphore, #tpu.memory_space<semaphore_mem>>
    tpu.enqueue_dma source(%arg11 : memref<128x512xf32, #tpu.memory_space<any>>) target(%arg17 : memref<128x512xf32, #tpu.memory_space<vmem>>) target_semaphore(%5 : memref<!tpu.dma_semaphore, #tpu.memory_space<semaphore_mem>>)
    %c0 = arith.constant 0 : index
    %c0_0 = arith.constant 0 : index
    %6 = vector.load %arg1[%c0, %c0_0] : memref<800x16xf32, #tpu.memory_space<vmem>>, vector<800x16xf32>
    %c0_1 = arith.constant 0 : index
    %c0_2 = arith.constant 0 : index
    %7 = vector.load %arg2[%c0_1, %c0_2] : memref<16x128xf32, #tpu.memory_space<vmem>>, vector<16x128xf32>
    %cst = arith.constant dense<0.000000e+00> : vector<800x128xf32>
    %8 = tpu.matmul %6, %7, %cst {dimension_numbers = #tpu.dot_dimension_numbers<[1], [0], [0], [1], [0, 0, 1, 1], [], []>} : vector<800x16xf32>, vector<16x128xf32>, vector<800x128xf32> -> vector<800x128xf32>
    %c0_3 = arith.constant 0 : index
    %c0_4 = arith.constant 0 : index
    %9 = vector.load %arg3[%c0_3, %c0_4] : memref<1x128xf32, #tpu.memory_space<vmem>>, vector<1x128xf32>
    %10 = vector.broadcast %9 : vector<1x128xf32> to vector<800x128xf32>
    %11 = arith.addf %8, %10 : vector<800x128xf32>
    %cst_5 = arith.constant 0.000000e+00 : f32
    %12 = vector.broadcast %cst_5 : f32 to vector<800x128xf32>
    %13 = arith.cmpf ogt, %11, %12 : vector<800x128xf32>
    %cst_6 = arith.constant 0.00999999977 : f32
    %14 = vector.broadcast %cst_6 : f32 to vector<800x128xf32>
    %15 = arith.mulf %14, %11 : vector<800x128xf32>
    %16 = arith.select %13, %11, %15 : vector<800x128xi1>, vector<800x128xf32>
    %17 = vector.extract_strided_slice %16 {offsets = [0, 0], sizes = [80, 128], strides = [1, 1]} : vector<800x128xf32> to vector<80x128xf32>
    %18 = vector.extract_strided_slice %16 {offsets = [80, 0], sizes = [80, 128], strides = [1, 1]} : vector<800x128xf32> to vector<80x128xf32>
    %19 = arith.maximumf %17, %18 : vector<80x128xf32>
    %20 = vector.extract_strided_slice %16 {offsets = [160, 0], sizes = [80, 128], strides = [1, 1]} : vector<800x128xf32> to vector<80x128xf32>
    %21 = arith.maximumf %19, %20 : vector<80x128xf32>
    %22 = vector.extract_strided_slice %16 {offsets = [240, 0], sizes = [80, 128], strides = [1, 1]} : vector<800x128xf32> to vector<80x128xf32>
    %23 = arith.maximumf %21, %22 : vector<80x128xf32>
    %24 = vector.extract_strided_slice %16 {offsets = [320, 0], sizes = [80, 128], strides = [1, 1]} : vector<800x128xf32> to vector<80x128xf32>
    %25 = arith.maximumf %23, %24 : vector<80x128xf32>
    %26 = vector.extract_strided_slice %16 {offsets = [400, 0], sizes = [80, 128], strides = [1, 1]} : vector<800x128xf32> to vector<80x128xf32>
    %27 = arith.maximumf %25, %26 : vector<80x128xf32>
    %28 = vector.extract_strided_slice %16 {offsets = [480, 0], sizes = [80, 128], strides = [1, 1]} : vector<800x128xf32> to vector<80x128xf32>
    %29 = arith.maximumf %27, %28 : vector<80x128xf32>
    %30 = vector.extract_strided_slice %16 {offsets = [560, 0], sizes = [80, 128], strides = [1, 1]} : vector<800x128xf32> to vector<80x128xf32>
    %31 = arith.maximumf %29, %30 : vector<80x128xf32>
    %32 = vector.extract_strided_slice %16 {offsets = [640, 0], sizes = [80, 128], strides = [1, 1]} : vector<800x128xf32> to vector<80x128xf32>
    %33 = arith.maximumf %31, %32 : vector<80x128xf32>
    %34 = vector.extract_strided_slice %16 {offsets = [720, 0], sizes = [80, 128], strides = [1, 1]} : vector<800x128xf32> to vector<80x128xf32>
    %35 = arith.maximumf %33, %34 : vector<80x128xf32>
    %c0_7 = arith.constant 0 : index
    %c0_8 = arith.constant 0 : index
    %36 = vector.load %arg4[%c0_7, %c0_8] : memref<128x1024xf32, #tpu.memory_space<vmem>>, vector<128x1024xf32>
    %cst_9 = arith.constant dense<0.000000e+00> : vector<80x1024xf32>
    %37 = tpu.matmul %35, %36, %cst_9 {dimension_numbers = #tpu.dot_dimension_numbers<[1], [0], [0], [1], [0, 0, 1, 1], [], []>} : vector<80x128xf32>, vector<128x1024xf32>, vector<80x1024xf32> -> vector<80x1024xf32>
    %c0_10 = arith.constant 0 : index
    %c0_11 = arith.constant 0 : index
    %38 = vector.load %arg5[%c0_10, %c0_11] : memref<1x1024xf32, #tpu.memory_space<vmem>>, vector<1x1024xf32>
    %39 = vector.broadcast %38 : vector<1x1024xf32> to vector<80x1024xf32>
    %40 = arith.addf %37, %39 : vector<80x1024xf32>
    %c0_12 = arith.constant 0 : index
    %c0_13 = arith.constant 0 : index
    %41 = vector.load %arg13[%c0_12, %c0_13] : memref<80x1024xf32, #tpu.memory_space<vmem>>, vector<80x1024xf32>
    tpu.vector_store %arg13[%c0_12, %c0_13], %40 {strides = array<i32>} : memref<80x1024xf32, #tpu.memory_space<vmem>>, vector<80x1024xf32>,
    %c0_14 = arith.constant 0 : index
    %c0_15 = arith.constant 0 : index
    %42 = vector.load %arg6[%c0_14, %c0_15] : memref<128x512xf32, #tpu.memory_space<vmem>>, vector<128x512xf32>
    %c0_16 = arith.constant 0 : index
    %c0_17 = arith.constant 0 : index
    %43 = vector.load %arg7[%c0_16, %c0_17] : memref<128x512xf32, #tpu.memory_space<vmem>>, vector<128x512xf32>
    %cst_18 = arith.constant 0.000000e+00 : f32
    %44 = vector.broadcast %cst_18 : f32 to vector<8x128xf32>
    %cst_19 = arith.constant 0.000000e+00 : f32
    %45 = vector.broadcast %cst_19 : f32 to vector<8x128xf32>
    %c0_20 = arith.constant 0 : index
    %c0_21 = arith.constant 0 : index
    %46 = vector.load %arg13[%c0_20, %c0_21] : memref<80x1024xf32, #tpu.memory_space<vmem>>, vector<8x512xf32>
    %cst_22 = arith.constant dense<0.000000e+00> : vector<8x512xf32>
    %47 = tpu.matmul %44, %42, %cst_22 {dimension_numbers = #tpu.dot_dimension_numbers<[1], [0], [0], [1], [0, 0, 1, 1], [], []>} : vector<8x128xf32>, vector<128x512xf32>, vector<8x512xf32> -> vector<8x512xf32>
    %48 = arith.addf %46, %47 : vector<8x512xf32>
    %c72 = arith.constant 72 : index
    %c512 = arith.constant 512 : index
    %49 = vector.load %arg13[%c72, %c512] : memref<80x1024xf32, #tpu.memory_space<vmem>>, vector<8x512xf32>
    %cst_23 = arith.constant dense<0.000000e+00> : vector<8x512xf32>
    %50 = tpu.matmul %45, %43, %cst_23 {dimension_numbers = #tpu.dot_dimension_numbers<[1], [0], [0], [1], [0, 0, 1, 1], [], []>} : vector<8x128xf32>, vector<128x512xf32>, vector<8x512xf32> -> vector<8x512xf32>
    %51 = arith.addf %49, %50 : vector<8x512xf32>
    %52 = vector.extract_strided_slice %48 {offsets = [0, 0], sizes = [8, 384], strides = [1, 1]} : vector<8x512xf32> to vector<8x384xf32>
    %53 = arith.negf %52 : vector<8x384xf32>
    %54 = math.exp %53 : vector<8x384xf32>
    %cst_24 = arith.constant 1.000000e+00 : f32
    %55 = vector.broadcast %cst_24 : f32 to vector<8x384xf32>
    %56 = arith.addf %55, %54 : vector<8x384xf32>
    %57 = arith.divf %55, %56 : vector<8x384xf32>
    %58 = vector.extract_strided_slice %48 {offsets = [0, 384], sizes = [8, 128], strides = [1, 1]} : vector<8x512xf32> to vector<8x128xf32>
    %59 = math.tanh %58 : vector<8x128xf32>
    %60 = vector.extract_strided_slice %57 {offsets = [0, 128], sizes = [8, 128], strides = [1, 1]} : vector<8x384xf32> to vector<8x128xf32>
    %61 = arith.mulf %60, %44 : vector<8x128xf32>
    %62 = vector.extract_strided_slice %57 {offsets = [0, 0], sizes = [8, 128], strides = [1, 1]} : vector<8x384xf32> to vector<8x128xf32>
    %63 = arith.mulf %62, %59 : vector<8x128xf32>
    %64 = arith.addf %61, %63 : vector<8x128xf32>
    %65 = vector.extract_strided_slice %57 {offsets = [0, 256], sizes = [8, 128], strides = [1, 1]} : vector<8x384xf32> to vector<8x128xf32>
    %66 = math.tanh %64 : vector<8x128xf32>
    %67 = arith.mulf %65, %66 : vector<8x128xf32>
    %68 = vector.extract_strided_slice %51 {offsets = [0, 0], sizes = [8, 384], strides = [1, 1]} : vector<8x512xf32> to vector<8x384xf32>
    %69 = arith.negf %68 : vector<8x384xf32>
    %70 = math.exp %69 : vector<8x384xf32>
    %cst_25 = arith.constant 1.000000e+00 : f32
    %71 = vector.broadcast %cst_25 : f32 to vector<8x384xf32>
    %72 = arith.addf %71, %70 : vector<8x384xf32>
    %73 = arith.divf %71, %72 : vector<8x384xf32>
    %74 = vector.extract_strided_slice %51 {offsets = [0, 384], sizes = [8, 128], strides = [1, 1]} : vector<8x512xf32> to vector<8x128xf32>
    %75 = math.tanh %74 : vector<8x128xf32>
    %76 = vector.extract_strided_slice %73 {offsets = [0, 128], sizes = [8, 128], strides = [1, 1]} : vector<8x384xf32> to vector<8x128xf32>
    %77 = arith.mulf %76, %45 : vector<8x128xf32>
    %78 = vector.extract_strided_slice %73 {offsets = [0, 0], sizes = [8, 128], strides = [1, 1]} : vector<8x384xf32> to vector<8x128xf32>
    %79 = arith.mulf %78, %75 : vector<8x128xf32>
    %80 = arith.addf %77, %79 : vector<8x128xf32>
    %81 = vector.extract_strided_slice %73 {offsets = [0, 256], sizes = [8, 128], strides = [1, 1]} : vector<8x384xf32> to vector<8x128xf32>
    %82 = math.tanh %80 : vector<8x128xf32>
    %83 = arith.mulf %81, %82 : vector<8x128xf32>
    %c0_26 = arith.constant 0 : index
    %c0_27 = arith.constant 0 : index
    %84 = vector.load %arg14[%c0_26, %c0_27] : memref<80x128xf32, #tpu.memory_space<vmem>>, vector<8x128xf32>
    tpu.vector_store %arg14[%c0_26, %c0_27], %67 {strides = array<i32>} : memref<80x128xf32, #tpu.memory_space<vmem>>, vector<8x128xf32>,
    %c72_28 = arith.constant 72 : index
    %c0_29 = arith.constant 0 : index
    %85 = vector.load %arg14[%c72_28, %c0_29] : memref<80x128xf32, #tpu.memory_space<vmem>>, vector<8x128xf32>
    tpu.vector_store %arg14[%c72_28, %c0_29], %83 {strides = array<i32>} : memref<80x128xf32, #tpu.memory_space<vmem>>, vector<8x128xf32>,
    %c8 = arith.constant 8 : index
    %c0_30 = arith.constant 0 : index
    %86 = vector.load %arg13[%c8, %c0_30] : memref<80x1024xf32, #tpu.memory_space<vmem>>, vector<8x512xf32>
    %cst_31 = arith.constant dense<0.000000e+00> : vector<8x512xf32>
    %87 = tpu.matmul %67, %42, %cst_31 {dimension_numbers = #tpu.dot_dimension_numbers<[1], [0], [0], [1], [0, 0, 1, 1], [], []>} : vector<8x128xf32>, vector<128x512xf32>, vector<8x512xf32> -> vector<8x512xf32>
    %88 = arith.addf %86, %87 : vector<8x512xf32>
    %c64 = arith.constant 64 : index
    %c512_32 = arith.constant 512 : index
    %89 = vector.load %arg13[%c64, %c512_32] : memref<80x1024xf32, #tpu.memory_space<vmem>>, vector<8x512xf32>
    %cst_33 = arith.constant dense<0.000000e+00> : vector<8x512xf32>
    %90 = tpu.matmul %83, %43, %cst_33 {dimension_numbers = #tpu.dot_dimension_numbers<[1], [0], [0], [1], [0, 0, 1, 1], [], []>} : vector<8x128xf32>, vector<128x512xf32>, vector<8x512xf32> -> vector<8x512xf32>
    %91 = arith.addf %89, %90 : vector<8x512xf32>
    %92 = vector.extract_strided_slice %88 {offsets = [0, 0], sizes = [8, 384], strides = [1, 1]} : vector<8x512xf32> to vector<8x384xf32>
    %93 = arith.negf %92 : vector<8x384xf32>
    %94 = math.exp %93 : vector<8x384xf32>
    %cst_34 = arith.constant 1.000000e+00 : f32
    %95 = vector.broadcast %cst_34 : f32 to vector<8x384xf32>
    %96 = arith.addf %95, %94 : vector<8x384xf32>
    %97 = arith.divf %95, %96 : vector<8x384xf32>
    %98 = vector.extract_strided_slice %88 {offsets = [0, 384], sizes = [8, 128], strides = [1, 1]} : vector<8x512xf32> to vector<8x128xf32>
    %99 = math.tanh %98 : vector<8x128xf32>
    %100 = vector.extract_strided_slice %97 {offsets = [0, 128], sizes = [8, 128], strides = [1, 1]} : vector<8x384xf32> to vector<8x128xf32>
    %101 = arith.mulf %100, %64 : vector<8x128xf32>
    %102 = vector.extract_strided_slice %97 {offsets = [0, 0], sizes = [8, 128], strides = [1, 1]} : vector<8x384xf32> to vector<8x128xf32>
    %103 = arith.mulf %102, %99 : vector<8x128xf32>
    %104 = arith.addf %101, %103 : vector<8x128xf32>
    %105 = vector.extract_strided_slice %97 {offsets = [0, 256], sizes = [8, 128], strides = [1, 1]} : vector<8x384xf32> to vector<8x128xf32>
    %106 = math.tanh %104 : vector<8x128xf32>
    %107 = arith.mulf %105, %106 : vector<8x128xf32>
    %108 = vector.extract_strided_slice %91 {offsets = [0, 0], sizes = [8, 384], strides = [1, 1]} : vector<8x512xf32> to vector<8x384xf32>
    %109 = arith.negf %108 : vector<8x384xf32>
    %110 = math.exp %109 : vector<8x384xf32>
    %cst_35 = arith.constant 1.000000e+00 : f32
    %111 = vector.broadcast %cst_35 : f32 to vector<8x384xf32>
    %112 = arith.addf %111, %110 : vector<8x384xf32>
    %113 = arith.divf %111, %112 : vector<8x384xf32>
    %114 = vector.extract_strided_slice %91 {offsets = [0, 384], sizes = [8, 128], strides = [1, 1]} : vector<8x512xf32> to vector<8x128xf32>
    %115 = math.tanh %114 : vector<8x128xf32>
    %116 = vector.extract_strided_slice %113 {offsets = [0, 128], sizes = [8, 128], strides = [1, 1]} : vector<8x384xf32> to vector<8x128xf32>
    %117 = arith.mulf %116, %80 : vector<8x128xf32>
    %118 = vector.extract_strided_slice %113 {offsets = [0, 0], sizes = [8, 128], strides = [1, 1]} : vector<8x384xf32> to vector<8x128xf32>
    %119 = arith.mulf %118, %115 : vector<8x128xf32>
    %120 = arith.addf %117, %119 : vector<8x128xf32>
    %121 = vector.extract_strided_slice %113 {offsets = [0, 256], sizes = [8, 128], strides = [1, 1]} : vector<8x384xf32> to vector<8x128xf32>
    %122 = math.tanh %120 : vector<8x128xf32>
    %123 = arith.mulf %121, %122 : vector<8x128xf32>
    %c8_36 = arith.constant 8 : index
    %c0_37 = arith.constant 0 : index
    %124 = vector.load %arg14[%c8_36, %c0_37] : memref<80x128xf32, #tpu.memory_space<vmem>>, vector<8x128xf32>
    tpu.vector_store %arg14[%c8_36, %c0_37], %107 {strides = array<i32>} : memref<80x128xf32, #tpu.memory_space<vmem>>, vector<8x128xf32>,
    %c64_38 = arith.constant 64 : index
    %c0_39 = arith.constant 0 : index
    %125 = vector.load %arg14[%c64_38, %c0_39] : memref<80x128xf32, #tpu.memory_space<vmem>>, vector<8x128xf32>
    tpu.vector_store %arg14[%c64_38, %c0_39], %123 {strides = array<i32>} : memref<80x128xf32, #tpu.memory_space<vmem>>, vector<8x128xf32>,
    %c16 = arith.constant 16 : index
    %c0_40 = arith.constant 0 : index
    %126 = vector.load %arg13[%c16, %c0_40] : memref<80x1024xf32, #tpu.memory_space<vmem>>, vector<8x512xf32>
    %cst_41 = arith.constant dense<0.000000e+00> : vector<8x512xf32>
    %127 = tpu.matmul %107, %42, %cst_41 {dimension_numbers = #tpu.dot_dimension_numbers<[1], [0], [0], [1], [0, 0, 1, 1], [], []>} : vector<8x128xf32>, vector<128x512xf32>, vector<8x512xf32> -> vector<8x512xf32>
    %128 = arith.addf %126, %127 : vector<8x512xf32>
    %c56 = arith.constant 56 : index
    %c512_42 = arith.constant 512 : index
    %129 = vector.load %arg13[%c56, %c512_42] : memref<80x1024xf32, #tpu.memory_space<vmem>>, vector<8x512xf32>
    %cst_43 = arith.constant dense<0.000000e+00> : vector<8x512xf32>
    %130 = tpu.matmul %123, %43, %cst_43 {dimension_numbers = #tpu.dot_dimension_numbers<[1], [0], [0], [1], [0, 0, 1, 1], [], []>} : vector<8x128xf32>, vector<128x512xf32>, vector<8x512xf32> -> vector<8x512xf32>
    %131 = arith.addf %129, %130 : vector<8x512xf32>
    %132 = vector.extract_strided_slice %128 {offsets = [0, 0], sizes = [8, 384], strides = [1, 1]} : vector<8x512xf32> to vector<8x384xf32>
    %133 = arith.negf %132 : vector<8x384xf32>
    %134 = math.exp %133 : vector<8x384xf32>
    %cst_44 = arith.constant 1.000000e+00 : f32
    %135 = vector.broadcast %cst_44 : f32 to vector<8x384xf32>
    %136 = arith.addf %135, %134 : vector<8x384xf32>
    %137 = arith.divf %135, %136 : vector<8x384xf32>
    %138 = vector.extract_strided_slice %128 {offsets = [0, 384], sizes = [8, 128], strides = [1, 1]} : vector<8x512xf32> to vector<8x128xf32>
    %139 = math.tanh %138 : vector<8x128xf32>
    %140 = vector.extract_strided_slice %137 {offsets = [0, 128], sizes = [8, 128], strides = [1, 1]} : vector<8x384xf32> to vector<8x128xf32>
    %141 = arith.mulf %140, %104 : vector<8x128xf32>
    %142 = vector.extract_strided_slice %137 {offsets = [0, 0], sizes = [8, 128], strides = [1, 1]} : vector<8x384xf32> to vector<8x128xf32>
    %143 = arith.mulf %142, %139 : vector<8x128xf32>
    %144 = arith.addf %141, %143 : vector<8x128xf32>
    %145 = vector.extract_strided_slice %137 {offsets = [0, 256], sizes = [8, 128], strides = [1, 1]} : vector<8x384xf32> to vector<8x128xf32>
    %146 = math.tanh %144 : vector<8x128xf32>
    %147 = arith.mulf %145, %146 : vector<8x128xf32>
    %148 = vector.extract_strided_slice %131 {offsets = [0, 0], sizes = [8, 384], strides = [1, 1]} : vector<8x512xf32> to vector<8x384xf32>
    %149 = arith.negf %148 : vector<8x384xf32>
    %150 = math.exp %149 : vector<8x384xf32>
    %cst_45 = arith.constant 1.000000e+00 : f32
    %151 = vector.broadcast %cst_45 : f32 to vector<8x384xf32>
    %152 = arith.addf %151, %150 : vector<8x384xf32>
    %153 = arith.divf %151, %152 : vector<8x384xf32>
    %154 = vector.extract_strided_slice %131 {offsets = [0, 384], sizes = [8, 128], strides = [1, 1]} : vector<8x512xf32> to vector<8x128xf32>
    %155 = math.tanh %154 : vector<8x128xf32>
    %156 = vector.extract_strided_slice %153 {offsets = [0, 128], sizes = [8, 128], strides = [1, 1]} : vector<8x384xf32> to vector<8x128xf32>
    %157 = arith.mulf %156, %120 : vector<8x128xf32>
    %158 = vector.extract_strided_slice %153 {offsets = [0, 0], sizes = [8, 128], strides = [1, 1]} : vector<8x384xf32> to vector<8x128xf32>
    %159 = arith.mulf %158, %155 : vector<8x128xf32>
    %160 = arith.addf %157, %159 : vector<8x128xf32>
    %161 = vector.extract_strided_slice %153 {offsets = [0, 256], sizes = [8, 128], strides = [1, 1]} : vector<8x384xf32> to vector<8x128xf32>
    %162 = math.tanh %160 : vector<8x128xf32>
    %163 = arith.mulf %161, %162 : vector<8x128xf32>
    %c16_46 = arith.constant 16 : index
    %c0_47 = arith.constant 0 : index
    %164 = vector.load %arg14[%c16_46, %c0_47] : memref<80x128xf32, #tpu.memory_space<vmem>>, vector<8x128xf32>
    tpu.vector_store %arg14[%c16_46, %c0_47], %147 {strides = array<i32>} : memref<80x128xf32, #tpu.memory_space<vmem>>, vector<8x128xf32>,
    %c56_48 = arith.constant 56 : index
    %c0_49 = arith.constant 0 : index
    %165 = vector.load %arg14[%c56_48, %c0_49] : memref<80x128xf32, #tpu.memory_space<vmem>>, vector<8x128xf32>
    tpu.vector_store %arg14[%c56_48, %c0_49], %163 {strides = array<i32>} : memref<80x128xf32, #tpu.memory_space<vmem>>, vector<8x128xf32>,
    %c24 = arith.constant 24 : index
    %c0_50 = arith.constant 0 : index
    %166 = vector.load %arg13[%c24, %c0_50] : memref<80x1024xf32, #tpu.memory_space<vmem>>, vector<8x512xf32>
    %cst_51 = arith.constant dense<0.000000e+00> : vector<8x512xf32>
    %167 = tpu.matmul %147, %42, %cst_51 {dimension_numbers = #tpu.dot_dimension_numbers<[1], [0], [0], [1], [0, 0, 1, 1], [], []>} : vector<8x128xf32>, vector<128x512xf32>, vector<8x512xf32> -> vector<8x512xf32>
    %168 = arith.addf %166, %167 : vector<8x512xf32>
    %c48 = arith.constant 48 : index
    %c512_52 = arith.constant 512 : index
    %169 = vector.load %arg13[%c48, %c512_52] : memref<80x1024xf32, #tpu.memory_space<vmem>>, vector<8x512xf32>
    %cst_53 = arith.constant dense<0.000000e+00> : vector<8x512xf32>
    %170 = tpu.matmul %163, %43, %cst_53 {dimension_numbers = #tpu.dot_dimension_numbers<[1], [0], [0], [1], [0, 0, 1, 1], [], []>} : vector<8x128xf32>, vector<128x512xf32>, vector<8x512xf32> -> vector<8x512xf32>
    %171 = arith.addf %169, %170 : vector<8x512xf32>
    %172 = vector.extract_strided_slice %168 {offsets = [0, 0], sizes = [8, 384], strides = [1, 1]} : vector<8x512xf32> to vector<8x384xf32>
    %173 = arith.negf %172 : vector<8x384xf32>
    %174 = math.exp %173 : vector<8x384xf32>
    %cst_54 = arith.constant 1.000000e+00 : f32
    %175 = vector.broadcast %cst_54 : f32 to vector<8x384xf32>
    %176 = arith.addf %175, %174 : vector<8x384xf32>
    %177 = arith.divf %175, %176 : vector<8x384xf32>
    %178 = vector.extract_strided_slice %168 {offsets = [0, 384], sizes = [8, 128], strides = [1, 1]} : vector<8x512xf32> to vector<8x128xf32>
    %179 = math.tanh %178 : vector<8x128xf32>
    %180 = vector.extract_strided_slice %177 {offsets = [0, 128], sizes = [8, 128], strides = [1, 1]} : vector<8x384xf32> to vector<8x128xf32>
    %181 = arith.mulf %180, %144 : vector<8x128xf32>
    %182 = vector.extract_strided_slice %177 {offsets = [0, 0], sizes = [8, 128], strides = [1, 1]} : vector<8x384xf32> to vector<8x128xf32>
    %183 = arith.mulf %182, %179 : vector<8x128xf32>
    %184 = arith.addf %181, %183 : vector<8x128xf32>
    %185 = vector.extract_strided_slice %177 {offsets = [0, 256], sizes = [8, 128], strides = [1, 1]} : vector<8x384xf32> to vector<8x128xf32>
    %186 = math.tanh %184 : vector<8x128xf32>
    %187 = arith.mulf %185, %186 : vector<8x128xf32>
    %188 = vector.extract_strided_slice %171 {offsets = [0, 0], sizes = [8, 384], strides = [1, 1]} : vector<8x512xf32> to vector<8x384xf32>
    %189 = arith.negf %188 : vector<8x384xf32>
    %190 = math.exp %189 : vector<8x384xf32>
    %cst_55 = arith.constant 1.000000e+00 : f32
    %191 = vector.broadcast %cst_55 : f32 to vector<8x384xf32>
    %192 = arith.addf %191, %190 : vector<8x384xf32>
    %193 = arith.divf %191, %192 : vector<8x384xf32>
    %194 = vector.extract_strided_slice %171 {offsets = [0, 384], sizes = [8, 128], strides = [1, 1]} : vector<8x512xf32> to vector<8x128xf32>
    %195 = math.tanh %194 : vector<8x128xf32>
    %196 = vector.extract_strided_slice %193 {offsets = [0, 128], sizes = [8, 128], strides = [1, 1]} : vector<8x384xf32> to vector<8x128xf32>
    %197 = arith.mulf %196, %160 : vector<8x128xf32>
    %198 = vector.extract_strided_slice %193 {offsets = [0, 0], sizes = [8, 128], strides = [1, 1]} : vector<8x384xf32> to vector<8x128xf32>
    %199 = arith.mulf %198, %195 : vector<8x128xf32>
    %200 = arith.addf %197, %199 : vector<8x128xf32>
    %201 = vector.extract_strided_slice %193 {offsets = [0, 256], sizes = [8, 128], strides = [1, 1]} : vector<8x384xf32> to vector<8x128xf32>
    %202 = math.tanh %200 : vector<8x128xf32>
    %203 = arith.mulf %201, %202 : vector<8x128xf32>
    %c24_56 = arith.constant 24 : index
    %c0_57 = arith.constant 0 : index
    %204 = vector.load %arg14[%c24_56, %c0_57] : memref<80x128xf32, #tpu.memory_space<vmem>>, vector<8x128xf32>
    tpu.vector_store %arg14[%c24_56, %c0_57], %187 {strides = array<i32>} : memref<80x128xf32, #tpu.memory_space<vmem>>, vector<8x128xf32>,
    %c48_58 = arith.constant 48 : index
    %c0_59 = arith.constant 0 : index
    %205 = vector.load %arg14[%c48_58, %c0_59] : memref<80x128xf32, #tpu.memory_space<vmem>>, vector<8x128xf32>
    tpu.vector_store %arg14[%c48_58, %c0_59], %203 {strides = array<i32>} : memref<80x128xf32, #tpu.memory_space<vmem>>, vector<8x128xf32>,
    %c32 = arith.constant 32 : index
    %c0_60 = arith.constant 0 : index
    %206 = vector.load %arg13[%c32, %c0_60] : memref<80x1024xf32, #tpu.memory_space<vmem>>, vector<8x512xf32>
    %cst_61 = arith.constant dense<0.000000e+00> : vector<8x512xf32>
    %207 = tpu.matmul %187, %42, %cst_61 {dimension_numbers = #tpu.dot_dimension_numbers<[1], [0], [0], [1], [0, 0, 1, 1], [], []>} : vector<8x128xf32>, vector<128x512xf32>, vector<8x512xf32> -> vector<8x512xf32>
    %208 = arith.addf %206, %207 : vector<8x512xf32>
    %c40 = arith.constant 40 : index
    %c512_62 = arith.constant 512 : index
    %209 = vector.load %arg13[%c40, %c512_62] : memref<80x1024xf32, #tpu.memory_space<vmem>>, vector<8x512xf32>
    %cst_63 = arith.constant dense<0.000000e+00> : vector<8x512xf32>
    %210 = tpu.matmul %203, %43, %cst_63 {dimension_numbers = #tpu.dot_dimension_numbers<[1], [0], [0], [1], [0, 0, 1, 1], [], []>} : vector<8x128xf32>, vector<128x512xf32>, vector<8x512xf32> -> vector<8x512xf32>
    %211 = arith.addf %209, %210 : vector<8x512xf32>
    %212 = vector.extract_strided_slice %208 {offsets = [0, 0], sizes = [8, 384], strides = [1, 1]} : vector<8x512xf32> to vector<8x384xf32>
    %213 = arith.negf %212 : vector<8x384xf32>
    %214 = math.exp %213 : vector<8x384xf32>
    %cst_64 = arith.constant 1.000000e+00 : f32
    %215 = vector.broadcast %cst_64 : f32 to vector<8x384xf32>
    %216 = arith.addf %215, %214 : vector<8x384xf32>
    %217 = arith.divf %215, %216 : vector<8x384xf32>
    %218 = vector.extract_strided_slice %208 {offsets = [0, 384], sizes = [8, 128], strides = [1, 1]} : vector<8x512xf32> to vector<8x128xf32>
    %219 = math.tanh %218 : vector<8x128xf32>
    %220 = vector.extract_strided_slice %217 {offsets = [0, 128], sizes = [8, 128], strides = [1, 1]} : vector<8x384xf32> to vector<8x128xf32>
    %221 = arith.mulf %220, %184 : vector<8x128xf32>
    %222 = vector.extract_strided_slice %217 {offsets = [0, 0], sizes = [8, 128], strides = [1, 1]} : vector<8x384xf32> to vector<8x128xf32>
    %223 = arith.mulf %222, %219 : vector<8x128xf32>
    %224 = arith.addf %221, %223 : vector<8x128xf32>
    %225 = vector.extract_strided_slice %217 {offsets = [0, 256], sizes = [8, 128], strides = [1, 1]} : vector<8x384xf32> to vector<8x128xf32>
    %226 = math.tanh %224 : vector<8x128xf32>
    %227 = arith.mulf %225, %226 : vector<8x128xf32>
    %228 = vector.extract_strided_slice %211 {offsets = [0, 0], sizes = [8, 384], strides = [1, 1]} : vector<8x512xf32> to vector<8x384xf32>
    %229 = arith.negf %228 : vector<8x384xf32>
    %230 = math.exp %229 : vector<8x384xf32>
    %cst_65 = arith.constant 1.000000e+00 : f32
    %231 = vector.broadcast %cst_65 : f32 to vector<8x384xf32>
    %232 = arith.addf %231, %230 : vector<8x384xf32>
    %233 = arith.divf %231, %232 : vector<8x384xf32>
    %234 = vector.extract_strided_slice %211 {offsets = [0, 384], sizes = [8, 128], strides = [1, 1]} : vector<8x512xf32> to vector<8x128xf32>
    %235 = math.tanh %234 : vector<8x128xf32>
    %236 = vector.extract_strided_slice %233 {offsets = [0, 128], sizes = [8, 128], strides = [1, 1]} : vector<8x384xf32> to vector<8x128xf32>
    %237 = arith.mulf %236, %200 : vector<8x128xf32>
    %238 = vector.extract_strided_slice %233 {offsets = [0, 0], sizes = [8, 128], strides = [1, 1]} : vector<8x384xf32> to vector<8x128xf32>
    %239 = arith.mulf %238, %235 : vector<8x128xf32>
    %240 = arith.addf %237, %239 : vector<8x128xf32>
    %241 = vector.extract_strided_slice %233 {offsets = [0, 256], sizes = [8, 128], strides = [1, 1]} : vector<8x384xf32> to vector<8x128xf32>
    %242 = math.tanh %240 : vector<8x128xf32>
    %243 = arith.mulf %241, %242 : vector<8x128xf32>
    %c32_66 = arith.constant 32 : index
    %c0_67 = arith.constant 0 : index
    %244 = vector.load %arg14[%c32_66, %c0_67] : memref<80x128xf32, #tpu.memory_space<vmem>>, vector<8x128xf32>
    tpu.vector_store %arg14[%c32_66, %c0_67], %227 {strides = array<i32>} : memref<80x128xf32, #tpu.memory_space<vmem>>, vector<8x128xf32>,
    %c40_68 = arith.constant 40 : index
    %c0_69 = arith.constant 0 : index
    %245 = vector.load %arg14[%c40_68, %c0_69] : memref<80x128xf32, #tpu.memory_space<vmem>>, vector<8x128xf32>
    tpu.vector_store %arg14[%c40_68, %c0_69], %243 {strides = array<i32>} : memref<80x128xf32, #tpu.memory_space<vmem>>, vector<8x128xf32>,
    %c40_70 = arith.constant 40 : index
    %c0_71 = arith.constant 0 : index
    %246 = vector.load %arg13[%c40_70, %c0_71] : memref<80x1024xf32, #tpu.memory_space<vmem>>, vector<8x512xf32>
    %cst_72 = arith.constant dense<0.000000e+00> : vector<8x512xf32>
    %247 = tpu.matmul %227, %42, %cst_72 {dimension_numbers = #tpu.dot_dimension_numbers<[1], [0], [0], [1], [0, 0, 1, 1], [], []>} : vector<8x128xf32>, vector<128x512xf32>, vector<8x512xf32> -> vector<8x512xf32>
    %248 = arith.addf %246, %247 : vector<8x512xf32>
    %c32_73 = arith.constant 32 : index
    %c512_74 = arith.constant 512 : index
    %249 = vector.load %arg13[%c32_73, %c512_74] : memref<80x1024xf32, #tpu.memory_space<vmem>>, vector<8x512xf32>
    %cst_75 = arith.constant dense<0.000000e+00> : vector<8x512xf32>
    %250 = tpu.matmul %243, %43, %cst_75 {dimension_numbers = #tpu.dot_dimension_numbers<[1], [0], [0], [1], [0, 0, 1, 1], [], []>} : vector<8x128xf32>, vector<128x512xf32>, vector<8x512xf32> -> vector<8x512xf32>
    %251 = arith.addf %249, %250 : vector<8x512xf32>
    %252 = vector.extract_strided_slice %248 {offsets = [0, 0], sizes = [8, 384], strides = [1, 1]} : vector<8x512xf32> to vector<8x384xf32>
    %253 = arith.negf %252 : vector<8x384xf32>
    %254 = math.exp %253 : vector<8x384xf32>
    %cst_76 = arith.constant 1.000000e+00 : f32
    %255 = vector.broadcast %cst_76 : f32 to vector<8x384xf32>
    %256 = arith.addf %255, %254 : vector<8x384xf32>
    %257 = arith.divf %255, %256 : vector<8x384xf32>
    %258 = vector.extract_strided_slice %248 {offsets = [0, 384], sizes = [8, 128], strides = [1, 1]} : vector<8x512xf32> to vector<8x128xf32>
    %259 = math.tanh %258 : vector<8x128xf32>
    %260 = vector.extract_strided_slice %257 {offsets = [0, 128], sizes = [8, 128], strides = [1, 1]} : vector<8x384xf32> to vector<8x128xf32>
    %261 = arith.mulf %260, %224 : vector<8x128xf32>
    %262 = vector.extract_strided_slice %257 {offsets = [0, 0], sizes = [8, 128], strides = [1, 1]} : vector<8x384xf32> to vector<8x128xf32>
    %263 = arith.mulf %262, %259 : vector<8x128xf32>
    %264 = arith.addf %261, %263 : vector<8x128xf32>
    %265 = vector.extract_strided_slice %257 {offsets = [0, 256], sizes = [8, 128], strides = [1, 1]} : vector<8x384xf32> to vector<8x128xf32>
    %266 = math.tanh %264 : vector<8x128xf32>
    %267 = arith.mulf %265, %266 : vector<8x128xf32>
    %268 = vector.extract_strided_slice %251 {offsets = [0, 0], sizes = [8, 384], strides = [1, 1]} : vector<8x512xf32> to vector<8x384xf32>
    %269 = arith.negf %268 : vector<8x384xf32>
    %270 = math.exp %269 : vector<8x384xf32>
    %cst_77 = arith.constant 1.000000e+00 : f32
    %271 = vector.broadcast %cst_77 : f32 to vector<8x384xf32>
    %272 = arith.addf %271, %270 : vector<8x384xf32>
    %273 = arith.divf %271, %272 : vector<8x384xf32>
    %274 = vector.extract_strided_slice %251 {offsets = [0, 384], sizes = [8, 128], strides = [1, 1]} : vector<8x512xf32> to vector<8x128xf32>
    %275 = math.tanh %274 : vector<8x128xf32>
    %276 = vector.extract_strided_slice %273 {offsets = [0, 128], sizes = [8, 128], strides = [1, 1]} : vector<8x384xf32> to vector<8x128xf32>
    %277 = arith.mulf %276, %240 : vector<8x128xf32>
    %278 = vector.extract_strided_slice %273 {offsets = [0, 0], sizes = [8, 128], strides = [1, 1]} : vector<8x384xf32> to vector<8x128xf32>
    %279 = arith.mulf %278, %275 : vector<8x128xf32>
    %280 = arith.addf %277, %279 : vector<8x128xf32>
    %281 = vector.extract_strided_slice %273 {offsets = [0, 256], sizes = [8, 128], strides = [1, 1]} : vector<8x384xf32> to vector<8x128xf32>
    %282 = math.tanh %280 : vector<8x128xf32>
    %283 = arith.mulf %281, %282 : vector<8x128xf32>
    %c40_78 = arith.constant 40 : index
    %c0_79 = arith.constant 0 : index
    %284 = vector.load %arg14[%c40_78, %c0_79] : memref<80x128xf32, #tpu.memory_space<vmem>>, vector<8x128xf32>
    %285 = arith.addf %284, %267 : vector<8x128xf32>
    %c40_80 = arith.constant 40 : index
    %c0_81 = arith.constant 0 : index
    %286 = vector.load %arg14[%c40_80, %c0_81] : memref<80x128xf32, #tpu.memory_space<vmem>>, vector<8x128xf32>
    tpu.vector_store %arg14[%c40_80, %c0_81], %285 {strides = array<i32>} : memref<80x128xf32, #tpu.memory_space<vmem>>, vector<8x128xf32>,
    %c32_82 = arith.constant 32 : index
    %c0_83 = arith.constant 0 : index
    %287 = vector.load %arg14[%c32_82, %c0_83] : memref<80x128xf32, #tpu.memory_space<vmem>>, vector<8x128xf32>
    %288 = arith.addf %287, %283 : vector<8x128xf32>
    %c32_84 = arith.constant 32 : index
    %c0_85 = arith.constant 0 : index
    %289 = vector.load %arg14[%c32_84, %c0_85] : memref<80x128xf32, #tpu.memory_space<vmem>>, vector<8x128xf32>
    tpu.vector_store %arg14[%c32_84, %c0_85], %288 {strides = array<i32>} : memref<80x128xf32, #tpu.memory_space<vmem>>, vector<8x128xf32>,
    %c48_86 = arith.constant 48 : index
    %c0_87 = arith.constant 0 : index
    %290 = vector.load %arg13[%c48_86, %c0_87] : memref<80x1024xf32, #tpu.memory_space<vmem>>, vector<8x512xf32>
    %cst_88 = arith.constant dense<0.000000e+00> : vector<8x512xf32>
    %291 = tpu.matmul %267, %42, %cst_88 {dimension_numbers = #tpu.dot_dimension_numbers<[1], [0], [0], [1], [0, 0, 1, 1], [], []>} : vector<8x128xf32>, vector<128x512xf32>, vector<8x512xf32> -> vector<8x512xf32>
    %292 = arith.addf %290, %291 : vector<8x512xf32>
    %c24_89 = arith.constant 24 : index
    %c512_90 = arith.constant 512 : index
    %293 = vector.load %arg13[%c24_89, %c512_90] : memref<80x1024xf32, #tpu.memory_space<vmem>>, vector<8x512xf32>
    %cst_91 = arith.constant dense<0.000000e+00> : vector<8x512xf32>
    %294 = tpu.matmul %283, %43, %cst_91 {dimension_numbers = #tpu.dot_dimension_numbers<[1], [0], [0], [1], [0, 0, 1, 1], [], []>} : vector<8x128xf32>, vector<128x512xf32>, vector<8x512xf32> -> vector<8x512xf32>
    %295 = arith.addf %293, %294 : vector<8x512xf32>
    %296 = vector.extract_strided_slice %292 {offsets = [0, 0], sizes = [8, 384], strides = [1, 1]} : vector<8x512xf32> to vector<8x384xf32>
    %297 = arith.negf %296 : vector<8x384xf32>
    %298 = math.exp %297 : vector<8x384xf32>
    %cst_92 = arith.constant 1.000000e+00 : f32
    %299 = vector.broadcast %cst_92 : f32 to vector<8x384xf32>
    %300 = arith.addf %299, %298 : vector<8x384xf32>
    %301 = arith.divf %299, %300 : vector<8x384xf32>
    %302 = vector.extract_strided_slice %292 {offsets = [0, 384], sizes = [8, 128], strides = [1, 1]} : vector<8x512xf32> to vector<8x128xf32>
    %303 = math.tanh %302 : vector<8x128xf32>
    %304 = vector.extract_strided_slice %301 {offsets = [0, 128], sizes = [8, 128], strides = [1, 1]} : vector<8x384xf32> to vector<8x128xf32>
    %305 = arith.mulf %304, %264 : vector<8x128xf32>
    %306 = vector.extract_strided_slice %301 {offsets = [0, 0], sizes = [8, 128], strides = [1, 1]} : vector<8x384xf32> to vector<8x128xf32>
    %307 = arith.mulf %306, %303 : vector<8x128xf32>
    %308 = arith.addf %305, %307 : vector<8x128xf32>
    %309 = vector.extract_strided_slice %301 {offsets = [0, 256], sizes = [8, 128], strides = [1, 1]} : vector<8x384xf32> to vector<8x128xf32>
    %310 = math.tanh %308 : vector<8x128xf32>
    %311 = arith.mulf %309, %310 : vector<8x128xf32>
    %312 = vector.extract_strided_slice %295 {offsets = [0, 0], sizes = [8, 384], strides = [1, 1]} : vector<8x512xf32> to vector<8x384xf32>
    %313 = arith.negf %312 : vector<8x384xf32>
    %314 = math.exp %313 : vector<8x384xf32>
    %cst_93 = arith.constant 1.000000e+00 : f32
    %315 = vector.broadcast %cst_93 : f32 to vector<8x384xf32>
    %316 = arith.addf %315, %314 : vector<8x384xf32>
    %317 = arith.divf %315, %316 : vector<8x384xf32>
    %318 = vector.extract_strided_slice %295 {offsets = [0, 384], sizes = [8, 128], strides = [1, 1]} : vector<8x512xf32> to vector<8x128xf32>
    %319 = math.tanh %318 : vector<8x128xf32>
    %320 = vector.extract_strided_slice %317 {offsets = [0, 128], sizes = [8, 128], strides = [1, 1]} : vector<8x384xf32> to vector<8x128xf32>
    %321 = arith.mulf %320, %280 : vector<8x128xf32>
    %322 = vector.extract_strided_slice %317 {offsets = [0, 0], sizes = [8, 128], strides = [1, 1]} : vector<8x384xf32> to vector<8x128xf32>
    %323 = arith.mulf %322, %319 : vector<8x128xf32>
    %324 = arith.addf %321, %323 : vector<8x128xf32>
    %325 = vector.extract_strided_slice %317 {offsets = [0, 256], sizes = [8, 128], strides = [1, 1]} : vector<8x384xf32> to vector<8x128xf32>
    %326 = math.tanh %324 : vector<8x128xf32>
    %327 = arith.mulf %325, %326 : vector<8x128xf32>
    %c48_94 = arith.constant 48 : index
    %c0_95 = arith.constant 0 : index
    %328 = vector.load %arg14[%c48_94, %c0_95] : memref<80x128xf32, #tpu.memory_space<vmem>>, vector<8x128xf32>
    %329 = arith.addf %328, %311 : vector<8x128xf32>
    %c48_96 = arith.constant 48 : index
    %c0_97 = arith.constant 0 : index
    %330 = vector.load %arg14[%c48_96, %c0_97] : memref<80x128xf32, #tpu.memory_space<vmem>>, vector<8x128xf32>
    tpu.vector_store %arg14[%c48_96, %c0_97], %329 {strides = array<i32>} : memref<80x128xf32, #tpu.memory_space<vmem>>, vector<8x128xf32>,
    %c24_98 = arith.constant 24 : index
    %c0_99 = arith.constant 0 : index
    %331 = vector.load %arg14[%c24_98, %c0_99] : memref<80x128xf32, #tpu.memory_space<vmem>>, vector<8x128xf32>
    %332 = arith.addf %331, %327 : vector<8x128xf32>
    %c24_100 = arith.constant 24 : index
    %c0_101 = arith.constant 0 : index
    %333 = vector.load %arg14[%c24_100, %c0_101] : memref<80x128xf32, #tpu.memory_space<vmem>>, vector<8x128xf32>
    tpu.vector_store %arg14[%c24_100, %c0_101], %332 {strides = array<i32>} : memref<80x128xf32, #tpu.memory_space<vmem>>, vector<8x128xf32>,
    %c56_102 = arith.constant 56 : index
    %c0_103 = arith.constant 0 : index
    %334 = vector.load %arg13[%c56_102, %c0_103] : memref<80x1024xf32, #tpu.memory_space<vmem>>, vector<8x512xf32>
    %cst_104 = arith.constant dense<0.000000e+00> : vector<8x512xf32>
    %335 = tpu.matmul %311, %42, %cst_104 {dimension_numbers = #tpu.dot_dimension_numbers<[1], [0], [0], [1], [0, 0, 1, 1], [], []>} : vector<8x128xf32>, vector<128x512xf32>, vector<8x512xf32> -> vector<8x512xf32>
    %336 = arith.addf %334, %335 : vector<8x512xf32>
    %c16_105 = arith.constant 16 : index
    %c512_106 = arith.constant 512 : index
    %337 = vector.load %arg13[%c16_105, %c512_106] : memref<80x1024xf32, #tpu.memory_space<vmem>>, vector<8x512xf32>
    %cst_107 = arith.constant dense<0.000000e+00> : vector<8x512xf32>
    %338 = tpu.matmul %327, %43, %cst_107 {dimension_numbers = #tpu.dot_dimension_numbers<[1], [0], [0], [1], [0, 0, 1, 1], [], []>} : vector<8x128xf32>, vector<128x512xf32>, vector<8x512xf32> -> vector<8x512xf32>
    %339 = arith.addf %337, %338 : vector<8x512xf32>
    %340 = vector.extract_strided_slice %336 {offsets = [0, 0], sizes = [8, 384], strides = [1, 1]} : vector<8x512xf32> to vector<8x384xf32>
    %341 = arith.negf %340 : vector<8x384xf32>
    %342 = math.exp %341 : vector<8x384xf32>
    %cst_108 = arith.constant 1.000000e+00 : f32
    %343 = vector.broadcast %cst_108 : f32 to vector<8x384xf32>
    %344 = arith.addf %343, %342 : vector<8x384xf32>
    %345 = arith.divf %343, %344 : vector<8x384xf32>
    %346 = vector.extract_strided_slice %336 {offsets = [0, 384], sizes = [8, 128], strides = [1, 1]} : vector<8x512xf32> to vector<8x128xf32>
    %347 = math.tanh %346 : vector<8x128xf32>
    %348 = vector.extract_strided_slice %345 {offsets = [0, 128], sizes = [8, 128], strides = [1, 1]} : vector<8x384xf32> to vector<8x128xf32>
    %349 = arith.mulf %348, %308 : vector<8x128xf32>
    %350 = vector.extract_strided_slice %345 {offsets = [0, 0], sizes = [8, 128], strides = [1, 1]} : vector<8x384xf32> to vector<8x128xf32>
    %351 = arith.mulf %350, %347 : vector<8x128xf32>
    %352 = arith.addf %349, %351 : vector<8x128xf32>
    %353 = vector.extract_strided_slice %345 {offsets = [0, 256], sizes = [8, 128], strides = [1, 1]} : vector<8x384xf32> to vector<8x128xf32>
    %354 = math.tanh %352 : vector<8x128xf32>
    %355 = arith.mulf %353, %354 : vector<8x128xf32>
    %356 = vector.extract_strided_slice %339 {offsets = [0, 0], sizes = [8, 384], strides = [1, 1]} : vector<8x512xf32> to vector<8x384xf32>
    %357 = arith.negf %356 : vector<8x384xf32>
    %358 = math.exp %357 : vector<8x384xf32>
    %cst_109 = arith.constant 1.000000e+00 : f32
    %359 = vector.broadcast %cst_109 : f32 to vector<8x384xf32>
    %360 = arith.addf %359, %358 : vector<8x384xf32>
    %361 = arith.divf %359, %360 : vector<8x384xf32>
    %362 = vector.extract_strided_slice %339 {offsets = [0, 384], sizes = [8, 128], strides = [1, 1]} : vector<8x512xf32> to vector<8x128xf32>
    %363 = math.tanh %362 : vector<8x128xf32>
    %364 = vector.extract_strided_slice %361 {offsets = [0, 128], sizes = [8, 128], strides = [1, 1]} : vector<8x384xf32> to vector<8x128xf32>
    %365 = arith.mulf %364, %324 : vector<8x128xf32>
    %366 = vector.extract_strided_slice %361 {offsets = [0, 0], sizes = [8, 128], strides = [1, 1]} : vector<8x384xf32> to vector<8x128xf32>
    %367 = arith.mulf %366, %363 : vector<8x128xf32>
    %368 = arith.addf %365, %367 : vector<8x128xf32>
    %369 = vector.extract_strided_slice %361 {offsets = [0, 256], sizes = [8, 128], strides = [1, 1]} : vector<8x384xf32> to vector<8x128xf32>
    %370 = math.tanh %368 : vector<8x128xf32>
    %371 = arith.mulf %369, %370 : vector<8x128xf32>
    %c56_110 = arith.constant 56 : index
    %c0_111 = arith.constant 0 : index
    %372 = vector.load %arg14[%c56_110, %c0_111] : memref<80x128xf32, #tpu.memory_space<vmem>>, vector<8x128xf32>
    %373 = arith.addf %372, %355 : vector<8x128xf32>
    %c56_112 = arith.constant 56 : index
    %c0_113 = arith.constant 0 : index
    %374 = vector.load %arg14[%c56_112, %c0_113] : memref<80x128xf32, #tpu.memory_space<vmem>>, vector<8x128xf32>
    tpu.vector_store %arg14[%c56_112, %c0_113], %373 {strides = array<i32>} : memref<80x128xf32, #tpu.memory_space<vmem>>, vector<8x128xf32>,
    %c16_114 = arith.constant 16 : index
    %c0_115 = arith.constant 0 : index
    %375 = vector.load %arg14[%c16_114, %c0_115] : memref<80x128xf32, #tpu.memory_space<vmem>>, vector<8x128xf32>
    %376 = arith.addf %375, %371 : vector<8x128xf32>
    %c16_116 = arith.constant 16 : index
    %c0_117 = arith.constant 0 : index
    %377 = vector.load %arg14[%c16_116, %c0_117] : memref<80x128xf32, #tpu.memory_space<vmem>>, vector<8x128xf32>
    tpu.vector_store %arg14[%c16_116, %c0_117], %376 {strides = array<i32>} : memref<80x128xf32, #tpu.memory_space<vmem>>, vector<8x128xf32>,
    %c64_118 = arith.constant 64 : index
    %c0_119 = arith.constant 0 : index
    %378 = vector.load %arg13[%c64_118, %c0_119] : memref<80x1024xf32, #tpu.memory_space<vmem>>, vector<8x512xf32>
    %cst_120 = arith.constant dense<0.000000e+00> : vector<8x512xf32>
    %379 = tpu.matmul %355, %42, %cst_120 {dimension_numbers = #tpu.dot_dimension_numbers<[1], [0], [0], [1], [0, 0, 1, 1], [], []>} : vector<8x128xf32>, vector<128x512xf32>, vector<8x512xf32> -> vector<8x512xf32>
    %380 = arith.addf %378, %379 : vector<8x512xf32>
    %c8_121 = arith.constant 8 : index
    %c512_122 = arith.constant 512 : index
    %381 = vector.load %arg13[%c8_121, %c512_122] : memref<80x1024xf32, #tpu.memory_space<vmem>>, vector<8x512xf32>
    %cst_123 = arith.constant dense<0.000000e+00> : vector<8x512xf32>
    %382 = tpu.matmul %371, %43, %cst_123 {dimension_numbers = #tpu.dot_dimension_numbers<[1], [0], [0], [1], [0, 0, 1, 1], [], []>} : vector<8x128xf32>, vector<128x512xf32>, vector<8x512xf32> -> vector<8x512xf32>
    %383 = arith.addf %381, %382 : vector<8x512xf32>
    %384 = vector.extract_strided_slice %380 {offsets = [0, 0], sizes = [8, 384], strides = [1, 1]} : vector<8x512xf32> to vector<8x384xf32>
    %385 = arith.negf %384 : vector<8x384xf32>
    %386 = math.exp %385 : vector<8x384xf32>
    %cst_124 = arith.constant 1.000000e+00 : f32
    %387 = vector.broadcast %cst_124 : f32 to vector<8x384xf32>
    %388 = arith.addf %387, %386 : vector<8x384xf32>
    %389 = arith.divf %387, %388 : vector<8x384xf32>
    %390 = vector.extract_strided_slice %380 {offsets = [0, 384], sizes = [8, 128], strides = [1, 1]} : vector<8x512xf32> to vector<8x128xf32>
    %391 = math.tanh %390 : vector<8x128xf32>
    %392 = vector.extract_strided_slice %389 {offsets = [0, 128], sizes = [8, 128], strides = [1, 1]} : vector<8x384xf32> to vector<8x128xf32>
    %393 = arith.mulf %392, %352 : vector<8x128xf32>
    %394 = vector.extract_strided_slice %389 {offsets = [0, 0], sizes = [8, 128], strides = [1, 1]} : vector<8x384xf32> to vector<8x128xf32>
    %395 = arith.mulf %394, %391 : vector<8x128xf32>
    %396 = arith.addf %393, %395 : vector<8x128xf32>
    %397 = vector.extract_strided_slice %389 {offsets = [0, 256], sizes = [8, 128], strides = [1, 1]} : vector<8x384xf32> to vector<8x128xf32>
    %398 = math.tanh %396 : vector<8x128xf32>
    %399 = arith.mulf %397, %398 : vector<8x128xf32>
    %400 = vector.extract_strided_slice %383 {offsets = [0, 0], sizes = [8, 384], strides = [1, 1]} : vector<8x512xf32> to vector<8x384xf32>
    %401 = arith.negf %400 : vector<8x384xf32>
    %402 = math.exp %401 : vector<8x384xf32>
    %cst_125 = arith.constant 1.000000e+00 : f32
    %403 = vector.broadcast %cst_125 : f32 to vector<8x384xf32>
    %404 = arith.addf %403, %402 : vector<8x384xf32>
    %405 = arith.divf %403, %404 : vector<8x384xf32>
    %406 = vector.extract_strided_slice %383 {offsets = [0, 384], sizes = [8, 128], strides = [1, 1]} : vector<8x512xf32> to vector<8x128xf32>
    %407 = math.tanh %406 : vector<8x128xf32>
    %408 = vector.extract_strided_slice %405 {offsets = [0, 128], sizes = [8, 128], strides = [1, 1]} : vector<8x384xf32> to vector<8x128xf32>
    %409 = arith.mulf %408, %368 : vector<8x128xf32>
    %410 = vector.extract_strided_slice %405 {offsets = [0, 0], sizes = [8, 128], strides = [1, 1]} : vector<8x384xf32> to vector<8x128xf32>
    %411 = arith.mulf %410, %407 : vector<8x128xf32>
    %412 = arith.addf %409, %411 : vector<8x128xf32>
    %413 = vector.extract_strided_slice %405 {offsets = [0, 256], sizes = [8, 128], strides = [1, 1]} : vector<8x384xf32> to vector<8x128xf32>
    %414 = math.tanh %412 : vector<8x128xf32>
    %415 = arith.mulf %413, %414 : vector<8x128xf32>
    %c64_126 = arith.constant 64 : index
    %c0_127 = arith.constant 0 : index
    %416 = vector.load %arg14[%c64_126, %c0_127] : memref<80x128xf32, #tpu.memory_space<vmem>>, vector<8x128xf32>
    %417 = arith.addf %416, %399 : vector<8x128xf32>
    %c64_128 = arith.constant 64 : index
    %c0_129 = arith.constant 0 : index
    %418 = vector.load %arg14[%c64_128, %c0_129] : memref<80x128xf32, #tpu.memory_space<vmem>>, vector<8x128xf32>
    tpu.vector_store %arg14[%c64_128, %c0_129], %417 {strides = array<i32>} : memref<80x128xf32, #tpu.memory_space<vmem>>, vector<8x128xf32>,
    %c8_130 = arith.constant 8 : index
    %c0_131 = arith.constant 0 : index
    %419 = vector.load %arg14[%c8_130, %c0_131] : memref<80x128xf32, #tpu.memory_space<vmem>>, vector<8x128xf32>
    %420 = arith.addf %419, %415 : vector<8x128xf32>
    %c8_132 = arith.constant 8 : index
    %c0_133 = arith.constant 0 : index
    %421 = vector.load %arg14[%c8_132, %c0_133] : memref<80x128xf32, #tpu.memory_space<vmem>>, vector<8x128xf32>
    tpu.vector_store %arg14[%c8_132, %c0_133], %420 {strides = array<i32>} : memref<80x128xf32, #tpu.memory_space<vmem>>, vector<8x128xf32>,
    %c72_134 = arith.constant 72 : index
    %c0_135 = arith.constant 0 : index
    %422 = vector.load %arg13[%c72_134, %c0_135] : memref<80x1024xf32, #tpu.memory_space<vmem>>, vector<8x512xf32>
    %cst_136 = arith.constant dense<0.000000e+00> : vector<8x512xf32>
    %423 = tpu.matmul %399, %42, %cst_136 {dimension_numbers = #tpu.dot_dimension_numbers<[1], [0], [0], [1], [0, 0, 1, 1], [], []>} : vector<8x128xf32>, vector<128x512xf32>, vector<8x512xf32> -> vector<8x512xf32>
    %424 = arith.addf %422, %423 : vector<8x512xf32>
    %c0_137 = arith.constant 0 : index
    %c512_138 = arith.constant 512 : index
    %425 = vector.load %arg13[%c0_137, %c512_138] : memref<80x1024xf32, #tpu.memory_space<vmem>>, vector<8x512xf32>
    %cst_139 = arith.constant dense<0.000000e+00> : vector<8x512xf32>
    %426 = tpu.matmul %415, %43, %cst_139 {dimension_numbers = #tpu.dot_dimension_numbers<[1], [0], [0], [1], [0, 0, 1, 1], [], []>} : vector<8x128xf32>, vector<128x512xf32>, vector<8x512xf32> -> vector<8x512xf32>
    %427 = arith.addf %425, %426 : vector<8x512xf32>
    %428 = vector.extract_strided_slice %424 {offsets = [0, 0], sizes = [8, 384], strides = [1, 1]} : vector<8x512xf32> to vector<8x384xf32>
    %429 = arith.negf %428 : vector<8x384xf32>
    %430 = math.exp %429 : vector<8x384xf32>
    %cst_140 = arith.constant 1.000000e+00 : f32
    %431 = vector.broadcast %cst_140 : f32 to vector<8x384xf32>
    %432 = arith.addf %431, %430 : vector<8x384xf32>
    %433 = arith.divf %431, %432 : vector<8x384xf32>
    %434 = vector.extract_strided_slice %424 {offsets = [0, 384], sizes = [8, 128], strides = [1, 1]} : vector<8x512xf32> to vector<8x128xf32>
    %435 = math.tanh %434 : vector<8x128xf32>
    %436 = vector.extract_strided_slice %433 {offsets = [0, 128], sizes = [8, 128], strides = [1, 1]} : vector<8x384xf32> to vector<8x128xf32>
    %437 = arith.mulf %436, %396 : vector<8x128xf32>
    %438 = vector.extract_strided_slice %433 {offsets = [0, 0], sizes = [8, 128], strides = [1, 1]} : vector<8x384xf32> to vector<8x128xf32>
    %439 = arith.mulf %438, %435 : vector<8x128xf32>
    %440 = arith.addf %437, %439 : vector<8x128xf32>
    %441 = vector.extract_strided_slice %433 {offsets = [0, 256], sizes = [8, 128], strides = [1, 1]} : vector<8x384xf32> to vector<8x128xf32>
    %442 = math.tanh %440 : vector<8x128xf32>
    %443 = arith.mulf %441, %442 : vector<8x128xf32>
    %444 = vector.extract_strided_slice %427 {offsets = [0, 0], sizes = [8, 384], strides = [1, 1]} : vector<8x512xf32> to vector<8x384xf32>
    %445 = arith.negf %444 : vector<8x384xf32>
    %446 = math.exp %445 : vector<8x384xf32>
    %cst_141 = arith.constant 1.000000e+00 : f32
    %447 = vector.broadcast %cst_141 : f32 to vector<8x384xf32>
    %448 = arith.addf %447, %446 : vector<8x384xf32>
    %449 = arith.divf %447, %448 : vector<8x384xf32>
    %450 = vector.extract_strided_slice %427 {offsets = [0, 384], sizes = [8, 128], strides = [1, 1]} : vector<8x512xf32> to vector<8x128xf32>
    %451 = math.tanh %450 : vector<8x128xf32>
    %452 = vector.extract_strided_slice %449 {offsets = [0, 128], sizes = [8, 128], strides = [1, 1]} : vector<8x384xf32> to vector<8x128xf32>
    %453 = arith.mulf %452, %412 : vector<8x128xf32>
    %454 = vector.extract_strided_slice %449 {offsets = [0, 0], sizes = [8, 128], strides = [1, 1]} : vector<8x384xf32> to vector<8x128xf32>
    %455 = arith.mulf %454, %451 : vector<8x128xf32>
    %456 = arith.addf %453, %455 : vector<8x128xf32>
    %457 = vector.extract_strided_slice %449 {offsets = [0, 256], sizes = [8, 128], strides = [1, 1]} : vector<8x384xf32> to vector<8x128xf32>
    %458 = math.tanh %456 : vector<8x128xf32>
    %459 = arith.mulf %457, %458 : vector<8x128xf32>
    %c72_142 = arith.constant 72 : index
    %c0_143 = arith.constant 0 : index
    %460 = vector.load %arg14[%c72_142, %c0_143] : memref<80x128xf32, #tpu.memory_space<vmem>>, vector<8x128xf32>
    %461 = arith.addf %460, %443 : vector<8x128xf32>
    %c72_144 = arith.constant 72 : index
    %c0_145 = arith.constant 0 : index
    %462 = vector.load %arg14[%c72_144, %c0_145] : memref<80x128xf32, #tpu.memory_space<vmem>>, vector<8x128xf32>
    tpu.vector_store %arg14[%c72_144, %c0_145], %461 {strides = array<i32>} : memref<80x128xf32, #tpu.memory_space<vmem>>, vector<8x128xf32>,
    %c0_146 = arith.constant 0 : index
    %c0_147 = arith.constant 0 : index
    %463 = vector.load %arg14[%c0_146, %c0_147] : memref<80x128xf32, #tpu.memory_space<vmem>>, vector<8x128xf32>
    %464 = arith.addf %463, %459 : vector<8x128xf32>
    %c0_148 = arith.constant 0 : index
    %c0_149 = arith.constant 0 : index
    %465 = vector.load %arg14[%c0_148, %c0_149] : memref<80x128xf32, #tpu.memory_space<vmem>>, vector<8x128xf32>
    tpu.vector_store %arg14[%c0_148, %c0_149], %464 {strides = array<i32>} : memref<80x128xf32, #tpu.memory_space<vmem>>, vector<8x128xf32>,
    %c0_i32_150 = arith.constant 0 : i32
    %466 = tpu.memref_slice %arg18[%c0_i32_150] : memref<3x!tpu.dma_semaphore, #tpu.memory_space<semaphore_mem>> -> memref<1x!tpu.dma_semaphore, #tpu.memory_space<semaphore_mem>>
    %467 = tpu.memref_squeeze %466 : memref<1x!tpu.dma_semaphore, #tpu.memory_space<semaphore_mem>> -> memref<!tpu.dma_semaphore, #tpu.memory_space<semaphore_mem>>
    tpu.wait_dma2 semaphore(%467 : memref<!tpu.dma_semaphore, #tpu.memory_space<semaphore_mem>>) src(%arg9 : memref<128x1024xf32, #tpu.memory_space<any>>) dst(%arg15 : memref<128x1024xf32, #tpu.memory_space<vmem>>)
    %c1_i32_151 = arith.constant 1 : i32
    %468 = tpu.memref_slice %arg18[%c1_i32_151] : memref<3x!tpu.dma_semaphore, #tpu.memory_space<semaphore_mem>> -> memref<1x!tpu.dma_semaphore, #tpu.memory_space<semaphore_mem>>
    %469 = tpu.memref_squeeze %468 : memref<1x!tpu.dma_semaphore, #tpu.memory_space<semaphore_mem>> -> memref<!tpu.dma_semaphore, #tpu.memory_space<semaphore_mem>>
    tpu.wait_dma2 semaphore(%469 : memref<!tpu.dma_semaphore, #tpu.memory_space<semaphore_mem>>) src(%arg10 : memref<128x512xf32, #tpu.memory_space<any>>) dst(%arg16 : memref<128x512xf32, #tpu.memory_space<vmem>>)
    %c2_i32_152 = arith.constant 2 : i32
    %470 = tpu.memref_slice %arg18[%c2_i32_152] : memref<3x!tpu.dma_semaphore, #tpu.memory_space<semaphore_mem>> -> memref<1x!tpu.dma_semaphore, #tpu.memory_space<semaphore_mem>>
    %471 = tpu.memref_squeeze %470 : memref<1x!tpu.dma_semaphore, #tpu.memory_space<semaphore_mem>> -> memref<!tpu.dma_semaphore, #tpu.memory_space<semaphore_mem>>
    tpu.wait_dma2 semaphore(%471 : memref<!tpu.dma_semaphore, #tpu.memory_space<semaphore_mem>>) src(%arg11 : memref<128x512xf32, #tpu.memory_space<any>>) dst(%arg17 : memref<128x512xf32, #tpu.memory_space<vmem>>)
    %c0_153 = arith.constant 0 : index
    %c0_154 = arith.constant 0 : index
    %472 = vector.load %arg14[%c0_153, %c0_154] : memref<80x128xf32, #tpu.memory_space<vmem>>, vector<80x128xf32>
    %c0_155 = arith.constant 0 : index
    %c0_156 = arith.constant 0 : index
    %473 = vector.load %arg15[%c0_155, %c0_156] : memref<128x1024xf32, #tpu.memory_space<vmem>>, vector<128x1024xf32>
    %cst_157 = arith.constant dense<0.000000e+00> : vector<80x1024xf32>
    %474 = tpu.matmul %472, %473, %cst_157 {dimension_numbers = #tpu.dot_dimension_numbers<[1], [0], [0], [1], [0, 0, 1, 1], [], []>} : vector<80x128xf32>, vector<128x1024xf32>, vector<80x1024xf32> -> vector<80x1024xf32>
    %c0_158 = arith.constant 0 : index
    %c0_159 = arith.constant 0 : index
    %475 = vector.load %arg8[%c0_158, %c0_159] : memref<1x1024xf32, #tpu.memory_space<vmem>>, vector<1x1024xf32>
    %476 = vector.broadcast %475 : vector<1x1024xf32> to vector<80x1024xf32>
    %477 = arith.addf %474, %476 : vector<80x1024xf32>
    %c0_160 = arith.constant 0 : index
    %c0_161 = arith.constant 0 : index
    %478 = vector.load %arg13[%c0_160, %c0_161] : memref<80x1024xf32, #tpu.memory_space<vmem>>, vector<80x1024xf32>
    tpu.vector_store %arg13[%c0_160, %c0_161], %477 {strides = array<i32>} : memref<80x1024xf32, #tpu.memory_space<vmem>>, vector<80x1024xf32>,
    %c0_162 = arith.constant 0 : index
    %c0_163 = arith.constant 0 : index
    %479 = vector.load %arg16[%c0_162, %c0_163] : memref<128x512xf32, #tpu.memory_space<vmem>>, vector<128x512xf32>
    %c0_164 = arith.constant 0 : index
    %c0_165 = arith.constant 0 : index
    %480 = vector.load %arg17[%c0_164, %c0_165] : memref<128x512xf32, #tpu.memory_space<vmem>>, vector<128x512xf32>
    %cst_166 = arith.constant 0.000000e+00 : f32
    %481 = vector.broadcast %cst_166 : f32 to vector<8x128xf32>
    %cst_167 = arith.constant 0.000000e+00 : f32
    %482 = vector.broadcast %cst_167 : f32 to vector<8x128xf32>
    %c0_168 = arith.constant 0 : index
    %c0_169 = arith.constant 0 : index
    %483 = vector.load %arg13[%c0_168, %c0_169] : memref<80x1024xf32, #tpu.memory_space<vmem>>, vector<8x512xf32>
    %cst_170 = arith.constant dense<0.000000e+00> : vector<8x512xf32>
    %484 = tpu.matmul %481, %479, %cst_170 {dimension_numbers = #tpu.dot_dimension_numbers<[1], [0], [0], [1], [0, 0, 1, 1], [], []>} : vector<8x128xf32>, vector<128x512xf32>, vector<8x512xf32> -> vector<8x512xf32>
    %485 = arith.addf %483, %484 : vector<8x512xf32>
    %c72_171 = arith.constant 72 : index
    %c512_172 = arith.constant 512 : index
    %486 = vector.load %arg13[%c72_171, %c512_172] : memref<80x1024xf32, #tpu.memory_space<vmem>>, vector<8x512xf32>
    %cst_173 = arith.constant dense<0.000000e+00> : vector<8x512xf32>
    %487 = tpu.matmul %482, %480, %cst_173 {dimension_numbers = #tpu.dot_dimension_numbers<[1], [0], [0], [1], [0, 0, 1, 1], [], []>} : vector<8x128xf32>, vector<128x512xf32>, vector<8x512xf32> -> vector<8x512xf32>
    %488 = arith.addf %486, %487 : vector<8x512xf32>
    %489 = vector.extract_strided_slice %485 {offsets = [0, 0], sizes = [8, 384], strides = [1, 1]} : vector<8x512xf32> to vector<8x384xf32>
    %490 = arith.negf %489 : vector<8x384xf32>
    %491 = math.exp %490 : vector<8x384xf32>
    %cst_174 = arith.constant 1.000000e+00 : f32
    %492 = vector.broadcast %cst_174 : f32 to vector<8x384xf32>
    %493 = arith.addf %492, %491 : vector<8x384xf32>
    %494 = arith.divf %492, %493 : vector<8x384xf32>
    %495 = vector.extract_strided_slice %485 {offsets = [0, 384], sizes = [8, 128], strides = [1, 1]} : vector<8x512xf32> to vector<8x128xf32>
    %496 = math.tanh %495 : vector<8x128xf32>
    %497 = vector.extract_strided_slice %494 {offsets = [0, 128], sizes = [8, 128], strides = [1, 1]} : vector<8x384xf32> to vector<8x128xf32>
    %498 = arith.mulf %497, %481 : vector<8x128xf32>
    %499 = vector.extract_strided_slice %494 {offsets = [0, 0], sizes = [8, 128], strides = [1, 1]} : vector<8x384xf32> to vector<8x128xf32>
    %500 = arith.mulf %499, %496 : vector<8x128xf32>
    %501 = arith.addf %498, %500 : vector<8x128xf32>
    %502 = vector.extract_strided_slice %494 {offsets = [0, 256], sizes = [8, 128], strides = [1, 1]} : vector<8x384xf32> to vector<8x128xf32>
    %503 = math.tanh %501 : vector<8x128xf32>
    %504 = arith.mulf %502, %503 : vector<8x128xf32>
    %505 = vector.extract_strided_slice %488 {offsets = [0, 0], sizes = [8, 384], strides = [1, 1]} : vector<8x512xf32> to vector<8x384xf32>
    %506 = arith.negf %505 : vector<8x384xf32>
    %507 = math.exp %506 : vector<8x384xf32>
    %cst_175 = arith.constant 1.000000e+00 : f32
    %508 = vector.broadcast %cst_175 : f32 to vector<8x384xf32>
    %509 = arith.addf %508, %507 : vector<8x384xf32>
    %510 = arith.divf %508, %509 : vector<8x384xf32>
    %511 = vector.extract_strided_slice %488 {offsets = [0, 384], sizes = [8, 128], strides = [1, 1]} : vector<8x512xf32> to vector<8x128xf32>
    %512 = math.tanh %511 : vector<8x128xf32>
    %513 = vector.extract_strided_slice %510 {offsets = [0, 128], sizes = [8, 128], strides = [1, 1]} : vector<8x384xf32> to vector<8x128xf32>
    %514 = arith.mulf %513, %482 : vector<8x128xf32>
    %515 = vector.extract_strided_slice %510 {offsets = [0, 0], sizes = [8, 128], strides = [1, 1]} : vector<8x384xf32> to vector<8x128xf32>
    %516 = arith.mulf %515, %512 : vector<8x128xf32>
    %517 = arith.addf %514, %516 : vector<8x128xf32>
    %518 = vector.extract_strided_slice %510 {offsets = [0, 256], sizes = [8, 128], strides = [1, 1]} : vector<8x384xf32> to vector<8x128xf32>
    %519 = math.tanh %517 : vector<8x128xf32>
    %520 = arith.mulf %518, %519 : vector<8x128xf32>
    %c0_176 = arith.constant 0 : index
    %c0_177 = arith.constant 0 : index
    %521 = vector.load %arg12[%c0_176, %c0_177] : memref<80x128xf32, #tpu.memory_space<vmem>>, vector<8x128xf32>
    tpu.vector_store %arg12[%c0_176, %c0_177], %504 {strides = array<i32>} : memref<80x128xf32, #tpu.memory_space<vmem>>, vector<8x128xf32>,
    %c72_178 = arith.constant 72 : index
    %c0_179 = arith.constant 0 : index
    %522 = vector.load %arg12[%c72_178, %c0_179] : memref<80x128xf32, #tpu.memory_space<vmem>>, vector<8x128xf32>
    tpu.vector_store %arg12[%c72_178, %c0_179], %520 {strides = array<i32>} : memref<80x128xf32, #tpu.memory_space<vmem>>, vector<8x128xf32>,
    %c8_180 = arith.constant 8 : index
    %c0_181 = arith.constant 0 : index
    %523 = vector.load %arg13[%c8_180, %c0_181] : memref<80x1024xf32, #tpu.memory_space<vmem>>, vector<8x512xf32>
    %cst_182 = arith.constant dense<0.000000e+00> : vector<8x512xf32>
    %524 = tpu.matmul %504, %479, %cst_182 {dimension_numbers = #tpu.dot_dimension_numbers<[1], [0], [0], [1], [0, 0, 1, 1], [], []>} : vector<8x128xf32>, vector<128x512xf32>, vector<8x512xf32> -> vector<8x512xf32>
    %525 = arith.addf %523, %524 : vector<8x512xf32>
    %c64_183 = arith.constant 64 : index
    %c512_184 = arith.constant 512 : index
    %526 = vector.load %arg13[%c64_183, %c512_184] : memref<80x1024xf32, #tpu.memory_space<vmem>>, vector<8x512xf32>
    %cst_185 = arith.constant dense<0.000000e+00> : vector<8x512xf32>
    %527 = tpu.matmul %520, %480, %cst_185 {dimension_numbers = #tpu.dot_dimension_numbers<[1], [0], [0], [1], [0, 0, 1, 1], [], []>} : vector<8x128xf32>, vector<128x512xf32>, vector<8x512xf32> -> vector<8x512xf32>
    %528 = arith.addf %526, %527 : vector<8x512xf32>
    %529 = vector.extract_strided_slice %525 {offsets = [0, 0], sizes = [8, 384], strides = [1, 1]} : vector<8x512xf32> to vector<8x384xf32>
    %530 = arith.negf %529 : vector<8x384xf32>
    %531 = math.exp %530 : vector<8x384xf32>
    %cst_186 = arith.constant 1.000000e+00 : f32
    %532 = vector.broadcast %cst_186 : f32 to vector<8x384xf32>
    %533 = arith.addf %532, %531 : vector<8x384xf32>
    %534 = arith.divf %532, %533 : vector<8x384xf32>
    %535 = vector.extract_strided_slice %525 {offsets = [0, 384], sizes = [8, 128], strides = [1, 1]} : vector<8x512xf32> to vector<8x128xf32>
    %536 = math.tanh %535 : vector<8x128xf32>
    %537 = vector.extract_strided_slice %534 {offsets = [0, 128], sizes = [8, 128], strides = [1, 1]} : vector<8x384xf32> to vector<8x128xf32>
    %538 = arith.mulf %537, %501 : vector<8x128xf32>
    %539 = vector.extract_strided_slice %534 {offsets = [0, 0], sizes = [8, 128], strides = [1, 1]} : vector<8x384xf32> to vector<8x128xf32>
    %540 = arith.mulf %539, %536 : vector<8x128xf32>
    %541 = arith.addf %538, %540 : vector<8x128xf32>
    %542 = vector.extract_strided_slice %534 {offsets = [0, 256], sizes = [8, 128], strides = [1, 1]} : vector<8x384xf32> to vector<8x128xf32>
    %543 = math.tanh %541 : vector<8x128xf32>
    %544 = arith.mulf %542, %543 : vector<8x128xf32>
    %545 = vector.extract_strided_slice %528 {offsets = [0, 0], sizes = [8, 384], strides = [1, 1]} : vector<8x512xf32> to vector<8x384xf32>
    %546 = arith.negf %545 : vector<8x384xf32>
    %547 = math.exp %546 : vector<8x384xf32>
    %cst_187 = arith.constant 1.000000e+00 : f32
    %548 = vector.broadcast %cst_187 : f32 to vector<8x384xf32>
    %549 = arith.addf %548, %547 : vector<8x384xf32>
    %550 = arith.divf %548, %549 : vector<8x384xf32>
    %551 = vector.extract_strided_slice %528 {offsets = [0, 384], sizes = [8, 128], strides = [1, 1]} : vector<8x512xf32> to vector<8x128xf32>
    %552 = math.tanh %551 : vector<8x128xf32>
    %553 = vector.extract_strided_slice %550 {offsets = [0, 128], sizes = [8, 128], strides = [1, 1]} : vector<8x384xf32> to vector<8x128xf32>
    %554 = arith.mulf %553, %517 : vector<8x128xf32>
    %555 = vector.extract_strided_slice %550 {offsets = [0, 0], sizes = [8, 128], strides = [1, 1]} : vector<8x384xf32> to vector<8x128xf32>
    %556 = arith.mulf %555, %552 : vector<8x128xf32>
    %557 = arith.addf %554, %556 : vector<8x128xf32>
    %558 = vector.extract_strided_slice %550 {offsets = [0, 256], sizes = [8, 128], strides = [1, 1]} : vector<8x384xf32> to vector<8x128xf32>
    %559 = math.tanh %557 : vector<8x128xf32>
    %560 = arith.mulf %558, %559 : vector<8x128xf32>
    %c8_188 = arith.constant 8 : index
    %c0_189 = arith.constant 0 : index
    %561 = vector.load %arg12[%c8_188, %c0_189] : memref<80x128xf32, #tpu.memory_space<vmem>>, vector<8x128xf32>
    tpu.vector_store %arg12[%c8_188, %c0_189], %544 {strides = array<i32>} : memref<80x128xf32, #tpu.memory_space<vmem>>, vector<8x128xf32>,
    %c64_190 = arith.constant 64 : index
    %c0_191 = arith.constant 0 : index
    %562 = vector.load %arg12[%c64_190, %c0_191] : memref<80x128xf32, #tpu.memory_space<vmem>>, vector<8x128xf32>
    tpu.vector_store %arg12[%c64_190, %c0_191], %560 {strides = array<i32>} : memref<80x128xf32, #tpu.memory_space<vmem>>, vector<8x128xf32>,
    %c16_192 = arith.constant 16 : index
    %c0_193 = arith.constant 0 : index
    %563 = vector.load %arg13[%c16_192, %c0_193] : memref<80x1024xf32, #tpu.memory_space<vmem>>, vector<8x512xf32>
    %cst_194 = arith.constant dense<0.000000e+00> : vector<8x512xf32>
    %564 = tpu.matmul %544, %479, %cst_194 {dimension_numbers = #tpu.dot_dimension_numbers<[1], [0], [0], [1], [0, 0, 1, 1], [], []>} : vector<8x128xf32>, vector<128x512xf32>, vector<8x512xf32> -> vector<8x512xf32>
    %565 = arith.addf %563, %564 : vector<8x512xf32>
    %c56_195 = arith.constant 56 : index
    %c512_196 = arith.constant 512 : index
    %566 = vector.load %arg13[%c56_195, %c512_196] : memref<80x1024xf32, #tpu.memory_space<vmem>>, vector<8x512xf32>
    %cst_197 = arith.constant dense<0.000000e+00> : vector<8x512xf32>
    %567 = tpu.matmul %560, %480, %cst_197 {dimension_numbers = #tpu.dot_dimension_numbers<[1], [0], [0], [1], [0, 0, 1, 1], [], []>} : vector<8x128xf32>, vector<128x512xf32>, vector<8x512xf32> -> vector<8x512xf32>
    %568 = arith.addf %566, %567 : vector<8x512xf32>
    %569 = vector.extract_strided_slice %565 {offsets = [0, 0], sizes = [8, 384], strides = [1, 1]} : vector<8x512xf32> to vector<8x384xf32>
    %570 = arith.negf %569 : vector<8x384xf32>
    %571 = math.exp %570 : vector<8x384xf32>
    %cst_198 = arith.constant 1.000000e+00 : f32
    %572 = vector.broadcast %cst_198 : f32 to vector<8x384xf32>
    %573 = arith.addf %572, %571 : vector<8x384xf32>
    %574 = arith.divf %572, %573 : vector<8x384xf32>
    %575 = vector.extract_strided_slice %565 {offsets = [0, 384], sizes = [8, 128], strides = [1, 1]} : vector<8x512xf32> to vector<8x128xf32>
    %576 = math.tanh %575 : vector<8x128xf32>
    %577 = vector.extract_strided_slice %574 {offsets = [0, 128], sizes = [8, 128], strides = [1, 1]} : vector<8x384xf32> to vector<8x128xf32>
    %578 = arith.mulf %577, %541 : vector<8x128xf32>
    %579 = vector.extract_strided_slice %574 {offsets = [0, 0], sizes = [8, 128], strides = [1, 1]} : vector<8x384xf32> to vector<8x128xf32>
    %580 = arith.mulf %579, %576 : vector<8x128xf32>
    %581 = arith.addf %578, %580 : vector<8x128xf32>
    %582 = vector.extract_strided_slice %574 {offsets = [0, 256], sizes = [8, 128], strides = [1, 1]} : vector<8x384xf32> to vector<8x128xf32>
    %583 = math.tanh %581 : vector<8x128xf32>
    %584 = arith.mulf %582, %583 : vector<8x128xf32>
    %585 = vector.extract_strided_slice %568 {offsets = [0, 0], sizes = [8, 384], strides = [1, 1]} : vector<8x512xf32> to vector<8x384xf32>
    %586 = arith.negf %585 : vector<8x384xf32>
    %587 = math.exp %586 : vector<8x384xf32>
    %cst_199 = arith.constant 1.000000e+00 : f32
    %588 = vector.broadcast %cst_199 : f32 to vector<8x384xf32>
    %589 = arith.addf %588, %587 : vector<8x384xf32>
    %590 = arith.divf %588, %589 : vector<8x384xf32>
    %591 = vector.extract_strided_slice %568 {offsets = [0, 384], sizes = [8, 128], strides = [1, 1]} : vector<8x512xf32> to vector<8x128xf32>
    %592 = math.tanh %591 : vector<8x128xf32>
    %593 = vector.extract_strided_slice %590 {offsets = [0, 128], sizes = [8, 128], strides = [1, 1]} : vector<8x384xf32> to vector<8x128xf32>
    %594 = arith.mulf %593, %557 : vector<8x128xf32>
    %595 = vector.extract_strided_slice %590 {offsets = [0, 0], sizes = [8, 128], strides = [1, 1]} : vector<8x384xf32> to vector<8x128xf32>
    %596 = arith.mulf %595, %592 : vector<8x128xf32>
    %597 = arith.addf %594, %596 : vector<8x128xf32>
    %598 = vector.extract_strided_slice %590 {offsets = [0, 256], sizes = [8, 128], strides = [1, 1]} : vector<8x384xf32> to vector<8x128xf32>
    %599 = math.tanh %597 : vector<8x128xf32>
    %600 = arith.mulf %598, %599 : vector<8x128xf32>
    %c16_200 = arith.constant 16 : index
    %c0_201 = arith.constant 0 : index
    %601 = vector.load %arg12[%c16_200, %c0_201] : memref<80x128xf32, #tpu.memory_space<vmem>>, vector<8x128xf32>
    tpu.vector_store %arg12[%c16_200, %c0_201], %584 {strides = array<i32>} : memref<80x128xf32, #tpu.memory_space<vmem>>, vector<8x128xf32>,
    %c56_202 = arith.constant 56 : index
    %c0_203 = arith.constant 0 : index
    %602 = vector.load %arg12[%c56_202, %c0_203] : memref<80x128xf32, #tpu.memory_space<vmem>>, vector<8x128xf32>
    tpu.vector_store %arg12[%c56_202, %c0_203], %600 {strides = array<i32>} : memref<80x128xf32, #tpu.memory_space<vmem>>, vector<8x128xf32>,
    %c24_204 = arith.constant 24 : index
    %c0_205 = arith.constant 0 : index
    %603 = vector.load %arg13[%c24_204, %c0_205] : memref<80x1024xf32, #tpu.memory_space<vmem>>, vector<8x512xf32>
    %cst_206 = arith.constant dense<0.000000e+00> : vector<8x512xf32>
    %604 = tpu.matmul %584, %479, %cst_206 {dimension_numbers = #tpu.dot_dimension_numbers<[1], [0], [0], [1], [0, 0, 1, 1], [], []>} : vector<8x128xf32>, vector<128x512xf32>, vector<8x512xf32> -> vector<8x512xf32>
    %605 = arith.addf %603, %604 : vector<8x512xf32>
    %c48_207 = arith.constant 48 : index
    %c512_208 = arith.constant 512 : index
    %606 = vector.load %arg13[%c48_207, %c512_208] : memref<80x1024xf32, #tpu.memory_space<vmem>>, vector<8x512xf32>
    %cst_209 = arith.constant dense<0.000000e+00> : vector<8x512xf32>
    %607 = tpu.matmul %600, %480, %cst_209 {dimension_numbers = #tpu.dot_dimension_numbers<[1], [0], [0], [1], [0, 0, 1, 1], [], []>} : vector<8x128xf32>, vector<128x512xf32>, vector<8x512xf32> -> vector<8x512xf32>
    %608 = arith.addf %606, %607 : vector<8x512xf32>
    %609 = vector.extract_strided_slice %605 {offsets = [0, 0], sizes = [8, 384], strides = [1, 1]} : vector<8x512xf32> to vector<8x384xf32>
    %610 = arith.negf %609 : vector<8x384xf32>
    %611 = math.exp %610 : vector<8x384xf32>
    %cst_210 = arith.constant 1.000000e+00 : f32
    %612 = vector.broadcast %cst_210 : f32 to vector<8x384xf32>
    %613 = arith.addf %612, %611 : vector<8x384xf32>
    %614 = arith.divf %612, %613 : vector<8x384xf32>
    %615 = vector.extract_strided_slice %605 {offsets = [0, 384], sizes = [8, 128], strides = [1, 1]} : vector<8x512xf32> to vector<8x128xf32>
    %616 = math.tanh %615 : vector<8x128xf32>
    %617 = vector.extract_strided_slice %614 {offsets = [0, 128], sizes = [8, 128], strides = [1, 1]} : vector<8x384xf32> to vector<8x128xf32>
    %618 = arith.mulf %617, %581 : vector<8x128xf32>
    %619 = vector.extract_strided_slice %614 {offsets = [0, 0], sizes = [8, 128], strides = [1, 1]} : vector<8x384xf32> to vector<8x128xf32>
    %620 = arith.mulf %619, %616 : vector<8x128xf32>
    %621 = arith.addf %618, %620 : vector<8x128xf32>
    %622 = vector.extract_strided_slice %614 {offsets = [0, 256], sizes = [8, 128], strides = [1, 1]} : vector<8x384xf32> to vector<8x128xf32>
    %623 = math.tanh %621 : vector<8x128xf32>
    %624 = arith.mulf %622, %623 : vector<8x128xf32>
    %625 = vector.extract_strided_slice %608 {offsets = [0, 0], sizes = [8, 384], strides = [1, 1]} : vector<8x512xf32> to vector<8x384xf32>
    %626 = arith.negf %625 : vector<8x384xf32>
    %627 = math.exp %626 : vector<8x384xf32>
    %cst_211 = arith.constant 1.000000e+00 : f32
    %628 = vector.broadcast %cst_211 : f32 to vector<8x384xf32>
    %629 = arith.addf %628, %627 : vector<8x384xf32>
    %630 = arith.divf %628, %629 : vector<8x384xf32>
    %631 = vector.extract_strided_slice %608 {offsets = [0, 384], sizes = [8, 128], strides = [1, 1]} : vector<8x512xf32> to vector<8x128xf32>
    %632 = math.tanh %631 : vector<8x128xf32>
    %633 = vector.extract_strided_slice %630 {offsets = [0, 128], sizes = [8, 128], strides = [1, 1]} : vector<8x384xf32> to vector<8x128xf32>
    %634 = arith.mulf %633, %597 : vector<8x128xf32>
    %635 = vector.extract_strided_slice %630 {offsets = [0, 0], sizes = [8, 128], strides = [1, 1]} : vector<8x384xf32> to vector<8x128xf32>
    %636 = arith.mulf %635, %632 : vector<8x128xf32>
    %637 = arith.addf %634, %636 : vector<8x128xf32>
    %638 = vector.extract_strided_slice %630 {offsets = [0, 256], sizes = [8, 128], strides = [1, 1]} : vector<8x384xf32> to vector<8x128xf32>
    %639 = math.tanh %637 : vector<8x128xf32>
    %640 = arith.mulf %638, %639 : vector<8x128xf32>
    %c24_212 = arith.constant 24 : index
    %c0_213 = arith.constant 0 : index
    %641 = vector.load %arg12[%c24_212, %c0_213] : memref<80x128xf32, #tpu.memory_space<vmem>>, vector<8x128xf32>
    tpu.vector_store %arg12[%c24_212, %c0_213], %624 {strides = array<i32>} : memref<80x128xf32, #tpu.memory_space<vmem>>, vector<8x128xf32>,
    %c48_214 = arith.constant 48 : index
    %c0_215 = arith.constant 0 : index
    %642 = vector.load %arg12[%c48_214, %c0_215] : memref<80x128xf32, #tpu.memory_space<vmem>>, vector<8x128xf32>
    tpu.vector_store %arg12[%c48_214, %c0_215], %640 {strides = array<i32>} : memref<80x128xf32, #tpu.memory_space<vmem>>, vector<8x128xf32>,
    %c32_216 = arith.constant 32 : index
    %c0_217 = arith.constant 0 : index
    %643 = vector.load %arg13[%c32_216, %c0_217] : memref<80x1024xf32, #tpu.memory_space<vmem>>, vector<8x512xf32>
    %cst_218 = arith.constant dense<0.000000e+00> : vector<8x512xf32>
    %644 = tpu.matmul %624, %479, %cst_218 {dimension_numbers = #tpu.dot_dimension_numbers<[1], [0], [0], [1], [0, 0, 1, 1], [], []>} : vector<8x128xf32>, vector<128x512xf32>, vector<8x512xf32> -> vector<8x512xf32>
    %645 = arith.addf %643, %644 : vector<8x512xf32>
    %c40_219 = arith.constant 40 : index
    %c512_220 = arith.constant 512 : index
    %646 = vector.load %arg13[%c40_219, %c512_220] : memref<80x1024xf32, #tpu.memory_space<vmem>>, vector<8x512xf32>
    %cst_221 = arith.constant dense<0.000000e+00> : vector<8x512xf32>
    %647 = tpu.matmul %640, %480, %cst_221 {dimension_numbers = #tpu.dot_dimension_numbers<[1], [0], [0], [1], [0, 0, 1, 1], [], []>} : vector<8x128xf32>, vector<128x512xf32>, vector<8x512xf32> -> vector<8x512xf32>
    %648 = arith.addf %646, %647 : vector<8x512xf32>
    %649 = vector.extract_strided_slice %645 {offsets = [0, 0], sizes = [8, 384], strides = [1, 1]} : vector<8x512xf32> to vector<8x384xf32>
    %650 = arith.negf %649 : vector<8x384xf32>
    %651 = math.exp %650 : vector<8x384xf32>
    %cst_222 = arith.constant 1.000000e+00 : f32
    %652 = vector.broadcast %cst_222 : f32 to vector<8x384xf32>
    %653 = arith.addf %652, %651 : vector<8x384xf32>
    %654 = arith.divf %652, %653 : vector<8x384xf32>
    %655 = vector.extract_strided_slice %645 {offsets = [0, 384], sizes = [8, 128], strides = [1, 1]} : vector<8x512xf32> to vector<8x128xf32>
    %656 = math.tanh %655 : vector<8x128xf32>
    %657 = vector.extract_strided_slice %654 {offsets = [0, 128], sizes = [8, 128], strides = [1, 1]} : vector<8x384xf32> to vector<8x128xf32>
    %658 = arith.mulf %657, %621 : vector<8x128xf32>
    %659 = vector.extract_strided_slice %654 {offsets = [0, 0], sizes = [8, 128], strides = [1, 1]} : vector<8x384xf32> to vector<8x128xf32>
    %660 = arith.mulf %659, %656 : vector<8x128xf32>
    %661 = arith.addf %658, %660 : vector<8x128xf32>
    %662 = vector.extract_strided_slice %654 {offsets = [0, 256], sizes = [8, 128], strides = [1, 1]} : vector<8x384xf32> to vector<8x128xf32>
    %663 = math.tanh %661 : vector<8x128xf32>
    %664 = arith.mulf %662, %663 : vector<8x128xf32>
    %665 = vector.extract_strided_slice %648 {offsets = [0, 0], sizes = [8, 384], strides = [1, 1]} : vector<8x512xf32> to vector<8x384xf32>
    %666 = arith.negf %665 : vector<8x384xf32>
    %667 = math.exp %666 : vector<8x384xf32>
    %cst_223 = arith.constant 1.000000e+00 : f32
    %668 = vector.broadcast %cst_223 : f32 to vector<8x384xf32>
    %669 = arith.addf %668, %667 : vector<8x384xf32>
    %670 = arith.divf %668, %669 : vector<8x384xf32>
    %671 = vector.extract_strided_slice %648 {offsets = [0, 384], sizes = [8, 128], strides = [1, 1]} : vector<8x512xf32> to vector<8x128xf32>
    %672 = math.tanh %671 : vector<8x128xf32>
    %673 = vector.extract_strided_slice %670 {offsets = [0, 128], sizes = [8, 128], strides = [1, 1]} : vector<8x384xf32> to vector<8x128xf32>
    %674 = arith.mulf %673, %637 : vector<8x128xf32>
    %675 = vector.extract_strided_slice %670 {offsets = [0, 0], sizes = [8, 128], strides = [1, 1]} : vector<8x384xf32> to vector<8x128xf32>
    %676 = arith.mulf %675, %672 : vector<8x128xf32>
    %677 = arith.addf %674, %676 : vector<8x128xf32>
    %678 = vector.extract_strided_slice %670 {offsets = [0, 256], sizes = [8, 128], strides = [1, 1]} : vector<8x384xf32> to vector<8x128xf32>
    %679 = math.tanh %677 : vector<8x128xf32>
    %680 = arith.mulf %678, %679 : vector<8x128xf32>
    %c32_224 = arith.constant 32 : index
    %c0_225 = arith.constant 0 : index
    %681 = vector.load %arg12[%c32_224, %c0_225] : memref<80x128xf32, #tpu.memory_space<vmem>>, vector<8x128xf32>
    tpu.vector_store %arg12[%c32_224, %c0_225], %664 {strides = array<i32>} : memref<80x128xf32, #tpu.memory_space<vmem>>, vector<8x128xf32>,
    %c40_226 = arith.constant 40 : index
    %c0_227 = arith.constant 0 : index
    %682 = vector.load %arg12[%c40_226, %c0_227] : memref<80x128xf32, #tpu.memory_space<vmem>>, vector<8x128xf32>
    tpu.vector_store %arg12[%c40_226, %c0_227], %680 {strides = array<i32>} : memref<80x128xf32, #tpu.memory_space<vmem>>, vector<8x128xf32>,
    %c40_228 = arith.constant 40 : index
    %c0_229 = arith.constant 0 : index
    %683 = vector.load %arg13[%c40_228, %c0_229] : memref<80x1024xf32, #tpu.memory_space<vmem>>, vector<8x512xf32>
    %cst_230 = arith.constant dense<0.000000e+00> : vector<8x512xf32>
    %684 = tpu.matmul %664, %479, %cst_230 {dimension_numbers = #tpu.dot_dimension_numbers<[1], [0], [0], [1], [0, 0, 1, 1], [], []>} : vector<8x128xf32>, vector<128x512xf32>, vector<8x512xf32> -> vector<8x512xf32>
    %685 = arith.addf %683, %684 : vector<8x512xf32>
    %c32_231 = arith.constant 32 : index
    %c512_232 = arith.constant 512 : index
    %686 = vector.load %arg13[%c32_231, %c512_232] : memref<80x1024xf32, #tpu.memory_space<vmem>>, vector<8x512xf32>
    %cst_233 = arith.constant dense<0.000000e+00> : vector<8x512xf32>
    %687 = tpu.matmul %680, %480, %cst_233 {dimension_numbers = #tpu.dot_dimension_numbers<[1], [0], [0], [1], [0, 0, 1, 1], [], []>} : vector<8x128xf32>, vector<128x512xf32>, vector<8x512xf32> -> vector<8x512xf32>
    %688 = arith.addf %686, %687 : vector<8x512xf32>
    %689 = vector.extract_strided_slice %685 {offsets = [0, 0], sizes = [8, 384], strides = [1, 1]} : vector<8x512xf32> to vector<8x384xf32>
    %690 = arith.negf %689 : vector<8x384xf32>
    %691 = math.exp %690 : vector<8x384xf32>
    %cst_234 = arith.constant 1.000000e+00 : f32
    %692 = vector.broadcast %cst_234 : f32 to vector<8x384xf32>
    %693 = arith.addf %692, %691 : vector<8x384xf32>
    %694 = arith.divf %692, %693 : vector<8x384xf32>
    %695 = vector.extract_strided_slice %685 {offsets = [0, 384], sizes = [8, 128], strides = [1, 1]} : vector<8x512xf32> to vector<8x128xf32>
    %696 = math.tanh %695 : vector<8x128xf32>
    %697 = vector.extract_strided_slice %694 {offsets = [0, 128], sizes = [8, 128], strides = [1, 1]} : vector<8x384xf32> to vector<8x128xf32>
    %698 = arith.mulf %697, %661 : vector<8x128xf32>
    %699 = vector.extract_strided_slice %694 {offsets = [0, 0], sizes = [8, 128], strides = [1, 1]} : vector<8x384xf32> to vector<8x128xf32>
    %700 = arith.mulf %699, %696 : vector<8x128xf32>
    %701 = arith.addf %698, %700 : vector<8x128xf32>
    %702 = vector.extract_strided_slice %694 {offsets = [0, 256], sizes = [8, 128], strides = [1, 1]} : vector<8x384xf32> to vector<8x128xf32>
    %703 = math.tanh %701 : vector<8x128xf32>
    %704 = arith.mulf %702, %703 : vector<8x128xf32>
    %705 = vector.extract_strided_slice %688 {offsets = [0, 0], sizes = [8, 384], strides = [1, 1]} : vector<8x512xf32> to vector<8x384xf32>
    %706 = arith.negf %705 : vector<8x384xf32>
    %707 = math.exp %706 : vector<8x384xf32>
    %cst_235 = arith.constant 1.000000e+00 : f32
    %708 = vector.broadcast %cst_235 : f32 to vector<8x384xf32>
    %709 = arith.addf %708, %707 : vector<8x384xf32>
    %710 = arith.divf %708, %709 : vector<8x384xf32>
    %711 = vector.extract_strided_slice %688 {offsets = [0, 384], sizes = [8, 128], strides = [1, 1]} : vector<8x512xf32> to vector<8x128xf32>
    %712 = math.tanh %711 : vector<8x128xf32>
    %713 = vector.extract_strided_slice %710 {offsets = [0, 128], sizes = [8, 128], strides = [1, 1]} : vector<8x384xf32> to vector<8x128xf32>
    %714 = arith.mulf %713, %677 : vector<8x128xf32>
    %715 = vector.extract_strided_slice %710 {offsets = [0, 0], sizes = [8, 128], strides = [1, 1]} : vector<8x384xf32> to vector<8x128xf32>
    %716 = arith.mulf %715, %712 : vector<8x128xf32>
    %717 = arith.addf %714, %716 : vector<8x128xf32>
    %718 = vector.extract_strided_slice %710 {offsets = [0, 256], sizes = [8, 128], strides = [1, 1]} : vector<8x384xf32> to vector<8x128xf32>
    %719 = math.tanh %717 : vector<8x128xf32>
    %720 = arith.mulf %718, %719 : vector<8x128xf32>
    %c40_236 = arith.constant 40 : index
    %c0_237 = arith.constant 0 : index
    %721 = vector.load %arg12[%c40_236, %c0_237] : memref<80x128xf32, #tpu.memory_space<vmem>>, vector<8x128xf32>
    %722 = arith.addf %721, %704 : vector<8x128xf32>
    %c40_238 = arith.constant 40 : index
    %c0_239 = arith.constant 0 : index
    %723 = vector.load %arg12[%c40_238, %c0_239] : memref<80x128xf32, #tpu.memory_space<vmem>>, vector<8x128xf32>
    tpu.vector_store %arg12[%c40_238, %c0_239], %722 {strides = array<i32>} : memref<80x128xf32, #tpu.memory_space<vmem>>, vector<8x128xf32>,
    %c32_240 = arith.constant 32 : index
    %c0_241 = arith.constant 0 : index
    %724 = vector.load %arg12[%c32_240, %c0_241] : memref<80x128xf32, #tpu.memory_space<vmem>>, vector<8x128xf32>
    %725 = arith.addf %724, %720 : vector<8x128xf32>
    %c32_242 = arith.constant 32 : index
    %c0_243 = arith.constant 0 : index
    %726 = vector.load %arg12[%c32_242, %c0_243] : memref<80x128xf32, #tpu.memory_space<vmem>>, vector<8x128xf32>
    tpu.vector_store %arg12[%c32_242, %c0_243], %725 {strides = array<i32>} : memref<80x128xf32, #tpu.memory_space<vmem>>, vector<8x128xf32>,
    %c48_244 = arith.constant 48 : index
    %c0_245 = arith.constant 0 : index
    %727 = vector.load %arg13[%c48_244, %c0_245] : memref<80x1024xf32, #tpu.memory_space<vmem>>, vector<8x512xf32>
    %cst_246 = arith.constant dense<0.000000e+00> : vector<8x512xf32>
    %728 = tpu.matmul %704, %479, %cst_246 {dimension_numbers = #tpu.dot_dimension_numbers<[1], [0], [0], [1], [0, 0, 1, 1], [], []>} : vector<8x128xf32>, vector<128x512xf32>, vector<8x512xf32> -> vector<8x512xf32>
    %729 = arith.addf %727, %728 : vector<8x512xf32>
    %c24_247 = arith.constant 24 : index
    %c512_248 = arith.constant 512 : index
    %730 = vector.load %arg13[%c24_247, %c512_248] : memref<80x1024xf32, #tpu.memory_space<vmem>>, vector<8x512xf32>
    %cst_249 = arith.constant dense<0.000000e+00> : vector<8x512xf32>
    %731 = tpu.matmul %720, %480, %cst_249 {dimension_numbers = #tpu.dot_dimension_numbers<[1], [0], [0], [1], [0, 0, 1, 1], [], []>} : vector<8x128xf32>, vector<128x512xf32>, vector<8x512xf32> -> vector<8x512xf32>
    %732 = arith.addf %730, %731 : vector<8x512xf32>
    %733 = vector.extract_strided_slice %729 {offsets = [0, 0], sizes = [8, 384], strides = [1, 1]} : vector<8x512xf32> to vector<8x384xf32>
    %734 = arith.negf %733 : vector<8x384xf32>
    %735 = math.exp %734 : vector<8x384xf32>
    %cst_250 = arith.constant 1.000000e+00 : f32
    %736 = vector.broadcast %cst_250 : f32 to vector<8x384xf32>
    %737 = arith.addf %736, %735 : vector<8x384xf32>
    %738 = arith.divf %736, %737 : vector<8x384xf32>
    %739 = vector.extract_strided_slice %729 {offsets = [0, 384], sizes = [8, 128], strides = [1, 1]} : vector<8x512xf32> to vector<8x128xf32>
    %740 = math.tanh %739 : vector<8x128xf32>
    %741 = vector.extract_strided_slice %738 {offsets = [0, 128], sizes = [8, 128], strides = [1, 1]} : vector<8x384xf32> to vector<8x128xf32>
    %742 = arith.mulf %741, %701 : vector<8x128xf32>
    %743 = vector.extract_strided_slice %738 {offsets = [0, 0], sizes = [8, 128], strides = [1, 1]} : vector<8x384xf32> to vector<8x128xf32>
    %744 = arith.mulf %743, %740 : vector<8x128xf32>
    %745 = arith.addf %742, %744 : vector<8x128xf32>
    %746 = vector.extract_strided_slice %738 {offsets = [0, 256], sizes = [8, 128], strides = [1, 1]} : vector<8x384xf32> to vector<8x128xf32>
    %747 = math.tanh %745 : vector<8x128xf32>
    %748 = arith.mulf %746, %747 : vector<8x128xf32>
    %749 = vector.extract_strided_slice %732 {offsets = [0, 0], sizes = [8, 384], strides = [1, 1]} : vector<8x512xf32> to vector<8x384xf32>
    %750 = arith.negf %749 : vector<8x384xf32>
    %751 = math.exp %750 : vector<8x384xf32>
    %cst_251 = arith.constant 1.000000e+00 : f32
    %752 = vector.broadcast %cst_251 : f32 to vector<8x384xf32>
    %753 = arith.addf %752, %751 : vector<8x384xf32>
    %754 = arith.divf %752, %753 : vector<8x384xf32>
    %755 = vector.extract_strided_slice %732 {offsets = [0, 384], sizes = [8, 128], strides = [1, 1]} : vector<8x512xf32> to vector<8x128xf32>
    %756 = math.tanh %755 : vector<8x128xf32>
    %757 = vector.extract_strided_slice %754 {offsets = [0, 128], sizes = [8, 128], strides = [1, 1]} : vector<8x384xf32> to vector<8x128xf32>
    %758 = arith.mulf %757, %717 : vector<8x128xf32>
    %759 = vector.extract_strided_slice %754 {offsets = [0, 0], sizes = [8, 128], strides = [1, 1]} : vector<8x384xf32> to vector<8x128xf32>
    %760 = arith.mulf %759, %756 : vector<8x128xf32>
    %761 = arith.addf %758, %760 : vector<8x128xf32>
    %762 = vector.extract_strided_slice %754 {offsets = [0, 256], sizes = [8, 128], strides = [1, 1]} : vector<8x384xf32> to vector<8x128xf32>
    %763 = math.tanh %761 : vector<8x128xf32>
    %764 = arith.mulf %762, %763 : vector<8x128xf32>
    %c48_252 = arith.constant 48 : index
    %c0_253 = arith.constant 0 : index
    %765 = vector.load %arg12[%c48_252, %c0_253] : memref<80x128xf32, #tpu.memory_space<vmem>>, vector<8x128xf32>
    %766 = arith.addf %765, %748 : vector<8x128xf32>
    %c48_254 = arith.constant 48 : index
    %c0_255 = arith.constant 0 : index
    %767 = vector.load %arg12[%c48_254, %c0_255] : memref<80x128xf32, #tpu.memory_space<vmem>>, vector<8x128xf32>
    tpu.vector_store %arg12[%c48_254, %c0_255], %766 {strides = array<i32>} : memref<80x128xf32, #tpu.memory_space<vmem>>, vector<8x128xf32>,
    %c24_256 = arith.constant 24 : index
    %c0_257 = arith.constant 0 : index
    %768 = vector.load %arg12[%c24_256, %c0_257] : memref<80x128xf32, #tpu.memory_space<vmem>>, vector<8x128xf32>
    %769 = arith.addf %768, %764 : vector<8x128xf32>
    %c24_258 = arith.constant 24 : index
    %c0_259 = arith.constant 0 : index
    %770 = vector.load %arg12[%c24_258, %c0_259] : memref<80x128xf32, #tpu.memory_space<vmem>>, vector<8x128xf32>
    tpu.vector_store %arg12[%c24_258, %c0_259], %769 {strides = array<i32>} : memref<80x128xf32, #tpu.memory_space<vmem>>, vector<8x128xf32>,
    %c56_260 = arith.constant 56 : index
    %c0_261 = arith.constant 0 : index
    %771 = vector.load %arg13[%c56_260, %c0_261] : memref<80x1024xf32, #tpu.memory_space<vmem>>, vector<8x512xf32>
    %cst_262 = arith.constant dense<0.000000e+00> : vector<8x512xf32>
    %772 = tpu.matmul %748, %479, %cst_262 {dimension_numbers = #tpu.dot_dimension_numbers<[1], [0], [0], [1], [0, 0, 1, 1], [], []>} : vector<8x128xf32>, vector<128x512xf32>, vector<8x512xf32> -> vector<8x512xf32>
    %773 = arith.addf %771, %772 : vector<8x512xf32>
    %c16_263 = arith.constant 16 : index
    %c512_264 = arith.constant 512 : index
    %774 = vector.load %arg13[%c16_263, %c512_264] : memref<80x1024xf32, #tpu.memory_space<vmem>>, vector<8x512xf32>
    %cst_265 = arith.constant dense<0.000000e+00> : vector<8x512xf32>
    %775 = tpu.matmul %764, %480, %cst_265 {dimension_numbers = #tpu.dot_dimension_numbers<[1], [0], [0], [1], [0, 0, 1, 1], [], []>} : vector<8x128xf32>, vector<128x512xf32>, vector<8x512xf32> -> vector<8x512xf32>
    %776 = arith.addf %774, %775 : vector<8x512xf32>
    %777 = vector.extract_strided_slice %773 {offsets = [0, 0], sizes = [8, 384], strides = [1, 1]} : vector<8x512xf32> to vector<8x384xf32>
    %778 = arith.negf %777 : vector<8x384xf32>
    %779 = math.exp %778 : vector<8x384xf32>
    %cst_266 = arith.constant 1.000000e+00 : f32
    %780 = vector.broadcast %cst_266 : f32 to vector<8x384xf32>
    %781 = arith.addf %780, %779 : vector<8x384xf32>
    %782 = arith.divf %780, %781 : vector<8x384xf32>
    %783 = vector.extract_strided_slice %773 {offsets = [0, 384], sizes = [8, 128], strides = [1, 1]} : vector<8x512xf32> to vector<8x128xf32>
    %784 = math.tanh %783 : vector<8x128xf32>
    %785 = vector.extract_strided_slice %782 {offsets = [0, 128], sizes = [8, 128], strides = [1, 1]} : vector<8x384xf32> to vector<8x128xf32>
    %786 = arith.mulf %785, %745 : vector<8x128xf32>
    %787 = vector.extract_strided_slice %782 {offsets = [0, 0], sizes = [8, 128], strides = [1, 1]} : vector<8x384xf32> to vector<8x128xf32>
    %788 = arith.mulf %787, %784 : vector<8x128xf32>
    %789 = arith.addf %786, %788 : vector<8x128xf32>
    %790 = vector.extract_strided_slice %782 {offsets = [0, 256], sizes = [8, 128], strides = [1, 1]} : vector<8x384xf32> to vector<8x128xf32>
    %791 = math.tanh %789 : vector<8x128xf32>
    %792 = arith.mulf %790, %791 : vector<8x128xf32>
    %793 = vector.extract_strided_slice %776 {offsets = [0, 0], sizes = [8, 384], strides = [1, 1]} : vector<8x512xf32> to vector<8x384xf32>
    %794 = arith.negf %793 : vector<8x384xf32>
    %795 = math.exp %794 : vector<8x384xf32>
    %cst_267 = arith.constant 1.000000e+00 : f32
    %796 = vector.broadcast %cst_267 : f32 to vector<8x384xf32>
    %797 = arith.addf %796, %795 : vector<8x384xf32>
    %798 = arith.divf %796, %797 : vector<8x384xf32>
    %799 = vector.extract_strided_slice %776 {offsets = [0, 384], sizes = [8, 128], strides = [1, 1]} : vector<8x512xf32> to vector<8x128xf32>
    %800 = math.tanh %799 : vector<8x128xf32>
    %801 = vector.extract_strided_slice %798 {offsets = [0, 128], sizes = [8, 128], strides = [1, 1]} : vector<8x384xf32> to vector<8x128xf32>
    %802 = arith.mulf %801, %761 : vector<8x128xf32>
    %803 = vector.extract_strided_slice %798 {offsets = [0, 0], sizes = [8, 128], strides = [1, 1]} : vector<8x384xf32> to vector<8x128xf32>
    %804 = arith.mulf %803, %800 : vector<8x128xf32>
    %805 = arith.addf %802, %804 : vector<8x128xf32>
    %806 = vector.extract_strided_slice %798 {offsets = [0, 256], sizes = [8, 128], strides = [1, 1]} : vector<8x384xf32> to vector<8x128xf32>
    %807 = math.tanh %805 : vector<8x128xf32>
    %808 = arith.mulf %806, %807 : vector<8x128xf32>
    %c56_268 = arith.constant 56 : index
    %c0_269 = arith.constant 0 : index
    %809 = vector.load %arg12[%c56_268, %c0_269] : memref<80x128xf32, #tpu.memory_space<vmem>>, vector<8x128xf32>
    %810 = arith.addf %809, %792 : vector<8x128xf32>
    %c56_270 = arith.constant 56 : index
    %c0_271 = arith.constant 0 : index
    %811 = vector.load %arg12[%c56_270, %c0_271] : memref<80x128xf32, #tpu.memory_space<vmem>>, vector<8x128xf32>
    tpu.vector_store %arg12[%c56_270, %c0_271], %810 {strides = array<i32>} : memref<80x128xf32, #tpu.memory_space<vmem>>, vector<8x128xf32>,
    %c16_272 = arith.constant 16 : index
    %c0_273 = arith.constant 0 : index
    %812 = vector.load %arg12[%c16_272, %c0_273] : memref<80x128xf32, #tpu.memory_space<vmem>>, vector<8x128xf32>
    %813 = arith.addf %812, %808 : vector<8x128xf32>
    %c16_274 = arith.constant 16 : index
    %c0_275 = arith.constant 0 : index
    %814 = vector.load %arg12[%c16_274, %c0_275] : memref<80x128xf32, #tpu.memory_space<vmem>>, vector<8x128xf32>
    tpu.vector_store %arg12[%c16_274, %c0_275], %813 {strides = array<i32>} : memref<80x128xf32, #tpu.memory_space<vmem>>, vector<8x128xf32>,
    %c64_276 = arith.constant 64 : index
    %c0_277 = arith.constant 0 : index
    %815 = vector.load %arg13[%c64_276, %c0_277] : memref<80x1024xf32, #tpu.memory_space<vmem>>, vector<8x512xf32>
    %cst_278 = arith.constant dense<0.000000e+00> : vector<8x512xf32>
    %816 = tpu.matmul %792, %479, %cst_278 {dimension_numbers = #tpu.dot_dimension_numbers<[1], [0], [0], [1], [0, 0, 1, 1], [], []>} : vector<8x128xf32>, vector<128x512xf32>, vector<8x512xf32> -> vector<8x512xf32>
    %817 = arith.addf %815, %816 : vector<8x512xf32>
    %c8_279 = arith.constant 8 : index
    %c512_280 = arith.constant 512 : index
    %818 = vector.load %arg13[%c8_279, %c512_280] : memref<80x1024xf32, #tpu.memory_space<vmem>>, vector<8x512xf32>
    %cst_281 = arith.constant dense<0.000000e+00> : vector<8x512xf32>
    %819 = tpu.matmul %808, %480, %cst_281 {dimension_numbers = #tpu.dot_dimension_numbers<[1], [0], [0], [1], [0, 0, 1, 1], [], []>} : vector<8x128xf32>, vector<128x512xf32>, vector<8x512xf32> -> vector<8x512xf32>
    %820 = arith.addf %818, %819 : vector<8x512xf32>
    %821 = vector.extract_strided_slice %817 {offsets = [0, 0], sizes = [8, 384], strides = [1, 1]} : vector<8x512xf32> to vector<8x384xf32>
    %822 = arith.negf %821 : vector<8x384xf32>
    %823 = math.exp %822 : vector<8x384xf32>
    %cst_282 = arith.constant 1.000000e+00 : f32
    %824 = vector.broadcast %cst_282 : f32 to vector<8x384xf32>
    %825 = arith.addf %824, %823 : vector<8x384xf32>
    %826 = arith.divf %824, %825 : vector<8x384xf32>
    %827 = vector.extract_strided_slice %817 {offsets = [0, 384], sizes = [8, 128], strides = [1, 1]} : vector<8x512xf32> to vector<8x128xf32>
    %828 = math.tanh %827 : vector<8x128xf32>
    %829 = vector.extract_strided_slice %826 {offsets = [0, 128], sizes = [8, 128], strides = [1, 1]} : vector<8x384xf32> to vector<8x128xf32>
    %830 = arith.mulf %829, %789 : vector<8x128xf32>
    %831 = vector.extract_strided_slice %826 {offsets = [0, 0], sizes = [8, 128], strides = [1, 1]} : vector<8x384xf32> to vector<8x128xf32>
    %832 = arith.mulf %831, %828 : vector<8x128xf32>
    %833 = arith.addf %830, %832 : vector<8x128xf32>
    %834 = vector.extract_strided_slice %826 {offsets = [0, 256], sizes = [8, 128], strides = [1, 1]} : vector<8x384xf32> to vector<8x128xf32>
    %835 = math.tanh %833 : vector<8x128xf32>
    %836 = arith.mulf %834, %835 : vector<8x128xf32>
    %837 = vector.extract_strided_slice %820 {offsets = [0, 0], sizes = [8, 384], strides = [1, 1]} : vector<8x512xf32> to vector<8x384xf32>
    %838 = arith.negf %837 : vector<8x384xf32>
    %839 = math.exp %838 : vector<8x384xf32>
    %cst_283 = arith.constant 1.000000e+00 : f32
    %840 = vector.broadcast %cst_283 : f32 to vector<8x384xf32>
    %841 = arith.addf %840, %839 : vector<8x384xf32>
    %842 = arith.divf %840, %841 : vector<8x384xf32>
    %843 = vector.extract_strided_slice %820 {offsets = [0, 384], sizes = [8, 128], strides = [1, 1]} : vector<8x512xf32> to vector<8x128xf32>
    %844 = math.tanh %843 : vector<8x128xf32>
    %845 = vector.extract_strided_slice %842 {offsets = [0, 128], sizes = [8, 128], strides = [1, 1]} : vector<8x384xf32> to vector<8x128xf32>
    %846 = arith.mulf %845, %805 : vector<8x128xf32>
    %847 = vector.extract_strided_slice %842 {offsets = [0, 0], sizes = [8, 128], strides = [1, 1]} : vector<8x384xf32> to vector<8x128xf32>
    %848 = arith.mulf %847, %844 : vector<8x128xf32>
    %849 = arith.addf %846, %848 : vector<8x128xf32>
    %850 = vector.extract_strided_slice %842 {offsets = [0, 256], sizes = [8, 128], strides = [1, 1]} : vector<8x384xf32> to vector<8x128xf32>
    %851 = math.tanh %849 : vector<8x128xf32>
    %852 = arith.mulf %850, %851 : vector<8x128xf32>
    %c64_284 = arith.constant 64 : index
    %c0_285 = arith.constant 0 : index
    %853 = vector.load %arg12[%c64_284, %c0_285] : memref<80x128xf32, #tpu.memory_space<vmem>>, vector<8x128xf32>
    %854 = arith.addf %853, %836 : vector<8x128xf32>
    %c64_286 = arith.constant 64 : index
    %c0_287 = arith.constant 0 : index
    %855 = vector.load %arg12[%c64_286, %c0_287] : memref<80x128xf32, #tpu.memory_space<vmem>>, vector<8x128xf32>
    tpu.vector_store %arg12[%c64_286, %c0_287], %854 {strides = array<i32>} : memref<80x128xf32, #tpu.memory_space<vmem>>, vector<8x128xf32>,
    %c8_288 = arith.constant 8 : index
    %c0_289 = arith.constant 0 : index
    %856 = vector.load %arg12[%c8_288, %c0_289] : memref<80x128xf32, #tpu.memory_space<vmem>>, vector<8x128xf32>
    %857 = arith.addf %856, %852 : vector<8x128xf32>
    %c8_290 = arith.constant 8 : index
    %c0_291 = arith.constant 0 : index
    %858 = vector.load %arg12[%c8_290, %c0_291] : memref<80x128xf32, #tpu.memory_space<vmem>>, vector<8x128xf32>
    tpu.vector_store %arg12[%c8_290, %c0_291], %857 {strides = array<i32>} : memref<80x128xf32, #tpu.memory_space<vmem>>, vector<8x128xf32>,
    %c72_292 = arith.constant 72 : index
    %c0_293 = arith.constant 0 : index
    %859 = vector.load %arg13[%c72_292, %c0_293] : memref<80x1024xf32, #tpu.memory_space<vmem>>, vector<8x512xf32>
    %cst_294 = arith.constant dense<0.000000e+00> : vector<8x512xf32>
    %860 = tpu.matmul %836, %479, %cst_294 {dimension_numbers = #tpu.dot_dimension_numbers<[1], [0], [0], [1], [0, 0, 1, 1], [], []>} : vector<8x128xf32>, vector<128x512xf32>, vector<8x512xf32> -> vector<8x512xf32>
    %861 = arith.addf %859, %860 : vector<8x512xf32>
    %c0_295 = arith.constant 0 : index
    %c512_296 = arith.constant 512 : index
    %862 = vector.load %arg13[%c0_295, %c512_296] : memref<80x1024xf32, #tpu.memory_space<vmem>>, vector<8x512xf32>
    %cst_297 = arith.constant dense<0.000000e+00> : vector<8x512xf32>
    %863 = tpu.matmul %852, %480, %cst_297 {dimension_numbers = #tpu.dot_dimension_numbers<[1], [0], [0], [1], [0, 0, 1, 1], [], []>} : vector<8x128xf32>, vector<128x512xf32>, vector<8x512xf32> -> vector<8x512xf32>
    %864 = arith.addf %862, %863 : vector<8x512xf32>
    %865 = vector.extract_strided_slice %861 {offsets = [0, 0], sizes = [8, 384], strides = [1, 1]} : vector<8x512xf32> to vector<8x384xf32>
    %866 = arith.negf %865 : vector<8x384xf32>
    %867 = math.exp %866 : vector<8x384xf32>
    %cst_298 = arith.constant 1.000000e+00 : f32
    %868 = vector.broadcast %cst_298 : f32 to vector<8x384xf32>
    %869 = arith.addf %868, %867 : vector<8x384xf32>
    %870 = arith.divf %868, %869 : vector<8x384xf32>
    %871 = vector.extract_strided_slice %861 {offsets = [0, 384], sizes = [8, 128], strides = [1, 1]} : vector<8x512xf32> to vector<8x128xf32>
    %872 = math.tanh %871 : vector<8x128xf32>
    %873 = vector.extract_strided_slice %870 {offsets = [0, 128], sizes = [8, 128], strides = [1, 1]} : vector<8x384xf32> to vector<8x128xf32>
    %874 = arith.mulf %873, %833 : vector<8x128xf32>
    %875 = vector.extract_strided_slice %870 {offsets = [0, 0], sizes = [8, 128], strides = [1, 1]} : vector<8x384xf32> to vector<8x128xf32>
    %876 = arith.mulf %875, %872 : vector<8x128xf32>
    %877 = arith.addf %874, %876 : vector<8x128xf32>
    %878 = vector.extract_strided_slice %870 {offsets = [0, 256], sizes = [8, 128], strides = [1, 1]} : vector<8x384xf32> to vector<8x128xf32>
    %879 = math.tanh %877 : vector<8x128xf32>
    %880 = arith.mulf %878, %879 : vector<8x128xf32>
    %881 = vector.extract_strided_slice %864 {offsets = [0, 0], sizes = [8, 384], strides = [1, 1]} : vector<8x512xf32> to vector<8x384xf32>
    %882 = arith.negf %881 : vector<8x384xf32>
    %883 = math.exp %882 : vector<8x384xf32>
    %cst_299 = arith.constant 1.000000e+00 : f32
    %884 = vector.broadcast %cst_299 : f32 to vector<8x384xf32>
    %885 = arith.addf %884, %883 : vector<8x384xf32>
    %886 = arith.divf %884, %885 : vector<8x384xf32>
    %887 = vector.extract_strided_slice %864 {offsets = [0, 384], sizes = [8, 128], strides = [1, 1]} : vector<8x512xf32> to vector<8x128xf32>
    %888 = math.tanh %887 : vector<8x128xf32>
    %889 = vector.extract_strided_slice %886 {offsets = [0, 128], sizes = [8, 128], strides = [1, 1]} : vector<8x384xf32> to vector<8x128xf32>
    %890 = arith.mulf %889, %849 : vector<8x128xf32>
    %891 = vector.extract_strided_slice %886 {offsets = [0, 0], sizes = [8, 128], strides = [1, 1]} : vector<8x384xf32> to vector<8x128xf32>
    %892 = arith.mulf %891, %888 : vector<8x128xf32>
    %893 = arith.addf %890, %892 : vector<8x128xf32>
    %894 = vector.extract_strided_slice %886 {offsets = [0, 256], sizes = [8, 128], strides = [1, 1]} : vector<8x384xf32> to vector<8x128xf32>
    %895 = math.tanh %893 : vector<8x128xf32>
    %896 = arith.mulf %894, %895 : vector<8x128xf32>
    %c72_300 = arith.constant 72 : index
    %c0_301 = arith.constant 0 : index
    %897 = vector.load %arg12[%c72_300, %c0_301] : memref<80x128xf32, #tpu.memory_space<vmem>>, vector<8x128xf32>
    %898 = arith.addf %897, %880 : vector<8x128xf32>
    %c72_302 = arith.constant 72 : index
    %c0_303 = arith.constant 0 : index
    %899 = vector.load %arg12[%c72_302, %c0_303] : memref<80x128xf32, #tpu.memory_space<vmem>>, vector<8x128xf32>
    tpu.vector_store %arg12[%c72_302, %c0_303], %898 {strides = array<i32>} : memref<80x128xf32, #tpu.memory_space<vmem>>, vector<8x128xf32>,
    %c0_304 = arith.constant 0 : index
    %c0_305 = arith.constant 0 : index
    %900 = vector.load %arg12[%c0_304, %c0_305] : memref<80x128xf32, #tpu.memory_space<vmem>>, vector<8x128xf32>
    %901 = arith.addf %900, %896 : vector<8x128xf32>
    %c0_306 = arith.constant 0 : index
    %c0_307 = arith.constant 0 : index
    %902 = vector.load %arg12[%c0_306, %c0_307] : memref<80x128xf32, #tpu.memory_space<vmem>>, vector<8x128xf32>
    tpu.vector_store %arg12[%c0_306, %c0_307], %901 {strides = array<i32>} : memref<80x128xf32, #tpu.memory_space<vmem>>, vector<8x128xf32>,
    return
  }
  func.func @transform_0(%arg0: i32) -> (i32, i32) {
    %c0_i32 = arith.constant 0 : i32
    %c0_i32_0 = arith.constant 0 : i32
    %c0_i32_1 = arith.constant 0 : i32
    return %c0_i32, %c0_i32_0 : i32, i32
  }
  func.func @transform_1(%arg0: i32) -> (i32, i32) {
    %c0_i32 = arith.constant 0 : i32
    %c0_i32_0 = arith.constant 0 : i32
    %c0_i32_1 = arith.constant 0 : i32
    return %c0_i32, %c0_i32_0 : i32, i32
  }
  func.func @transform_2(%arg0: i32) -> (i32, i32) {
    %c0_i32 = arith.constant 0 : i32
    %c0_i32_0 = arith.constant 0 : i32
    %c0_i32_1 = arith.constant 0 : i32
    return %c0_i32, %c0_i32_0 : i32, i32
  }
  func.func @transform_3(%arg0: i32) -> (i32, i32) {
    %c0_i32 = arith.constant 0 : i32
    %c0_i32_0 = arith.constant 0 : i32
    %c0_i32_1 = arith.constant 0 : i32
    return %c0_i32, %c0_i32_0 : i32, i32
  }
  func.func @transform_4(%arg0: i32) -> (i32, i32) {
    %c0_i32 = arith.constant 0 : i32
    %c0_i32_0 = arith.constant 0 : i32
    %c0_i32_1 = arith.constant 0 : i32
    return %c0_i32, %c0_i32_0 : i32, i32
  }
  func.func @transform_5(%arg0: i32) -> (i32, i32) {
    %c0_i32 = arith.constant 0 : i32
    %c0_i32_0 = arith.constant 0 : i32
    %c0_i32_1 = arith.constant 0 : i32
    return %c0_i32, %c0_i32_0 : i32, i32
  }
  func.func @transform_6(%arg0: i32) -> (i32, i32) {
    %c0_i32 = arith.constant 0 : i32
    %c0_i32_0 = arith.constant 0 : i32
    %c0_i32_1 = arith.constant 0 : i32
    return %c0_i32, %c0_i32_0 : i32, i32
  }
  func.func @transform_7(%arg0: i32) -> (i32, i32) {
    %c0_i32 = arith.constant 0 : i32
    %c0_i32_0 = arith.constant 0 : i32
    %c0_i32_1 = arith.constant 0 : i32
    return %c0_i32, %c0_i32_0 : i32, i32
  }
  func.func @transform_11(%arg0: i32) -> (i32, i32) {
    %c0_i32 = arith.constant 0 : i32
    %c0_i32_0 = arith.constant 0 : i32
    %c0_i32_1 = arith.constant 0 : i32
    return %c0_i32, %c0_i32_0 : i32, i32
  }
}

</mosaic_0001>

<llo_original>
// kernel: tae_encoder_forward.1
$region0: #{tae_encoder_forward.1}
  #allocation0 [shape = 'u32[]', space=smem, size = 0x4, offset = 0x4, fixed_abs, tag = 'smem constant byte address 0x4 - core index']
  #allocation1 [shape = 'u32[72,128]{1,0:T(1,128)}', space=vmem, size = 0x9000, scoped, tag = 'internal scratch']
  #allocation2 [shape = 'f32[80,1024]{1,0:T(8,128)}', space=vmem, size = 0x50000, scoped, tag = 'scratch operand']
  #allocation3 [shape = 'f32[80,128]{1,0:T(8,128)}', space=vmem, size = 0xa000, scoped, tag = 'scratch operand']
  #allocation4 [shape = 'f32[128,1024]{1,0:T(8,128)}', space=vmem, size = 0x80000, scoped, tag = 'scratch operand']
  #allocation5 [shape = 'f32[128,512]{1,0:T(8,128)}', space=vmem, size = 0x40000, scoped, tag = 'scratch operand']
  #allocation6 [shape = 'f32[128,512]{1,0:T(8,128)}', space=vmem, size = 0x40000, scoped, tag = 'scratch operand']
  #allocation7 [shape = 's32[3]{0}', space=sflag, size = 0xc, scoped, tag = 'scratch operand']
  #allocation8 [shape = 's32[]', space=sflag, size = 0x4, offset = 0, fixed_abs, tag = 'sflag constant byte address 0x0 - dummy sync flag']
  #allocation9 [shape = 's32[]', space=sflag, size = 0x4, offset = 0, fixed_abs, tag = 'sflag constant byte address 0x0 - dummy sync flag']
  #allocation10 [shape = 's32[]', space=sflag, size = 0x4, offset = 0, fixed_abs, tag = 'sflag constant byte address 0x0 - dummy sync flag']
  %s0 = inlined_call_operand.vmem [shape: f32[800,16], index: 0, kind: input, shape index: {}]
  %s1 = inlined_call_operand.vmem [shape: f32[16,128], index: 1, kind: input, shape index: {}]
  %s2 = inlined_call_operand.vmem [shape: f32[1,128], index: 2, kind: input, shape index: {}]
  %s3 = inlined_call_operand.vmem [shape: f32[128,1024], index: 3, kind: input, shape index: {}]
  %s4 = inlined_call_operand.vmem [shape: f32[1,1024], index: 4, kind: input, shape index: {}]
  %s5 = inlined_call_operand.vmem [shape: f32[128,512], index: 5, kind: input, shape index: {}]
  %s6 = inlined_call_operand.vmem [shape: f32[128,512], index: 6, kind: input, shape index: {}]
  %s7 = inlined_call_operand.vmem [shape: f32[1,1024], index: 7, kind: input, shape index: {}]
  %s8 = inlined_call_operand.vmem [shape: f32[128,1024], index: 8, kind: input, shape index: {}]
  %s9 = inlined_call_operand.vmem [shape: f32[128,512], index: 9, kind: input, shape index: {}]
  %s10 = inlined_call_operand.vmem [shape: f32[128,512], index: 10, kind: input, shape index: {}]
  %s11 = inlined_call_operand.vmem [shape: f32[80,128], index: 11, kind: output, shape index: {}]
  %s12 = sld [smem:[#allocation0]]
  $region99: #{tae_encoder_forward.1} parent=0
    _
  %s14 = ssub.s32 1, %s12
  %s15 = scalar_select 0, %s14, %s12
  // Predicated region
  $region2: #{tae_encoder_forward.1} parent=0 // pred_check
    _
  $region3: #{tae_encoder_forward.1} parent=0 // pred_check_branch
    %17 = sbr.rel (0) target = $region5
  $region4: #{tae_encoder_forward.1} parent=0 // pred_region
    _
  $region5: #{tae_encoder_forward.1} parent=0 // pred_fallthru
    _
  // Predicated region
  $region6: #{tae_encoder_forward.1} parent=0 // pred_check
    _
  $region7: #{tae_encoder_forward.1} parent=0 // pred_check_branch
    %19 = sbr.rel (0) target = $region9
  $region8: #{tae_encoder_forward.1} parent=0 // pred_region
    _
  $region9: #{tae_encoder_forward.1} parent=0 // pred_fallthru
    _
  // Predicated region
  $region10: #{tae_encoder_forward.1} parent=0 // pred_check
    _
  $region11: #{tae_encoder_forward.1} parent=0 // pred_check_branch
    %21 = sbr.rel (0) target = $region13
  $region12: #{tae_encoder_forward.1} parent=0 // pred_region
    _
  $region13: #{tae_encoder_forward.1} parent=0 // pred_fallthru
    _
  // Predicated region
  $region14: #{tae_encoder_forward.1} parent=0 // pred_check
    _
  $region15: #{tae_encoder_forward.1} parent=0 // pred_check_branch
    %23 = sbr.rel (0) target = $region17
  $region16: #{tae_encoder_forward.1} parent=0 // pred_region
    _
  $region17: #{tae_encoder_forward.1} parent=0 // pred_fallthru
    _
  // Predicated region
  $region18: #{tae_encoder_forward.1} parent=0 // pred_check
    _
  $region19: #{tae_encoder_forward.1} parent=0 // pred_check_branch
    %25 = sbr.rel (0) target = $region21
  $region20: #{tae_encoder_forward.1} parent=0 // pred_region
    _
  $region21: #{tae_encoder_forward.1} parent=0 // pred_fallthru
    _
  // Predicated region
  $region22: #{tae_encoder_forward.1} parent=0 // pred_check
    _
  $region23: #{tae_encoder_forward.1} parent=0 // pred_check_branch
    %27 = sbr.rel (0) target = $region25
  $region24: #{tae_encoder_forward.1} parent=0 // pred_region
    _
  $region25: #{tae_encoder_forward.1} parent=0 // pred_fallthru
    _
  // Predicated region
  $region26: #{tae_encoder_forward.1} parent=0 // pred_check
    _
  $region27: #{tae_encoder_forward.1} parent=0 // pred_check_branch
    %29 = sbr.rel (0) target = $region29
  $region28: #{tae_encoder_forward.1} parent=0 // pred_region
    _
  $region29: #{tae_encoder_forward.1} parent=0 // pred_fallthru
    _
  // Predicated region
  $region30: #{tae_encoder_forward.1} parent=0 // pred_check
    _
  $region31: #{tae_encoder_forward.1} parent=0 // pred_check_branch
    %31 = sbr.rel (0) target = $region33
  $region32: #{tae_encoder_forward.1} parent=0 // pred_region
    _
  $region33: #{tae_encoder_forward.1} parent=0 // pred_fallthru
    _
  // Predicated region
  $region34: #{tae_encoder_forward.1} parent=0 // pred_check
    _
  $region35: #{tae_encoder_forward.1} parent=0 // pred_check_branch
    %33 = sbr.rel (0) target = $region37
  $region36: #{tae_encoder_forward.1} parent=0 // pred_region
    loop: start=0, step=1, limit=1
    $region38: #{tae_encoder_forward.1} parent=36 // loop_pre_header
      _
    $region39: #{tae_encoder_forward.1} parent=36 // loop_header
      %s35 = sphi 0, %s39
      %p36 = scmp.ge.s32.totalorder %s35, 1
      %s40 = sphi %s8, %s8
      %s41 = sphi [#allocation4], [#allocation4]
    $region40: #{tae_encoder_forward.1} parent=36 // loop_header_branch
      %38 = sbr.rel (%p36) target = $region44
    $region41: #{tae_encoder_forward.1} parent=36 // loop_body
      %v42 = vld [vmem:[%s40] sm:$0xff]
      %43 = vst [vmem:[%s41] sm:$0xff] %v42
      %v44 = vld [vmem:[%s40 + $0x8] sm:$0xff]
      %45 = vst [vmem:[%s41 + $0x8] sm:$0xff] %v44
      %v46 = vld [vmem:[%s40 + $0x10] sm:$0xff]
      %47 = vst [vmem:[%s41 + $0x10] sm:$0xff] %v46
      %v48 = vld [vmem:[%s40 + $0x18] sm:$0xff]
      %49 = vst [vmem:[%s41 + $0x18] sm:$0xff] %v48
      %v50 = vld [vmem:[%s40 + $0x20] sm:$0xff]
      %51 = vst [vmem:[%s41 + $0x20] sm:$0xff] %v50
      %v52 = vld [vmem:[%s40 + $0x28] sm:$0xff]
      %53 = vst [vmem:[%s41 + $0x28] sm:$0xff] %v52
      %v54 = vld [vmem:[%s40 + $0x30] sm:$0xff]
      %55 = vst [vmem:[%s41 + $0x30] sm:$0xff] %v54
      %v56 = vld [vmem:[%s40 + $0x38] sm:$0xff]
      %57 = vst [vmem:[%s41 + $0x38] sm:$0xff] %v56
      %v58 = vld [vmem:[%s40 + $0x40] sm:$0xff]
      %59 = vst [vmem:[%s41 + $0x40] sm:$0xff] %v58
      %v60 = vld [vmem:[%s40 + $0x48] sm:$0xff]
      %61 = vst [vmem:[%s41 + $0x48] sm:$0xff] %v60
      %v62 = vld [vmem:[%s40 + $0x50] sm:$0xff]
      %63 = vst [vmem:[%s41 + $0x50] sm:$0xff] %v62
      %v64 = vld [vmem:[%s40 + $0x58] sm:$0xff]
      %65 = vst [vmem:[%s41 + $0x58] sm:$0xff] %v64
      %v66 = vld [vmem:[%s40 + $0x60] sm:$0xff]
      %67 = vst [vmem:[%s41 + $0x60] sm:$0xff] %v66
      %v68 = vld [vmem:[%s40 + $0x68] sm:$0xff]
      %69 = vst [vmem:[%s41 + $0x68] sm:$0xff] %v68
      %v70 = vld [vmem:[%s40 + $0x70] sm:$0xff]
      %71 = vst [vmem:[%s41 + $0x70] sm:$0xff] %v70
      %v72 = vld [vmem:[%s40 + $0x78] sm:$0xff]
      %73 = vst [vmem:[%s41 + $0x78] sm:$0xff] %v72
      %v74 = vld [vmem:[%s40 + $0x80] sm:$0xff]
      %75 = vst [vmem:[%s41 + $0x80] sm:$0xff] %v74
      %v76 = vld [vmem:[%s40 + $0x88] sm:$0xff]
      %77 = vst [vmem:[%s41 + $0x88] sm:$0xff] %v76
      %v78 = vld [vmem:[%s40 + $0x90] sm:$0xff]
      %79 = vst [vmem:[%s41 + $0x90] sm:$0xff] %v78
      %v80 = vld [vmem:[%s40 + $0x98] sm:$0xff]
      %81 = vst [vmem:[%s41 + $0x98] sm:$0xff] %v80
      %v82 = vld [vmem:[%s40 + $0xa0] sm:$0xff]
      %83 = vst [vmem:[%s41 + $0xa0] sm:$0xff] %v82
      %v84 = vld [vmem:[%s40 + $0xa8] sm:$0xff]
      %85 = vst [vmem:[%s41 + $0xa8] sm:$0xff] %v84
      %v86 = vld [vmem:[%s40 + $0xb0] sm:$0xff]
      %87 = vst [vmem:[%s41 + $0xb0] sm:$0xff] %v86
      %v88 = vld [vmem:[%s40 + $0xb8] sm:$0xff]
      %89 = vst [vmem:[%s41 + $0xb8] sm:$0xff] %v88
      %v90 = vld [vmem:[%s40 + $0xc0] sm:$0xff]
      %91 = vst [vmem:[%s41 + $0xc0] sm:$0xff] %v90
      %v92 = vld [vmem:[%s40 + $0xc8] sm:$0xff]
      %93 = vst [vmem:[%s41 + $0xc8] sm:$0xff] %v92
      %v94 = vld [vmem:[%s40 + $0xd0] sm:$0xff]
      %95 = vst [vmem:[%s41 + $0xd0] sm:$0xff] %v94
      %v96 = vld [vmem:[%s40 + $0xd8] sm:$0xff]
      %97 = vst [vmem:[%s41 + $0xd8] sm:$0xff] %v96
      %v98 = vld [vmem:[%s40 + $0xe0] sm:$0xff]
      %99 = vst [vmem:[%s41 + $0xe0] sm:$0xff] %v98
      %v100 = vld [vmem:[%s40 + $0xe8] sm:$0xff]
      %101 = vst [vmem:[%s41 + $0xe8] sm:$0xff] %v100
      %v102 = vld [vmem:[%s40 + $0xf0] sm:$0xff]
      %103 = vst [vmem:[%s41 + $0xf0] sm:$0xff] %v102
      %v104 = vld [vmem:[%s40 + $0xf8] sm:$0xff]
      %105 = vst [vmem:[%s41 + $0xf8] sm:$0xff] %v104
      %v106 = vld [vmem:[%s40 + $0x100] sm:$0xff]
      %107 = vst [vmem:[%s41 + $0x100] sm:$0xff] %v106
      %v108 = vld [vmem:[%s40 + $0x108] sm:$0xff]
      %109 = vst [vmem:[%s41 + $0x108] sm:$0xff] %v108
      %v110 = vld [vmem:[%s40 + $0x110] sm:$0xff]
      %111 = vst [vmem:[%s41 + $0x110] sm:$0xff] %v110
      %v112 = vld [vmem:[%s40 + $0x118] sm:$0xff]
      %113 = vst [vmem:[%s41 + $0x118] sm:$0xff] %v112
      %v114 = vld [vmem:[%s40 + $0x120] sm:$0xff]
      %115 = vst [vmem:[%s41 + $0x120] sm:$0xff] %v114
      %v116 = vld [vmem:[%s40 + $0x128] sm:$0xff]
      %117 = vst [vmem:[%s41 + $0x128] sm:$0xff] %v116
      %v118 = vld [vmem:[%s40 + $0x130] sm:$0xff]
      %119 = vst [vmem:[%s41 + $0x130] sm:$0xff] %v118
      %v120 = vld [vmem:[%s40 + $0x138] sm:$0xff]
      %121 = vst [vmem:[%s41 + $0x138] sm:$0xff] %v120
      %v122 = vld [vmem:[%s40 + $0x140] sm:$0xff]
      %123 = vst [vmem:[%s41 + $0x140] sm:$0xff] %v122
      %v124 = vld [vmem:[%s40 + $0x148] sm:$0xff]
      %125 = vst [vmem:[%s41 + $0x148] sm:$0xff] %v124
      %v126 = vld [vmem:[%s40 + $0x150] sm:$0xff]
      %127 = vst [vmem:[%s41 + $0x150] sm:$0xff] %v126
      %v128 = vld [vmem:[%s40 + $0x158] sm:$0xff]
      %129 = vst [vmem:[%s41 + $0x158] sm:$0xff] %v128
      %v130 = vld [vmem:[%s40 + $0x160] sm:$0xff]
      %131 = vst [vmem:[%s41 + $0x160] sm:$0xff] %v130
      %v132 = vld [vmem:[%s40 + $0x168] sm:$0xff]
      %133 = vst [vmem:[%s41 + $0x168] sm:$0xff] %v132
      %v134 = vld [vmem:[%s40 + $0x170] sm:$0xff]
      %135 = vst [vmem:[%s41 + $0x170] sm:$0xff] %v134
      %v136 = vld [vmem:[%s40 + $0x178] sm:$0xff]
      %137 = vst [vmem:[%s41 + $0x178] sm:$0xff] %v136
      %v138 = vld [vmem:[%s40 + $0x180] sm:$0xff]
      %139 = vst [vmem:[%s41 + $0x180] sm:$0xff] %v138
      %v140 = vld [vmem:[%s40 + $0x188] sm:$0xff]
      %141 = vst [vmem:[%s41 + $0x188] sm:$0xff] %v140
      %v142 = vld [vmem:[%s40 + $0x190] sm:$0xff]
      %143 = vst [vmem:[%s41 + $0x190] sm:$0xff] %v142
      %v144 = vld [vmem:[%s40 + $0x198] sm:$0xff]
      %145 = vst [vmem:[%s41 + $0x198] sm:$0xff] %v144
      %v146 = vld [vmem:[%s40 + $0x1a0] sm:$0xff]
      %147 = vst [vmem:[%s41 + $0x1a0] sm:$0xff] %v146
      %v148 = vld [vmem:[%s40 + $0x1a8] sm:$0xff]
      %149 = vst [vmem:[%s41 + $0x1a8] sm:$0xff] %v148
      %v150 = vld [vmem:[%s40 + $0x1b0] sm:$0xff]
      %151 = vst [vmem:[%s41 + $0x1b0] sm:$0xff] %v150
      %v152 = vld [vmem:[%s40 + $0x1b8] sm:$0xff]
      %153 = vst [vmem:[%s41 + $0x1b8] sm:$0xff] %v152
      %v154 = vld [vmem:[%s40 + $0x1c0] sm:$0xff]
      %155 = vst [vmem:[%s41 + $0x1c0] sm:$0xff] %v154
      %v156 = vld [vmem:[%s40 + $0x1c8] sm:$0xff]
      %157 = vst [vmem:[%s41 + $0x1c8] sm:$0xff] %v156
      %v158 = vld [vmem:[%s40 + $0x1d0] sm:$0xff]
      %159 = vst [vmem:[%s41 + $0x1d0] sm:$0xff] %v158
      %v160 = vld [vmem:[%s40 + $0x1d8] sm:$0xff]
      %161 = vst [vmem:[%s41 + $0x1d8] sm:$0xff] %v160
      %v162 = vld [vmem:[%s40 + $0x1e0] sm:$0xff]
      %163 = vst [vmem:[%s41 + $0x1e0] sm:$0xff] %v162
      %v164 = vld [vmem:[%s40 + $0x1e8] sm:$0xff]
      %165 = vst [vmem:[%s41 + $0x1e8] sm:$0xff] %v164
      %v166 = vld [vmem:[%s40 + $0x1f0] sm:$0xff]
      %167 = vst [vmem:[%s41 + $0x1f0] sm:$0xff] %v166
      %v168 = vld [vmem:[%s40 + $0x1f8] sm:$0xff]
      %169 = vst [vmem:[%s41 + $0x1f8] sm:$0xff] %v168
      %v170 = vld [vmem:[%s40 + $0x200] sm:$0xff]
      %171 = vst [vmem:[%s41 + $0x200] sm:$0xff] %v170
      %v172 = vld [vmem:[%s40 + $0x208] sm:$0xff]
      %173 = vst [vmem:[%s41 + $0x208] sm:$0xff] %v172
      %v174 = vld [vmem:[%s40 + $0x210] sm:$0xff]
      %175 = vst [vmem:[%s41 + $0x210] sm:$0xff] %v174
      %v176 = vld [vmem:[%s40 + $0x218] sm:$0xff]
      %177 = vst [vmem:[%s41 + $0x218] sm:$0xff] %v176
      %v178 = vld [vmem:[%s40 + $0x220] sm:$0xff]
      %179 = vst [vmem:[%s41 + $0x220] sm:$0xff] %v178
      %v180 = vld [vmem:[%s40 + $0x228] sm:$0xff]
      %181 = vst [vmem:[%s41 + $0x228] sm:$0xff] %v180
      %v182 = vld [vmem:[%s40 + $0x230] sm:$0xff]
      %183 = vst [vmem:[%s41 + $0x230] sm:$0xff] %v182
      %v184 = vld [vmem:[%s40 + $0x238] sm:$0xff]
      %185 = vst [vmem:[%s41 + $0x238] sm:$0xff] %v184
      %v186 = vld [vmem:[%s40 + $0x240] sm:$0xff]
      %187 = vst [vmem:[%s41 + $0x240] sm:$0xff] %v186
      %v188 = vld [vmem:[%s40 + $0x248] sm:$0xff]
      %189 = vst [vmem:[%s41 + $0x248] sm:$0xff] %v188
      %v190 = vld [vmem:[%s40 + $0x250] sm:$0xff]
      %191 = vst [vmem:[%s41 + $0x250] sm:$0xff] %v190
      %v192 = vld [vmem:[%s40 + $0x258] sm:$0xff]
      %193 = vst [vmem:[%s41 + $0x258] sm:$0xff] %v192
      %v194 = vld [vmem:[%s40 + $0x260] sm:$0xff]
      %195 = vst [vmem:[%s41 + $0x260] sm:$0xff] %v194
      %v196 = vld [vmem:[%s40 + $0x268] sm:$0xff]
      %197 = vst [vmem:[%s41 + $0x268] sm:$0xff] %v196
      %v198 = vld [vmem:[%s40 + $0x270] sm:$0xff]
      %199 = vst [vmem:[%s41 + $0x270] sm:$0xff] %v198
      %v200 = vld [vmem:[%s40 + $0x278] sm:$0xff]
      %201 = vst [vmem:[%s41 + $0x278] sm:$0xff] %v200
      %v202 = vld [vmem:[%s40 + $0x280] sm:$0xff]
      %203 = vst [vmem:[%s41 + $0x280] sm:$0xff] %v202
      %v204 = vld [vmem:[%s40 + $0x288] sm:$0xff]
      %205 = vst [vmem:[%s41 + $0x288] sm:$0xff] %v204
      %v206 = vld [vmem:[%s40 + $0x290] sm:$0xff]
      %207 = vst [vmem:[%s41 + $0x290] sm:$0xff] %v206
      %v208 = vld [vmem:[%s40 + $0x298] sm:$0xff]
      %209 = vst [vmem:[%s41 + $0x298] sm:$0xff] %v208
      %v210 = vld [vmem:[%s40 + $0x2a0] sm:$0xff]
      %211 = vst [vmem:[%s41 + $0x2a0] sm:$0xff] %v210
      %v212 = vld [vmem:[%s40 + $0x2a8] sm:$0xff]
      %213 = vst [vmem:[%s41 + $0x2a8] sm:$0xff] %v212
      %v214 = vld [vmem:[%s40 + $0x2b0] sm:$0xff]
      %215 = vst [vmem:[%s41 + $0x2b0] sm:$0xff] %v214
      %v216 = vld [vmem:[%s40 + $0x2b8] sm:$0xff]
      %217 = vst [vmem:[%s41 + $0x2b8] sm:$0xff] %v216
      %v218 = vld [vmem:[%s40 + $0x2c0] sm:$0xff]
      %219 = vst [vmem:[%s41 + $0x2c0] sm:$0xff] %v218
      %v220 = vld [vmem:[%s40 + $0x2c8] sm:$0xff]
      %221 = vst [vmem:[%s41 + $0x2c8] sm:$0xff] %v220
      %v222 = vld [vmem:[%s40 + $0x2d0] sm:$0xff]
      %223 = vst [vmem:[%s41 + $0x2d0] sm:$0xff] %v222
      %v224 = vld [vmem:[%s40 + $0x2d8] sm:$0xff]
      %225 = vst [vmem:[%s41 + $0x2d8] sm:$0xff] %v224
      %v226 = vld [vmem:[%s40 + $0x2e0] sm:$0xff]
      %227 = vst [vmem:[%s41 + $0x2e0] sm:$0xff] %v226
      %v228 = vld [vmem:[%s40 + $0x2e8] sm:$0xff]
      %229 = vst [vmem:[%s41 + $0x2e8] sm:$0xff] %v228
      %v230 = vld [vmem:[%s40 + $0x2f0] sm:$0xff]
      %231 = vst [vmem:[%s41 + $0x2f0] sm:$0xff] %v230
      %v232 = vld [vmem:[%s40 + $0x2f8] sm:$0xff]
      %233 = vst [vmem:[%s41 + $0x2f8] sm:$0xff] %v232
      %v234 = vld [vmem:[%s40 + $0x300] sm:$0xff]
      %235 = vst [vmem:[%s41 + $0x300] sm:$0xff] %v234
      %v236 = vld [vmem:[%s40 + $0x308] sm:$0xff]
      %237 = vst [vmem:[%s41 + $0x308] sm:$0xff] %v236
      %v238 = vld [vmem:[%s40 + $0x310] sm:$0xff]
      %239 = vst [vmem:[%s41 + $0x310] sm:$0xff] %v238
      %v240 = vld [vmem:[%s40 + $0x318] sm:$0xff]
      %241 = vst [vmem:[%s41 + $0x318] sm:$0xff] %v240
      %v242 = vld [vmem:[%s40 + $0x320] sm:$0xff]
      %243 = vst [vmem:[%s41 + $0x320] sm:$0xff] %v242
      %v244 = vld [vmem:[%s40 + $0x328] sm:$0xff]
      %245 = vst [vmem:[%s41 + $0x328] sm:$0xff] %v244
      %v246 = vld [vmem:[%s40 + $0x330] sm:$0xff]
      %247 = vst [vmem:[%s41 + $0x330] sm:$0xff] %v246
      %v248 = vld [vmem:[%s40 + $0x338] sm:$0xff]
      %249 = vst [vmem:[%s41 + $0x338] sm:$0xff] %v248
      %v250 = vld [vmem:[%s40 + $0x340] sm:$0xff]
      %251 = vst [vmem:[%s41 + $0x340] sm:$0xff] %v250
      %v252 = vld [vmem:[%s40 + $0x348] sm:$0xff]
      %253 = vst [vmem:[%s41 + $0x348] sm:$0xff] %v252
      %v254 = vld [vmem:[%s40 + $0x350] sm:$0xff]
      %255 = vst [vmem:[%s41 + $0x350] sm:$0xff] %v254
      %v256 = vld [vmem:[%s40 + $0x358] sm:$0xff]
      %257 = vst [vmem:[%s41 + $0x358] sm:$0xff] %v256
      %v258 = vld [vmem:[%s40 + $0x360] sm:$0xff]
      %259 = vst [vmem:[%s41 + $0x360] sm:$0xff] %v258
      %v260 = vld [vmem:[%s40 + $0x368] sm:$0xff]
      %261 = vst [vmem:[%s41 + $0x368] sm:$0xff] %v260
      %v262 = vld [vmem:[%s40 + $0x370] sm:$0xff]
      %263 = vst [vmem:[%s41 + $0x370] sm:$0xff] %v262
      %v264 = vld [vmem:[%s40 + $0x378] sm:$0xff]
      %265 = vst [vmem:[%s41 + $0x378] sm:$0xff] %v264
      %v266 = vld [vmem:[%s40 + $0x380] sm:$0xff]
      %267 = vst [vmem:[%s41 + $0x380] sm:$0xff] %v266
      %v268 = vld [vmem:[%s40 + $0x388] sm:$0xff]
      %269 = vst [vmem:[%s41 + $0x388] sm:$0xff] %v268
      %v270 = vld [vmem:[%s40 + $0x390] sm:$0xff]
      %271 = vst [vmem:[%s41 + $0x390] sm:$0xff] %v270
      %v272 = vld [vmem:[%s40 + $0x398] sm:$0xff]
      %273 = vst [vmem:[%s41 + $0x398] sm:$0xff] %v272
      %v274 = vld [vmem:[%s40 + $0x3a0] sm:$0xff]
      %275 = vst [vmem:[%s41 + $0x3a0] sm:$0xff] %v274
      %v276 = vld [vmem:[%s40 + $0x3a8] sm:$0xff]
      %277 = vst [vmem:[%s41 + $0x3a8] sm:$0xff] %v276
      %v278 = vld [vmem:[%s40 + $0x3b0] sm:$0xff]
      %279 = vst [vmem:[%s41 + $0x3b0] sm:$0xff] %v278
      %v280 = vld [vmem:[%s40 + $0x3b8] sm:$0xff]
      %281 = vst [vmem:[%s41 + $0x3b8] sm:$0xff] %v280
      %v282 = vld [vmem:[%s40 + $0x3c0] sm:$0xff]
      %283 = vst [vmem:[%s41 + $0x3c0] sm:$0xff] %v282
      %v284 = vld [vmem:[%s40 + $0x3c8] sm:$0xff]
      %285 = vst [vmem:[%s41 + $0x3c8] sm:$0xff] %v284
      %v286 = vld [vmem:[%s40 + $0x3d0] sm:$0xff]
      %287 = vst [vmem:[%s41 + $0x3d0] sm:$0xff] %v286
      %v288 = vld [vmem:[%s40 + $0x3d8] sm:$0xff]
      %289 = vst [vmem:[%s41 + $0x3d8] sm:$0xff] %v288
      %v290 = vld [vmem:[%s40 + $0x3e0] sm:$0xff]
      %291 = vst [vmem:[%s41 + $0x3e0] sm:$0xff] %v290
      %v292 = vld [vmem:[%s40 + $0x3e8] sm:$0xff]
      %293 = vst [vmem:[%s41 + $0x3e8] sm:$0xff] %v292
      %v294 = vld [vmem:[%s40 + $0x3f0] sm:$0xff]
      %295 = vst [vmem:[%s41 + $0x3f0] sm:$0xff] %v294
      %v296 = vld [vmem:[%s40 + $0x3f8] sm:$0xff]
      %297 = vst [vmem:[%s41 + $0x3f8] sm:$0xff] %v296
    $region42: #{tae_encoder_forward.1} parent=36 // loop_footer
      %s39 = sadd.s32 1, %s35
    $region43: #{tae_encoder_forward.1} parent=36 // loop_footer_branch
      %34 = sbr.rel target = $region39
    $region44: #{tae_encoder_forward.1} parent=36 // loop_exit
      _
  $region37: #{tae_encoder_forward.1} parent=0 // pred_fallthru
    _
  // Predicated region
  $region45: #{tae_encoder_forward.1} parent=0 // pred_check
    _
  $region46: #{tae_encoder_forward.1} parent=0 // pred_check_branch
    %299 = sbr.rel target = $region48
  $region47: #{tae_encoder_forward.1} parent=0 // pred_region
    _
  $region48: #{tae_encoder_forward.1} parent=0 // pred_fallthru
    _
  // Predicated region
  $region49: #{tae_encoder_forward.1} parent=0 // pred_check
    _
  $region50: #{tae_encoder_forward.1} parent=0 // pred_check_branch
    %302 = sbr.rel (0) target = $region52
  $region51: #{tae_encoder_forward.1} parent=0 // pred_region
    %303 = vsyncadd [#allocation7], 16384
  $region52: #{tae_encoder_forward.1} parent=0 // pred_fallthru
    _
  %s304 = scalar_lea.sflag [#allocation7], 1
  // Predicated region
  $region53: #{tae_encoder_forward.1} parent=0 // pred_check
    _
  $region54: #{tae_encoder_forward.1} parent=0 // pred_check_branch
    %306 = sbr.rel (0) target = $region56
  $region55: #{tae_encoder_forward.1} parent=0 // pred_region
    loop: start=0, step=1, limit=1
    $region57: #{tae_encoder_forward.1} parent=55 // loop_pre_header
      _
    $region58: #{tae_encoder_forward.1} parent=55 // loop_header
      %s308 = sphi 0, %s312
      %p309 = scmp.ge.s32.totalorder %s308, 1
      %s313 = sphi %s9, %s9
      %s314 = sphi [#allocation5], [#allocation5]
    $region59: #{tae_encoder_forward.1} parent=55 // loop_header_branch
      %311 = sbr.rel (%p309) target = $region63
    $region60: #{tae_encoder_forward.1} parent=55 // loop_body
      %v315 = vld [vmem:[%s313] sm:$0xff]
      %316 = vst [vmem:[%s314] sm:$0xff] %v315
      %v317 = vld [vmem:[%s313 + $0x8] sm:$0xff]
      %318 = vst [vmem:[%s314 + $0x8] sm:$0xff] %v317
      %v319 = vld [vmem:[%s313 + $0x10] sm:$0xff]
      %320 = vst [vmem:[%s314 + $0x10] sm:$0xff] %v319
      %v321 = vld [vmem:[%s313 + $0x18] sm:$0xff]
      %322 = vst [vmem:[%s314 + $0x18] sm:$0xff] %v321
      %v323 = vld [vmem:[%s313 + $0x20] sm:$0xff]
      %324 = vst [vmem:[%s314 + $0x20] sm:$0xff] %v323
      %v325 = vld [vmem:[%s313 + $0x28] sm:$0xff]
      %326 = vst [vmem:[%s314 + $0x28] sm:$0xff] %v325
      %v327 = vld [vmem:[%s313 + $0x30] sm:$0xff]
      %328 = vst [vmem:[%s314 + $0x30] sm:$0xff] %v327
      %v329 = vld [vmem:[%s313 + $0x38] sm:$0xff]
      %330 = vst [vmem:[%s314 + $0x38] sm:$0xff] %v329
      %v331 = vld [vmem:[%s313 + $0x40] sm:$0xff]
      %332 = vst [vmem:[%s314 + $0x40] sm:$0xff] %v331
      %v333 = vld [vmem:[%s313 + $0x48] sm:$0xff]
      %334 = vst [vmem:[%s314 + $0x48] sm:$0xff] %v333
      %v335 = vld [vmem:[%s313 + $0x50] sm:$0xff]
      %336 = vst [vmem:[%s314 + $0x50] sm:$0xff] %v335
      %v337 = vld [vmem:[%s313 + $0x58] sm:$0xff]
      %338 = vst [vmem:[%s314 + $0x58] sm:$0xff] %v337
      %v339 = vld [vmem:[%s313 + $0x60] sm:$0xff]
      %340 = vst [vmem:[%s314 + $0x60] sm:$0xff] %v339
      %v341 = vld [vmem:[%s313 + $0x68] sm:$0xff]
      %342 = vst [vmem:[%s314 + $0x68] sm:$0xff] %v341
      %v343 = vld [vmem:[%s313 + $0x70] sm:$0xff]
      %344 = vst [vmem:[%s314 + $0x70] sm:$0xff] %v343
      %v345 = vld [vmem:[%s313 + $0x78] sm:$0xff]
      %346 = vst [vmem:[%s314 + $0x78] sm:$0xff] %v345
      %v347 = vld [vmem:[%s313 + $0x80] sm:$0xff]
      %348 = vst [vmem:[%s314 + $0x80] sm:$0xff] %v347
      %v349 = vld [vmem:[%s313 + $0x88] sm:$0xff]
      %350 = vst [vmem:[%s314 + $0x88] sm:$0xff] %v349
      %v351 = vld [vmem:[%s313 + $0x90] sm:$0xff]
      %352 = vst [vmem:[%s314 + $0x90] sm:$0xff] %v351
      %v353 = vld [vmem:[%s313 + $0x98] sm:$0xff]
      %354 = vst [vmem:[%s314 + $0x98] sm:$0xff] %v353
      %v355 = vld [vmem:[%s313 + $0xa0] sm:$0xff]
      %356 = vst [vmem:[%s314 + $0xa0] sm:$0xff] %v355
      %v357 = vld [vmem:[%s313 + $0xa8] sm:$0xff]
      %358 = vst [vmem:[%s314 + $0xa8] sm:$0xff] %v357
      %v359 = vld [vmem:[%s313 + $0xb0] sm:$0xff]
      %360 = vst [vmem:[%s314 + $0xb0] sm:$0xff] %v359
      %v361 = vld [vmem:[%s313 + $0xb8] sm:$0xff]
      %362 = vst [vmem:[%s314 + $0xb8] sm:$0xff] %v361
      %v363 = vld [vmem:[%s313 + $0xc0] sm:$0xff]
      %364 = vst [vmem:[%s314 + $0xc0] sm:$0xff] %v363
      %v365 = vld [vmem:[%s313 + $0xc8] sm:$0xff]
      %366 = vst [vmem:[%s314 + $0xc8] sm:$0xff] %v365
      %v367 = vld [vmem:[%s313 + $0xd0] sm:$0xff]
      %368 = vst [vmem:[%s314 + $0xd0] sm:$0xff] %v367
      %v369 = vld [vmem:[%s313 + $0xd8] sm:$0xff]
      %370 = vst [vmem:[%s314 + $0xd8] sm:$0xff] %v369
      %v371 = vld [vmem:[%s313 + $0xe0] sm:$0xff]
      %372 = vst [vmem:[%s314 + $0xe0] sm:$0xff] %v371
      %v373 = vld [vmem:[%s313 + $0xe8] sm:$0xff]
      %374 = vst [vmem:[%s314 + $0xe8] sm:$0xff] %v373
      %v375 = vld [vmem:[%s313 + $0xf0] sm:$0xff]
      %376 = vst [vmem:[%s314 + $0xf0] sm:$0xff] %v375
      %v377 = vld [vmem:[%s313 + $0xf8] sm:$0xff]
      %378 = vst [vmem:[%s314 + $0xf8] sm:$0xff] %v377
      %v379 = vld [vmem:[%s313 + $0x100] sm:$0xff]
      %380 = vst [vmem:[%s314 + $0x100] sm:$0xff] %v379
      %v381 = vld [vmem:[%s313 + $0x108] sm:$0xff]
      %382 = vst [vmem:[%s314 + $0x108] sm:$0xff] %v381
      %v383 = vld [vmem:[%s313 + $0x110] sm:$0xff]
      %384 = vst [vmem:[%s314 + $0x110] sm:$0xff] %v383
      %v385 = vld [vmem:[%s313 + $0x118] sm:$0xff]
      %386 = vst [vmem:[%s314 + $0x118] sm:$0xff] %v385
      %v387 = vld [vmem:[%s313 + $0x120] sm:$0xff]
      %388 = vst [vmem:[%s314 + $0x120] sm:$0xff] %v387
      %v389 = vld [vmem:[%s313 + $0x128] sm:$0xff]
      %390 = vst [vmem:[%s314 + $0x128] sm:$0xff] %v389
      %v391 = vld [vmem:[%s313 + $0x130] sm:$0xff]
      %392 = vst [vmem:[%s314 + $0x130] sm:$0xff] %v391
      %v393 = vld [vmem:[%s313 + $0x138] sm:$0xff]
      %394 = vst [vmem:[%s314 + $0x138] sm:$0xff] %v393
      %v395 = vld [vmem:[%s313 + $0x140] sm:$0xff]
      %396 = vst [vmem:[%s314 + $0x140] sm:$0xff] %v395
      %v397 = vld [vmem:[%s313 + $0x148] sm:$0xff]
      %398 = vst [vmem:[%s314 + $0x148] sm:$0xff] %v397
      %v399 = vld [vmem:[%s313 + $0x150] sm:$0xff]
      %400 = vst [vmem:[%s314 + $0x150] sm:$0xff] %v399
      %v401 = vld [vmem:[%s313 + $0x158] sm:$0xff]
      %402 = vst [vmem:[%s314 + $0x158] sm:$0xff] %v401
      %v403 = vld [vmem:[%s313 + $0x160] sm:$0xff]
      %404 = vst [vmem:[%s314 + $0x160] sm:$0xff] %v403
      %v405 = vld [vmem:[%s313 + $0x168] sm:$0xff]
      %406 = vst [vmem:[%s314 + $0x168] sm:$0xff] %v405
      %v407 = vld [vmem:[%s313 + $0x170] sm:$0xff]
      %408 = vst [vmem:[%s314 + $0x170] sm:$0xff] %v407
      %v409 = vld [vmem:[%s313 + $0x178] sm:$0xff]
      %410 = vst [vmem:[%s314 + $0x178] sm:$0xff] %v409
      %v411 = vld [vmem:[%s313 + $0x180] sm:$0xff]
      %412 = vst [vmem:[%s314 + $0x180] sm:$0xff] %v411
      %v413 = vld [vmem:[%s313 + $0x188] sm:$0xff]
      %414 = vst [vmem:[%s314 + $0x188] sm:$0xff] %v413
      %v415 = vld [vmem:[%s313 + $0x190] sm:$0xff]
      %416 = vst [vmem:[%s314 + $0x190] sm:$0xff] %v415
      %v417 = vld [vmem:[%s313 + $0x198] sm:$0xff]
      %418 = vst [vmem:[%s314 + $0x198] sm:$0xff] %v417
      %v419 = vld [vmem:[%s313 + $0x1a0] sm:$0xff]
      %420 = vst [vmem:[%s314 + $0x1a0] sm:$0xff] %v419
      %v421 = vld [vmem:[%s313 + $0x1a8] sm:$0xff]
      %422 = vst [vmem:[%s314 + $0x1a8] sm:$0xff] %v421
      %v423 = vld [vmem:[%s313 + $0x1b0] sm:$0xff]
      %424 = vst [vmem:[%s314 + $0x1b0] sm:$0xff] %v423
      %v425 = vld [vmem:[%s313 + $0x1b8] sm:$0xff]
      %426 = vst [vmem:[%s314 + $0x1b8] sm:$0xff] %v425
      %v427 = vld [vmem:[%s313 + $0x1c0] sm:$0xff]
      %428 = vst [vmem:[%s314 + $0x1c0] sm:$0xff] %v427
      %v429 = vld [vmem:[%s313 + $0x1c8] sm:$0xff]
      %430 = vst [vmem:[%s314 + $0x1c8] sm:$0xff] %v429
      %v431 = vld [vmem:[%s313 + $0x1d0] sm:$0xff]
      %432 = vst [vmem:[%s314 + $0x1d0] sm:$0xff] %v431
      %v433 = vld [vmem:[%s313 + $0x1d8] sm:$0xff]
      %434 = vst [vmem:[%s314 + $0x1d8] sm:$0xff] %v433
      %v435 = vld [vmem:[%s313 + $0x1e0] sm:$0xff]
      %436 = vst [vmem:[%s314 + $0x1e0] sm:$0xff] %v435
      %v437 = vld [vmem:[%s313 + $0x1e8] sm:$0xff]
      %438 = vst [vmem:[%s314 + $0x1e8] sm:$0xff] %v437
      %v439 = vld [vmem:[%s313 + $0x1f0] sm:$0xff]
      %440 = vst [vmem:[%s314 + $0x1f0] sm:$0xff] %v439
      %v441 = vld [vmem:[%s313 + $0x1f8] sm:$0xff]
      %442 = vst [vmem:[%s314 + $0x1f8] sm:$0xff] %v441
    $region61: #{tae_encoder_forward.1} parent=55 // loop_footer
      %s312 = sadd.s32 1, %s308
    $region62: #{tae_encoder_forward.1} parent=55 // loop_footer_branch
      %307 = sbr.rel target = $region58
    $region63: #{tae_encoder_forward.1} parent=55 // loop_exit
      _
  $region56: #{tae_encoder_forward.1} parent=0 // pred_fallthru
    _
  // Predicated region
  $region64: #{tae_encoder_forward.1} parent=0 // pred_check
    _
  $region65: #{tae_encoder_forward.1} parent=0 // pred_check_branch
    %444 = sbr.rel target = $region67
  $region66: #{tae_encoder_forward.1} parent=0 // pred_region
    _
  $region67: #{tae_encoder_forward.1} parent=0 // pred_fallthru
    _
  // Predicated region
  $region68: #{tae_encoder_forward.1} parent=0 // pred_check
    _
  $region69: #{tae_encoder_forward.1} parent=0 // pred_check_branch
    %447 = sbr.rel (0) target = $region71
  $region70: #{tae_encoder_forward.1} parent=0 // pred_region
    %448 = vsyncadd %s304, 8192
  $region71: #{tae_encoder_forward.1} parent=0 // pred_fallthru
    _
  %s449 = scalar_lea.sflag [#allocation7], 2
  // Predicated region
  $region72: #{tae_encoder_forward.1} parent=0 // pred_check
    _
  $region73: #{tae_encoder_forward.1} parent=0 // pred_check_branch
    %451 = sbr.rel (0) target = $region75
  $region74: #{tae_encoder_forward.1} parent=0 // pred_region
    loop: start=0, step=1, limit=1
    $region76: #{tae_encoder_forward.1} parent=74 // loop_pre_header
      _
    $region77: #{tae_encoder_forward.1} parent=74 // loop_header
      %s453 = sphi 0, %s457
      %p454 = scmp.ge.s32.totalorder %s453, 1
      %s458 = sphi %s10, %s10
      %s459 = sphi [#allocation6], [#allocation6]
    $region78: #{tae_encoder_forward.1} parent=74 // loop_header_branch
      %456 = sbr.rel (%p454) target = $region82
    $region79: #{tae_encoder_forward.1} parent=74 // loop_body
      %v460 = vld [vmem:[%s458] sm:$0xff]
      %461 = vst [vmem:[%s459] sm:$0xff] %v460
      %v462 = vld [vmem:[%s458 + $0x8] sm:$0xff]
      %463 = vst [vmem:[%s459 + $0x8] sm:$0xff] %v462
      %v464 = vld [vmem:[%s458 + $0x10] sm:$0xff]
      %465 = vst [vmem:[%s459 + $0x10] sm:$0xff] %v464
      %v466 = vld [vmem:[%s458 + $0x18] sm:$0xff]
      %467 = vst [vmem:[%s459 + $0x18] sm:$0xff] %v466
      %v468 = vld [vmem:[%s458 + $0x20] sm:$0xff]
      %469 = vst [vmem:[%s459 + $0x20] sm:$0xff] %v468
      %v470 = vld [vmem:[%s458 + $0x28] sm:$0xff]
      %471 = vst [vmem:[%s459 + $0x28] sm:$0xff] %v470
      %v472 = vld [vmem:[%s458 + $0x30] sm:$0xff]
      %473 = vst [vmem:[%s459 + $0x30] sm:$0xff] %v472
      %v474 = vld [vmem:[%s458 + $0x38] sm:$0xff]
      %475 = vst [vmem:[%s459 + $0x38] sm:$0xff] %v474
      %v476 = vld [vmem:[%s458 + $0x40] sm:$0xff]
      %477 = vst [vmem:[%s459 + $0x40] sm:$0xff] %v476
      %v478 = vld [vmem:[%s458 + $0x48] sm:$0xff]
      %479 = vst [vmem:[%s459 + $0x48] sm:$0xff] %v478
      %v480 = vld [vmem:[%s458 + $0x50] sm:$0xff]
      %481 = vst [vmem:[%s459 + $0x50] sm:$0xff] %v480
      %v482 = vld [vmem:[%s458 + $0x58] sm:$0xff]
      %483 = vst [vmem:[%s459 + $0x58] sm:$0xff] %v482
      %v484 = vld [vmem:[%s458 + $0x60] sm:$0xff]
      %485 = vst [vmem:[%s459 + $0x60] sm:$0xff] %v484
      %v486 = vld [vmem:[%s458 + $0x68] sm:$0xff]
      %487 = vst [vmem:[%s459 + $0x68] sm:$0xff] %v486
      %v488 = vld [vmem:[%s458 + $0x70] sm:$0xff]
      %489 = vst [vmem:[%s459 + $0x70] sm:$0xff] %v488
      %v490 = vld [vmem:[%s458 + $0x78] sm:$0xff]
      %491 = vst [vmem:[%s459 + $0x78] sm:$0xff] %v490
      %v492 = vld [vmem:[%s458 + $0x80] sm:$0xff]
      %493 = vst [vmem:[%s459 + $0x80] sm:$0xff] %v492
      %v494 = vld [vmem:[%s458 + $0x88] sm:$0xff]
      %495 = vst [vmem:[%s459 + $0x88] sm:$0xff] %v494
      %v496 = vld [vmem:[%s458 + $0x90] sm:$0xff]
      %497 = vst [vmem:[%s459 + $0x90] sm:$0xff] %v496
      %v498 = vld [vmem:[%s458 + $0x98] sm:$0xff]
      %499 = vst [vmem:[%s459 + $0x98] sm:$0xff] %v498
      %v500 = vld [vmem:[%s458 + $0xa0] sm:$0xff]
      %501 = vst [vmem:[%s459 + $0xa0] sm:$0xff] %v500
      %v502 = vld [vmem:[%s458 + $0xa8] sm:$0xff]
      %503 = vst [vmem:[%s459 + $0xa8] sm:$0xff] %v502
      %v504 = vld [vmem:[%s458 + $0xb0] sm:$0xff]
      %505 = vst [vmem:[%s459 + $0xb0] sm:$0xff] %v504
      %v506 = vld [vmem:[%s458 + $0xb8] sm:$0xff]
      %507 = vst [vmem:[%s459 + $0xb8] sm:$0xff] %v506
      %v508 = vld [vmem:[%s458 + $0xc0] sm:$0xff]
      %509 = vst [vmem:[%s459 + $0xc0] sm:$0xff] %v508
      %v510 = vld [vmem:[%s458 + $0xc8] sm:$0xff]
      %511 = vst [vmem:[%s459 + $0xc8] sm:$0xff] %v510
      %v512 = vld [vmem:[%s458 + $0xd0] sm:$0xff]
      %513 = vst [vmem:[%s459 + $0xd0] sm:$0xff] %v512
      %v514 = vld [vmem:[%s458 + $0xd8] sm:$0xff]
      %515 = vst [vmem:[%s459 + $0xd8] sm:$0xff] %v514
      %v516 = vld [vmem:[%s458 + $0xe0] sm:$0xff]
      %517 = vst [vmem:[%s459 + $0xe0] sm:$0xff] %v516
      %v518 = vld [vmem:[%s458 + $0xe8] sm:$0xff]
      %519 = vst [vmem:[%s459 + $0xe8] sm:$0xff] %v518
      %v520 = vld [vmem:[%s458 + $0xf0] sm:$0xff]
      %521 = vst [vmem:[%s459 + $0xf0] sm:$0xff] %v520
      %v522 = vld [vmem:[%s458 + $0xf8] sm:$0xff]
      %523 = vst [vmem:[%s459 + $0xf8] sm:$0xff] %v522
      %v524 = vld [vmem:[%s458 + $0x100] sm:$0xff]
      %525 = vst [vmem:[%s459 + $0x100] sm:$0xff] %v524
      %v526 = vld [vmem:[%s458 + $0x108] sm:$0xff]
      %527 = vst [vmem:[%s459 + $0x108] sm:$0xff] %v526
      %v528 = vld [vmem:[%s458 + $0x110] sm:$0xff]
      %529 = vst [vmem:[%s459 + $0x110] sm:$0xff] %v528
      %v530 = vld [vmem:[%s458 + $0x118] sm:$0xff]
      %531 = vst [vmem:[%s459 + $0x118] sm:$0xff] %v530
      %v532 = vld [vmem:[%s458 + $0x120] sm:$0xff]
      %533 = vst [vmem:[%s459 + $0x120] sm:$0xff] %v532
      %v534 = vld [vmem:[%s458 + $0x128] sm:$0xff]
      %535 = vst [vmem:[%s459 + $0x128] sm:$0xff] %v534
      %v536 = vld [vmem:[%s458 + $0x130] sm:$0xff]
      %537 = vst [vmem:[%s459 + $0x130] sm:$0xff] %v536
      %v538 = vld [vmem:[%s458 + $0x138] sm:$0xff]
      %539 = vst [vmem:[%s459 + $0x138] sm:$0xff] %v538
      %v540 = vld [vmem:[%s458 + $0x140] sm:$0xff]
      %541 = vst [vmem:[%s459 + $0x140] sm:$0xff] %v540
      %v542 = vld [vmem:[%s458 + $0x148] sm:$0xff]
      %543 = vst [vmem:[%s459 + $0x148] sm:$0xff] %v542
      %v544 = vld [vmem:[%s458 + $0x150] sm:$0xff]
      %545 = vst [vmem:[%s459 + $0x150] sm:$0xff] %v544
      %v546 = vld [vmem:[%s458 + $0x158] sm:$0xff]
      %547 = vst [vmem:[%s459 + $0x158] sm:$0xff] %v546
      %v548 = vld [vmem:[%s458 + $0x160] sm:$0xff]
      %549 = vst [vmem:[%s459 + $0x160] sm:$0xff] %v548
      %v550 = vld [vmem:[%s458 + $0x168] sm:$0xff]
      %551 = vst [vmem:[%s459 + $0x168] sm:$0xff] %v550
      %v552 = vld [vmem:[%s458 + $0x170] sm:$0xff]
      %553 = vst [vmem:[%s459 + $0x170] sm:$0xff] %v552
      %v554 = vld [vmem:[%s458 + $0x178] sm:$0xff]
      %555 = vst [vmem:[%s459 + $0x178] sm:$0xff] %v554
      %v556 = vld [vmem:[%s458 + $0x180] sm:$0xff]
      %557 = vst [vmem:[%s459 + $0x180] sm:$0xff] %v556
      %v558 = vld [vmem:[%s458 + $0x188] sm:$0xff]
      %559 = vst [vmem:[%s459 + $0x188] sm:$0xff] %v558
      %v560 = vld [vmem:[%s458 + $0x190] sm:$0xff]
      %561 = vst [vmem:[%s459 + $0x190] sm:$0xff] %v560
      %v562 = vld [vmem:[%s458 + $0x198] sm:$0xff]
      %563 = vst [vmem:[%s459 + $0x198] sm:$0xff] %v562
      %v564 = vld [vmem:[%s458 + $0x1a0] sm:$0xff]
      %565 = vst [vmem:[%s459 + $0x1a0] sm:$0xff] %v564
      %v566 = vld [vmem:[%s458 + $0x1a8] sm:$0xff]
      %567 = vst [vmem:[%s459 + $0x1a8] sm:$0xff] %v566
      %v568 = vld [vmem:[%s458 + $0x1b0] sm:$0xff]
      %569 = vst [vmem:[%s459 + $0x1b0] sm:$0xff] %v568
      %v570 = vld [vmem:[%s458 + $0x1b8] sm:$0xff]
      %571 = vst [vmem:[%s459 + $0x1b8] sm:$0xff] %v570
      %v572 = vld [vmem:[%s458 + $0x1c0] sm:$0xff]
      %573 = vst [vmem:[%s459 + $0x1c0] sm:$0xff] %v572
      %v574 = vld [vmem:[%s458 + $0x1c8] sm:$0xff]
      %575 = vst [vmem:[%s459 + $0x1c8] sm:$0xff] %v574
      %v576 = vld [vmem:[%s458 + $0x1d0] sm:$0xff]
      %577 = vst [vmem:[%s459 + $0x1d0] sm:$0xff] %v576
      %v578 = vld [vmem:[%s458 + $0x1d8] sm:$0xff]
      %579 = vst [vmem:[%s459 + $0x1d8] sm:$0xff] %v578
      %v580 = vld [vmem:[%s458 + $0x1e0] sm:$0xff]
      %581 = vst [vmem:[%s459 + $0x1e0] sm:$0xff] %v580
      %v582 = vld [vmem:[%s458 + $0x1e8] sm:$0xff]
      %583 = vst [vmem:[%s459 + $0x1e8] sm:$0xff] %v582
      %v584 = vld [vmem:[%s458 + $0x1f0] sm:$0xff]
      %585 = vst [vmem:[%s459 + $0x1f0] sm:$0xff] %v584
      %v586 = vld [vmem:[%s458 + $0x1f8] sm:$0xff]
      %587 = vst [vmem:[%s459 + $0x1f8] sm:$0xff] %v586
    $region80: #{tae_encoder_forward.1} parent=74 // loop_footer
      %s457 = sadd.s32 1, %s453
    $region81: #{tae_encoder_forward.1} parent=74 // loop_footer_branch
      %452 = sbr.rel target = $region77
    $region82: #{tae_encoder_forward.1} parent=74 // loop_exit
      _
  $region75: #{tae_encoder_forward.1} parent=0 // pred_fallthru
    _
  // Predicated region
  $region83: #{tae_encoder_forward.1} parent=0 // pred_check
    _
  $region84: #{tae_encoder_forward.1} parent=0 // pred_check_branch
    %589 = sbr.rel target = $region86
  $region85: #{tae_encoder_forward.1} parent=0 // pred_region
    _
  $region86: #{tae_encoder_forward.1} parent=0 // pred_fallthru
    _
  // Predicated region
  $region87: #{tae_encoder_forward.1} parent=0 // pred_check
    _
  $region88: #{tae_encoder_forward.1} parent=0 // pred_check_branch
    %592 = sbr.rel (0) target = $region90
  $region89: #{tae_encoder_forward.1} parent=0 // pred_region
    %593 = vsyncadd %s449, 8192
  $region90: #{tae_encoder_forward.1} parent=0 // pred_fallthru
    _
  %v594 = vld [vmem:[%s0] sm:$0xff]
  %v595 = vld [vmem:[%s0 + $0x8] sm:$0xff]
  %v596 = vld [vmem:[%s0 + $0x10] sm:$0xff]
  %v597 = vld [vmem:[%s0 + $0x18] sm:$0xff]
  %v598 = vld [vmem:[%s0 + $0x20] sm:$0xff]
  %v599 = vld [vmem:[%s0 + $0x28] sm:$0xff]
  %v600 = vld [vmem:[%s0 + $0x30] sm:$0xff]
  %v601 = vld [vmem:[%s0 + $0x38] sm:$0xff]
  %v602 = vld [vmem:[%s0 + $0x40] sm:$0xff]
  %v603 = vld [vmem:[%s0 + $0x48] sm:$0xff]
  %v604 = vld [vmem:[%s0 + $0x50] sm:$0xff]
  %v605 = vld [vmem:[%s0 + $0x58] sm:$0xff]
  %v606 = vld [vmem:[%s0 + $0x60] sm:$0xff]
  %v607 = vld [vmem:[%s0 + $0x68] sm:$0xff]
  %v608 = vld [vmem:[%s0 + $0x70] sm:$0xff]
  %v609 = vld [vmem:[%s0 + $0x78] sm:$0xff]
  %v610 = vld [vmem:[%s0 + $0x80] sm:$0xff]
  %v611 = vld [vmem:[%s0 + $0x88] sm:$0xff]
  %v612 = vld [vmem:[%s0 + $0x90] sm:$0xff]
  %v613 = vld [vmem:[%s0 + $0x98] sm:$0xff]
  %v614 = vld [vmem:[%s0 + $0xa0] sm:$0xff]
  %v615 = vld [vmem:[%s0 + $0xa8] sm:$0xff]
  %v616 = vld [vmem:[%s0 + $0xb0] sm:$0xff]
  %v617 = vld [vmem:[%s0 + $0xb8] sm:$0xff]
  %v618 = vld [vmem:[%s0 + $0xc0] sm:$0xff]
  %v619 = vld [vmem:[%s0 + $0xc8] sm:$0xff]
  %v620 = vld [vmem:[%s0 + $0xd0] sm:$0xff]
  %v621 = vld [vmem:[%s0 + $0xd8] sm:$0xff]
  %v622 = vld [vmem:[%s0 + $0xe0] sm:$0xff]
  %v623 = vld [vmem:[%s0 + $0xe8] sm:$0xff]
  %v624 = vld [vmem:[%s0 + $0xf0] sm:$0xff]
  %v625 = vld [vmem:[%s0 + $0xf8] sm:$0xff]
  %v626 = vld [vmem:[%s0 + $0x100] sm:$0xff]
  %v627 = vld [vmem:[%s0 + $0x108] sm:$0xff]
  %v628 = vld [vmem:[%s0 + $0x110] sm:$0xff]
  %v629 = vld [vmem:[%s0 + $0x118] sm:$0xff]
  %v630 = vld [vmem:[%s0 + $0x120] sm:$0xff]
  %v631 = vld [vmem:[%s0 + $0x128] sm:$0xff]
  %v632 = vld [vmem:[%s0 + $0x130] sm:$0xff]
  %v633 = vld [vmem:[%s0 + $0x138] sm:$0xff]
  %v634 = vld [vmem:[%s0 + $0x140] sm:$0xff]
  %v635 = vld [vmem:[%s0 + $0x148] sm:$0xff]
  %v636 = vld [vmem:[%s0 + $0x150] sm:$0xff]
  %v637 = vld [vmem:[%s0 + $0x158] sm:$0xff]
  %v638 = vld [vmem:[%s0 + $0x160] sm:$0xff]
  %v639 = vld [vmem:[%s0 + $0x168] sm:$0xff]
  %v640 = vld [vmem:[%s0 + $0x170] sm:$0xff]
  %v641 = vld [vmem:[%s0 + $0x178] sm:$0xff]
  %v642 = vld [vmem:[%s0 + $0x180] sm:$0xff]
  %v643 = vld [vmem:[%s0 + $0x188] sm:$0xff]
  %v644 = vld [vmem:[%s0 + $0x190] sm:$0xff]
  %v645 = vld [vmem:[%s0 + $0x198] sm:$0xff]
  %v646 = vld [vmem:[%s0 + $0x1a0] sm:$0xff]
  %v647 = vld [vmem:[%s0 + $0x1a8] sm:$0xff]
  %v648 = vld [vmem:[%s0 + $0x1b0] sm:$0xff]
  %v649 = vld [vmem:[%s0 + $0x1b8] sm:$0xff]
  %v650 = vld [vmem:[%s0 + $0x1c0] sm:$0xff]
  %v651 = vld [vmem:[%s0 + $0x1c8] sm:$0xff]
  %v652 = vld [vmem:[%s0 + $0x1d0] sm:$0xff]
  %v653 = vld [vmem:[%s0 + $0x1d8] sm:$0xff]
  %v654 = vld [vmem:[%s0 + $0x1e0] sm:$0xff]
  %v655 = vld [vmem:[%s0 + $0x1e8] sm:$0xff]
  %v656 = vld [vmem:[%s0 + $0x1f0] sm:$0xff]
  %v657 = vld [vmem:[%s0 + $0x1f8] sm:$0xff]
  %v658 = vld [vmem:[%s0 + $0x200] sm:$0xff]
  %v659 = vld [vmem:[%s0 + $0x208] sm:$0xff]
  %v660 = vld [vmem:[%s0 + $0x210] sm:$0xff]
  %v661 = vld [vmem:[%s0 + $0x218] sm:$0xff]
  %v662 = vld [vmem:[%s0 + $0x220] sm:$0xff]
  %v663 = vld [vmem:[%s0 + $0x228] sm:$0xff]
  %v664 = vld [vmem:[%s0 + $0x230] sm:$0xff]
  %v665 = vld [vmem:[%s0 + $0x238] sm:$0xff]
  %v666 = vld [vmem:[%s0 + $0x240] sm:$0xff]
  %v667 = vld [vmem:[%s0 + $0x248] sm:$0xff]
  %v668 = vld [vmem:[%s0 + $0x250] sm:$0xff]
  %v669 = vld [vmem:[%s0 + $0x258] sm:$0xff]
  %v670 = vld [vmem:[%s0 + $0x260] sm:$0xff]
  %v671 = vld [vmem:[%s0 + $0x268] sm:$0xff]
  %v672 = vld [vmem:[%s0 + $0x270] sm:$0xff]
  %v673 = vld [vmem:[%s0 + $0x278] sm:$0xff]
  %v674 = vld [vmem:[%s0 + $0x280] sm:$0xff]
  %v675 = vld [vmem:[%s0 + $0x288] sm:$0xff]
  %v676 = vld [vmem:[%s0 + $0x290] sm:$0xff]
  %v677 = vld [vmem:[%s0 + $0x298] sm:$0xff]
  %v678 = vld [vmem:[%s0 + $0x2a0] sm:$0xff]
  %v679 = vld [vmem:[%s0 + $0x2a8] sm:$0xff]
  %v680 = vld [vmem:[%s0 + $0x2b0] sm:$0xff]
  %v681 = vld [vmem:[%s0 + $0x2b8] sm:$0xff]
  %v682 = vld [vmem:[%s0 + $0x2c0] sm:$0xff]
  %v683 = vld [vmem:[%s0 + $0x2c8] sm:$0xff]
  %v684 = vld [vmem:[%s0 + $0x2d0] sm:$0xff]
  %v685 = vld [vmem:[%s0 + $0x2d8] sm:$0xff]
  %v686 = vld [vmem:[%s0 + $0x2e0] sm:$0xff]
  %v687 = vld [vmem:[%s0 + $0x2e8] sm:$0xff]
  %v688 = vld [vmem:[%s0 + $0x2f0] sm:$0xff]
  %v689 = vld [vmem:[%s0 + $0x2f8] sm:$0xff]
  %v690 = vld [vmem:[%s0 + $0x300] sm:$0xff]
  %v691 = vld [vmem:[%s0 + $0x308] sm:$0xff]
  %v692 = vld [vmem:[%s0 + $0x310] sm:$0xff]
  %v693 = vld [vmem:[%s0 + $0x318] sm:$0xff]
  %v694 = vld [vmem:[%s1] sm:$0xff]
  %v695 = vld [vmem:[%s1 + $0x8] sm:$0xff]
  %v696 = vld [vmem:[%s2] sm:$0x1]
  %v698 = vperm.slane %v696, 0
  %vm700 = vcmask 130048
  %v702 = vsel %vm700, %v594, 0
  %v705 = vsel %vm700, %v595, 0
  %v708 = vsel %vm700, %v596, 0
  %v711 = vsel %vm700, %v597, 0
  %v714 = vsel %vm700, %v598, 0
  %v717 = vsel %vm700, %v599, 0
  %v720 = vsel %vm700, %v600, 0
  %v723 = vsel %vm700, %v601, 0
  %v726 = vsel %vm700, %v602, 0
  %v729 = vsel %vm700, %v603, 0
  %v732 = vsel %vm700, %v604, 0
  %v735 = vsel %vm700, %v605, 0
  %v738 = vsel %vm700, %v606, 0
  %v741 = vsel %vm700, %v607, 0
  %v744 = vsel %vm700, %v608, 0
  %v747 = vsel %vm700, %v609, 0
  %v750 = vsel %vm700, %v610, 0
  %v753 = vsel %vm700, %v611, 0
  %v756 = vsel %vm700, %v612, 0
  %v759 = vsel %vm700, %v613, 0
  %v762 = vsel %vm700, %v614, 0
  %v765 = vsel %vm700, %v615, 0
  %v768 = vsel %vm700, %v616, 0
  %v771 = vsel %vm700, %v617, 0
  %v774 = vsel %vm700, %v618, 0
  %v777 = vsel %vm700, %v619, 0
  %v780 = vsel %vm700, %v620, 0
  %v783 = vsel %vm700, %v621, 0
  %v786 = vsel %vm700, %v622, 0
  %v789 = vsel %vm700, %v623, 0
  %v792 = vsel %vm700, %v624, 0
  %v795 = vsel %vm700, %v625, 0
  %v798 = vsel %vm700, %v626, 0
  %v801 = vsel %vm700, %v627, 0
  %v804 = vsel %vm700, %v628, 0
  %v807 = vsel %vm700, %v629, 0
  %v810 = vsel %vm700, %v630, 0
  %v813 = vsel %vm700, %v631, 0
  %v816 = vsel %vm700, %v632, 0
  %v819 = vsel %vm700, %v633, 0
  %v822 = vsel %vm700, %v634, 0
  %v825 = vsel %vm700, %v635, 0
  %v828 = vsel %vm700, %v636, 0
  %v831 = vsel %vm700, %v637, 0
  %v834 = vsel %vm700, %v638, 0
  %v837 = vsel %vm700, %v639, 0
  %v840 = vsel %vm700, %v640, 0
  %v843 = vsel %vm700, %v641, 0
  %v846 = vsel %vm700, %v642, 0
  %v849 = vsel %vm700, %v643, 0
  %v852 = vsel %vm700, %v644, 0
  %v855 = vsel %vm700, %v645, 0
  %v858 = vsel %vm700, %v646, 0
  %v861 = vsel %vm700, %v647, 0
  %v864 = vsel %vm700, %v648, 0
  %v867 = vsel %vm700, %v649, 0
  %v870 = vsel %vm700, %v650, 0
  %v873 = vsel %vm700, %v651, 0
  %v876 = vsel %vm700, %v652, 0
  %v879 = vsel %vm700, %v653, 0
  %v882 = vsel %vm700, %v654, 0
  %v885 = vsel %vm700, %v655, 0
  %v888 = vsel %vm700, %v656, 0
  %v891 = vsel %vm700, %v657, 0
  %v894 = vsel %vm700, %v658, 0
  %v897 = vsel %vm700, %v659, 0
  %v900 = vsel %vm700, %v660, 0
  %v903 = vsel %vm700, %v661, 0
  %v906 = vsel %vm700, %v662, 0
  %v909 = vsel %vm700, %v663, 0
  %v912 = vsel %vm700, %v664, 0
  %v915 = vsel %vm700, %v665, 0
  %v918 = vsel %vm700, %v666, 0
  %v921 = vsel %vm700, %v667, 0
  %v924 = vsel %vm700, %v668, 0
  %v927 = vsel %vm700, %v669, 0
  %v930 = vsel %vm700, %v670, 0
  %v933 = vsel %vm700, %v671, 0
  %v936 = vsel %vm700, %v672, 0
  %v939 = vsel %vm700, %v673, 0
  %v942 = vsel %vm700, %v674, 0
  %v945 = vsel %vm700, %v675, 0
  %v948 = vsel %vm700, %v676, 0
  %v951 = vsel %vm700, %v677, 0
  %v954 = vsel %vm700, %v678, 0
  %v957 = vsel %vm700, %v679, 0
  %v960 = vsel %vm700, %v680, 0
  %v963 = vsel %vm700, %v681, 0
  %v966 = vsel %vm700, %v682, 0
  %v969 = vsel %vm700, %v683, 0
  %v972 = vsel %vm700, %v684, 0
  %v975 = vsel %vm700, %v685, 0
  %v978 = vsel %vm700, %v686, 0
  %v981 = vsel %vm700, %v687, 0
  %v984 = vsel %vm700, %v688, 0
  %v987 = vsel %vm700, %v689, 0
  %v990 = vsel %vm700, %v690, 0
  %v993 = vsel %vm700, %v691, 0
  %v996 = vsel %vm700, %v692, 0
  %v999 = vsel %vm700, %v693, 0
  %1001 = vmatpush.msra.mxu0 0.0
  %1002 = vmatpush.msra.mxu0 0.0
  %1003 = vmatpush.msra.mxu0 0.0
  %1004 = vmatpush.msra.mxu0 0.0
  %1005 = vmatpush.msra.mxu0 0.0
  %1006 = vmatpush.msra.mxu0 0.0
  %1007 = vmatpush.msra.mxu0 0.0
  %1008 = vmatpush.msra.mxu0 0.0
  %1009 = vmatpush.msra.mxu0 0.0
  %1010 = vmatpush.msra.mxu0 0.0
  %1011 = vmatpush.msra.mxu0 0.0
  %1012 = vmatpush.msra.mxu0 0.0
  %1013 = vmatpush.msra.mxu0 0.0
  %1014 = vmatpush.msra.mxu0 0.0
  %1015 = vmatpush.msra.mxu0 %v695
  %1016 = vmatpush.msra.mxu0 %v694
  %1017 = vmatmul.f32.gmra.mxu0 %v702
  %v1018 = vpop.f32.mrf.mxu0
  %v1019 = vadd.f32 %v698, %v1018
  %1020 = vmatmul.f32.gmra.mxu0 %v705
  %v1021 = vpop.f32.mrf.mxu0
  %v1022 = vadd.f32 %v698, %v1021
  %1023 = vmatmul.f32.gmra.mxu0 %v708
  %v1024 = vpop.f32.mrf.mxu0
  %v1025 = vadd.f32 %v698, %v1024
  %1026 = vmatmul.f32.gmra.mxu0 %v711
  %v1027 = vpop.f32.mrf.mxu0
  %v1028 = vadd.f32 %v698, %v1027
  %1029 = vmatmul.f32.gmra.mxu0 %v714
  %v1030 = vpop.f32.mrf.mxu0
  %v1031 = vadd.f32 %v698, %v1030
  %1032 = vmatmul.f32.gmra.mxu0 %v717
  %v1033 = vpop.f32.mrf.mxu0
  %v1034 = vadd.f32 %v698, %v1033
  %1035 = vmatmul.f32.gmra.mxu0 %v720
  %v1036 = vpop.f32.mrf.mxu0
  %v1037 = vadd.f32 %v698, %v1036
  %1038 = vmatmul.f32.gmra.mxu0 %v723
  %v1039 = vpop.f32.mrf.mxu0
  %v1040 = vadd.f32 %v698, %v1039
  %1041 = vmatmul.f32.gmra.mxu0 %v726
  %v1042 = vpop.f32.mrf.mxu0
  %v1043 = vadd.f32 %v698, %v1042
  %1044 = vmatmul.f32.gmra.mxu0 %v729
  %v1045 = vpop.f32.mrf.mxu0
  %v1046 = vadd.f32 %v698, %v1045
  %1047 = vmatmul.f32.gmra.mxu0 %v732
  %v1048 = vpop.f32.mrf.mxu0
  %v1049 = vadd.f32 %v698, %v1048
  %1050 = vmatmul.f32.gmra.mxu0 %v735
  %v1051 = vpop.f32.mrf.mxu0
  %v1052 = vadd.f32 %v698, %v1051
  %1053 = vmatmul.f32.gmra.mxu0 %v738
  %v1054 = vpop.f32.mrf.mxu0
  %v1055 = vadd.f32 %v698, %v1054
  %1056 = vmatmul.f32.gmra.mxu0 %v741
  %v1057 = vpop.f32.mrf.mxu0
  %v1058 = vadd.f32 %v698, %v1057
  %1059 = vmatmul.f32.gmra.mxu0 %v744
  %v1060 = vpop.f32.mrf.mxu0
  %v1061 = vadd.f32 %v698, %v1060
  %1062 = vmatmul.f32.gmra.mxu0 %v747
  %v1063 = vpop.f32.mrf.mxu0
  %v1064 = vadd.f32 %v698, %v1063
  %1065 = vmatmul.f32.gmra.mxu0 %v750
  %v1066 = vpop.f32.mrf.mxu0
  %v1067 = vadd.f32 %v698, %v1066
  %1068 = vmatmul.f32.gmra.mxu0 %v753
  %v1069 = vpop.f32.mrf.mxu0
  %v1070 = vadd.f32 %v698, %v1069
  %1071 = vmatmul.f32.gmra.mxu0 %v756
  %v1072 = vpop.f32.mrf.mxu0
  %v1073 = vadd.f32 %v698, %v1072
  %1074 = vmatmul.f32.gmra.mxu0 %v759
  %v1075 = vpop.f32.mrf.mxu0
  %v1076 = vadd.f32 %v698, %v1075
  %1077 = vmatmul.f32.gmra.mxu0 %v762
  %v1078 = vpop.f32.mrf.mxu0
  %v1079 = vadd.f32 %v698, %v1078
  %1080 = vmatmul.f32.gmra.mxu0 %v765
  %v1081 = vpop.f32.mrf.mxu0
  %v1082 = vadd.f32 %v698, %v1081
  %1083 = vmatmul.f32.gmra.mxu0 %v768
  %v1084 = vpop.f32.mrf.mxu0
  %v1085 = vadd.f32 %v698, %v1084
  %1086 = vmatmul.f32.gmra.mxu0 %v771
  %v1087 = vpop.f32.mrf.mxu0
  %v1088 = vadd.f32 %v698, %v1087
  %1089 = vmatmul.f32.gmra.mxu0 %v774
  %v1090 = vpop.f32.mrf.mxu0
  %v1091 = vadd.f32 %v698, %v1090
  %1092 = vmatmul.f32.gmra.mxu0 %v777
  %v1093 = vpop.f32.mrf.mxu0
  %v1094 = vadd.f32 %v698, %v1093
  %1095 = vmatmul.f32.gmra.mxu0 %v780
  %v1096 = vpop.f32.mrf.mxu0
  %v1097 = vadd.f32 %v698, %v1096
  %1098 = vmatmul.f32.gmra.mxu0 %v783
  %v1099 = vpop.f32.mrf.mxu0
  %v1100 = vadd.f32 %v698, %v1099
  %1101 = vmatmul.f32.gmra.mxu0 %v786
  %v1102 = vpop.f32.mrf.mxu0
  %v1103 = vadd.f32 %v698, %v1102
  %1104 = vmatmul.f32.gmra.mxu0 %v789
  %v1105 = vpop.f32.mrf.mxu0
  %v1106 = vadd.f32 %v698, %v1105
  %1107 = vmatmul.f32.gmra.mxu0 %v792
  %v1108 = vpop.f32.mrf.mxu0
  %v1109 = vadd.f32 %v698, %v1108
  %1110 = vmatmul.f32.gmra.mxu0 %v795
  %v1111 = vpop.f32.mrf.mxu0
  %v1112 = vadd.f32 %v698, %v1111
  %1113 = vmatmul.f32.gmra.mxu0 %v798
  %v1114 = vpop.f32.mrf.mxu0
  %v1115 = vadd.f32 %v698, %v1114
  %1116 = vmatmul.f32.gmra.mxu0 %v801
  %v1117 = vpop.f32.mrf.mxu0
  %v1118 = vadd.f32 %v698, %v1117
  %1119 = vmatmul.f32.gmra.mxu0 %v804
  %v1120 = vpop.f32.mrf.mxu0
  %v1121 = vadd.f32 %v698, %v1120
  %1122 = vmatmul.f32.gmra.mxu0 %v807
  %v1123 = vpop.f32.mrf.mxu0
  %v1124 = vadd.f32 %v698, %v1123
  %1125 = vmatmul.f32.gmra.mxu0 %v810
  %v1126 = vpop.f32.mrf.mxu0
  %v1127 = vadd.f32 %v698, %v1126
  %1128 = vmatmul.f32.gmra.mxu0 %v813
  %v1129 = vpop.f32.mrf.mxu0
  %v1130 = vadd.f32 %v698, %v1129
  %1131 = vmatmul.f32.gmra.mxu0 %v816
  %v1132 = vpop.f32.mrf.mxu0
  %v1133 = vadd.f32 %v698, %v1132
  %1134 = vmatmul.f32.gmra.mxu0 %v819
  %v1135 = vpop.f32.mrf.mxu0
  %v1136 = vadd.f32 %v698, %v1135
  %1137 = vmatmul.f32.gmra.mxu0 %v822
  %v1138 = vpop.f32.mrf.mxu0
  %v1139 = vadd.f32 %v698, %v1138
  %1140 = vmatmul.f32.gmra.mxu0 %v825
  %v1141 = vpop.f32.mrf.mxu0
  %v1142 = vadd.f32 %v698, %v1141
  %1143 = vmatmul.f32.gmra.mxu0 %v828
  %v1144 = vpop.f32.mrf.mxu0
  %v1145 = vadd.f32 %v698, %v1144
  %1146 = vmatmul.f32.gmra.mxu0 %v831
  %v1147 = vpop.f32.mrf.mxu0
  %v1148 = vadd.f32 %v698, %v1147
  %1149 = vmatmul.f32.gmra.mxu0 %v834
  %v1150 = vpop.f32.mrf.mxu0
  %v1151 = vadd.f32 %v698, %v1150
  %1152 = vmatmul.f32.gmra.mxu0 %v837
  %v1153 = vpop.f32.mrf.mxu0
  %v1154 = vadd.f32 %v698, %v1153
  %1155 = vmatmul.f32.gmra.mxu0 %v840
  %v1156 = vpop.f32.mrf.mxu0
  %v1157 = vadd.f32 %v698, %v1156
  %1158 = vmatmul.f32.gmra.mxu0 %v843
  %v1159 = vpop.f32.mrf.mxu0
  %v1160 = vadd.f32 %v698, %v1159
  %1161 = vmatmul.f32.gmra.mxu0 %v846
  %v1162 = vpop.f32.mrf.mxu0
  %v1163 = vadd.f32 %v698, %v1162
  %1164 = vmatmul.f32.gmra.mxu0 %v849
  %v1165 = vpop.f32.mrf.mxu0
  %v1166 = vadd.f32 %v698, %v1165
  %1167 = vmatmul.f32.gmra.mxu0 %v852
  %v1168 = vpop.f32.mrf.mxu0
  %v1169 = vadd.f32 %v698, %v1168
  %1170 = vmatmul.f32.gmra.mxu0 %v855
  %v1171 = vpop.f32.mrf.mxu0
  %v1172 = vadd.f32 %v698, %v1171
  %1173 = vmatmul.f32.gmra.mxu0 %v858
  %v1174 = vpop.f32.mrf.mxu0
  %v1175 = vadd.f32 %v698, %v1174
  %1176 = vmatmul.f32.gmra.mxu0 %v861
  %v1177 = vpop.f32.mrf.mxu0
  %v1178 = vadd.f32 %v698, %v1177
  %1179 = vmatmul.f32.gmra.mxu0 %v864
  %v1180 = vpop.f32.mrf.mxu0
  %v1181 = vadd.f32 %v698, %v1180
  %1182 = vmatmul.f32.gmra.mxu0 %v867
  %v1183 = vpop.f32.mrf.mxu0
  %v1184 = vadd.f32 %v698, %v1183
  %1185 = vmatmul.f32.gmra.mxu0 %v870
  %v1186 = vpop.f32.mrf.mxu0
  %v1187 = vadd.f32 %v698, %v1186
  %1188 = vmatmul.f32.gmra.mxu0 %v873
  %v1189 = vpop.f32.mrf.mxu0
  %v1190 = vadd.f32 %v698, %v1189
  %1191 = vmatmul.f32.gmra.mxu0 %v876
  %v1192 = vpop.f32.mrf.mxu0
  %v1193 = vadd.f32 %v698, %v1192
  %1194 = vmatmul.f32.gmra.mxu0 %v879
  %v1195 = vpop.f32.mrf.mxu0
  %v1196 = vadd.f32 %v698, %v1195
  %1197 = vmatmul.f32.gmra.mxu0 %v882
  %v1198 = vpop.f32.mrf.mxu0
  %v1199 = vadd.f32 %v698, %v1198
  %1200 = vmatmul.f32.gmra.mxu0 %v885
  %v1201 = vpop.f32.mrf.mxu0
  %v1202 = vadd.f32 %v698, %v1201
  %1203 = vmatmul.f32.gmra.mxu0 %v888
  %v1204 = vpop.f32.mrf.mxu0
  %v1205 = vadd.f32 %v698, %v1204
  %1206 = vmatmul.f32.gmra.mxu0 %v891
  %v1207 = vpop.f32.mrf.mxu0
  %v1208 = vadd.f32 %v698, %v1207
  %1209 = vmatmul.f32.gmra.mxu0 %v894
  %v1210 = vpop.f32.mrf.mxu0
  %v1211 = vadd.f32 %v698, %v1210
  %1212 = vmatmul.f32.gmra.mxu0 %v897
  %v1213 = vpop.f32.mrf.mxu0
  %v1214 = vadd.f32 %v698, %v1213
  %1215 = vmatmul.f32.gmra.mxu0 %v900
  %v1216 = vpop.f32.mrf.mxu0
  %v1217 = vadd.f32 %v698, %v1216
  %1218 = vmatmul.f32.gmra.mxu0 %v903
  %v1219 = vpop.f32.mrf.mxu0
  %v1220 = vadd.f32 %v698, %v1219
  %1221 = vmatmul.f32.gmra.mxu0 %v906
  %v1222 = vpop.f32.mrf.mxu0
  %v1223 = vadd.f32 %v698, %v1222
  %1224 = vmatmul.f32.gmra.mxu0 %v909
  %v1225 = vpop.f32.mrf.mxu0
  %v1226 = vadd.f32 %v698, %v1225
  %1227 = vmatmul.f32.gmra.mxu0 %v912
  %v1228 = vpop.f32.mrf.mxu0
  %v1229 = vadd.f32 %v698, %v1228
  %1230 = vmatmul.f32.gmra.mxu0 %v915
  %v1231 = vpop.f32.mrf.mxu0
  %v1232 = vadd.f32 %v698, %v1231
  %1233 = vmatmul.f32.gmra.mxu0 %v918
  %v1234 = vpop.f32.mrf.mxu0
  %v1235 = vadd.f32 %v698, %v1234
  %1236 = vmatmul.f32.gmra.mxu0 %v921
  %v1237 = vpop.f32.mrf.mxu0
  %v1238 = vadd.f32 %v698, %v1237
  %1239 = vmatmul.f32.gmra.mxu0 %v924
  %v1240 = vpop.f32.mrf.mxu0
  %v1241 = vadd.f32 %v698, %v1240
  %1242 = vmatmul.f32.gmra.mxu0 %v927
  %v1243 = vpop.f32.mrf.mxu0
  %v1244 = vadd.f32 %v698, %v1243
  %1245 = vmatmul.f32.gmra.mxu0 %v930
  %v1246 = vpop.f32.mrf.mxu0
  %v1247 = vadd.f32 %v698, %v1246
  %1248 = vmatmul.f32.gmra.mxu0 %v933
  %v1249 = vpop.f32.mrf.mxu0
  %v1250 = vadd.f32 %v698, %v1249
  %1251 = vmatmul.f32.gmra.mxu0 %v936
  %v1252 = vpop.f32.mrf.mxu0
  %v1253 = vadd.f32 %v698, %v1252
  %1254 = vmatmul.f32.gmra.mxu0 %v939
  %v1255 = vpop.f32.mrf.mxu0
  %v1256 = vadd.f32 %v698, %v1255
  %1257 = vmatmul.f32.gmra.mxu0 %v942
  %v1258 = vpop.f32.mrf.mxu0
  %v1259 = vadd.f32 %v698, %v1258
  %1260 = vmatmul.f32.gmra.mxu0 %v945
  %v1261 = vpop.f32.mrf.mxu0
  %v1262 = vadd.f32 %v698, %v1261
  %1263 = vmatmul.f32.gmra.mxu0 %v948
  %v1264 = vpop.f32.mrf.mxu0
  %v1265 = vadd.f32 %v698, %v1264
  %1266 = vmatmul.f32.gmra.mxu0 %v951
  %v1267 = vpop.f32.mrf.mxu0
  %v1268 = vadd.f32 %v698, %v1267
  %1269 = vmatmul.f32.gmra.mxu0 %v954
  %v1270 = vpop.f32.mrf.mxu0
  %v1271 = vadd.f32 %v698, %v1270
  %1272 = vmatmul.f32.gmra.mxu0 %v957
  %v1273 = vpop.f32.mrf.mxu0
  %v1274 = vadd.f32 %v698, %v1273
  %1275 = vmatmul.f32.gmra.mxu0 %v960
  %v1276 = vpop.f32.mrf.mxu0
  %v1277 = vadd.f32 %v698, %v1276
  %1278 = vmatmul.f32.gmra.mxu0 %v963
  %v1279 = vpop.f32.mrf.mxu0
  %v1280 = vadd.f32 %v698, %v1279
  %1281 = vmatmul.f32.gmra.mxu0 %v966
  %v1282 = vpop.f32.mrf.mxu0
  %v1283 = vadd.f32 %v698, %v1282
  %1284 = vmatmul.f32.gmra.mxu0 %v969
  %v1285 = vpop.f32.mrf.mxu0
  %v1286 = vadd.f32 %v698, %v1285
  %1287 = vmatmul.f32.gmra.mxu0 %v972
  %v1288 = vpop.f32.mrf.mxu0
  %v1289 = vadd.f32 %v698, %v1288
  %1290 = vmatmul.f32.gmra.mxu0 %v975
  %v1291 = vpop.f32.mrf.mxu0
  %v1292 = vadd.f32 %v698, %v1291
  %1293 = vmatmul.f32.gmra.mxu0 %v978
  %v1294 = vpop.f32.mrf.mxu0
  %v1295 = vadd.f32 %v698, %v1294
  %1296 = vmatmul.f32.gmra.mxu0 %v981
  %v1297 = vpop.f32.mrf.mxu0
  %v1298 = vadd.f32 %v698, %v1297
  %1299 = vmatmul.f32.gmra.mxu0 %v984
  %v1300 = vpop.f32.mrf.mxu0
  %v1301 = vadd.f32 %v698, %v1300
  %1302 = vmatmul.f32.gmra.mxu0 %v987
  %v1303 = vpop.f32.mrf.mxu0
  %v1304 = vadd.f32 %v698, %v1303
  %1305 = vmatmul.f32.gmra.mxu0 %v990
  %v1306 = vpop.f32.mrf.mxu0
  %v1307 = vadd.f32 %v698, %v1306
  %1308 = vmatmul.f32.gmra.mxu0 %v993
  %v1309 = vpop.f32.mrf.mxu0
  %v1310 = vadd.f32 %v698, %v1309
  %1311 = vmatmul.f32.gmra.mxu0 %v996
  %v1312 = vpop.f32.mrf.mxu0
  %v1313 = vadd.f32 %v698, %v1312
  %1314 = vmatmul.f32.gmra.mxu0 %v999
  %v1315 = vpop.f32.mrf.mxu0
  %v1316 = vadd.f32 %v698, %v1315
  %1317 = vdwg.mxu0
  %vm1318 = vcmp.gt.f32.partialorder %v1019, 0.0
  %vm1319 = vcmp.gt.f32.partialorder %v1022, 0.0
  %vm1320 = vcmp.gt.f32.partialorder %v1025, 0.0
  %vm1321 = vcmp.gt.f32.partialorder %v1028, 0.0
  %vm1322 = vcmp.gt.f32.partialorder %v1031, 0.0
  %vm1323 = vcmp.gt.f32.partialorder %v1034, 0.0
  %vm1324 = vcmp.gt.f32.partialorder %v1037, 0.0
  %vm1325 = vcmp.gt.f32.partialorder %v1040, 0.0
  %vm1326 = vcmp.gt.f32.partialorder %v1043, 0.0
  %vm1327 = vcmp.gt.f32.partialorder %v1046, 0.0
  %vm1328 = vcmp.gt.f32.partialorder %v1049, 0.0
  %vm1329 = vcmp.gt.f32.partialorder %v1052, 0.0
  %vm1330 = vcmp.gt.f32.partialorder %v1055, 0.0
  %vm1331 = vcmp.gt.f32.partialorder %v1058, 0.0
  %vm1332 = vcmp.gt.f32.partialorder %v1061, 0.0
  %vm1333 = vcmp.gt.f32.partialorder %v1064, 0.0
  %vm1334 = vcmp.gt.f32.partialorder %v1067, 0.0
  %vm1335 = vcmp.gt.f32.partialorder %v1070, 0.0
  %vm1336 = vcmp.gt.f32.partialorder %v1073, 0.0
  %vm1337 = vcmp.gt.f32.partialorder %v1076, 0.0
  %vm1338 = vcmp.gt.f32.partialorder %v1079, 0.0
  %vm1339 = vcmp.gt.f32.partialorder %v1082, 0.0
  %vm1340 = vcmp.gt.f32.partialorder %v1085, 0.0
  %vm1341 = vcmp.gt.f32.partialorder %v1088, 0.0
  %vm1342 = vcmp.gt.f32.partialorder %v1091, 0.0
  %vm1343 = vcmp.gt.f32.partialorder %v1094, 0.0
  %vm1344 = vcmp.gt.f32.partialorder %v1097, 0.0
  %vm1345 = vcmp.gt.f32.partialorder %v1100, 0.0
  %vm1346 = vcmp.gt.f32.partialorder %v1103, 0.0
  %vm1347 = vcmp.gt.f32.partialorder %v1106, 0.0
  %vm1348 = vcmp.gt.f32.partialorder %v1109, 0.0
  %vm1349 = vcmp.gt.f32.partialorder %v1112, 0.0
  %vm1350 = vcmp.gt.f32.partialorder %v1115, 0.0
  %vm1351 = vcmp.gt.f32.partialorder %v1118, 0.0
  %vm1352 = vcmp.gt.f32.partialorder %v1121, 0.0
  %vm1353 = vcmp.gt.f32.partialorder %v1124, 0.0
  %vm1354 = vcmp.gt.f32.partialorder %v1127, 0.0
  %vm1355 = vcmp.gt.f32.partialorder %v1130, 0.0
  %vm1356 = vcmp.gt.f32.partialorder %v1133, 0.0
  %vm1357 = vcmp.gt.f32.partialorder %v1136, 0.0
  %vm1358 = vcmp.gt.f32.partialorder %v1139, 0.0
  %vm1359 = vcmp.gt.f32.partialorder %v1142, 0.0
  %vm1360 = vcmp.gt.f32.partialorder %v1145, 0.0
  %vm1361 = vcmp.gt.f32.partialorder %v1148, 0.0
  %vm1362 = vcmp.gt.f32.partialorder %v1151, 0.0
  %vm1363 = vcmp.gt.f32.partialorder %v1154, 0.0
  %vm1364 = vcmp.gt.f32.partialorder %v1157, 0.0
  %vm1365 = vcmp.gt.f32.partialorder %v1160, 0.0
  %vm1366 = vcmp.gt.f32.partialorder %v1163, 0.0
  %vm1367 = vcmp.gt.f32.partialorder %v1166, 0.0
  %vm1368 = vcmp.gt.f32.partialorder %v1169, 0.0
  %vm1369 = vcmp.gt.f32.partialorder %v1172, 0.0
  %vm1370 = vcmp.gt.f32.partialorder %v1175, 0.0
  %vm1371 = vcmp.gt.f32.partialorder %v1178, 0.0
  %vm1372 = vcmp.gt.f32.partialorder %v1181, 0.0
  %vm1373 = vcmp.gt.f32.partialorder %v1184, 0.0
  %vm1374 = vcmp.gt.f32.partialorder %v1187, 0.0
  %vm1375 = vcmp.gt.f32.partialorder %v1190, 0.0
  %vm1376 = vcmp.gt.f32.partialorder %v1193, 0.0
  %vm1377 = vcmp.gt.f32.partialorder %v1196, 0.0
  %vm1378 = vcmp.gt.f32.partialorder %v1199, 0.0
  %vm1379 = vcmp.gt.f32.partialorder %v1202, 0.0
  %vm1380 = vcmp.gt.f32.partialorder %v1205, 0.0
  %vm1381 = vcmp.gt.f32.partialorder %v1208, 0.0
  %vm1382 = vcmp.gt.f32.partialorder %v1211, 0.0
  %vm1383 = vcmp.gt.f32.partialorder %v1214, 0.0
  %vm1384 = vcmp.gt.f32.partialorder %v1217, 0.0
  %vm1385 = vcmp.gt.f32.partialorder %v1220, 0.0
  %vm1386 = vcmp.gt.f32.partialorder %v1223, 0.0
  %vm1387 = vcmp.gt.f32.partialorder %v1226, 0.0
  %vm1388 = vcmp.gt.f32.partialorder %v1229, 0.0
  %vm1389 = vcmp.gt.f32.partialorder %v1232, 0.0
  %vm1390 = vcmp.gt.f32.partialorder %v1235, 0.0
  %vm1391 = vcmp.gt.f32.partialorder %v1238, 0.0
  %vm1392 = vcmp.gt.f32.partialorder %v1241, 0.0
  %vm1393 = vcmp.gt.f32.partialorder %v1244, 0.0
  %vm1394 = vcmp.gt.f32.partialorder %v1247, 0.0
  %vm1395 = vcmp.gt.f32.partialorder %v1250, 0.0
  %vm1396 = vcmp.gt.f32.partialorder %v1253, 0.0
  %vm1397 = vcmp.gt.f32.partialorder %v1256, 0.0
  %vm1398 = vcmp.gt.f32.partialorder %v1259, 0.0
  %vm1399 = vcmp.gt.f32.partialorder %v1262, 0.0
  %vm1400 = vcmp.gt.f32.partialorder %v1265, 0.0
  %vm1401 = vcmp.gt.f32.partialorder %v1268, 0.0
  %vm1402 = vcmp.gt.f32.partialorder %v1271, 0.0
  %vm1403 = vcmp.gt.f32.partialorder %v1274, 0.0
  %vm1404 = vcmp.gt.f32.partialorder %v1277, 0.0
  %vm1405 = vcmp.gt.f32.partialorder %v1280, 0.0
  %vm1406 = vcmp.gt.f32.partialorder %v1283, 0.0
  %vm1407 = vcmp.gt.f32.partialorder %v1286, 0.0
  %vm1408 = vcmp.gt.f32.partialorder %v1289, 0.0
  %vm1409 = vcmp.gt.f32.partialorder %v1292, 0.0
  %vm1410 = vcmp.gt.f32.partialorder %v1295, 0.0
  %vm1411 = vcmp.gt.f32.partialorder %v1298, 0.0
  %vm1412 = vcmp.gt.f32.partialorder %v1301, 0.0
  %vm1413 = vcmp.gt.f32.partialorder %v1304, 0.0
  %vm1414 = vcmp.gt.f32.partialorder %v1307, 0.0
  %vm1415 = vcmp.gt.f32.partialorder %v1310, 0.0
  %vm1416 = vcmp.gt.f32.partialorder %v1313, 0.0
  %vm1417 = vcmp.gt.f32.partialorder %v1316, 0.0
  %v1418 = vmul.f32 %v1019, 0.01
  %v1419 = vmul.f32 %v1022, 0.01
  %v1420 = vmul.f32 %v1025, 0.01
  %v1421 = vmul.f32 %v1028, 0.01
  %v1422 = vmul.f32 %v1031, 0.01
  %v1423 = vmul.f32 %v1034, 0.01
  %v1424 = vmul.f32 %v1037, 0.01
  %v1425 = vmul.f32 %v1040, 0.01
  %v1426 = vmul.f32 %v1043, 0.01
  %v1427 = vmul.f32 %v1046, 0.01
  %v1428 = vmul.f32 %v1049, 0.01
  %v1429 = vmul.f32 %v1052, 0.01
  %v1430 = vmul.f32 %v1055, 0.01
  %v1431 = vmul.f32 %v1058, 0.01
  %v1432 = vmul.f32 %v1061, 0.01
  %v1433 = vmul.f32 %v1064, 0.01
  %v1434 = vmul.f32 %v1067, 0.01
  %v1435 = vmul.f32 %v1070, 0.01
  %v1436 = vmul.f32 %v1073, 0.01
  %v1437 = vmul.f32 %v1076, 0.01
  %v1438 = vmul.f32 %v1079, 0.01
  %v1439 = vmul.f32 %v1082, 0.01
  %v1440 = vmul.f32 %v1085, 0.01
  %v1441 = vmul.f32 %v1088, 0.01
  %v1442 = vmul.f32 %v1091, 0.01
  %v1443 = vmul.f32 %v1094, 0.01
  %v1444 = vmul.f32 %v1097, 0.01
  %v1445 = vmul.f32 %v1100, 0.01
  %v1446 = vmul.f32 %v1103, 0.01
  %v1447 = vmul.f32 %v1106, 0.01
  %v1448 = vmul.f32 %v1109, 0.01
  %v1449 = vmul.f32 %v1112, 0.01
  %v1450 = vmul.f32 %v1115, 0.01
  %v1451 = vmul.f32 %v1118, 0.01
  %v1452 = vmul.f32 %v1121, 0.01
  %v1453 = vmul.f32 %v1124, 0.01
  %v1454 = vmul.f32 %v1127, 0.01
  %v1455 = vmul.f32 %v1130, 0.01
  %v1456 = vmul.f32 %v1133, 0.01
  %v1457 = vmul.f32 %v1136, 0.01
  %v1458 = vmul.f32 %v1139, 0.01
  %v1459 = vmul.f32 %v1142, 0.01
  %v1460 = vmul.f32 %v1145, 0.01
  %v1461 = vmul.f32 %v1148, 0.01
  %v1462 = vmul.f32 %v1151, 0.01
  %v1463 = vmul.f32 %v1154, 0.01
  %v1464 = vmul.f32 %v1157, 0.01
  %v1465 = vmul.f32 %v1160, 0.01
  %v1466 = vmul.f32 %v1163, 0.01
  %v1467 = vmul.f32 %v1166, 0.01
  %v1468 = vmul.f32 %v1169, 0.01
  %v1469 = vmul.f32 %v1172, 0.01
  %v1470 = vmul.f32 %v1175, 0.01
  %v1471 = vmul.f32 %v1178, 0.01
  %v1472 = vmul.f32 %v1181, 0.01
  %v1473 = vmul.f32 %v1184, 0.01
  %v1474 = vmul.f32 %v1187, 0.01
  %v1475 = vmul.f32 %v1190, 0.01
  %v1476 = vmul.f32 %v1193, 0.01
  %v1477 = vmul.f32 %v1196, 0.01
  %v1478 = vmul.f32 %v1199, 0.01
  %v1479 = vmul.f32 %v1202, 0.01
  %v1480 = vmul.f32 %v1205, 0.01
  %v1481 = vmul.f32 %v1208, 0.01
  %v1482 = vmul.f32 %v1211, 0.01
  %v1483 = vmul.f32 %v1214, 0.01
  %v1484 = vmul.f32 %v1217, 0.01
  %v1485 = vmul.f32 %v1220, 0.01
  %v1486 = vmul.f32 %v1223, 0.01
  %v1487 = vmul.f32 %v1226, 0.01
  %v1488 = vmul.f32 %v1229, 0.01
  %v1489 = vmul.f32 %v1232, 0.01
  %v1490 = vmul.f32 %v1235, 0.01
  %v1491 = vmul.f32 %v1238, 0.01
  %v1492 = vmul.f32 %v1241, 0.01
  %v1493 = vmul.f32 %v1244, 0.01
  %v1494 = vmul.f32 %v1247, 0.01
  %v1495 = vmul.f32 %v1250, 0.01
  %v1496 = vmul.f32 %v1253, 0.01
  %v1497 = vmul.f32 %v1256, 0.01
  %v1498 = vmul.f32 %v1259, 0.01
  %v1499 = vmul.f32 %v1262, 0.01
  %v1500 = vmul.f32 %v1265, 0.01
  %v1501 = vmul.f32 %v1268, 0.01
  %v1502 = vmul.f32 %v1271, 0.01
  %v1503 = vmul.f32 %v1274, 0.01
  %v1504 = vmul.f32 %v1277, 0.01
  %v1505 = vmul.f32 %v1280, 0.01
  %v1506 = vmul.f32 %v1283, 0.01
  %v1507 = vmul.f32 %v1286, 0.01
  %v1508 = vmul.f32 %v1289, 0.01
  %v1509 = vmul.f32 %v1292, 0.01
  %v1510 = vmul.f32 %v1295, 0.01
  %v1511 = vmul.f32 %v1298, 0.01
  %v1512 = vmul.f32 %v1301, 0.01
  %v1513 = vmul.f32 %v1304, 0.01
  %v1514 = vmul.f32 %v1307, 0.01
  %v1515 = vmul.f32 %v1310, 0.01
  %v1516 = vmul.f32 %v1313, 0.01
  %v1517 = vmul.f32 %v1316, 0.01
  %v1518 = vsel %vm1318, %v1019, %v1418
  %v1519 = vsel %vm1319, %v1022, %v1419
  %v1520 = vsel %vm1320, %v1025, %v1420
  %v1521 = vsel %vm1321, %v1028, %v1421
  %v1522 = vsel %vm1322, %v1031, %v1422
  %v1523 = vsel %vm1323, %v1034, %v1423
  %v1524 = vsel %vm1324, %v1037, %v1424
  %v1525 = vsel %vm1325, %v1040, %v1425
  %v1526 = vsel %vm1326, %v1043, %v1426
  %v1527 = vsel %vm1327, %v1046, %v1427
  %v1528 = vsel %vm1328, %v1049, %v1428
  %v1529 = vsel %vm1329, %v1052, %v1429
  %v1530 = vsel %vm1330, %v1055, %v1430
  %v1531 = vsel %vm1331, %v1058, %v1431
  %v1532 = vsel %vm1332, %v1061, %v1432
  %v1533 = vsel %vm1333, %v1064, %v1433
  %v1534 = vsel %vm1334, %v1067, %v1434
  %v1535 = vsel %vm1335, %v1070, %v1435
  %v1536 = vsel %vm1336, %v1073, %v1436
  %v1537 = vsel %vm1337, %v1076, %v1437
  %v1538 = vsel %vm1338, %v1079, %v1438
  %v1539 = vsel %vm1339, %v1082, %v1439
  %v1540 = vsel %vm1340, %v1085, %v1440
  %v1541 = vsel %vm1341, %v1088, %v1441
  %v1542 = vsel %vm1342, %v1091, %v1442
  %v1543 = vsel %vm1343, %v1094, %v1443
  %v1544 = vsel %vm1344, %v1097, %v1444
  %v1545 = vsel %vm1345, %v1100, %v1445
  %v1546 = vsel %vm1346, %v1103, %v1446
  %v1547 = vsel %vm1347, %v1106, %v1447
  %v1548 = vsel %vm1348, %v1109, %v1448
  %v1549 = vsel %vm1349, %v1112, %v1449
  %v1550 = vsel %vm1350, %v1115, %v1450
  %v1551 = vsel %vm1351, %v1118, %v1451
  %v1552 = vsel %vm1352, %v1121, %v1452
  %v1553 = vsel %vm1353, %v1124, %v1453
  %v1554 = vsel %vm1354, %v1127, %v1454
  %v1555 = vsel %vm1355, %v1130, %v1455
  %v1556 = vsel %vm1356, %v1133, %v1456
  %v1557 = vsel %vm1357, %v1136, %v1457
  %v1558 = vsel %vm1358, %v1139, %v1458
  %v1559 = vsel %vm1359, %v1142, %v1459
  %v1560 = vsel %vm1360, %v1145, %v1460
  %v1561 = vsel %vm1361, %v1148, %v1461
  %v1562 = vsel %vm1362, %v1151, %v1462
  %v1563 = vsel %vm1363, %v1154, %v1463
  %v1564 = vsel %vm1364, %v1157, %v1464
  %v1565 = vsel %vm1365, %v1160, %v1465
  %v1566 = vsel %vm1366, %v1163, %v1466
  %v1567 = vsel %vm1367, %v1166, %v1467
  %v1568 = vsel %vm1368, %v1169, %v1468
  %v1569 = vsel %vm1369, %v1172, %v1469
  %v1570 = vsel %vm1370, %v1175, %v1470
  %v1571 = vsel %vm1371, %v1178, %v1471
  %v1572 = vsel %vm1372, %v1181, %v1472
  %v1573 = vsel %vm1373, %v1184, %v1473
  %v1574 = vsel %vm1374, %v1187, %v1474
  %v1575 = vsel %vm1375, %v1190, %v1475
  %v1576 = vsel %vm1376, %v1193, %v1476
  %v1577 = vsel %vm1377, %v1196, %v1477
  %v1578 = vsel %vm1378, %v1199, %v1478
  %v1579 = vsel %vm1379, %v1202, %v1479
  %v1580 = vsel %vm1380, %v1205, %v1480
  %v1581 = vsel %vm1381, %v1208, %v1481
  %v1582 = vsel %vm1382, %v1211, %v1482
  %v1583 = vsel %vm1383, %v1214, %v1483
  %v1584 = vsel %vm1384, %v1217, %v1484
  %v1585 = vsel %vm1385, %v1220, %v1485
  %v1586 = vsel %vm1386, %v1223, %v1486
  %v1587 = vsel %vm1387, %v1226, %v1487
  %v1588 = vsel %vm1388, %v1229, %v1488
  %v1589 = vsel %vm1389, %v1232, %v1489
  %v1590 = vsel %vm1390, %v1235, %v1490
  %v1591 = vsel %vm1391, %v1238, %v1491
  %v1592 = vsel %vm1392, %v1241, %v1492
  %v1593 = vsel %vm1393, %v1244, %v1493
  %v1594 = vsel %vm1394, %v1247, %v1494
  %v1595 = vsel %vm1395, %v1250, %v1495
  %v1596 = vsel %vm1396, %v1253, %v1496
  %v1597 = vsel %vm1397, %v1256, %v1497
  %v1598 = vsel %vm1398, %v1259, %v1498
  %v1599 = vsel %vm1399, %v1262, %v1499
  %v1600 = vsel %vm1400, %v1265, %v1500
  %v1601 = vsel %vm1401, %v1268, %v1501
  %v1602 = vsel %vm1402, %v1271, %v1502
  %v1603 = vsel %vm1403, %v1274, %v1503
  %v1604 = vsel %vm1404, %v1277, %v1504
  %v1605 = vsel %vm1405, %v1280, %v1505
  %v1606 = vsel %vm1406, %v1283, %v1506
  %v1607 = vsel %vm1407, %v1286, %v1507
  %v1608 = vsel %vm1408, %v1289, %v1508
  %v1609 = vsel %vm1409, %v1292, %v1509
  %v1610 = vsel %vm1410, %v1295, %v1510
  %v1611 = vsel %vm1411, %v1298, %v1511
  %v1612 = vsel %vm1412, %v1301, %v1512
  %v1613 = vsel %vm1413, %v1304, %v1513
  %v1614 = vsel %vm1414, %v1307, %v1514
  %v1615 = vsel %vm1415, %v1310, %v1515
  %v1616 = vsel %vm1416, %v1313, %v1516
  %v1617 = vsel %vm1417, %v1316, %v1517
  %v1618 = vmax.f32 %v1518, %v1528
  %v1619 = vmax.f32 %v1519, %v1529
  %v1620 = vmax.f32 %v1520, %v1530
  %v1621 = vmax.f32 %v1521, %v1531
  %v1622 = vmax.f32 %v1522, %v1532
  %v1623 = vmax.f32 %v1523, %v1533
  %v1624 = vmax.f32 %v1524, %v1534
  %v1625 = vmax.f32 %v1525, %v1535
  %v1626 = vmax.f32 %v1526, %v1536
  %v1627 = vmax.f32 %v1527, %v1537
  %v1628 = vmax.f32 %v1618, %v1538
  %v1629 = vmax.f32 %v1619, %v1539
  %v1630 = vmax.f32 %v1620, %v1540
  %v1631 = vmax.f32 %v1621, %v1541
  %v1632 = vmax.f32 %v1622, %v1542
  %v1633 = vmax.f32 %v1623, %v1543
  %v1634 = vmax.f32 %v1624, %v1544
  %v1635 = vmax.f32 %v1625, %v1545
  %v1636 = vmax.f32 %v1626, %v1546
  %v1637 = vmax.f32 %v1627, %v1547
  %v1638 = vmax.f32 %v1628, %v1548
  %v1639 = vmax.f32 %v1629, %v1549
  %v1640 = vmax.f32 %v1630, %v1550
  %v1641 = vmax.f32 %v1631, %v1551
  %v1642 = vmax.f32 %v1632, %v1552
  %v1643 = vmax.f32 %v1633, %v1553
  %v1644 = vmax.f32 %v1634, %v1554
  %v1645 = vmax.f32 %v1635, %v1555
  %v1646 = vmax.f32 %v1636, %v1556
  %v1647 = vmax.f32 %v1637, %v1557
  %v1648 = vmax.f32 %v1638, %v1558
  %v1649 = vmax.f32 %v1639, %v1559
  %v1650 = vmax.f32 %v1640, %v1560
  %v1651 = vmax.f32 %v1641, %v1561
  %v1652 = vmax.f32 %v1642, %v1562
  %v1653 = vmax.f32 %v1643, %v1563
  %v1654 = vmax.f32 %v1644, %v1564
  %v1655 = vmax.f32 %v1645, %v1565
  %v1656 = vmax.f32 %v1646, %v1566
  %v1657 = vmax.f32 %v1647, %v1567
  %v1658 = vmax.f32 %v1648, %v1568
  %v1659 = vmax.f32 %v1649, %v1569
  %v1660 = vmax.f32 %v1650, %v1570
  %v1661 = vmax.f32 %v1651, %v1571
  %v1662 = vmax.f32 %v1652, %v1572
  %v1663 = vmax.f32 %v1653, %v1573
  %v1664 = vmax.f32 %v1654, %v1574
  %v1665 = vmax.f32 %v1655, %v1575
  %v1666 = vmax.f32 %v1656, %v1576
  %v1667 = vmax.f32 %v1657, %v1577
  %v1668 = vmax.f32 %v1658, %v1578
  %v1669 = vmax.f32 %v1659, %v1579
  %v1670 = vmax.f32 %v1660, %v1580
  %v1671 = vmax.f32 %v1661, %v1581
  %v1672 = vmax.f32 %v1662, %v1582
  %v1673 = vmax.f32 %v1663, %v1583
  %v1674 = vmax.f32 %v1664, %v1584
  %v1675 = vmax.f32 %v1665, %v1585
  %v1676 = vmax.f32 %v1666, %v1586
  %v1677 = vmax.f32 %v1667, %v1587
  %v1678 = vmax.f32 %v1668, %v1588
  %v1679 = vmax.f32 %v1669, %v1589
  %v1680 = vmax.f32 %v1670, %v1590
  %v1681 = vmax.f32 %v1671, %v1591
  %v1682 = vmax.f32 %v1672, %v1592
  %v1683 = vmax.f32 %v1673, %v1593
  %v1684 = vmax.f32 %v1674, %v1594
  %v1685 = vmax.f32 %v1675, %v1595
  %v1686 = vmax.f32 %v1676, %v1596
  %v1687 = vmax.f32 %v1677, %v1597
  %v1688 = vmax.f32 %v1678, %v1598
  %v1689 = vmax.f32 %v1679, %v1599
  %v1690 = vmax.f32 %v1680, %v1600
  %v1691 = vmax.f32 %v1681, %v1601
  %v1692 = vmax.f32 %v1682, %v1602
  %v1693 = vmax.f32 %v1683, %v1603
  %v1694 = vmax.f32 %v1684, %v1604
  %v1695 = vmax.f32 %v1685, %v1605
  %v1696 = vmax.f32 %v1686, %v1606
  %v1697 = vmax.f32 %v1687, %v1607
  %v1698 = vmax.f32 %v1688, %v1608
  %v1699 = vmax.f32 %v1689, %v1609
  %v1700 = vmax.f32 %v1690, %v1610
  %v1701 = vmax.f32 %v1691, %v1611
  %v1702 = vmax.f32 %v1692, %v1612
  %v1703 = vmax.f32 %v1693, %v1613
  %v1704 = vmax.f32 %v1694, %v1614
  %v1705 = vmax.f32 %v1695, %v1615
  %v1706 = vmax.f32 %v1696, %v1616
  %v1707 = vmax.f32 %v1697, %v1617
  %v1708 = vld [vmem:[%s3] sm:$0xff]
  %v1709 = vld [vmem:[%s3 + $0x8] sm:$0xff]
  %v1710 = vld [vmem:[%s3 + $0x10] sm:$0xff]
  %v1711 = vld [vmem:[%s3 + $0x18] sm:$0xff]
  %v1712 = vld [vmem:[%s3 + $0x20] sm:$0xff]
  %v1713 = vld [vmem:[%s3 + $0x28] sm:$0xff]
  %v1714 = vld [vmem:[%s3 + $0x30] sm:$0xff]
  %v1715 = vld [vmem:[%s3 + $0x38] sm:$0xff]
  %v1716 = vld [vmem:[%s3 + $0x40] sm:$0xff]
  %v1717 = vld [vmem:[%s3 + $0x48] sm:$0xff]
  %v1718 = vld [vmem:[%s3 + $0x50] sm:$0xff]
  %v1719 = vld [vmem:[%s3 + $0x58] sm:$0xff]
  %v1720 = vld [vmem:[%s3 + $0x60] sm:$0xff]
  %v1721 = vld [vmem:[%s3 + $0x68] sm:$0xff]
  %v1722 = vld [vmem:[%s3 + $0x70] sm:$0xff]
  %v1723 = vld [vmem:[%s3 + $0x78] sm:$0xff]
  %v1724 = vld [vmem:[%s3 + $0x80] sm:$0xff]
  %v1725 = vld [vmem:[%s3 + $0x88] sm:$0xff]
  %v1726 = vld [vmem:[%s3 + $0x90] sm:$0xff]
  %v1727 = vld [vmem:[%s3 + $0x98] sm:$0xff]
  %v1728 = vld [vmem:[%s3 + $0xa0] sm:$0xff]
  %v1729 = vld [vmem:[%s3 + $0xa8] sm:$0xff]
  %v1730 = vld [vmem:[%s3 + $0xb0] sm:$0xff]
  %v1731 = vld [vmem:[%s3 + $0xb8] sm:$0xff]
  %v1732 = vld [vmem:[%s3 + $0xc0] sm:$0xff]
  %v1733 = vld [vmem:[%s3 + $0xc8] sm:$0xff]
  %v1734 = vld [vmem:[%s3 + $0xd0] sm:$0xff]
  %v1735 = vld [vmem:[%s3 + $0xd8] sm:$0xff]
  %v1736 = vld [vmem:[%s3 + $0xe0] sm:$0xff]
  %v1737 = vld [vmem:[%s3 + $0xe8] sm:$0xff]
  %v1738 = vld [vmem:[%s3 + $0xf0] sm:$0xff]
  %v1739 = vld [vmem:[%s3 + $0xf8] sm:$0xff]
  %v1740 = vld [vmem:[%s3 + $0x100] sm:$0xff]
  %v1741 = vld [vmem:[%s3 + $0x108] sm:$0xff]
  %v1742 = vld [vmem:[%s3 + $0x110] sm:$0xff]
  %v1743 = vld [vmem:[%s3 + $0x118] sm:$0xff]
  %v1744 = vld [vmem:[%s3 + $0x120] sm:$0xff]
  %v1745 = vld [vmem:[%s3 + $0x128] sm:$0xff]
  %v1746 = vld [vmem:[%s3 + $0x130] sm:$0xff]
  %v1747 = vld [vmem:[%s3 + $0x138] sm:$0xff]
  %v1748 = vld [vmem:[%s3 + $0x140] sm:$0xff]
  %v1749 = vld [vmem:[%s3 + $0x148] sm:$0xff]
  %v1750 = vld [vmem:[%s3 + $0x150] sm:$0xff]
  %v1751 = vld [vmem:[%s3 + $0x158] sm:$0xff]
  %v1752 = vld [vmem:[%s3 + $0x160] sm:$0xff]
  %v1753 = vld [vmem:[%s3 + $0x168] sm:$0xff]
  %v1754 = vld [vmem:[%s3 + $0x170] sm:$0xff]
  %v1755 = vld [vmem:[%s3 + $0x178] sm:$0xff]
  %v1756 = vld [vmem:[%s3 + $0x180] sm:$0xff]
  %v1757 = vld [vmem:[%s3 + $0x188] sm:$0xff]
  %v1758 = vld [vmem:[%s3 + $0x190] sm:$0xff]
  %v1759 = vld [vmem:[%s3 + $0x198] sm:$0xff]
  %v1760 = vld [vmem:[%s3 + $0x1a0] sm:$0xff]
  %v1761 = vld [vmem:[%s3 + $0x1a8] sm:$0xff]
  %v1762 = vld [vmem:[%s3 + $0x1b0] sm:$0xff]
  %v1763 = vld [vmem:[%s3 + $0x1b8] sm:$0xff]
  %v1764 = vld [vmem:[%s3 + $0x1c0] sm:$0xff]
  %v1765 = vld [vmem:[%s3 + $0x1c8] sm:$0xff]
  %v1766 = vld [vmem:[%s3 + $0x1d0] sm:$0xff]
  %v1767 = vld [vmem:[%s3 + $0x1d8] sm:$0xff]
  %v1768 = vld [vmem:[%s3 + $0x1e0] sm:$0xff]
  %v1769 = vld [vmem:[%s3 + $0x1e8] sm:$0xff]
  %v1770 = vld [vmem:[%s3 + $0x1f0] sm:$0xff]
  %v1771 = vld [vmem:[%s3 + $0x1f8] sm:$0xff]
  %v1772 = vld [vmem:[%s3 + $0x200] sm:$0xff]
  %v1773 = vld [vmem:[%s3 + $0x208] sm:$0xff]
  %v1774 = vld [vmem:[%s3 + $0x210] sm:$0xff]
  %v1775 = vld [vmem:[%s3 + $0x218] sm:$0xff]
  %v1776 = vld [vmem:[%s3 + $0x220] sm:$0xff]
  %v1777 = vld [vmem:[%s3 + $0x228] sm:$0xff]
  %v1778 = vld [vmem:[%s3 + $0x230] sm:$0xff]
  %v1779 = vld [vmem:[%s3 + $0x238] sm:$0xff]
  %v1780 = vld [vmem:[%s3 + $0x240] sm:$0xff]
  %v1781 = vld [vmem:[%s3 + $0x248] sm:$0xff]
  %v1782 = vld [vmem:[%s3 + $0x250] sm:$0xff]
  %v1783 = vld [vmem:[%s3 + $0x258] sm:$0xff]
  %v1784 = vld [vmem:[%s3 + $0x260] sm:$0xff]
  %v1785 = vld [vmem:[%s3 + $0x268] sm:$0xff]
  %v1786 = vld [vmem:[%s3 + $0x270] sm:$0xff]
  %v1787 = vld [vmem:[%s3 + $0x278] sm:$0xff]
  %v1788 = vld [vmem:[%s3 + $0x280] sm:$0xff]
  %v1789 = vld [vmem:[%s3 + $0x288] sm:$0xff]
  %v1790 = vld [vmem:[%s3 + $0x290] sm:$0xff]
  %v1791 = vld [vmem:[%s3 + $0x298] sm:$0xff]
  %v1792 = vld [vmem:[%s3 + $0x2a0] sm:$0xff]
  %v1793 = vld [vmem:[%s3 + $0x2a8] sm:$0xff]
  %v1794 = vld [vmem:[%s3 + $0x2b0] sm:$0xff]
  %v1795 = vld [vmem:[%s3 + $0x2b8] sm:$0xff]
  %v1796 = vld [vmem:[%s3 + $0x2c0] sm:$0xff]
  %v1797 = vld [vmem:[%s3 + $0x2c8] sm:$0xff]
  %v1798 = vld [vmem:[%s3 + $0x2d0] sm:$0xff]
  %v1799 = vld [vmem:[%s3 + $0x2d8] sm:$0xff]
  %v1800 = vld [vmem:[%s3 + $0x2e0] sm:$0xff]
  %v1801 = vld [vmem:[%s3 + $0x2e8] sm:$0xff]
  %v1802 = vld [vmem:[%s3 + $0x2f0] sm:$0xff]
  %v1803 = vld [vmem:[%s3 + $0x2f8] sm:$0xff]
  %v1804 = vld [vmem:[%s3 + $0x300] sm:$0xff]
  %v1805 = vld [vmem:[%s3 + $0x308] sm:$0xff]
  %v1806 = vld [vmem:[%s3 + $0x310] sm:$0xff]
  %v1807 = vld [vmem:[%s3 + $0x318] sm:$0xff]
  %v1808 = vld [vmem:[%s3 + $0x320] sm:$0xff]
  %v1809 = vld [vmem:[%s3 + $0x328] sm:$0xff]
  %v1810 = vld [vmem:[%s3 + $0x330] sm:$0xff]
  %v1811 = vld [vmem:[%s3 + $0x338] sm:$0xff]
  %v1812 = vld [vmem:[%s3 + $0x340] sm:$0xff]
  %v1813 = vld [vmem:[%s3 + $0x348] sm:$0xff]
  %v1814 = vld [vmem:[%s3 + $0x350] sm:$0xff]
  %v1815 = vld [vmem:[%s3 + $0x358] sm:$0xff]
  %v1816 = vld [vmem:[%s3 + $0x360] sm:$0xff]
  %v1817 = vld [vmem:[%s3 + $0x368] sm:$0xff]
  %v1818 = vld [vmem:[%s3 + $0x370] sm:$0xff]
  %v1819 = vld [vmem:[%s3 + $0x378] sm:$0xff]
  %v1820 = vld [vmem:[%s3 + $0x380] sm:$0xff]
  %v1821 = vld [vmem:[%s3 + $0x388] sm:$0xff]
  %v1822 = vld [vmem:[%s3 + $0x390] sm:$0xff]
  %v1823 = vld [vmem:[%s3 + $0x398] sm:$0xff]
  %v1824 = vld [vmem:[%s3 + $0x3a0] sm:$0xff]
  %v1825 = vld [vmem:[%s3 + $0x3a8] sm:$0xff]
  %v1826 = vld [vmem:[%s3 + $0x3b0] sm:$0xff]
  %v1827 = vld [vmem:[%s3 + $0x3b8] sm:$0xff]
  %v1828 = vld [vmem:[%s3 + $0x3c0] sm:$0xff]
  %v1829 = vld [vmem:[%s3 + $0x3c8] sm:$0xff]
  %v1830 = vld [vmem:[%s3 + $0x3d0] sm:$0xff]
  %v1831 = vld [vmem:[%s3 + $0x3d8] sm:$0xff]
  %v1832 = vld [vmem:[%s3 + $0x3e0] sm:$0xff]
  %v1833 = vld [vmem:[%s3 + $0x3e8] sm:$0xff]
  %v1834 = vld [vmem:[%s3 + $0x3f0] sm:$0xff]
  %v1835 = vld [vmem:[%s3 + $0x3f8] sm:$0xff]
  %v1836 = vld [vmem:[%s4] sm:$0xff]
  %v1838 = vperm.slane %v1836, 0
  %v1839 = vperm.slane %v1836, 1
  %v1840 = vperm.slane %v1836, 2
  %v1841 = vperm.slane %v1836, 3
  %v1842 = vperm.slane %v1836, 4
  %v1843 = vperm.slane %v1836, 5
  %v1844 = vperm.slane %v1836, 6
  %v1845 = vperm.slane %v1836, 7
  %1854 = vmatpush.msra.mxu0 %v1828
  %1855 = vmatpush.msra.mxu0 %v1820
  %1856 = vmatpush.msra.mxu0 %v1812
  %1857 = vmatpush.msra.mxu0 %v1804
  %1858 = vmatpush.msra.mxu0 %v1796
  %1859 = vmatpush.msra.mxu0 %v1788
  %1860 = vmatpush.msra.mxu0 %v1780
  %1861 = vmatpush.msra.mxu0 %v1772
  %1862 = vmatpush.msra.mxu0 %v1764
  %1863 = vmatpush.msra.mxu0 %v1756
  %1864 = vmatpush.msra.mxu0 %v1748
  %1865 = vmatpush.msra.mxu0 %v1740
  %1866 = vmatpush.msra.mxu0 %v1732
  %1867 = vmatpush.msra.mxu0 %v1724
  %1868 = vmatpush.msra.mxu0 %v1716
  %1869 = vmatpush.msra.mxu0 %v1708
  %1870 = vmatmul.f32.gmra.mxu0 %v1698
  %v1871 = vpop.f32.mrf.mxu0
  %v1872 = vadd.f32 %v1838, %v1871
  %1873 = vmatmul.f32.gmra.mxu0 %v1699
  %v1874 = vpop.f32.mrf.mxu0
  %v1875 = vadd.f32 %v1838, %v1874
  %1876 = vmatmul.f32.gmra.mxu0 %v1700
  %v1877 = vpop.f32.mrf.mxu0
  %v1878 = vadd.f32 %v1838, %v1877
  %1879 = vmatmul.f32.gmra.mxu0 %v1701
  %v1880 = vpop.f32.mrf.mxu0
  %v1881 = vadd.f32 %v1838, %v1880
  %1882 = vmatmul.f32.gmra.mxu0 %v1702
  %v1883 = vpop.f32.mrf.mxu0
  %v1884 = vadd.f32 %v1838, %v1883
  %1885 = vmatmul.f32.gmra.mxu0 %v1703
  %v1886 = vpop.f32.mrf.mxu0
  %v1887 = vadd.f32 %v1838, %v1886
  %1888 = vmatmul.f32.gmra.mxu0 %v1704
  %v1889 = vpop.f32.mrf.mxu0
  %v1890 = vadd.f32 %v1838, %v1889
  %1891 = vmatmul.f32.gmra.mxu0 %v1705
  %v1892 = vpop.f32.mrf.mxu0
  %v1893 = vadd.f32 %v1838, %v1892
  %1894 = vmatmul.f32.gmra.mxu0 %v1706
  %v1895 = vpop.f32.mrf.mxu0
  %v1896 = vadd.f32 %v1838, %v1895
  %1897 = vmatmul.f32.gmra.mxu0 %v1707
  %v1898 = vpop.f32.mrf.mxu0
  %v1899 = vadd.f32 %v1838, %v1898
  %1900 = vdwg.mxu0
  %1901 = vmatpush.msra.mxu0 %v1829
  %1902 = vmatpush.msra.mxu0 %v1821
  %1903 = vmatpush.msra.mxu0 %v1813
  %1904 = vmatpush.msra.mxu0 %v1805
  %1905 = vmatpush.msra.mxu0 %v1797
  %1906 = vmatpush.msra.mxu0 %v1789
  %1907 = vmatpush.msra.mxu0 %v1781
  %1908 = vmatpush.msra.mxu0 %v1773
  %1909 = vmatpush.msra.mxu0 %v1765
  %1910 = vmatpush.msra.mxu0 %v1757
  %1911 = vmatpush.msra.mxu0 %v1749
  %1912 = vmatpush.msra.mxu0 %v1741
  %1913 = vmatpush.msra.mxu0 %v1733
  %1914 = vmatpush.msra.mxu0 %v1725
  %1915 = vmatpush.msra.mxu0 %v1717
  %1916 = vmatpush.msra.mxu0 %v1709
  %1917 = vmatmul.f32.gmra.mxu0 %v1698
  %v1918 = vpop.f32.mrf.mxu0
  %v1919 = vadd.f32 %v1839, %v1918
  %1920 = vmatmul.f32.gmra.mxu0 %v1699
  %v1921 = vpop.f32.mrf.mxu0
  %v1922 = vadd.f32 %v1839, %v1921
  %1923 = vmatmul.f32.gmra.mxu0 %v1700
  %v1924 = vpop.f32.mrf.mxu0
  %v1925 = vadd.f32 %v1839, %v1924
  %1926 = vmatmul.f32.gmra.mxu0 %v1701
  %v1927 = vpop.f32.mrf.mxu0
  %v1928 = vadd.f32 %v1839, %v1927
  %1929 = vmatmul.f32.gmra.mxu0 %v1702
  %v1930 = vpop.f32.mrf.mxu0
  %v1931 = vadd.f32 %v1839, %v1930
  %1932 = vmatmul.f32.gmra.mxu0 %v1703
  %v1933 = vpop.f32.mrf.mxu0
  %v1934 = vadd.f32 %v1839, %v1933
  %1935 = vmatmul.f32.gmra.mxu0 %v1704
  %v1936 = vpop.f32.mrf.mxu0
  %v1937 = vadd.f32 %v1839, %v1936
  %1938 = vmatmul.f32.gmra.mxu0 %v1705
  %v1939 = vpop.f32.mrf.mxu0
  %v1940 = vadd.f32 %v1839, %v1939
  %1941 = vmatmul.f32.gmra.mxu0 %v1706
  %v1942 = vpop.f32.mrf.mxu0
  %v1943 = vadd.f32 %v1839, %v1942
  %1944 = vmatmul.f32.gmra.mxu0 %v1707
  %v1945 = vpop.f32.mrf.mxu0
  %v1946 = vadd.f32 %v1839, %v1945
  %1947 = vdwg.mxu0
  %1948 = vmatpush.msra.mxu0 %v1830
  %1949 = vmatpush.msra.mxu0 %v1822
  %1950 = vmatpush.msra.mxu0 %v1814
  %1951 = vmatpush.msra.mxu0 %v1806
  %1952 = vmatpush.msra.mxu0 %v1798
  %1953 = vmatpush.msra.mxu0 %v1790
  %1954 = vmatpush.msra.mxu0 %v1782
  %1955 = vmatpush.msra.mxu0 %v1774
  %1956 = vmatpush.msra.mxu0 %v1766
  %1957 = vmatpush.msra.mxu0 %v1758
  %1958 = vmatpush.msra.mxu0 %v1750
  %1959 = vmatpush.msra.mxu0 %v1742
  %1960 = vmatpush.msra.mxu0 %v1734
  %1961 = vmatpush.msra.mxu0 %v1726
  %1962 = vmatpush.msra.mxu0 %v1718
  %1963 = vmatpush.msra.mxu0 %v1710
  %1964 = vmatmul.f32.gmra.mxu0 %v1698
  %v1965 = vpop.f32.mrf.mxu0
  %v1966 = vadd.f32 %v1840, %v1965
  %1967 = vmatmul.f32.gmra.mxu0 %v1699
  %v1968 = vpop.f32.mrf.mxu0
  %v1969 = vadd.f32 %v1840, %v1968
  %1970 = vmatmul.f32.gmra.mxu0 %v1700
  %v1971 = vpop.f32.mrf.mxu0
  %v1972 = vadd.f32 %v1840, %v1971
  %1973 = vmatmul.f32.gmra.mxu0 %v1701
  %v1974 = vpop.f32.mrf.mxu0
  %v1975 = vadd.f32 %v1840, %v1974
  %1976 = vmatmul.f32.gmra.mxu0 %v1702
  %v1977 = vpop.f32.mrf.mxu0
  %v1978 = vadd.f32 %v1840, %v1977
  %1979 = vmatmul.f32.gmra.mxu0 %v1703
  %v1980 = vpop.f32.mrf.mxu0
  %v1981 = vadd.f32 %v1840, %v1980
  %1982 = vmatmul.f32.gmra.mxu0 %v1704
  %v1983 = vpop.f32.mrf.mxu0
  %v1984 = vadd.f32 %v1840, %v1983
  %1985 = vmatmul.f32.gmra.mxu0 %v1705
  %v1986 = vpop.f32.mrf.mxu0
  %v1987 = vadd.f32 %v1840, %v1986
  %1988 = vmatmul.f32.gmra.mxu0 %v1706
  %v1989 = vpop.f32.mrf.mxu0
  %v1990 = vadd.f32 %v1840, %v1989
  %1991 = vmatmul.f32.gmra.mxu0 %v1707
  %v1992 = vpop.f32.mrf.mxu0
  %v1993 = vadd.f32 %v1840, %v1992
  %1994 = vdwg.mxu0
  %1995 = vmatpush.msra.mxu0 %v1831
  %1996 = vmatpush.msra.mxu0 %v1823
  %1997 = vmatpush.msra.mxu0 %v1815
  %1998 = vmatpush.msra.mxu0 %v1807
  %1999 = vmatpush.msra.mxu0 %v1799
  %2000 = vmatpush.msra.mxu0 %v1791
  %2001 = vmatpush.msra.mxu0 %v1783
  %2002 = vmatpush.msra.mxu0 %v1775
  %2003 = vmatpush.msra.mxu0 %v1767
  %2004 = vmatpush.msra.mxu0 %v1759
  %2005 = vmatpush.msra.mxu0 %v1751
  %2006 = vmatpush.msra.mxu0 %v1743
  %2007 = vmatpush.msra.mxu0 %v1735
  %2008 = vmatpush.msra.mxu0 %v1727
  %2009 = vmatpush.msra.mxu0 %v1719
  %2010 = vmatpush.msra.mxu0 %v1711
  %2011 = vmatmul.f32.gmra.mxu0 %v1698
  %v2012 = vpop.f32.mrf.mxu0
  %v2013 = vadd.f32 %v1841, %v2012
  %2014 = vmatmul.f32.gmra.mxu0 %v1699
  %v2015 = vpop.f32.mrf.mxu0
  %v2016 = vadd.f32 %v1841, %v2015
  %2017 = vmatmul.f32.gmra.mxu0 %v1700
  %v2018 = vpop.f32.mrf.mxu0
  %v2019 = vadd.f32 %v1841, %v2018
  %2020 = vmatmul.f32.gmra.mxu0 %v1701
  %v2021 = vpop.f32.mrf.mxu0
  %v2022 = vadd.f32 %v1841, %v2021
  %2023 = vmatmul.f32.gmra.mxu0 %v1702
  %v2024 = vpop.f32.mrf.mxu0
  %v2025 = vadd.f32 %v1841, %v2024
  %2026 = vmatmul.f32.gmra.mxu0 %v1703
  %v2027 = vpop.f32.mrf.mxu0
  %v2028 = vadd.f32 %v1841, %v2027
  %2029 = vmatmul.f32.gmra.mxu0 %v1704
  %v2030 = vpop.f32.mrf.mxu0
  %v2031 = vadd.f32 %v1841, %v2030
  %2032 = vmatmul.f32.gmra.mxu0 %v1705
  %v2033 = vpop.f32.mrf.mxu0
  %v2034 = vadd.f32 %v1841, %v2033
  %2035 = vmatmul.f32.gmra.mxu0 %v1706
  %v2036 = vpop.f32.mrf.mxu0
  %v2037 = vadd.f32 %v1841, %v2036
  %2038 = vmatmul.f32.gmra.mxu0 %v1707
  %v2039 = vpop.f32.mrf.mxu0
  %v2040 = vadd.f32 %v1841, %v2039
  %2041 = vdwg.mxu0
  %2042 = vmatpush.msra.mxu0 %v1832
  %2043 = vmatpush.msra.mxu0 %v1824
  %2044 = vmatpush.msra.mxu0 %v1816
  %2045 = vmatpush.msra.mxu0 %v1808
  %2046 = vmatpush.msra.mxu0 %v1800
  %2047 = vmatpush.msra.mxu0 %v1792
  %2048 = vmatpush.msra.mxu0 %v1784
  %2049 = vmatpush.msra.mxu0 %v1776
  %2050 = vmatpush.msra.mxu0 %v1768
  %2051 = vmatpush.msra.mxu0 %v1760
  %2052 = vmatpush.msra.mxu0 %v1752
  %2053 = vmatpush.msra.mxu0 %v1744
  %2054 = vmatpush.msra.mxu0 %v1736
  %2055 = vmatpush.msra.mxu0 %v1728
  %2056 = vmatpush.msra.mxu0 %v1720
  %2057 = vmatpush.msra.mxu0 %v1712
  %2058 = vmatmul.f32.gmra.mxu0 %v1698
  %v2059 = vpop.f32.mrf.mxu0
  %v2060 = vadd.f32 %v1842, %v2059
  %2061 = vmatmul.f32.gmra.mxu0 %v1699
  %v2062 = vpop.f32.mrf.mxu0
  %v2063 = vadd.f32 %v1842, %v2062
  %2064 = vmatmul.f32.gmra.mxu0 %v1700
  %v2065 = vpop.f32.mrf.mxu0
  %v2066 = vadd.f32 %v1842, %v2065
  %2067 = vmatmul.f32.gmra.mxu0 %v1701
  %v2068 = vpop.f32.mrf.mxu0
  %v2069 = vadd.f32 %v1842, %v2068
  %2070 = vmatmul.f32.gmra.mxu0 %v1702
  %v2071 = vpop.f32.mrf.mxu0
  %v2072 = vadd.f32 %v1842, %v2071
  %2073 = vmatmul.f32.gmra.mxu0 %v1703
  %v2074 = vpop.f32.mrf.mxu0
  %v2075 = vadd.f32 %v1842, %v2074
  %2076 = vmatmul.f32.gmra.mxu0 %v1704
  %v2077 = vpop.f32.mrf.mxu0
  %v2078 = vadd.f32 %v1842, %v2077
  %2079 = vmatmul.f32.gmra.mxu0 %v1705
  %v2080 = vpop.f32.mrf.mxu0
  %v2081 = vadd.f32 %v1842, %v2080
  %2082 = vmatmul.f32.gmra.mxu0 %v1706
  %v2083 = vpop.f32.mrf.mxu0
  %v2084 = vadd.f32 %v1842, %v2083
  %2085 = vmatmul.f32.gmra.mxu0 %v1707
  %v2086 = vpop.f32.mrf.mxu0
  %v2087 = vadd.f32 %v1842, %v2086
  %2088 = vdwg.mxu0
  %2089 = vmatpush.msra.mxu0 %v1833
  %2090 = vmatpush.msra.mxu0 %v1825
  %2091 = vmatpush.msra.mxu0 %v1817
  %2092 = vmatpush.msra.mxu0 %v1809
  %2093 = vmatpush.msra.mxu0 %v1801
  %2094 = vmatpush.msra.mxu0 %v1793
  %2095 = vmatpush.msra.mxu0 %v1785
  %2096 = vmatpush.msra.mxu0 %v1777
  %2097 = vmatpush.msra.mxu0 %v1769
  %2098 = vmatpush.msra.mxu0 %v1761
  %2099 = vmatpush.msra.mxu0 %v1753
  %2100 = vmatpush.msra.mxu0 %v1745
  %2101 = vmatpush.msra.mxu0 %v1737
  %2102 = vmatpush.msra.mxu0 %v1729
  %2103 = vmatpush.msra.mxu0 %v1721
  %2104 = vmatpush.msra.mxu0 %v1713
  %2105 = vmatmul.f32.gmra.mxu0 %v1698
  %v2106 = vpop.f32.mrf.mxu0
  %v2107 = vadd.f32 %v1843, %v2106
  %2108 = vmatmul.f32.gmra.mxu0 %v1699
  %v2109 = vpop.f32.mrf.mxu0
  %v2110 = vadd.f32 %v1843, %v2109
  %2111 = vmatmul.f32.gmra.mxu0 %v1700
  %v2112 = vpop.f32.mrf.mxu0
  %v2113 = vadd.f32 %v1843, %v2112
  %2114 = vmatmul.f32.gmra.mxu0 %v1701
  %v2115 = vpop.f32.mrf.mxu0
  %v2116 = vadd.f32 %v1843, %v2115
  %2117 = vmatmul.f32.gmra.mxu0 %v1702
  %v2118 = vpop.f32.mrf.mxu0
  %v2119 = vadd.f32 %v1843, %v2118
  %2120 = vmatmul.f32.gmra.mxu0 %v1703
  %v2121 = vpop.f32.mrf.mxu0
  %v2122 = vadd.f32 %v1843, %v2121
  %2123 = vmatmul.f32.gmra.mxu0 %v1704
  %v2124 = vpop.f32.mrf.mxu0
  %v2125 = vadd.f32 %v1843, %v2124
  %2126 = vmatmul.f32.gmra.mxu0 %v1705
  %v2127 = vpop.f32.mrf.mxu0
  %v2128 = vadd.f32 %v1843, %v2127
  %2129 = vmatmul.f32.gmra.mxu0 %v1706
  %v2130 = vpop.f32.mrf.mxu0
  %v2131 = vadd.f32 %v1843, %v2130
  %2132 = vmatmul.f32.gmra.mxu0 %v1707
  %v2133 = vpop.f32.mrf.mxu0
  %v2134 = vadd.f32 %v1843, %v2133
  %2135 = vdwg.mxu0
  %2136 = vmatpush.msra.mxu0 %v1834
  %2137 = vmatpush.msra.mxu0 %v1826
  %2138 = vmatpush.msra.mxu0 %v1818
  %2139 = vmatpush.msra.mxu0 %v1810
  %2140 = vmatpush.msra.mxu0 %v1802
  %2141 = vmatpush.msra.mxu0 %v1794
  %2142 = vmatpush.msra.mxu0 %v1786
  %2143 = vmatpush.msra.mxu0 %v1778
  %2144 = vmatpush.msra.mxu0 %v1770
  %2145 = vmatpush.msra.mxu0 %v1762
  %2146 = vmatpush.msra.mxu0 %v1754
  %2147 = vmatpush.msra.mxu0 %v1746
  %2148 = vmatpush.msra.mxu0 %v1738
  %2149 = vmatpush.msra.mxu0 %v1730
  %2150 = vmatpush.msra.mxu0 %v1722
  %2151 = vmatpush.msra.mxu0 %v1714
  %2152 = vmatmul.f32.gmra.mxu0 %v1698
  %v2153 = vpop.f32.mrf.mxu0
  %v2154 = vadd.f32 %v1844, %v2153
  %2155 = vmatmul.f32.gmra.mxu0 %v1699
  %v2156 = vpop.f32.mrf.mxu0
  %v2157 = vadd.f32 %v1844, %v2156
  %2158 = vmatmul.f32.gmra.mxu0 %v1700
  %v2159 = vpop.f32.mrf.mxu0
  %v2160 = vadd.f32 %v1844, %v2159
  %2161 = vmatmul.f32.gmra.mxu0 %v1701
  %v2162 = vpop.f32.mrf.mxu0
  %v2163 = vadd.f32 %v1844, %v2162
  %2164 = vmatmul.f32.gmra.mxu0 %v1702
  %v2165 = vpop.f32.mrf.mxu0
  %v2166 = vadd.f32 %v1844, %v2165
  %2167 = vmatmul.f32.gmra.mxu0 %v1703
  %v2168 = vpop.f32.mrf.mxu0
  %v2169 = vadd.f32 %v1844, %v2168
  %2170 = vmatmul.f32.gmra.mxu0 %v1704
  %v2171 = vpop.f32.mrf.mxu0
  %v2172 = vadd.f32 %v1844, %v2171
  %2173 = vmatmul.f32.gmra.mxu0 %v1705
  %v2174 = vpop.f32.mrf.mxu0
  %v2175 = vadd.f32 %v1844, %v2174
  %2176 = vmatmul.f32.gmra.mxu0 %v1706
  %v2177 = vpop.f32.mrf.mxu0
  %v2178 = vadd.f32 %v1844, %v2177
  %2179 = vmatmul.f32.gmra.mxu0 %v1707
  %v2180 = vpop.f32.mrf.mxu0
  %v2181 = vadd.f32 %v1844, %v2180
  %2182 = vdwg.mxu0
  %2183 = vmatpush.msra.mxu0 %v1835
  %2184 = vmatpush.msra.mxu0 %v1827
  %2185 = vmatpush.msra.mxu0 %v1819
  %2186 = vmatpush.msra.mxu0 %v1811
  %2187 = vmatpush.msra.mxu0 %v1803
  %2188 = vmatpush.msra.mxu0 %v1795
  %2189 = vmatpush.msra.mxu0 %v1787
  %2190 = vmatpush.msra.mxu0 %v1779
  %2191 = vmatpush.msra.mxu0 %v1771
  %2192 = vmatpush.msra.mxu0 %v1763
  %2193 = vmatpush.msra.mxu0 %v1755
  %2194 = vmatpush.msra.mxu0 %v1747
  %2195 = vmatpush.msra.mxu0 %v1739
  %2196 = vmatpush.msra.mxu0 %v1731
  %2197 = vmatpush.msra.mxu0 %v1723
  %2198 = vmatpush.msra.mxu0 %v1715
  %2199 = vmatmul.f32.gmra.mxu0 %v1698
  %v2200 = vpop.f32.mrf.mxu0
  %v2201 = vadd.f32 %v1845, %v2200
  %2202 = vmatmul.f32.gmra.mxu0 %v1699
  %v2203 = vpop.f32.mrf.mxu0
  %v2204 = vadd.f32 %v1845, %v2203
  %2205 = vmatmul.f32.gmra.mxu0 %v1700
  %v2206 = vpop.f32.mrf.mxu0
  %v2207 = vadd.f32 %v1845, %v2206
  %2208 = vmatmul.f32.gmra.mxu0 %v1701
  %v2209 = vpop.f32.mrf.mxu0
  %v2210 = vadd.f32 %v1845, %v2209
  %2211 = vmatmul.f32.gmra.mxu0 %v1702
  %v2212 = vpop.f32.mrf.mxu0
  %v2213 = vadd.f32 %v1845, %v2212
  %2214 = vmatmul.f32.gmra.mxu0 %v1703
  %v2215 = vpop.f32.mrf.mxu0
  %v2216 = vadd.f32 %v1845, %v2215
  %2217 = vmatmul.f32.gmra.mxu0 %v1704
  %v2218 = vpop.f32.mrf.mxu0
  %v2219 = vadd.f32 %v1845, %v2218
  %2220 = vmatmul.f32.gmra.mxu0 %v1705
  %v2221 = vpop.f32.mrf.mxu0
  %v2222 = vadd.f32 %v1845, %v2221
  %2223 = vmatmul.f32.gmra.mxu0 %v1706
  %v2224 = vpop.f32.mrf.mxu0
  %v2225 = vadd.f32 %v1845, %v2224
  %2226 = vmatmul.f32.gmra.mxu0 %v1707
  %v2227 = vpop.f32.mrf.mxu0
  %v2228 = vadd.f32 %v1845, %v2227
  %2229 = vdwg.mxu0
  %2230 = vst [vmem:[#allocation2] sm:$0xff] %v1872
  %2231 = vst [vmem:[#allocation2 + $0x8] sm:$0xff] %v1919
  %2232 = vst [vmem:[#allocation2 + $0x10] sm:$0xff] %v1966
  %2233 = vst [vmem:[#allocation2 + $0x18] sm:$0xff] %v2013
  %2234 = vst [vmem:[#allocation2 + $0x20] sm:$0xff] %v2060
  %2235 = vst [vmem:[#allocation2 + $0x28] sm:$0xff] %v2107
  %2236 = vst [vmem:[#allocation2 + $0x30] sm:$0xff] %v2154
  %2237 = vst [vmem:[#allocation2 + $0x38] sm:$0xff] %v2201
  %2238 = vst [vmem:[#allocation2 + $0x40] sm:$0xff] %v1875
  %2239 = vst [vmem:[#allocation2 + $0x48] sm:$0xff] %v1922
  %2240 = vst [vmem:[#allocation2 + $0x50] sm:$0xff] %v1969
  %2241 = vst [vmem:[#allocation2 + $0x58] sm:$0xff] %v2016
  %2242 = vst [vmem:[#allocation2 + $0x60] sm:$0xff] %v2063
  %2243 = vst [vmem:[#allocation2 + $0x68] sm:$0xff] %v2110
  %2244 = vst [vmem:[#allocation2 + $0x70] sm:$0xff] %v2157
  %2245 = vst [vmem:[#allocation2 + $0x78] sm:$0xff] %v2204
  %2246 = vst [vmem:[#allocation2 + $0x80] sm:$0xff] %v1878
  %2247 = vst [vmem:[#allocation2 + $0x88] sm:$0xff] %v1925
  %2248 = vst [vmem:[#allocation2 + $0x90] sm:$0xff] %v1972
  %2249 = vst [vmem:[#allocation2 + $0x98] sm:$0xff] %v2019
  %2250 = vst [vmem:[#allocation2 + $0xa0] sm:$0xff] %v2066
  %2251 = vst [vmem:[#allocation2 + $0xa8] sm:$0xff] %v2113
  %2252 = vst [vmem:[#allocation2 + $0xb0] sm:$0xff] %v2160
  %2253 = vst [vmem:[#allocation2 + $0xb8] sm:$0xff] %v2207
  %2254 = vst [vmem:[#allocation2 + $0xc0] sm:$0xff] %v1881
  %2255 = vst [vmem:[#allocation2 + $0xc8] sm:$0xff] %v1928
  %2256 = vst [vmem:[#allocation2 + $0xd0] sm:$0xff] %v1975
  %2257 = vst [vmem:[#allocation2 + $0xd8] sm:$0xff] %v2022
  %2258 = vst [vmem:[#allocation2 + $0xe0] sm:$0xff] %v2069
  %2259 = vst [vmem:[#allocation2 + $0xe8] sm:$0xff] %v2116
  %2260 = vst [vmem:[#allocation2 + $0xf0] sm:$0xff] %v2163
  %2261 = vst [vmem:[#allocation2 + $0xf8] sm:$0xff] %v2210
  %2262 = vst [vmem:[#allocation2 + $0x100] sm:$0xff] %v1884
  %2263 = vst [vmem:[#allocation2 + $0x108] sm:$0xff] %v1931
  %2264 = vst [vmem:[#allocation2 + $0x110] sm:$0xff] %v1978
  %2265 = vst [vmem:[#allocation2 + $0x118] sm:$0xff] %v2025
  %2266 = vst [vmem:[#allocation2 + $0x120] sm:$0xff] %v2072
  %2267 = vst [vmem:[#allocation2 + $0x128] sm:$0xff] %v2119
  %2268 = vst [vmem:[#allocation2 + $0x130] sm:$0xff] %v2166
  %2269 = vst [vmem:[#allocation2 + $0x138] sm:$0xff] %v2213
  %2270 = vst [vmem:[#allocation2 + $0x140] sm:$0xff] %v1887
  %2271 = vst [vmem:[#allocation2 + $0x148] sm:$0xff] %v1934
  %2272 = vst [vmem:[#allocation2 + $0x150] sm:$0xff] %v1981
  %2273 = vst [vmem:[#allocation2 + $0x158] sm:$0xff] %v2028
  %2274 = vst [vmem:[#allocation2 + $0x160] sm:$0xff] %v2075
  %2275 = vst [vmem:[#allocation2 + $0x168] sm:$0xff] %v2122
  %2276 = vst [vmem:[#allocation2 + $0x170] sm:$0xff] %v2169
  %2277 = vst [vmem:[#allocation2 + $0x178] sm:$0xff] %v2216
  %2278 = vst [vmem:[#allocation2 + $0x180] sm:$0xff] %v1890
  %2279 = vst [vmem:[#allocation2 + $0x188] sm:$0xff] %v1937
  %2280 = vst [vmem:[#allocation2 + $0x190] sm:$0xff] %v1984
  %2281 = vst [vmem:[#allocation2 + $0x198] sm:$0xff] %v2031
  %2282 = vst [vmem:[#allocation2 + $0x1a0] sm:$0xff] %v2078
  %2283 = vst [vmem:[#allocation2 + $0x1a8] sm:$0xff] %v2125
  %2284 = vst [vmem:[#allocation2 + $0x1b0] sm:$0xff] %v2172
  %2285 = vst [vmem:[#allocation2 + $0x1b8] sm:$0xff] %v2219
  %2286 = vst [vmem:[#allocation2 + $0x1c0] sm:$0xff] %v1893
  %2287 = vst [vmem:[#allocation2 + $0x1c8] sm:$0xff] %v1940
  %2288 = vst [vmem:[#allocation2 + $0x1d0] sm:$0xff] %v1987
  %2289 = vst [vmem:[#allocation2 + $0x1d8] sm:$0xff] %v2034
  %2290 = vst [vmem:[#allocation2 + $0x1e0] sm:$0xff] %v2081
  %2291 = vst [vmem:[#allocation2 + $0x1e8] sm:$0xff] %v2128
  %2292 = vst [vmem:[#allocation2 + $0x1f0] sm:$0xff] %v2175
  %2293 = vst [vmem:[#allocation2 + $0x1f8] sm:$0xff] %v2222
  %2294 = vst [vmem:[#allocation2 + $0x200] sm:$0xff] %v1896
  %2295 = vst [vmem:[#allocation2 + $0x208] sm:$0xff] %v1943
  %2296 = vst [vmem:[#allocation2 + $0x210] sm:$0xff] %v1990
  %2297 = vst [vmem:[#allocation2 + $0x218] sm:$0xff] %v2037
  %2298 = vst [vmem:[#allocation2 + $0x220] sm:$0xff] %v2084
  %2299 = vst [vmem:[#allocation2 + $0x228] sm:$0xff] %v2131
  %2300 = vst [vmem:[#allocation2 + $0x230] sm:$0xff] %v2178
  %2301 = vst [vmem:[#allocation2 + $0x238] sm:$0xff] %v2225
  %2302 = vst [vmem:[#allocation2 + $0x240] sm:$0xff] %v1899
  %2303 = vst [vmem:[#allocation2 + $0x248] sm:$0xff] %v1946
  %2304 = vst [vmem:[#allocation2 + $0x250] sm:$0xff] %v1993
  %2305 = vst [vmem:[#allocation2 + $0x258] sm:$0xff] %v2040
  %2306 = vst [vmem:[#allocation2 + $0x260] sm:$0xff] %v2087
  %2307 = vst [vmem:[#allocation2 + $0x268] sm:$0xff] %v2134
  %2308 = vst [vmem:[#allocation2 + $0x270] sm:$0xff] %v2181
  %2309 = vst [vmem:[#allocation2 + $0x278] sm:$0xff] %v2228
  %v2310 = vld [vmem:[%s5] sm:$0xff]
  %v2311 = vld [vmem:[%s5 + $0x8] sm:$0xff]
  %v2312 = vld [vmem:[%s5 + $0x10] sm:$0xff]
  %v2313 = vld [vmem:[%s5 + $0x18] sm:$0xff]
  %v2314 = vld [vmem:[%s5 + $0x20] sm:$0xff]
  %v2315 = vld [vmem:[%s5 + $0x28] sm:$0xff]
  %v2316 = vld [vmem:[%s5 + $0x30] sm:$0xff]
  %v2317 = vld [vmem:[%s5 + $0x38] sm:$0xff]
  %v2318 = vld [vmem:[%s5 + $0x40] sm:$0xff]
  %v2319 = vld [vmem:[%s5 + $0x48] sm:$0xff]
  %v2320 = vld [vmem:[%s5 + $0x50] sm:$0xff]
  %v2321 = vld [vmem:[%s5 + $0x58] sm:$0xff]
  %v2322 = vld [vmem:[%s5 + $0x60] sm:$0xff]
  %v2323 = vld [vmem:[%s5 + $0x68] sm:$0xff]
  %v2324 = vld [vmem:[%s5 + $0x70] sm:$0xff]
  %v2325 = vld [vmem:[%s5 + $0x78] sm:$0xff]
  %v2326 = vld [vmem:[%s5 + $0x80] sm:$0xff]
  %v2327 = vld [vmem:[%s5 + $0x88] sm:$0xff]
  %v2328 = vld [vmem:[%s5 + $0x90] sm:$0xff]
  %v2329 = vld [vmem:[%s5 + $0x98] sm:$0xff]
  %v2330 = vld [vmem:[%s5 + $0xa0] sm:$0xff]
  %v2331 = vld [vmem:[%s5 + $0xa8] sm:$0xff]
  %v2332 = vld [vmem:[%s5 + $0xb0] sm:$0xff]
  %v2333 = vld [vmem:[%s5 + $0xb8] sm:$0xff]
  %v2334 = vld [vmem:[%s5 + $0xc0] sm:$0xff]
  %v2335 = vld [vmem:[%s5 + $0xc8] sm:$0xff]
  %v2336 = vld [vmem:[%s5 + $0xd0] sm:$0xff]
  %v2337 = vld [vmem:[%s5 + $0xd8] sm:$0xff]
  %v2338 = vld [vmem:[%s5 + $0xe0] sm:$0xff]
  %v2339 = vld [vmem:[%s5 + $0xe8] sm:$0xff]
  %v2340 = vld [vmem:[%s5 + $0xf0] sm:$0xff]
  %v2341 = vld [vmem:[%s5 + $0xf8] sm:$0xff]
  %v2342 = vld [vmem:[%s5 + $0x100] sm:$0xff]
  %v2343 = vld [vmem:[%s5 + $0x108] sm:$0xff]
  %v2344 = vld [vmem:[%s5 + $0x110] sm:$0xff]
  %v2345 = vld [vmem:[%s5 + $0x118] sm:$0xff]
  %v2346 = vld [vmem:[%s5 + $0x120] sm:$0xff]
  %v2347 = vld [vmem:[%s5 + $0x128] sm:$0xff]
  %v2348 = vld [vmem:[%s5 + $0x130] sm:$0xff]
  %v2349 = vld [vmem:[%s5 + $0x138] sm:$0xff]
  %v2350 = vld [vmem:[%s5 + $0x140] sm:$0xff]
  %v2351 = vld [vmem:[%s5 + $0x148] sm:$0xff]
  %v2352 = vld [vmem:[%s5 + $0x150] sm:$0xff]
  %v2353 = vld [vmem:[%s5 + $0x158] sm:$0xff]
  %v2354 = vld [vmem:[%s5 + $0x160] sm:$0xff]
  %v2355 = vld [vmem:[%s5 + $0x168] sm:$0xff]
  %v2356 = vld [vmem:[%s5 + $0x170] sm:$0xff]
  %v2357 = vld [vmem:[%s5 + $0x178] sm:$0xff]
  %v2358 = vld [vmem:[%s5 + $0x180] sm:$0xff]
  %v2359 = vld [vmem:[%s5 + $0x188] sm:$0xff]
  %v2360 = vld [vmem:[%s5 + $0x190] sm:$0xff]
  %v2361 = vld [vmem:[%s5 + $0x198] sm:$0xff]
  %v2362 = vld [vmem:[%s5 + $0x1a0] sm:$0xff]
  %v2363 = vld [vmem:[%s5 + $0x1a8] sm:$0xff]
  %v2364 = vld [vmem:[%s5 + $0x1b0] sm:$0xff]
  %v2365 = vld [vmem:[%s5 + $0x1b8] sm:$0xff]
  %v2366 = vld [vmem:[%s5 + $0x1c0] sm:$0xff]
  %v2367 = vld [vmem:[%s5 + $0x1c8] sm:$0xff]
  %v2368 = vld [vmem:[%s5 + $0x1d0] sm:$0xff]
  %v2369 = vld [vmem:[%s5 + $0x1d8] sm:$0xff]
  %v2370 = vld [vmem:[%s5 + $0x1e0] sm:$0xff]
  %v2371 = vld [vmem:[%s5 + $0x1e8] sm:$0xff]
  %v2372 = vld [vmem:[%s5 + $0x1f0] sm:$0xff]
  %v2373 = vld [vmem:[%s5 + $0x1f8] sm:$0xff]
  %v2374 = vld [vmem:[%s6] sm:$0xff]
  %v2375 = vld [vmem:[%s6 + $0x8] sm:$0xff]
  %v2376 = vld [vmem:[%s6 + $0x10] sm:$0xff]
  %v2377 = vld [vmem:[%s6 + $0x18] sm:$0xff]
  %v2378 = vld [vmem:[%s6 + $0x20] sm:$0xff]
  %v2379 = vld [vmem:[%s6 + $0x28] sm:$0xff]
  %v2380 = vld [vmem:[%s6 + $0x30] sm:$0xff]
  %v2381 = vld [vmem:[%s6 + $0x38] sm:$0xff]
  %v2382 = vld [vmem:[%s6 + $0x40] sm:$0xff]
  %v2383 = vld [vmem:[%s6 + $0x48] sm:$0xff]
  %v2384 = vld [vmem:[%s6 + $0x50] sm:$0xff]
  %v2385 = vld [vmem:[%s6 + $0x58] sm:$0xff]
  %v2386 = vld [vmem:[%s6 + $0x60] sm:$0xff]
  %v2387 = vld [vmem:[%s6 + $0x68] sm:$0xff]
  %v2388 = vld [vmem:[%s6 + $0x70] sm:$0xff]
  %v2389 = vld [vmem:[%s6 + $0x78] sm:$0xff]
  %v2390 = vld [vmem:[%s6 + $0x80] sm:$0xff]
  %v2391 = vld [vmem:[%s6 + $0x88] sm:$0xff]
  %v2392 = vld [vmem:[%s6 + $0x90] sm:$0xff]
  %v2393 = vld [vmem:[%s6 + $0x98] sm:$0xff]
  %v2394 = vld [vmem:[%s6 + $0xa0] sm:$0xff]
  %v2395 = vld [vmem:[%s6 + $0xa8] sm:$0xff]
  %v2396 = vld [vmem:[%s6 + $0xb0] sm:$0xff]
  %v2397 = vld [vmem:[%s6 + $0xb8] sm:$0xff]
  %v2398 = vld [vmem:[%s6 + $0xc0] sm:$0xff]
  %v2399 = vld [vmem:[%s6 + $0xc8] sm:$0xff]
  %v2400 = vld [vmem:[%s6 + $0xd0] sm:$0xff]
  %v2401 = vld [vmem:[%s6 + $0xd8] sm:$0xff]
  %v2402 = vld [vmem:[%s6 + $0xe0] sm:$0xff]
  %v2403 = vld [vmem:[%s6 + $0xe8] sm:$0xff]
  %v2404 = vld [vmem:[%s6 + $0xf0] sm:$0xff]
  %v2405 = vld [vmem:[%s6 + $0xf8] sm:$0xff]
  %v2406 = vld [vmem:[%s6 + $0x100] sm:$0xff]
  %v2407 = vld [vmem:[%s6 + $0x108] sm:$0xff]
  %v2408 = vld [vmem:[%s6 + $0x110] sm:$0xff]
  %v2409 = vld [vmem:[%s6 + $0x118] sm:$0xff]
  %v2410 = vld [vmem:[%s6 + $0x120] sm:$0xff]
  %v2411 = vld [vmem:[%s6 + $0x128] sm:$0xff]
  %v2412 = vld [vmem:[%s6 + $0x130] sm:$0xff]
  %v2413 = vld [vmem:[%s6 + $0x138] sm:$0xff]
  %v2414 = vld [vmem:[%s6 + $0x140] sm:$0xff]
  %v2415 = vld [vmem:[%s6 + $0x148] sm:$0xff]
  %v2416 = vld [vmem:[%s6 + $0x150] sm:$0xff]
  %v2417 = vld [vmem:[%s6 + $0x158] sm:$0xff]
  %v2418 = vld [vmem:[%s6 + $0x160] sm:$0xff]
  %v2419 = vld [vmem:[%s6 + $0x168] sm:$0xff]
  %v2420 = vld [vmem:[%s6 + $0x170] sm:$0xff]
  %v2421 = vld [vmem:[%s6 + $0x178] sm:$0xff]
  %v2422 = vld [vmem:[%s6 + $0x180] sm:$0xff]
  %v2423 = vld [vmem:[%s6 + $0x188] sm:$0xff]
  %v2424 = vld [vmem:[%s6 + $0x190] sm:$0xff]
  %v2425 = vld [vmem:[%s6 + $0x198] sm:$0xff]
  %v2426 = vld [vmem:[%s6 + $0x1a0] sm:$0xff]
  %v2427 = vld [vmem:[%s6 + $0x1a8] sm:$0xff]
  %v2428 = vld [vmem:[%s6 + $0x1b0] sm:$0xff]
  %v2429 = vld [vmem:[%s6 + $0x1b8] sm:$0xff]
  %v2430 = vld [vmem:[%s6 + $0x1c0] sm:$0xff]
  %v2431 = vld [vmem:[%s6 + $0x1c8] sm:$0xff]
  %v2432 = vld [vmem:[%s6 + $0x1d0] sm:$0xff]
  %v2433 = vld [vmem:[%s6 + $0x1d8] sm:$0xff]
  %v2434 = vld [vmem:[%s6 + $0x1e0] sm:$0xff]
  %v2435 = vld [vmem:[%s6 + $0x1e8] sm:$0xff]
  %v2436 = vld [vmem:[%s6 + $0x1f0] sm:$0xff]
  %v2437 = vld [vmem:[%s6 + $0x1f8] sm:$0xff]
  %v2438 = vld [vmem:[#allocation2] sm:$0xff]
  %v2439 = vld [vmem:[#allocation2 + $0x8] sm:$0xff]
  %v2440 = vld [vmem:[#allocation2 + $0x10] sm:$0xff]
  %v2441 = vld [vmem:[#allocation2 + $0x18] sm:$0xff]
  %2442 = vmatpush.msra.mxu0 %v2370
  %2443 = vmatpush.msra.mxu0 %v2366
  %2444 = vmatpush.msra.mxu0 %v2362
  %2445 = vmatpush.msra.mxu0 %v2358
  %2446 = vmatpush.msra.mxu0 %v2354
  %2447 = vmatpush.msra.mxu0 %v2350
  %2448 = vmatpush.msra.mxu0 %v2346
  %2449 = vmatpush.msra.mxu0 %v2342
  %2450 = vmatpush.msra.mxu0 %v2338
  %2451 = vmatpush.msra.mxu0 %v2334
  %2452 = vmatpush.msra.mxu0 %v2330
  %2453 = vmatpush.msra.mxu0 %v2326
  %2454 = vmatpush.msra.mxu0 %v2322
  %2455 = vmatpush.msra.mxu0 %v2318
  %2456 = vmatpush.msra.mxu0 %v2314
  %2457 = vmatpush.msra.mxu0 %v2310
  %2458 = vmatmul.f32.gmra.mxu0 0.0
  %v2459 = vpop.f32.mrf.mxu0
  %v2460 = vadd.f32 0.0, %v2459
  %2461 = vdwg.mxu0
  %2462 = vmatpush.msra.mxu0 %v2371
  %2463 = vmatpush.msra.mxu0 %v2367
  %2464 = vmatpush.msra.mxu0 %v2363
  %2465 = vmatpush.msra.mxu0 %v2359
  %2466 = vmatpush.msra.mxu0 %v2355
  %2467 = vmatpush.msra.mxu0 %v2351
  %2468 = vmatpush.msra.mxu0 %v2347
  %2469 = vmatpush.msra.mxu0 %v2343
  %2470 = vmatpush.msra.mxu0 %v2339
  %2471 = vmatpush.msra.mxu0 %v2335
  %2472 = vmatpush.msra.mxu0 %v2331
  %2473 = vmatpush.msra.mxu0 %v2327
  %2474 = vmatpush.msra.mxu0 %v2323
  %2475 = vmatpush.msra.mxu0 %v2319
  %2476 = vmatpush.msra.mxu0 %v2315
  %2477 = vmatpush.msra.mxu0 %v2311
  %2478 = vmatmul.f32.gmra.mxu0 0.0
  %v2479 = vpop.f32.mrf.mxu0
  %v2480 = vadd.f32 0.0, %v2479
  %2481 = vdwg.mxu0
  %2482 = vmatpush.msra.mxu0 %v2372
  %2483 = vmatpush.msra.mxu0 %v2368
  %2484 = vmatpush.msra.mxu0 %v2364
  %2485 = vmatpush.msra.mxu0 %v2360
  %2486 = vmatpush.msra.mxu0 %v2356
  %2487 = vmatpush.msra.mxu0 %v2352
  %2488 = vmatpush.msra.mxu0 %v2348
  %2489 = vmatpush.msra.mxu0 %v2344
  %2490 = vmatpush.msra.mxu0 %v2340
  %2491 = vmatpush.msra.mxu0 %v2336
  %2492 = vmatpush.msra.mxu0 %v2332
  %2493 = vmatpush.msra.mxu0 %v2328
  %2494 = vmatpush.msra.mxu0 %v2324
  %2495 = vmatpush.msra.mxu0 %v2320
  %2496 = vmatpush.msra.mxu0 %v2316
  %2497 = vmatpush.msra.mxu0 %v2312
  %2498 = vmatmul.f32.gmra.mxu0 0.0
  %v2499 = vpop.f32.mrf.mxu0
  %v2500 = vadd.f32 0.0, %v2499
  %2501 = vdwg.mxu0
  %2502 = vmatpush.msra.mxu0 %v2373
  %2503 = vmatpush.msra.mxu0 %v2369
  %2504 = vmatpush.msra.mxu0 %v2365
  %2505 = vmatpush.msra.mxu0 %v2361
  %2506 = vmatpush.msra.mxu0 %v2357
  %2507 = vmatpush.msra.mxu0 %v2353
  %2508 = vmatpush.msra.mxu0 %v2349
  %2509 = vmatpush.msra.mxu0 %v2345
  %2510 = vmatpush.msra.mxu0 %v2341
  %2511 = vmatpush.msra.mxu0 %v2337
  %2512 = vmatpush.msra.mxu0 %v2333
  %2513 = vmatpush.msra.mxu0 %v2329
  %2514 = vmatpush.msra.mxu0 %v2325
  %2515 = vmatpush.msra.mxu0 %v2321
  %2516 = vmatpush.msra.mxu0 %v2317
  %2517 = vmatpush.msra.mxu0 %v2313
  %2518 = vmatmul.f32.gmra.mxu0 0.0
  %v2519 = vpop.f32.mrf.mxu0
  %v2520 = vadd.f32 0.0, %v2519
  %2521 = vdwg.mxu0
  %v2522 = vadd.f32 %v2438, %v2460
  %v2523 = vadd.f32 %v2439, %v2480
  %v2524 = vadd.f32 %v2440, %v2500
  %v2525 = vadd.f32 %v2441, %v2520
  %v2526 = vld [vmem:[#allocation2 + $0x260] sm:$0xff]
  %v2527 = vld [vmem:[#allocation2 + $0x268] sm:$0xff]
  %v2528 = vld [vmem:[#allocation2 + $0x270] sm:$0xff]
  %v2529 = vld [vmem:[#allocation2 + $0x278] sm:$0xff]
  %2530 = vmatpush.msra.mxu0 %v2434
  %2531 = vmatpush.msra.mxu0 %v2430
  %2532 = vmatpush.msra.mxu0 %v2426
  %2533 = vmatpush.msra.mxu0 %v2422
  %2534 = vmatpush.msra.mxu0 %v2418
  %2535 = vmatpush.msra.mxu0 %v2414
  %2536 = vmatpush.msra.mxu0 %v2410
  %2537 = vmatpush.msra.mxu0 %v2406
  %2538 = vmatpush.msra.mxu0 %v2402
  %2539 = vmatpush.msra.mxu0 %v2398
  %2540 = vmatpush.msra.mxu0 %v2394
  %2541 = vmatpush.msra.mxu0 %v2390
  %2542 = vmatpush.msra.mxu0 %v2386
  %2543 = vmatpush.msra.mxu0 %v2382
  %2544 = vmatpush.msra.mxu0 %v2378
  %2545 = vmatpush.msra.mxu0 %v2374
  %2546 = vmatmul.f32.gmra.mxu0 0.0
  %v2547 = vpop.f32.mrf.mxu0
  %v2548 = vadd.f32 0.0, %v2547
  %2549 = vdwg.mxu0
  %2550 = vmatpush.msra.mxu0 %v2435
  %2551 = vmatpush.msra.mxu0 %v2431
  %2552 = vmatpush.msra.mxu0 %v2427
  %2553 = vmatpush.msra.mxu0 %v2423
  %2554 = vmatpush.msra.mxu0 %v2419
  %2555 = vmatpush.msra.mxu0 %v2415
  %2556 = vmatpush.msra.mxu0 %v2411
  %2557 = vmatpush.msra.mxu0 %v2407
  %2558 = vmatpush.msra.mxu0 %v2403
  %2559 = vmatpush.msra.mxu0 %v2399
  %2560 = vmatpush.msra.mxu0 %v2395
  %2561 = vmatpush.msra.mxu0 %v2391
  %2562 = vmatpush.msra.mxu0 %v2387
  %2563 = vmatpush.msra.mxu0 %v2383
  %2564 = vmatpush.msra.mxu0 %v2379
  %2565 = vmatpush.msra.mxu0 %v2375
  %2566 = vmatmul.f32.gmra.mxu0 0.0
  %v2567 = vpop.f32.mrf.mxu0
  %v2568 = vadd.f32 0.0, %v2567
  %2569 = vdwg.mxu0
  %2570 = vmatpush.msra.mxu0 %v2436
  %2571 = vmatpush.msra.mxu0 %v2432
  %2572 = vmatpush.msra.mxu0 %v2428
  %2573 = vmatpush.msra.mxu0 %v2424
  %2574 = vmatpush.msra.mxu0 %v2420
  %2575 = vmatpush.msra.mxu0 %v2416
  %2576 = vmatpush.msra.mxu0 %v2412
  %2577 = vmatpush.msra.mxu0 %v2408
  %2578 = vmatpush.msra.mxu0 %v2404
  %2579 = vmatpush.msra.mxu0 %v2400
  %2580 = vmatpush.msra.mxu0 %v2396
  %2581 = vmatpush.msra.mxu0 %v2392
  %2582 = vmatpush.msra.mxu0 %v2388
  %2583 = vmatpush.msra.mxu0 %v2384
  %2584 = vmatpush.msra.mxu0 %v2380
  %2585 = vmatpush.msra.mxu0 %v2376
  %2586 = vmatmul.f32.gmra.mxu0 0.0
  %v2587 = vpop.f32.mrf.mxu0
  %v2588 = vadd.f32 0.0, %v2587
  %2589 = vdwg.mxu0
  %2590 = vmatpush.msra.mxu0 %v2437
  %2591 = vmatpush.msra.mxu0 %v2433
  %2592 = vmatpush.msra.mxu0 %v2429
  %2593 = vmatpush.msra.mxu0 %v2425
  %2594 = vmatpush.msra.mxu0 %v2421
  %2595 = vmatpush.msra.mxu0 %v2417
  %2596 = vmatpush.msra.mxu0 %v2413
  %2597 = vmatpush.msra.mxu0 %v2409
  %2598 = vmatpush.msra.mxu0 %v2405
  %2599 = vmatpush.msra.mxu0 %v2401
  %2600 = vmatpush.msra.mxu0 %v2397
  %2601 = vmatpush.msra.mxu0 %v2393
  %2602 = vmatpush.msra.mxu0 %v2389
  %2603 = vmatpush.msra.mxu0 %v2385
  %2604 = vmatpush.msra.mxu0 %v2381
  %2605 = vmatpush.msra.mxu0 %v2377
  %2606 = vmatmul.f32.gmra.mxu0 0.0
  %v2607 = vpop.f32.mrf.mxu0
  %v2608 = vadd.f32 0.0, %v2607
  %2609 = vdwg.mxu0
  %v2610 = vadd.f32 %v2526, %v2548
  %v2611 = vadd.f32 %v2527, %v2568
  %v2612 = vadd.f32 %v2528, %v2588
  %v2613 = vadd.f32 %v2529, %v2608
  %v2614 = vxor.u32 %v2522, 2147483648
  %v2615 = vxor.u32 %v2523, 2147483648
  %v2616 = vxor.u32 %v2524, 2147483648
  %v2617 = vmul.f32 %v2614, 1.442695
  %v2618 = vpow.pop %v2617
  %v2619 = vmul.f32 %v2615, 1.442695
  %v2620 = vpow.pop %v2619
  %v2621 = vmul.f32 %v2616, 1.442695
  %v2622 = vpow.pop %v2621
  %v2623 = vadd.f32 %v2618, 1.0
  %v2624 = vadd.f32 %v2620, 1.0
  %v2625 = vadd.f32 %v2622, 1.0
  %v2626 = vrcp.pop %v2623
  %v2627 = vmul.f32 %v2623, %v2626
  %v2628 = vsub.f32 1.0, %v2627
  %v2629 = vmul.f32 %v2626, %v2628
  %v2630 = vadd.f32 %v2626, %v2629
  %vm2631 = vweird.f32 %v2623
  %vm2632 = vweird.f32 %v2626
  %vm2633 = vmor %vm2631, %vm2632
  %v2634 = vsel %vm2633, %v2626, %v2630
  %v2635 = vand.u32 2147483647, %v2623
  %vm2636 = vcmp.eq.f32.partialorder %v2635, 8.507059e+37
  %v2637 = vand.u32 %v2623, 2147483648
  %v2638 = vor.u32 1.1754944e-38, %v2637
  %v2639 = vsel %vm2636, %v2638, %v2634
  %v2640 = vmul.f32 1.0, %v2639
  %v2641 = vrcp.pop %v2624
  %v2642 = vmul.f32 %v2624, %v2641
  %v2643 = vsub.f32 1.0, %v2642
  %v2644 = vmul.f32 %v2641, %v2643
  %v2645 = vadd.f32 %v2641, %v2644
  %vm2646 = vweird.f32 %v2624
  %vm2647 = vweird.f32 %v2641
  %vm2648 = vmor %vm2646, %vm2647
  %v2649 = vsel %vm2648, %v2641, %v2645
  %v2650 = vand.u32 2147483647, %v2624
  %vm2651 = vcmp.eq.f32.partialorder %v2650, 8.507059e+37
  %v2652 = vand.u32 %v2624, 2147483648
  %v2653 = vor.u32 1.1754944e-38, %v2652
  %v2654 = vsel %vm2651, %v2653, %v2649
  %v2655 = vmul.f32 1.0, %v2654
  %v2656 = vrcp.pop %v2625
  %v2657 = vmul.f32 %v2625, %v2656
  %v2658 = vsub.f32 1.0, %v2657
  %v2659 = vmul.f32 %v2656, %v2658
  %v2660 = vadd.f32 %v2656, %v2659
  %vm2661 = vweird.f32 %v2625
  %vm2662 = vweird.f32 %v2656
  %vm2663 = vmor %vm2661, %vm2662
  %v2664 = vsel %vm2663, %v2656, %v2660
  %v2665 = vand.u32 2147483647, %v2625
  %vm2666 = vcmp.eq.f32.partialorder %v2665, 8.507059e+37
  %v2667 = vand.u32 %v2625, 2147483648
  %v2668 = vor.u32 1.1754944e-38, %v2667
  %v2669 = vsel %vm2666, %v2668, %v2664
  %v2670 = vmul.f32 1.0, %v2669
  %v2671 = vtanh.pop %v2525
  %v2672 = vmul.f32 %v2655, 0.0
  %v2673 = vmul.f32 %v2640, %v2671
  %v2674 = vadd.f32 %v2672, %v2673
  %v2675 = vtanh.pop %v2674
  %v2676 = vmul.f32 %v2670, %v2675
  %v2677 = vxor.u32 %v2610, 2147483648
  %v2678 = vxor.u32 %v2611, 2147483648
  %v2679 = vxor.u32 %v2612, 2147483648
  %v2680 = vmul.f32 %v2677, 1.442695
  %v2681 = vpow.pop %v2680
  %v2682 = vmul.f32 %v2678, 1.442695
  %v2683 = vpow.pop %v2682
  %v2684 = vmul.f32 %v2679, 1.442695
  %v2685 = vpow.pop %v2684
  %v2686 = vadd.f32 %v2681, 1.0
  %v2687 = vadd.f32 %v2683, 1.0
  %v2688 = vadd.f32 %v2685, 1.0
  %v2689 = vrcp.pop %v2686
  %v2690 = vmul.f32 %v2686, %v2689
  %v2691 = vsub.f32 1.0, %v2690
  %v2692 = vmul.f32 %v2689, %v2691
  %v2693 = vadd.f32 %v2689, %v2692
  %vm2694 = vweird.f32 %v2686
  %vm2695 = vweird.f32 %v2689
  %vm2696 = vmor %vm2694, %vm2695
  %v2697 = vsel %vm2696, %v2689, %v2693
  %v2698 = vand.u32 2147483647, %v2686
  %vm2699 = vcmp.eq.f32.partialorder %v2698, 8.507059e+37
  %v2700 = vand.u32 %v2686, 2147483648
  %v2701 = vor.u32 1.1754944e-38, %v2700
  %v2702 = vsel %vm2699, %v2701, %v2697
  %v2703 = vmul.f32 1.0, %v2702
  %v2704 = vrcp.pop %v2687
  %v2705 = vmul.f32 %v2687, %v2704
  %v2706 = vsub.f32 1.0, %v2705
  %v2707 = vmul.f32 %v2704, %v2706
  %v2708 = vadd.f32 %v2704, %v2707
  %vm2709 = vweird.f32 %v2687
  %vm2710 = vweird.f32 %v2704
  %vm2711 = vmor %vm2709, %vm2710
  %v2712 = vsel %vm2711, %v2704, %v2708
  %v2713 = vand.u32 2147483647, %v2687
  %vm2714 = vcmp.eq.f32.partialorder %v2713, 8.507059e+37
  %v2715 = vand.u32 %v2687, 2147483648
  %v2716 = vor.u32 1.1754944e-38, %v2715
  %v2717 = vsel %vm2714, %v2716, %v2712
  %v2718 = vmul.f32 1.0, %v2717
  %v2719 = vrcp.pop %v2688
  %v2720 = vmul.f32 %v2688, %v2719
  %v2721 = vsub.f32 1.0, %v2720
  %v2722 = vmul.f32 %v2719, %v2721
  %v2723 = vadd.f32 %v2719, %v2722
  %vm2724 = vweird.f32 %v2688
  %vm2725 = vweird.f32 %v2719
  %vm2726 = vmor %vm2724, %vm2725
  %v2727 = vsel %vm2726, %v2719, %v2723
  %v2728 = vand.u32 2147483647, %v2688
  %vm2729 = vcmp.eq.f32.partialorder %v2728, 8.507059e+37
  %v2730 = vand.u32 %v2688, 2147483648
  %v2731 = vor.u32 1.1754944e-38, %v2730
  %v2732 = vsel %vm2729, %v2731, %v2727
  %v2733 = vmul.f32 1.0, %v2732
  %v2734 = vtanh.pop %v2613
  %v2735 = vmul.f32 %v2718, 0.0
  %v2736 = vmul.f32 %v2703, %v2734
  %v2737 = vadd.f32 %v2735, %v2736
  %v2738 = vtanh.pop %v2737
  %v2739 = vmul.f32 %v2733, %v2738
  %2740 = vst [vmem:[#allocation3] sm:$0xff] %v2676
  %2741 = vst [vmem:[#allocation3 + $0x48] sm:$0xff] %v2739
  %v2742 = vld [vmem:[#allocation2 + $0x40] sm:$0xff]
  %v2743 = vld [vmem:[#allocation2 + $0x48] sm:$0xff]
  %v2744 = vld [vmem:[#allocation2 + $0x50] sm:$0xff]
  %v2745 = vld [vmem:[#allocation2 + $0x58] sm:$0xff]
  %2746 = vmatpush.msra.mxu0 %v2370
  %2747 = vmatpush.msra.mxu0 %v2366
  %2748 = vmatpush.msra.mxu0 %v2362
  %2749 = vmatpush.msra.mxu0 %v2358
  %2750 = vmatpush.msra.mxu0 %v2354
  %2751 = vmatpush.msra.mxu0 %v2350
  %2752 = vmatpush.msra.mxu0 %v2346
  %2753 = vmatpush.msra.mxu0 %v2342
  %2754 = vmatpush.msra.mxu0 %v2338
  %2755 = vmatpush.msra.mxu0 %v2334
  %2756 = vmatpush.msra.mxu0 %v2330
  %2757 = vmatpush.msra.mxu0 %v2326
  %2758 = vmatpush.msra.mxu0 %v2322
  %2759 = vmatpush.msra.mxu0 %v2318
  %2760 = vmatpush.msra.mxu0 %v2314
  %2761 = vmatpush.msra.mxu0 %v2310
  %2762 = vmatmul.f32.gmra.mxu0 %v2676
  %v2763 = vpop.f32.mrf.mxu0
  %v2764 = vadd.f32 0.0, %v2763
  %2765 = vdwg.mxu0
  %2766 = vmatpush.msra.mxu0 %v2371
  %2767 = vmatpush.msra.mxu0 %v2367
  %2768 = vmatpush.msra.mxu0 %v2363
  %2769 = vmatpush.msra.mxu0 %v2359
  %2770 = vmatpush.msra.mxu0 %v2355
  %2771 = vmatpush.msra.mxu0 %v2351
  %2772 = vmatpush.msra.mxu0 %v2347
  %2773 = vmatpush.msra.mxu0 %v2343
  %2774 = vmatpush.msra.mxu0 %v2339
  %2775 = vmatpush.msra.mxu0 %v2335
  %2776 = vmatpush.msra.mxu0 %v2331
  %2777 = vmatpush.msra.mxu0 %v2327
  %2778 = vmatpush.msra.mxu0 %v2323
  %2779 = vmatpush.msra.mxu0 %v2319
  %2780 = vmatpush.msra.mxu0 %v2315
  %2781 = vmatpush.msra.mxu0 %v2311
  %2782 = vmatmul.f32.gmra.mxu0 %v2676
  %v2783 = vpop.f32.mrf.mxu0
  %v2784 = vadd.f32 0.0, %v2783
  %2785 = vdwg.mxu0
  %2786 = vmatpush.msra.mxu0 %v2372
  %2787 = vmatpush.msra.mxu0 %v2368
  %2788 = vmatpush.msra.mxu0 %v2364
  %2789 = vmatpush.msra.mxu0 %v2360
  %2790 = vmatpush.msra.mxu0 %v2356
  %2791 = vmatpush.msra.mxu0 %v2352
  %2792 = vmatpush.msra.mxu0 %v2348
  %2793 = vmatpush.msra.mxu0 %v2344
  %2794 = vmatpush.msra.mxu0 %v2340
  %2795 = vmatpush.msra.mxu0 %v2336
  %2796 = vmatpush.msra.mxu0 %v2332
  %2797 = vmatpush.msra.mxu0 %v2328
  %2798 = vmatpush.msra.mxu0 %v2324
  %2799 = vmatpush.msra.mxu0 %v2320
  %2800 = vmatpush.msra.mxu0 %v2316
  %2801 = vmatpush.msra.mxu0 %v2312
  %2802 = vmatmul.f32.gmra.mxu0 %v2676
  %v2803 = vpop.f32.mrf.mxu0
  %v2804 = vadd.f32 0.0, %v2803
  %2805 = vdwg.mxu0
  %2806 = vmatpush.msra.mxu0 %v2373
  %2807 = vmatpush.msra.mxu0 %v2369
  %2808 = vmatpush.msra.mxu0 %v2365
  %2809 = vmatpush.msra.mxu0 %v2361
  %2810 = vmatpush.msra.mxu0 %v2357
  %2811 = vmatpush.msra.mxu0 %v2353
  %2812 = vmatpush.msra.mxu0 %v2349
  %2813 = vmatpush.msra.mxu0 %v2345
  %2814 = vmatpush.msra.mxu0 %v2341
  %2815 = vmatpush.msra.mxu0 %v2337
  %2816 = vmatpush.msra.mxu0 %v2333
  %2817 = vmatpush.msra.mxu0 %v2329
  %2818 = vmatpush.msra.mxu0 %v2325
  %2819 = vmatpush.msra.mxu0 %v2321
  %2820 = vmatpush.msra.mxu0 %v2317
  %2821 = vmatpush.msra.mxu0 %v2313
  %2822 = vmatmul.f32.gmra.mxu0 %v2676
  %v2823 = vpop.f32.mrf.mxu0
  %v2824 = vadd.f32 0.0, %v2823
  %2825 = vdwg.mxu0
  %v2826 = vadd.f32 %v2742, %v2764
  %v2827 = vadd.f32 %v2743, %v2784
  %v2828 = vadd.f32 %v2744, %v2804
  %v2829 = vadd.f32 %v2745, %v2824
  %v2830 = vld [vmem:[#allocation2 + $0x220] sm:$0xff]
  %v2831 = vld [vmem:[#allocation2 + $0x228] sm:$0xff]
  %v2832 = vld [vmem:[#allocation2 + $0x230] sm:$0xff]
  %v2833 = vld [vmem:[#allocation2 + $0x238] sm:$0xff]
  %2834 = vmatpush.msra.mxu0 %v2434
  %2835 = vmatpush.msra.mxu0 %v2430
  %2836 = vmatpush.msra.mxu0 %v2426
  %2837 = vmatpush.msra.mxu0 %v2422
  %2838 = vmatpush.msra.mxu0 %v2418
  %2839 = vmatpush.msra.mxu0 %v2414
  %2840 = vmatpush.msra.mxu0 %v2410
  %2841 = vmatpush.msra.mxu0 %v2406
  %2842 = vmatpush.msra.mxu0 %v2402
  %2843 = vmatpush.msra.mxu0 %v2398
  %2844 = vmatpush.msra.mxu0 %v2394
  %2845 = vmatpush.msra.mxu0 %v2390
  %2846 = vmatpush.msra.mxu0 %v2386
  %2847 = vmatpush.msra.mxu0 %v2382
  %2848 = vmatpush.msra.mxu0 %v2378
  %2849 = vmatpush.msra.mxu0 %v2374
  %2850 = vmatmul.f32.gmra.mxu0 %v2739
  %v2851 = vpop.f32.mrf.mxu0
  %v2852 = vadd.f32 0.0, %v2851
  %2853 = vdwg.mxu0
  %2854 = vmatpush.msra.mxu0 %v2435
  %2855 = vmatpush.msra.mxu0 %v2431
  %2856 = vmatpush.msra.mxu0 %v2427
  %2857 = vmatpush.msra.mxu0 %v2423
  %2858 = vmatpush.msra.mxu0 %v2419
  %2859 = vmatpush.msra.mxu0 %v2415
  %2860 = vmatpush.msra.mxu0 %v2411
  %2861 = vmatpush.msra.mxu0 %v2407
  %2862 = vmatpush.msra.mxu0 %v2403
  %2863 = vmatpush.msra.mxu0 %v2399
  %2864 = vmatpush.msra.mxu0 %v2395
  %2865 = vmatpush.msra.mxu0 %v2391
  %2866 = vmatpush.msra.mxu0 %v2387
  %2867 = vmatpush.msra.mxu0 %v2383
  %2868 = vmatpush.msra.mxu0 %v2379
  %2869 = vmatpush.msra.mxu0 %v2375
  %2870 = vmatmul.f32.gmra.mxu0 %v2739
  %v2871 = vpop.f32.mrf.mxu0
  %v2872 = vadd.f32 0.0, %v2871
  %2873 = vdwg.mxu0
  %2874 = vmatpush.msra.mxu0 %v2436
  %2875 = vmatpush.msra.mxu0 %v2432
  %2876 = vmatpush.msra.mxu0 %v2428
  %2877 = vmatpush.msra.mxu0 %v2424
  %2878 = vmatpush.msra.mxu0 %v2420
  %2879 = vmatpush.msra.mxu0 %v2416
  %2880 = vmatpush.msra.mxu0 %v2412
  %2881 = vmatpush.msra.mxu0 %v2408
  %2882 = vmatpush.msra.mxu0 %v2404
  %2883 = vmatpush.msra.mxu0 %v2400
  %2884 = vmatpush.msra.mxu0 %v2396
  %2885 = vmatpush.msra.mxu0 %v2392
  %2886 = vmatpush.msra.mxu0 %v2388
  %2887 = vmatpush.msra.mxu0 %v2384
  %2888 = vmatpush.msra.mxu0 %v2380
  %2889 = vmatpush.msra.mxu0 %v2376
  %2890 = vmatmul.f32.gmra.mxu0 %v2739
  %v2891 = vpop.f32.mrf.mxu0
  %v2892 = vadd.f32 0.0, %v2891
  %2893 = vdwg.mxu0
  %2894 = vmatpush.msra.mxu0 %v2437
  %2895 = vmatpush.msra.mxu0 %v2433
  %2896 = vmatpush.msra.mxu0 %v2429
  %2897 = vmatpush.msra.mxu0 %v2425
  %2898 = vmatpush.msra.mxu0 %v2421
  %2899 = vmatpush.msra.mxu0 %v2417
  %2900 = vmatpush.msra.mxu0 %v2413
  %2901 = vmatpush.msra.mxu0 %v2409
  %2902 = vmatpush.msra.mxu0 %v2405
  %2903 = vmatpush.msra.mxu0 %v2401
  %2904 = vmatpush.msra.mxu0 %v2397
  %2905 = vmatpush.msra.mxu0 %v2393
  %2906 = vmatpush.msra.mxu0 %v2389
  %2907 = vmatpush.msra.mxu0 %v2385
  %2908 = vmatpush.msra.mxu0 %v2381
  %2909 = vmatpush.msra.mxu0 %v2377
  %2910 = vmatmul.f32.gmra.mxu0 %v2739
  %v2911 = vpop.f32.mrf.mxu0
  %v2912 = vadd.f32 0.0, %v2911
  %2913 = vdwg.mxu0
  %v2914 = vadd.f32 %v2830, %v2852
  %v2915 = vadd.f32 %v2831, %v2872
  %v2916 = vadd.f32 %v2832, %v2892
  %v2917 = vadd.f32 %v2833, %v2912
  %v2918 = vxor.u32 %v2826, 2147483648
  %v2919 = vxor.u32 %v2827, 2147483648
  %v2920 = vxor.u32 %v2828, 2147483648
  %v2921 = vmul.f32 %v2918, 1.442695
  %v2922 = vpow.pop %v2921
  %v2923 = vmul.f32 %v2919, 1.442695
  %v2924 = vpow.pop %v2923
  %v2925 = vmul.f32 %v2920, 1.442695
  %v2926 = vpow.pop %v2925
  %v2927 = vadd.f32 %v2922, 1.0
  %v2928 = vadd.f32 %v2924, 1.0
  %v2929 = vadd.f32 %v2926, 1.0
  %v2930 = vrcp.pop %v2927
  %v2931 = vmul.f32 %v2927, %v2930
  %v2932 = vsub.f32 1.0, %v2931
  %v2933 = vmul.f32 %v2930, %v2932
  %v2934 = vadd.f32 %v2930, %v2933
  %vm2935 = vweird.f32 %v2927
  %vm2936 = vweird.f32 %v2930
  %vm2937 = vmor %vm2935, %vm2936
  %v2938 = vsel %vm2937, %v2930, %v2934
  %v2939 = vand.u32 2147483647, %v2927
  %vm2940 = vcmp.eq.f32.partialorder %v2939, 8.507059e+37
  %v2941 = vand.u32 %v2927, 2147483648
  %v2942 = vor.u32 1.1754944e-38, %v2941
  %v2943 = vsel %vm2940, %v2942, %v2938
  %v2944 = vmul.f32 1.0, %v2943
  %v2945 = vrcp.pop %v2928
  %v2946 = vmul.f32 %v2928, %v2945
  %v2947 = vsub.f32 1.0, %v2946
  %v2948 = vmul.f32 %v2945, %v2947
  %v2949 = vadd.f32 %v2945, %v2948
  %vm2950 = vweird.f32 %v2928
  %vm2951 = vweird.f32 %v2945
  %vm2952 = vmor %vm2950, %vm2951
  %v2953 = vsel %vm2952, %v2945, %v2949
  %v2954 = vand.u32 2147483647, %v2928
  %vm2955 = vcmp.eq.f32.partialorder %v2954, 8.507059e+37
  %v2956 = vand.u32 %v2928, 2147483648
  %v2957 = vor.u32 1.1754944e-38, %v2956
  %v2958 = vsel %vm2955, %v2957, %v2953
  %v2959 = vmul.f32 1.0, %v2958
  %v2960 = vrcp.pop %v2929
  %v2961 = vmul.f32 %v2929, %v2960
  %v2962 = vsub.f32 1.0, %v2961
  %v2963 = vmul.f32 %v2960, %v2962
  %v2964 = vadd.f32 %v2960, %v2963
  %vm2965 = vweird.f32 %v2929
  %vm2966 = vweird.f32 %v2960
  %vm2967 = vmor %vm2965, %vm2966
  %v2968 = vsel %vm2967, %v2960, %v2964
  %v2969 = vand.u32 2147483647, %v2929
  %vm2970 = vcmp.eq.f32.partialorder %v2969, 8.507059e+37
  %v2971 = vand.u32 %v2929, 2147483648
  %v2972 = vor.u32 1.1754944e-38, %v2971
  %v2973 = vsel %vm2970, %v2972, %v2968
  %v2974 = vmul.f32 1.0, %v2973
  %v2975 = vtanh.pop %v2829
  %v2976 = vmul.f32 %v2959, %v2674
  %v2977 = vmul.f32 %v2944, %v2975
  %v2978 = vadd.f32 %v2976, %v2977
  %v2979 = vtanh.pop %v2978
  %v2980 = vmul.f32 %v2974, %v2979
  %v2981 = vxor.u32 %v2914, 2147483648
  %v2982 = vxor.u32 %v2915, 2147483648
  %v2983 = vxor.u32 %v2916, 2147483648
  %v2984 = vmul.f32 %v2981, 1.442695
  %v2985 = vpow.pop %v2984
  %v2986 = vmul.f32 %v2982, 1.442695
  %v2987 = vpow.pop %v2986
  %v2988 = vmul.f32 %v2983, 1.442695
  %v2989 = vpow.pop %v2988
  %v2990 = vadd.f32 %v2985, 1.0
  %v2991 = vadd.f32 %v2987, 1.0
  %v2992 = vadd.f32 %v2989, 1.0
  %v2993 = vrcp.pop %v2990
  %v2994 = vmul.f32 %v2990, %v2993
  %v2995 = vsub.f32 1.0, %v2994
  %v2996 = vmul.f32 %v2993, %v2995
  %v2997 = vadd.f32 %v2993, %v2996
  %vm2998 = vweird.f32 %v2990
  %vm2999 = vweird.f32 %v2993
  %vm3000 = vmor %vm2998, %vm2999
  %v3001 = vsel %vm3000, %v2993, %v2997
  %v3002 = vand.u32 2147483647, %v2990
  %vm3003 = vcmp.eq.f32.partialorder %v3002, 8.507059e+37
  %v3004 = vand.u32 %v2990, 2147483648
  %v3005 = vor.u32 1.1754944e-38, %v3004
  %v3006 = vsel %vm3003, %v3005, %v3001
  %v3007 = vmul.f32 1.0, %v3006
  %v3008 = vrcp.pop %v2991
  %v3009 = vmul.f32 %v2991, %v3008
  %v3010 = vsub.f32 1.0, %v3009
  %v3011 = vmul.f32 %v3008, %v3010
  %v3012 = vadd.f32 %v3008, %v3011
  %vm3013 = vweird.f32 %v2991
  %vm3014 = vweird.f32 %v3008
  %vm3015 = vmor %vm3013, %vm3014
  %v3016 = vsel %vm3015, %v3008, %v3012
  %v3017 = vand.u32 2147483647, %v2991
  %vm3018 = vcmp.eq.f32.partialorder %v3017, 8.507059e+37
  %v3019 = vand.u32 %v2991, 2147483648
  %v3020 = vor.u32 1.1754944e-38, %v3019
  %v3021 = vsel %vm3018, %v3020, %v3016
  %v3022 = vmul.f32 1.0, %v3021
  %v3023 = vrcp.pop %v2992
  %v3024 = vmul.f32 %v2992, %v3023
  %v3025 = vsub.f32 1.0, %v3024
  %v3026 = vmul.f32 %v3023, %v3025
  %v3027 = vadd.f32 %v3023, %v3026
  %vm3028 = vweird.f32 %v2992
  %vm3029 = vweird.f32 %v3023
  %vm3030 = vmor %vm3028, %vm3029
  %v3031 = vsel %vm3030, %v3023, %v3027
  %v3032 = vand.u32 2147483647, %v2992
  %vm3033 = vcmp.eq.f32.partialorder %v3032, 8.507059e+37
  %v3034 = vand.u32 %v2992, 2147483648
  %v3035 = vor.u32 1.1754944e-38, %v3034
  %v3036 = vsel %vm3033, %v3035, %v3031
  %v3037 = vmul.f32 1.0, %v3036
  %v3038 = vtanh.pop %v2917
  %v3039 = vmul.f32 %v3022, %v2737
  %v3040 = vmul.f32 %v3007, %v3038
  %v3041 = vadd.f32 %v3039, %v3040
  %v3042 = vtanh.pop %v3041
  %v3043 = vmul.f32 %v3037, %v3042
  %3044 = vst [vmem:[#allocation3 + $0x8] sm:$0xff] %v2980
  %3045 = vst [vmem:[#allocation3 + $0x40] sm:$0xff] %v3043
  %v3046 = vld [vmem:[#allocation2 + $0x80] sm:$0xff]
  %v3047 = vld [vmem:[#allocation2 + $0x88] sm:$0xff]
  %v3048 = vld [vmem:[#allocation2 + $0x90] sm:$0xff]
  %v3049 = vld [vmem:[#allocation2 + $0x98] sm:$0xff]
  %3050 = vmatpush.msra.mxu0 %v2370
  %3051 = vmatpush.msra.mxu0 %v2366
  %3052 = vmatpush.msra.mxu0 %v2362
  %3053 = vmatpush.msra.mxu0 %v2358
  %3054 = vmatpush.msra.mxu0 %v2354
  %3055 = vmatpush.msra.mxu0 %v2350
  %3056 = vmatpush.msra.mxu0 %v2346
  %3057 = vmatpush.msra.mxu0 %v2342
  %3058 = vmatpush.msra.mxu0 %v2338
  %3059 = vmatpush.msra.mxu0 %v2334
  %3060 = vmatpush.msra.mxu0 %v2330
  %3061 = vmatpush.msra.mxu0 %v2326
  %3062 = vmatpush.msra.mxu0 %v2322
  %3063 = vmatpush.msra.mxu0 %v2318
  %3064 = vmatpush.msra.mxu0 %v2314
  %3065 = vmatpush.msra.mxu0 %v2310
  %3066 = vmatmul.f32.gmra.mxu0 %v2980
  %v3067 = vpop.f32.mrf.mxu0
  %v3068 = vadd.f32 0.0, %v3067
  %3069 = vdwg.mxu0
  %3070 = vmatpush.msra.mxu0 %v2371
  %3071 = vmatpush.msra.mxu0 %v2367
  %3072 = vmatpush.msra.mxu0 %v2363
  %3073 = vmatpush.msra.mxu0 %v2359
  %3074 = vmatpush.msra.mxu0 %v2355
  %3075 = vmatpush.msra.mxu0 %v2351
  %3076 = vmatpush.msra.mxu0 %v2347
  %3077 = vmatpush.msra.mxu0 %v2343
  %3078 = vmatpush.msra.mxu0 %v2339
  %3079 = vmatpush.msra.mxu0 %v2335
  %3080 = vmatpush.msra.mxu0 %v2331
  %3081 = vmatpush.msra.mxu0 %v2327
  %3082 = vmatpush.msra.mxu0 %v2323
  %3083 = vmatpush.msra.mxu0 %v2319
  %3084 = vmatpush.msra.mxu0 %v2315
  %3085 = vmatpush.msra.mxu0 %v2311
  %3086 = vmatmul.f32.gmra.mxu0 %v2980
  %v3087 = vpop.f32.mrf.mxu0
  %v3088 = vadd.f32 0.0, %v3087
  %3089 = vdwg.mxu0
  %3090 = vmatpush.msra.mxu0 %v2372
  %3091 = vmatpush.msra.mxu0 %v2368
  %3092 = vmatpush.msra.mxu0 %v2364
  %3093 = vmatpush.msra.mxu0 %v2360
  %3094 = vmatpush.msra.mxu0 %v2356
  %3095 = vmatpush.msra.mxu0 %v2352
  %3096 = vmatpush.msra.mxu0 %v2348
  %3097 = vmatpush.msra.mxu0 %v2344
  %3098 = vmatpush.msra.mxu0 %v2340
  %3099 = vmatpush.msra.mxu0 %v2336
  %3100 = vmatpush.msra.mxu0 %v2332
  %3101 = vmatpush.msra.mxu0 %v2328
  %3102 = vmatpush.msra.mxu0 %v2324
  %3103 = vmatpush.msra.mxu0 %v2320
  %3104 = vmatpush.msra.mxu0 %v2316
  %3105 = vmatpush.msra.mxu0 %v2312
  %3106 = vmatmul.f32.gmra.mxu0 %v2980
  %v3107 = vpop.f32.mrf.mxu0
  %v3108 = vadd.f32 0.0, %v3107
  %3109 = vdwg.mxu0
  %3110 = vmatpush.msra.mxu0 %v2373
  %3111 = vmatpush.msra.mxu0 %v2369
  %3112 = vmatpush.msra.mxu0 %v2365
  %3113 = vmatpush.msra.mxu0 %v2361
  %3114 = vmatpush.msra.mxu0 %v2357
  %3115 = vmatpush.msra.mxu0 %v2353
  %3116 = vmatpush.msra.mxu0 %v2349
  %3117 = vmatpush.msra.mxu0 %v2345
  %3118 = vmatpush.msra.mxu0 %v2341
  %3119 = vmatpush.msra.mxu0 %v2337
  %3120 = vmatpush.msra.mxu0 %v2333
  %3121 = vmatpush.msra.mxu0 %v2329
  %3122 = vmatpush.msra.mxu0 %v2325
  %3123 = vmatpush.msra.mxu0 %v2321
  %3124 = vmatpush.msra.mxu0 %v2317
  %3125 = vmatpush.msra.mxu0 %v2313
  %3126 = vmatmul.f32.gmra.mxu0 %v2980
  %v3127 = vpop.f32.mrf.mxu0
  %v3128 = vadd.f32 0.0, %v3127
  %3129 = vdwg.mxu0
  %v3130 = vadd.f32 %v3046, %v3068
  %v3131 = vadd.f32 %v3047, %v3088
  %v3132 = vadd.f32 %v3048, %v3108
  %v3133 = vadd.f32 %v3049, %v3128
  %v3134 = vld [vmem:[#allocation2 + $0x1e0] sm:$0xff]
  %v3135 = vld [vmem:[#allocation2 + $0x1e8] sm:$0xff]
  %v3136 = vld [vmem:[#allocation2 + $0x1f0] sm:$0xff]
  %v3137 = vld [vmem:[#allocation2 + $0x1f8] sm:$0xff]
  %3138 = vmatpush.msra.mxu0 %v2434
  %3139 = vmatpush.msra.mxu0 %v2430
  %3140 = vmatpush.msra.mxu0 %v2426
  %3141 = vmatpush.msra.mxu0 %v2422
  %3142 = vmatpush.msra.mxu0 %v2418
  %3143 = vmatpush.msra.mxu0 %v2414
  %3144 = vmatpush.msra.mxu0 %v2410
  %3145 = vmatpush.msra.mxu0 %v2406
  %3146 = vmatpush.msra.mxu0 %v2402
  %3147 = vmatpush.msra.mxu0 %v2398
  %3148 = vmatpush.msra.mxu0 %v2394
  %3149 = vmatpush.msra.mxu0 %v2390
  %3150 = vmatpush.msra.mxu0 %v2386
  %3151 = vmatpush.msra.mxu0 %v2382
  %3152 = vmatpush.msra.mxu0 %v2378
  %3153 = vmatpush.msra.mxu0 %v2374
  %3154 = vmatmul.f32.gmra.mxu0 %v3043
  %v3155 = vpop.f32.mrf.mxu0
  %v3156 = vadd.f32 0.0, %v3155
  %3157 = vdwg.mxu0
  %3158 = vmatpush.msra.mxu0 %v2435
  %3159 = vmatpush.msra.mxu0 %v2431
  %3160 = vmatpush.msra.mxu0 %v2427
  %3161 = vmatpush.msra.mxu0 %v2423
  %3162 = vmatpush.msra.mxu0 %v2419
  %3163 = vmatpush.msra.mxu0 %v2415
  %3164 = vmatpush.msra.mxu0 %v2411
  %3165 = vmatpush.msra.mxu0 %v2407
  %3166 = vmatpush.msra.mxu0 %v2403
  %3167 = vmatpush.msra.mxu0 %v2399
  %3168 = vmatpush.msra.mxu0 %v2395
  %3169 = vmatpush.msra.mxu0 %v2391
  %3170 = vmatpush.msra.mxu0 %v2387
  %3171 = vmatpush.msra.mxu0 %v2383
  %3172 = vmatpush.msra.mxu0 %v2379
  %3173 = vmatpush.msra.mxu0 %v2375
  %3174 = vmatmul.f32.gmra.mxu0 %v3043
  %v3175 = vpop.f32.mrf.mxu0
  %v3176 = vadd.f32 0.0, %v3175
  %3177 = vdwg.mxu0
  %3178 = vmatpush.msra.mxu0 %v2436
  %3179 = vmatpush.msra.mxu0 %v2432
  %3180 = vmatpush.msra.mxu0 %v2428
  %3181 = vmatpush.msra.mxu0 %v2424
  %3182 = vmatpush.msra.mxu0 %v2420
  %3183 = vmatpush.msra.mxu0 %v2416
  %3184 = vmatpush.msra.mxu0 %v2412
  %3185 = vmatpush.msra.mxu0 %v2408
  %3186 = vmatpush.msra.mxu0 %v2404
  %3187 = vmatpush.msra.mxu0 %v2400
  %3188 = vmatpush.msra.mxu0 %v2396
  %3189 = vmatpush.msra.mxu0 %v2392
  %3190 = vmatpush.msra.mxu0 %v2388
  %3191 = vmatpush.msra.mxu0 %v2384
  %3192 = vmatpush.msra.mxu0 %v2380
  %3193 = vmatpush.msra.mxu0 %v2376
  %3194 = vmatmul.f32.gmra.mxu0 %v3043
  %v3195 = vpop.f32.mrf.mxu0
  %v3196 = vadd.f32 0.0, %v3195
  %3197 = vdwg.mxu0
  %3198 = vmatpush.msra.mxu0 %v2437
  %3199 = vmatpush.msra.mxu0 %v2433
  %3200 = vmatpush.msra.mxu0 %v2429
  %3201 = vmatpush.msra.mxu0 %v2425
  %3202 = vmatpush.msra.mxu0 %v2421
  %3203 = vmatpush.msra.mxu0 %v2417
  %3204 = vmatpush.msra.mxu0 %v2413
  %3205 = vmatpush.msra.mxu0 %v2409
  %3206 = vmatpush.msra.mxu0 %v2405
  %3207 = vmatpush.msra.mxu0 %v2401
  %3208 = vmatpush.msra.mxu0 %v2397
  %3209 = vmatpush.msra.mxu0 %v2393
  %3210 = vmatpush.msra.mxu0 %v2389
  %3211 = vmatpush.msra.mxu0 %v2385
  %3212 = vmatpush.msra.mxu0 %v2381
  %3213 = vmatpush.msra.mxu0 %v2377
  %3214 = vmatmul.f32.gmra.mxu0 %v3043
  %v3215 = vpop.f32.mrf.mxu0
  %v3216 = vadd.f32 0.0, %v3215
  %3217 = vdwg.mxu0
  %v3218 = vadd.f32 %v3134, %v3156
  %v3219 = vadd.f32 %v3135, %v3176
  %v3220 = vadd.f32 %v3136, %v3196
  %v3221 = vadd.f32 %v3137, %v3216
  %v3222 = vxor.u32 %v3130, 2147483648
  %v3223 = vxor.u32 %v3131, 2147483648
  %v3224 = vxor.u32 %v3132, 2147483648
  %v3225 = vmul.f32 %v3222, 1.442695
  %v3226 = vpow.pop %v3225
  %v3227 = vmul.f32 %v3223, 1.442695
  %v3228 = vpow.pop %v3227
  %v3229 = vmul.f32 %v3224, 1.442695
  %v3230 = vpow.pop %v3229
  %v3231 = vadd.f32 %v3226, 1.0
  %v3232 = vadd.f32 %v3228, 1.0
  %v3233 = vadd.f32 %v3230, 1.0
  %v3234 = vrcp.pop %v3231
  %v3235 = vmul.f32 %v3231, %v3234
  %v3236 = vsub.f32 1.0, %v3235
  %v3237 = vmul.f32 %v3234, %v3236
  %v3238 = vadd.f32 %v3234, %v3237
  %vm3239 = vweird.f32 %v3231
  %vm3240 = vweird.f32 %v3234
  %vm3241 = vmor %vm3239, %vm3240
  %v3242 = vsel %vm3241, %v3234, %v3238
  %v3243 = vand.u32 2147483647, %v3231
  %vm3244 = vcmp.eq.f32.partialorder %v3243, 8.507059e+37
  %v3245 = vand.u32 %v3231, 2147483648
  %v3246 = vor.u32 1.1754944e-38, %v3245
  %v3247 = vsel %vm3244, %v3246, %v3242
  %v3248 = vmul.f32 1.0, %v3247
  %v3249 = vrcp.pop %v3232
  %v3250 = vmul.f32 %v3232, %v3249
  %v3251 = vsub.f32 1.0, %v3250
  %v3252 = vmul.f32 %v3249, %v3251
  %v3253 = vadd.f32 %v3249, %v3252
  %vm3254 = vweird.f32 %v3232
  %vm3255 = vweird.f32 %v3249
  %vm3256 = vmor %vm3254, %vm3255
  %v3257 = vsel %vm3256, %v3249, %v3253
  %v3258 = vand.u32 2147483647, %v3232
  %vm3259 = vcmp.eq.f32.partialorder %v3258, 8.507059e+37
  %v3260 = vand.u32 %v3232, 2147483648
  %v3261 = vor.u32 1.1754944e-38, %v3260
  %v3262 = vsel %vm3259, %v3261, %v3257
  %v3263 = vmul.f32 1.0, %v3262
  %v3264 = vrcp.pop %v3233
  %v3265 = vmul.f32 %v3233, %v3264
  %v3266 = vsub.f32 1.0, %v3265
  %v3267 = vmul.f32 %v3264, %v3266
  %v3268 = vadd.f32 %v3264, %v3267
  %vm3269 = vweird.f32 %v3233
  %vm3270 = vweird.f32 %v3264
  %vm3271 = vmor %vm3269, %vm3270
  %v3272 = vsel %vm3271, %v3264, %v3268
  %v3273 = vand.u32 2147483647, %v3233
  %vm3274 = vcmp.eq.f32.partialorder %v3273, 8.507059e+37
  %v3275 = vand.u32 %v3233, 2147483648
  %v3276 = vor.u32 1.1754944e-38, %v3275
  %v3277 = vsel %vm3274, %v3276, %v3272
  %v3278 = vmul.f32 1.0, %v3277
  %v3279 = vtanh.pop %v3133
  %v3280 = vmul.f32 %v3263, %v2978
  %v3281 = vmul.f32 %v3248, %v3279
  %v3282 = vadd.f32 %v3280, %v3281
  %v3283 = vtanh.pop %v3282
  %v3284 = vmul.f32 %v3278, %v3283
  %v3285 = vxor.u32 %v3218, 2147483648
  %v3286 = vxor.u32 %v3219, 2147483648
  %v3287 = vxor.u32 %v3220, 2147483648
  %v3288 = vmul.f32 %v3285, 1.442695
  %v3289 = vpow.pop %v3288
  %v3290 = vmul.f32 %v3286, 1.442695
  %v3291 = vpow.pop %v3290
  %v3292 = vmul.f32 %v3287, 1.442695
  %v3293 = vpow.pop %v3292
  %v3294 = vadd.f32 %v3289, 1.0
  %v3295 = vadd.f32 %v3291, 1.0
  %v3296 = vadd.f32 %v3293, 1.0
  %v3297 = vrcp.pop %v3294
  %v3298 = vmul.f32 %v3294, %v3297
  %v3299 = vsub.f32 1.0, %v3298
  %v3300 = vmul.f32 %v3297, %v3299
  %v3301 = vadd.f32 %v3297, %v3300
  %vm3302 = vweird.f32 %v3294
  %vm3303 = vweird.f32 %v3297
  %vm3304 = vmor %vm3302, %vm3303
  %v3305 = vsel %vm3304, %v3297, %v3301
  %v3306 = vand.u32 2147483647, %v3294
  %vm3307 = vcmp.eq.f32.partialorder %v3306, 8.507059e+37
  %v3308 = vand.u32 %v3294, 2147483648
  %v3309 = vor.u32 1.1754944e-38, %v3308
  %v3310 = vsel %vm3307, %v3309, %v3305
  %v3311 = vmul.f32 1.0, %v3310
  %v3312 = vrcp.pop %v3295
  %v3313 = vmul.f32 %v3295, %v3312
  %v3314 = vsub.f32 1.0, %v3313
  %v3315 = vmul.f32 %v3312, %v3314
  %v3316 = vadd.f32 %v3312, %v3315
  %vm3317 = vweird.f32 %v3295
  %vm3318 = vweird.f32 %v3312
  %vm3319 = vmor %vm3317, %vm3318
  %v3320 = vsel %vm3319, %v3312, %v3316
  %v3321 = vand.u32 2147483647, %v3295
  %vm3322 = vcmp.eq.f32.partialorder %v3321, 8.507059e+37
  %v3323 = vand.u32 %v3295, 2147483648
  %v3324 = vor.u32 1.1754944e-38, %v3323
  %v3325 = vsel %vm3322, %v3324, %v3320
  %v3326 = vmul.f32 1.0, %v3325
  %v3327 = vrcp.pop %v3296
  %v3328 = vmul.f32 %v3296, %v3327
  %v3329 = vsub.f32 1.0, %v3328
  %v3330 = vmul.f32 %v3327, %v3329
  %v3331 = vadd.f32 %v3327, %v3330
  %vm3332 = vweird.f32 %v3296
  %vm3333 = vweird.f32 %v3327
  %vm3334 = vmor %vm3332, %vm3333
  %v3335 = vsel %vm3334, %v3327, %v3331
  %v3336 = vand.u32 2147483647, %v3296
  %vm3337 = vcmp.eq.f32.partialorder %v3336, 8.507059e+37
  %v3338 = vand.u32 %v3296, 2147483648
  %v3339 = vor.u32 1.1754944e-38, %v3338
  %v3340 = vsel %vm3337, %v3339, %v3335
  %v3341 = vmul.f32 1.0, %v3340
  %v3342 = vtanh.pop %v3221
  %v3343 = vmul.f32 %v3326, %v3041
  %v3344 = vmul.f32 %v3311, %v3342
  %v3345 = vadd.f32 %v3343, %v3344
  %v3346 = vtanh.pop %v3345
  %v3347 = vmul.f32 %v3341, %v3346
  %3348 = vst [vmem:[#allocation3 + $0x10] sm:$0xff] %v3284
  %3349 = vst [vmem:[#allocation3 + $0x38] sm:$0xff] %v3347
  %v3350 = vld [vmem:[#allocation2 + $0xc0] sm:$0xff]
  %v3351 = vld [vmem:[#allocation2 + $0xc8] sm:$0xff]
  %v3352 = vld [vmem:[#allocation2 + $0xd0] sm:$0xff]
  %v3353 = vld [vmem:[#allocation2 + $0xd8] sm:$0xff]
  %3354 = vmatpush.msra.mxu0 %v2370
  %3355 = vmatpush.msra.mxu0 %v2366
  %3356 = vmatpush.msra.mxu0 %v2362
  %3357 = vmatpush.msra.mxu0 %v2358
  %3358 = vmatpush.msra.mxu0 %v2354
  %3359 = vmatpush.msra.mxu0 %v2350
  %3360 = vmatpush.msra.mxu0 %v2346
  %3361 = vmatpush.msra.mxu0 %v2342
  %3362 = vmatpush.msra.mxu0 %v2338
  %3363 = vmatpush.msra.mxu0 %v2334
  %3364 = vmatpush.msra.mxu0 %v2330
  %3365 = vmatpush.msra.mxu0 %v2326
  %3366 = vmatpush.msra.mxu0 %v2322
  %3367 = vmatpush.msra.mxu0 %v2318
  %3368 = vmatpush.msra.mxu0 %v2314
  %3369 = vmatpush.msra.mxu0 %v2310
  %3370 = vmatmul.f32.gmra.mxu0 %v3284
  %v3371 = vpop.f32.mrf.mxu0
  %v3372 = vadd.f32 0.0, %v3371
  %3373 = vdwg.mxu0
  %3374 = vmatpush.msra.mxu0 %v2371
  %3375 = vmatpush.msra.mxu0 %v2367
  %3376 = vmatpush.msra.mxu0 %v2363
  %3377 = vmatpush.msra.mxu0 %v2359
  %3378 = vmatpush.msra.mxu0 %v2355
  %3379 = vmatpush.msra.mxu0 %v2351
  %3380 = vmatpush.msra.mxu0 %v2347
  %3381 = vmatpush.msra.mxu0 %v2343
  %3382 = vmatpush.msra.mxu0 %v2339
  %3383 = vmatpush.msra.mxu0 %v2335
  %3384 = vmatpush.msra.mxu0 %v2331
  %3385 = vmatpush.msra.mxu0 %v2327
  %3386 = vmatpush.msra.mxu0 %v2323
  %3387 = vmatpush.msra.mxu0 %v2319
  %3388 = vmatpush.msra.mxu0 %v2315
  %3389 = vmatpush.msra.mxu0 %v2311
  %3390 = vmatmul.f32.gmra.mxu0 %v3284
  %v3391 = vpop.f32.mrf.mxu0
  %v3392 = vadd.f32 0.0, %v3391
  %3393 = vdwg.mxu0
  %3394 = vmatpush.msra.mxu0 %v2372
  %3395 = vmatpush.msra.mxu0 %v2368
  %3396 = vmatpush.msra.mxu0 %v2364
  %3397 = vmatpush.msra.mxu0 %v2360
  %3398 = vmatpush.msra.mxu0 %v2356
  %3399 = vmatpush.msra.mxu0 %v2352
  %3400 = vmatpush.msra.mxu0 %v2348
  %3401 = vmatpush.msra.mxu0 %v2344
  %3402 = vmatpush.msra.mxu0 %v2340
  %3403 = vmatpush.msra.mxu0 %v2336
  %3404 = vmatpush.msra.mxu0 %v2332
  %3405 = vmatpush.msra.mxu0 %v2328
  %3406 = vmatpush.msra.mxu0 %v2324
  %3407 = vmatpush.msra.mxu0 %v2320
  %3408 = vmatpush.msra.mxu0 %v2316
  %3409 = vmatpush.msra.mxu0 %v2312
  %3410 = vmatmul.f32.gmra.mxu0 %v3284
  %v3411 = vpop.f32.mrf.mxu0
  %v3412 = vadd.f32 0.0, %v3411
  %3413 = vdwg.mxu0
  %3414 = vmatpush.msra.mxu0 %v2373
  %3415 = vmatpush.msra.mxu0 %v2369
  %3416 = vmatpush.msra.mxu0 %v2365
  %3417 = vmatpush.msra.mxu0 %v2361
  %3418 = vmatpush.msra.mxu0 %v2357
  %3419 = vmatpush.msra.mxu0 %v2353
  %3420 = vmatpush.msra.mxu0 %v2349
  %3421 = vmatpush.msra.mxu0 %v2345
  %3422 = vmatpush.msra.mxu0 %v2341
  %3423 = vmatpush.msra.mxu0 %v2337
  %3424 = vmatpush.msra.mxu0 %v2333
  %3425 = vmatpush.msra.mxu0 %v2329
  %3426 = vmatpush.msra.mxu0 %v2325
  %3427 = vmatpush.msra.mxu0 %v2321
  %3428 = vmatpush.msra.mxu0 %v2317
  %3429 = vmatpush.msra.mxu0 %v2313
  %3430 = vmatmul.f32.gmra.mxu0 %v3284
  %v3431 = vpop.f32.mrf.mxu0
  %v3432 = vadd.f32 0.0, %v3431
  %3433 = vdwg.mxu0
  %v3434 = vadd.f32 %v3350, %v3372
  %v3435 = vadd.f32 %v3351, %v3392
  %v3436 = vadd.f32 %v3352, %v3412
  %v3437 = vadd.f32 %v3353, %v3432
  %v3438 = vld [vmem:[#allocation2 + $0x1a0] sm:$0xff]
  %v3439 = vld [vmem:[#allocation2 + $0x1a8] sm:$0xff]
  %v3440 = vld [vmem:[#allocation2 + $0x1b0] sm:$0xff]
  %v3441 = vld [vmem:[#allocation2 + $0x1b8] sm:$0xff]
  %3442 = vmatpush.msra.mxu0 %v2434
  %3443 = vmatpush.msra.mxu0 %v2430
  %3444 = vmatpush.msra.mxu0 %v2426
  %3445 = vmatpush.msra.mxu0 %v2422
  %3446 = vmatpush.msra.mxu0 %v2418
  %3447 = vmatpush.msra.mxu0 %v2414
  %3448 = vmatpush.msra.mxu0 %v2410
  %3449 = vmatpush.msra.mxu0 %v2406
  %3450 = vmatpush.msra.mxu0 %v2402
  %3451 = vmatpush.msra.mxu0 %v2398
  %3452 = vmatpush.msra.mxu0 %v2394
  %3453 = vmatpush.msra.mxu0 %v2390
  %3454 = vmatpush.msra.mxu0 %v2386
  %3455 = vmatpush.msra.mxu0 %v2382
  %3456 = vmatpush.msra.mxu0 %v2378
  %3457 = vmatpush.msra.mxu0 %v2374
  %3458 = vmatmul.f32.gmra.mxu0 %v3347
  %v3459 = vpop.f32.mrf.mxu0
  %v3460 = vadd.f32 0.0, %v3459
  %3461 = vdwg.mxu0
  %3462 = vmatpush.msra.mxu0 %v2435
  %3463 = vmatpush.msra.mxu0 %v2431
  %3464 = vmatpush.msra.mxu0 %v2427
  %3465 = vmatpush.msra.mxu0 %v2423
  %3466 = vmatpush.msra.mxu0 %v2419
  %3467 = vmatpush.msra.mxu0 %v2415
  %3468 = vmatpush.msra.mxu0 %v2411
  %3469 = vmatpush.msra.mxu0 %v2407
  %3470 = vmatpush.msra.mxu0 %v2403
  %3471 = vmatpush.msra.mxu0 %v2399
  %3472 = vmatpush.msra.mxu0 %v2395
  %3473 = vmatpush.msra.mxu0 %v2391
  %3474 = vmatpush.msra.mxu0 %v2387
  %3475 = vmatpush.msra.mxu0 %v2383
  %3476 = vmatpush.msra.mxu0 %v2379
  %3477 = vmatpush.msra.mxu0 %v2375
  %3478 = vmatmul.f32.gmra.mxu0 %v3347
  %v3479 = vpop.f32.mrf.mxu0
  %v3480 = vadd.f32 0.0, %v3479
  %3481 = vdwg.mxu0
  %3482 = vmatpush.msra.mxu0 %v2436
  %3483 = vmatpush.msra.mxu0 %v2432
  %3484 = vmatpush.msra.mxu0 %v2428
  %3485 = vmatpush.msra.mxu0 %v2424
  %3486 = vmatpush.msra.mxu0 %v2420
  %3487 = vmatpush.msra.mxu0 %v2416
  %3488 = vmatpush.msra.mxu0 %v2412
  %3489 = vmatpush.msra.mxu0 %v2408
  %3490 = vmatpush.msra.mxu0 %v2404
  %3491 = vmatpush.msra.mxu0 %v2400
  %3492 = vmatpush.msra.mxu0 %v2396
  %3493 = vmatpush.msra.mxu0 %v2392
  %3494 = vmatpush.msra.mxu0 %v2388
  %3495 = vmatpush.msra.mxu0 %v2384
  %3496 = vmatpush.msra.mxu0 %v2380
  %3497 = vmatpush.msra.mxu0 %v2376
  %3498 = vmatmul.f32.gmra.mxu0 %v3347
  %v3499 = vpop.f32.mrf.mxu0
  %v3500 = vadd.f32 0.0, %v3499
  %3501 = vdwg.mxu0
  %3502 = vmatpush.msra.mxu0 %v2437
  %3503 = vmatpush.msra.mxu0 %v2433
  %3504 = vmatpush.msra.mxu0 %v2429
  %3505 = vmatpush.msra.mxu0 %v2425
  %3506 = vmatpush.msra.mxu0 %v2421
  %3507 = vmatpush.msra.mxu0 %v2417
  %3508 = vmatpush.msra.mxu0 %v2413
  %3509 = vmatpush.msra.mxu0 %v2409
  %3510 = vmatpush.msra.mxu0 %v2405
  %3511 = vmatpush.msra.mxu0 %v2401
  %3512 = vmatpush.msra.mxu0 %v2397
  %3513 = vmatpush.msra.mxu0 %v2393
  %3514 = vmatpush.msra.mxu0 %v2389
  %3515 = vmatpush.msra.mxu0 %v2385
  %3516 = vmatpush.msra.mxu0 %v2381
  %3517 = vmatpush.msra.mxu0 %v2377
  %3518 = vmatmul.f32.gmra.mxu0 %v3347
  %v3519 = vpop.f32.mrf.mxu0
  %v3520 = vadd.f32 0.0, %v3519
  %3521 = vdwg.mxu0
  %v3522 = vadd.f32 %v3438, %v3460
  %v3523 = vadd.f32 %v3439, %v3480
  %v3524 = vadd.f32 %v3440, %v3500
  %v3525 = vadd.f32 %v3441, %v3520
  %v3526 = vxor.u32 %v3434, 2147483648
  %v3527 = vxor.u32 %v3435, 2147483648
  %v3528 = vxor.u32 %v3436, 2147483648
  %v3529 = vmul.f32 %v3526, 1.442695
  %v3530 = vpow.pop %v3529
  %v3531 = vmul.f32 %v3527, 1.442695
  %v3532 = vpow.pop %v3531
  %v3533 = vmul.f32 %v3528, 1.442695
  %v3534 = vpow.pop %v3533
  %v3535 = vadd.f32 %v3530, 1.0
  %v3536 = vadd.f32 %v3532, 1.0
  %v3537 = vadd.f32 %v3534, 1.0
  %v3538 = vrcp.pop %v3535
  %v3539 = vmul.f32 %v3535, %v3538
  %v3540 = vsub.f32 1.0, %v3539
  %v3541 = vmul.f32 %v3538, %v3540
  %v3542 = vadd.f32 %v3538, %v3541
  %vm3543 = vweird.f32 %v3535
  %vm3544 = vweird.f32 %v3538
  %vm3545 = vmor %vm3543, %vm3544
  %v3546 = vsel %vm3545, %v3538, %v3542
  %v3547 = vand.u32 2147483647, %v3535
  %vm3548 = vcmp.eq.f32.partialorder %v3547, 8.507059e+37
  %v3549 = vand.u32 %v3535, 2147483648
  %v3550 = vor.u32 1.1754944e-38, %v3549
  %v3551 = vsel %vm3548, %v3550, %v3546
  %v3552 = vmul.f32 1.0, %v3551
  %v3553 = vrcp.pop %v3536
  %v3554 = vmul.f32 %v3536, %v3553
  %v3555 = vsub.f32 1.0, %v3554
  %v3556 = vmul.f32 %v3553, %v3555
  %v3557 = vadd.f32 %v3553, %v3556
  %vm3558 = vweird.f32 %v3536
  %vm3559 = vweird.f32 %v3553
  %vm3560 = vmor %vm3558, %vm3559
  %v3561 = vsel %vm3560, %v3553, %v3557
  %v3562 = vand.u32 2147483647, %v3536
  %vm3563 = vcmp.eq.f32.partialorder %v3562, 8.507059e+37
  %v3564 = vand.u32 %v3536, 2147483648
  %v3565 = vor.u32 1.1754944e-38, %v3564
  %v3566 = vsel %vm3563, %v3565, %v3561
  %v3567 = vmul.f32 1.0, %v3566
  %v3568 = vrcp.pop %v3537
  %v3569 = vmul.f32 %v3537, %v3568
  %v3570 = vsub.f32 1.0, %v3569
  %v3571 = vmul.f32 %v3568, %v3570
  %v3572 = vadd.f32 %v3568, %v3571
  %vm3573 = vweird.f32 %v3537
  %vm3574 = vweird.f32 %v3568
  %vm3575 = vmor %vm3573, %vm3574
  %v3576 = vsel %vm3575, %v3568, %v3572
  %v3577 = vand.u32 2147483647, %v3537
  %vm3578 = vcmp.eq.f32.partialorder %v3577, 8.507059e+37
  %v3579 = vand.u32 %v3537, 2147483648
  %v3580 = vor.u32 1.1754944e-38, %v3579
  %v3581 = vsel %vm3578, %v3580, %v3576
  %v3582 = vmul.f32 1.0, %v3581
  %v3583 = vtanh.pop %v3437
  %v3584 = vmul.f32 %v3567, %v3282
  %v3585 = vmul.f32 %v3552, %v3583
  %v3586 = vadd.f32 %v3584, %v3585
  %v3587 = vtanh.pop %v3586
  %v3588 = vmul.f32 %v3582, %v3587
  %v3589 = vxor.u32 %v3522, 2147483648
  %v3590 = vxor.u32 %v3523, 2147483648
  %v3591 = vxor.u32 %v3524, 2147483648
  %v3592 = vmul.f32 %v3589, 1.442695
  %v3593 = vpow.pop %v3592
  %v3594 = vmul.f32 %v3590, 1.442695
  %v3595 = vpow.pop %v3594
  %v3596 = vmul.f32 %v3591, 1.442695
  %v3597 = vpow.pop %v3596
  %v3598 = vadd.f32 %v3593, 1.0
  %v3599 = vadd.f32 %v3595, 1.0
  %v3600 = vadd.f32 %v3597, 1.0
  %v3601 = vrcp.pop %v3598
  %v3602 = vmul.f32 %v3598, %v3601
  %v3603 = vsub.f32 1.0, %v3602
  %v3604 = vmul.f32 %v3601, %v3603
  %v3605 = vadd.f32 %v3601, %v3604
  %vm3606 = vweird.f32 %v3598
  %vm3607 = vweird.f32 %v3601
  %vm3608 = vmor %vm3606, %vm3607
  %v3609 = vsel %vm3608, %v3601, %v3605
  %v3610 = vand.u32 2147483647, %v3598
  %vm3611 = vcmp.eq.f32.partialorder %v3610, 8.507059e+37
  %v3612 = vand.u32 %v3598, 2147483648
  %v3613 = vor.u32 1.1754944e-38, %v3612
  %v3614 = vsel %vm3611, %v3613, %v3609
  %v3615 = vmul.f32 1.0, %v3614
  %v3616 = vrcp.pop %v3599
  %v3617 = vmul.f32 %v3599, %v3616
  %v3618 = vsub.f32 1.0, %v3617
  %v3619 = vmul.f32 %v3616, %v3618
  %v3620 = vadd.f32 %v3616, %v3619
  %vm3621 = vweird.f32 %v3599
  %vm3622 = vweird.f32 %v3616
  %vm3623 = vmor %vm3621, %vm3622
  %v3624 = vsel %vm3623, %v3616, %v3620
  %v3625 = vand.u32 2147483647, %v3599
  %vm3626 = vcmp.eq.f32.partialorder %v3625, 8.507059e+37
  %v3627 = vand.u32 %v3599, 2147483648
  %v3628 = vor.u32 1.1754944e-38, %v3627
  %v3629 = vsel %vm3626, %v3628, %v3624
  %v3630 = vmul.f32 1.0, %v3629
  %v3631 = vrcp.pop %v3600
  %v3632 = vmul.f32 %v3600, %v3631
  %v3633 = vsub.f32 1.0, %v3632
  %v3634 = vmul.f32 %v3631, %v3633
  %v3635 = vadd.f32 %v3631, %v3634
  %vm3636 = vweird.f32 %v3600
  %vm3637 = vweird.f32 %v3631
  %vm3638 = vmor %vm3636, %vm3637
  %v3639 = vsel %vm3638, %v3631, %v3635
  %v3640 = vand.u32 2147483647, %v3600
  %vm3641 = vcmp.eq.f32.partialorder %v3640, 8.507059e+37
  %v3642 = vand.u32 %v3600, 2147483648
  %v3643 = vor.u32 1.1754944e-38, %v3642
  %v3644 = vsel %vm3641, %v3643, %v3639
  %v3645 = vmul.f32 1.0, %v3644
  %v3646 = vtanh.pop %v3525
  %v3647 = vmul.f32 %v3630, %v3345
  %v3648 = vmul.f32 %v3615, %v3646
  %v3649 = vadd.f32 %v3647, %v3648
  %v3650 = vtanh.pop %v3649
  %v3651 = vmul.f32 %v3645, %v3650
  %3652 = vst [vmem:[#allocation3 + $0x18] sm:$0xff] %v3588
  %3653 = vst [vmem:[#allocation3 + $0x30] sm:$0xff] %v3651
  %v3654 = vld [vmem:[#allocation2 + $0x100] sm:$0xff]
  %v3655 = vld [vmem:[#allocation2 + $0x108] sm:$0xff]
  %v3656 = vld [vmem:[#allocation2 + $0x110] sm:$0xff]
  %v3657 = vld [vmem:[#allocation2 + $0x118] sm:$0xff]
  %3658 = vmatpush.msra.mxu0 %v2370
  %3659 = vmatpush.msra.mxu0 %v2366
  %3660 = vmatpush.msra.mxu0 %v2362
  %3661 = vmatpush.msra.mxu0 %v2358
  %3662 = vmatpush.msra.mxu0 %v2354
  %3663 = vmatpush.msra.mxu0 %v2350
  %3664 = vmatpush.msra.mxu0 %v2346
  %3665 = vmatpush.msra.mxu0 %v2342
  %3666 = vmatpush.msra.mxu0 %v2338
  %3667 = vmatpush.msra.mxu0 %v2334
  %3668 = vmatpush.msra.mxu0 %v2330
  %3669 = vmatpush.msra.mxu0 %v2326
  %3670 = vmatpush.msra.mxu0 %v2322
  %3671 = vmatpush.msra.mxu0 %v2318
  %3672 = vmatpush.msra.mxu0 %v2314
  %3673 = vmatpush.msra.mxu0 %v2310
  %3674 = vmatmul.f32.gmra.mxu0 %v3588
  %v3675 = vpop.f32.mrf.mxu0
  %v3676 = vadd.f32 0.0, %v3675
  %3677 = vdwg.mxu0
  %3678 = vmatpush.msra.mxu0 %v2371
  %3679 = vmatpush.msra.mxu0 %v2367
  %3680 = vmatpush.msra.mxu0 %v2363
  %3681 = vmatpush.msra.mxu0 %v2359
  %3682 = vmatpush.msra.mxu0 %v2355
  %3683 = vmatpush.msra.mxu0 %v2351
  %3684 = vmatpush.msra.mxu0 %v2347
  %3685 = vmatpush.msra.mxu0 %v2343
  %3686 = vmatpush.msra.mxu0 %v2339
  %3687 = vmatpush.msra.mxu0 %v2335
  %3688 = vmatpush.msra.mxu0 %v2331
  %3689 = vmatpush.msra.mxu0 %v2327
  %3690 = vmatpush.msra.mxu0 %v2323
  %3691 = vmatpush.msra.mxu0 %v2319
  %3692 = vmatpush.msra.mxu0 %v2315
  %3693 = vmatpush.msra.mxu0 %v2311
  %3694 = vmatmul.f32.gmra.mxu0 %v3588
  %v3695 = vpop.f32.mrf.mxu0
  %v3696 = vadd.f32 0.0, %v3695
  %3697 = vdwg.mxu0
  %3698 = vmatpush.msra.mxu0 %v2372
  %3699 = vmatpush.msra.mxu0 %v2368
  %3700 = vmatpush.msra.mxu0 %v2364
  %3701 = vmatpush.msra.mxu0 %v2360
  %3702 = vmatpush.msra.mxu0 %v2356
  %3703 = vmatpush.msra.mxu0 %v2352
  %3704 = vmatpush.msra.mxu0 %v2348
  %3705 = vmatpush.msra.mxu0 %v2344
  %3706 = vmatpush.msra.mxu0 %v2340
  %3707 = vmatpush.msra.mxu0 %v2336
  %3708 = vmatpush.msra.mxu0 %v2332
  %3709 = vmatpush.msra.mxu0 %v2328
  %3710 = vmatpush.msra.mxu0 %v2324
  %3711 = vmatpush.msra.mxu0 %v2320
  %3712 = vmatpush.msra.mxu0 %v2316
  %3713 = vmatpush.msra.mxu0 %v2312
  %3714 = vmatmul.f32.gmra.mxu0 %v3588
  %v3715 = vpop.f32.mrf.mxu0
  %v3716 = vadd.f32 0.0, %v3715
  %3717 = vdwg.mxu0
  %3718 = vmatpush.msra.mxu0 %v2373
  %3719 = vmatpush.msra.mxu0 %v2369
  %3720 = vmatpush.msra.mxu0 %v2365
  %3721 = vmatpush.msra.mxu0 %v2361
  %3722 = vmatpush.msra.mxu0 %v2357
  %3723 = vmatpush.msra.mxu0 %v2353
  %3724 = vmatpush.msra.mxu0 %v2349
  %3725 = vmatpush.msra.mxu0 %v2345
  %3726 = vmatpush.msra.mxu0 %v2341
  %3727 = vmatpush.msra.mxu0 %v2337
  %3728 = vmatpush.msra.mxu0 %v2333
  %3729 = vmatpush.msra.mxu0 %v2329
  %3730 = vmatpush.msra.mxu0 %v2325
  %3731 = vmatpush.msra.mxu0 %v2321
  %3732 = vmatpush.msra.mxu0 %v2317
  %3733 = vmatpush.msra.mxu0 %v2313
  %3734 = vmatmul.f32.gmra.mxu0 %v3588
  %v3735 = vpop.f32.mrf.mxu0
  %v3736 = vadd.f32 0.0, %v3735
  %3737 = vdwg.mxu0
  %v3738 = vadd.f32 %v3654, %v3676
  %v3739 = vadd.f32 %v3655, %v3696
  %v3740 = vadd.f32 %v3656, %v3716
  %v3741 = vadd.f32 %v3657, %v3736
  %v3742 = vld [vmem:[#allocation2 + $0x160] sm:$0xff]
  %v3743 = vld [vmem:[#allocation2 + $0x168] sm:$0xff]
  %v3744 = vld [vmem:[#allocation2 + $0x170] sm:$0xff]
  %v3745 = vld [vmem:[#allocation2 + $0x178] sm:$0xff]
  %3746 = vmatpush.msra.mxu0 %v2434
  %3747 = vmatpush.msra.mxu0 %v2430
  %3748 = vmatpush.msra.mxu0 %v2426
  %3749 = vmatpush.msra.mxu0 %v2422
  %3750 = vmatpush.msra.mxu0 %v2418
  %3751 = vmatpush.msra.mxu0 %v2414
  %3752 = vmatpush.msra.mxu0 %v2410
  %3753 = vmatpush.msra.mxu0 %v2406
  %3754 = vmatpush.msra.mxu0 %v2402
  %3755 = vmatpush.msra.mxu0 %v2398
  %3756 = vmatpush.msra.mxu0 %v2394
  %3757 = vmatpush.msra.mxu0 %v2390
  %3758 = vmatpush.msra.mxu0 %v2386
  %3759 = vmatpush.msra.mxu0 %v2382
  %3760 = vmatpush.msra.mxu0 %v2378
  %3761 = vmatpush.msra.mxu0 %v2374
  %3762 = vmatmul.f32.gmra.mxu0 %v3651
  %v3763 = vpop.f32.mrf.mxu0
  %v3764 = vadd.f32 0.0, %v3763
  %3765 = vdwg.mxu0
  %3766 = vmatpush.msra.mxu0 %v2435
  %3767 = vmatpush.msra.mxu0 %v2431
  %3768 = vmatpush.msra.mxu0 %v2427
  %3769 = vmatpush.msra.mxu0 %v2423
  %3770 = vmatpush.msra.mxu0 %v2419
  %3771 = vmatpush.msra.mxu0 %v2415
  %3772 = vmatpush.msra.mxu0 %v2411
  %3773 = vmatpush.msra.mxu0 %v2407
  %3774 = vmatpush.msra.mxu0 %v2403
  %3775 = vmatpush.msra.mxu0 %v2399
  %3776 = vmatpush.msra.mxu0 %v2395
  %3777 = vmatpush.msra.mxu0 %v2391
  %3778 = vmatpush.msra.mxu0 %v2387
  %3779 = vmatpush.msra.mxu0 %v2383
  %3780 = vmatpush.msra.mxu0 %v2379
  %3781 = vmatpush.msra.mxu0 %v2375
  %3782 = vmatmul.f32.gmra.mxu0 %v3651
  %v3783 = vpop.f32.mrf.mxu0
  %v3784 = vadd.f32 0.0, %v3783
  %3785 = vdwg.mxu0
  %3786 = vmatpush.msra.mxu0 %v2436
  %3787 = vmatpush.msra.mxu0 %v2432
  %3788 = vmatpush.msra.mxu0 %v2428
  %3789 = vmatpush.msra.mxu0 %v2424
  %3790 = vmatpush.msra.mxu0 %v2420
  %3791 = vmatpush.msra.mxu0 %v2416
  %3792 = vmatpush.msra.mxu0 %v2412
  %3793 = vmatpush.msra.mxu0 %v2408
  %3794 = vmatpush.msra.mxu0 %v2404
  %3795 = vmatpush.msra.mxu0 %v2400
  %3796 = vmatpush.msra.mxu0 %v2396
  %3797 = vmatpush.msra.mxu0 %v2392
  %3798 = vmatpush.msra.mxu0 %v2388
  %3799 = vmatpush.msra.mxu0 %v2384
  %3800 = vmatpush.msra.mxu0 %v2380
  %3801 = vmatpush.msra.mxu0 %v2376
  %3802 = vmatmul.f32.gmra.mxu0 %v3651
  %v3803 = vpop.f32.mrf.mxu0
  %v3804 = vadd.f32 0.0, %v3803
  %3805 = vdwg.mxu0
  %3806 = vmatpush.msra.mxu0 %v2437
  %3807 = vmatpush.msra.mxu0 %v2433
  %3808 = vmatpush.msra.mxu0 %v2429
  %3809 = vmatpush.msra.mxu0 %v2425
  %3810 = vmatpush.msra.mxu0 %v2421
  %3811 = vmatpush.msra.mxu0 %v2417
  %3812 = vmatpush.msra.mxu0 %v2413
  %3813 = vmatpush.msra.mxu0 %v2409
  %3814 = vmatpush.msra.mxu0 %v2405
  %3815 = vmatpush.msra.mxu0 %v2401
  %3816 = vmatpush.msra.mxu0 %v2397
  %3817 = vmatpush.msra.mxu0 %v2393
  %3818 = vmatpush.msra.mxu0 %v2389
  %3819 = vmatpush.msra.mxu0 %v2385
  %3820 = vmatpush.msra.mxu0 %v2381
  %3821 = vmatpush.msra.mxu0 %v2377
  %3822 = vmatmul.f32.gmra.mxu0 %v3651
  %v3823 = vpop.f32.mrf.mxu0
  %v3824 = vadd.f32 0.0, %v3823
  %3825 = vdwg.mxu0
  %v3826 = vadd.f32 %v3742, %v3764
  %v3827 = vadd.f32 %v3743, %v3784
  %v3828 = vadd.f32 %v3744, %v3804
  %v3829 = vadd.f32 %v3745, %v3824
  %v3830 = vxor.u32 %v3738, 2147483648
  %v3831 = vxor.u32 %v3739, 2147483648
  %v3832 = vxor.u32 %v3740, 2147483648
  %v3833 = vmul.f32 %v3830, 1.442695
  %v3834 = vpow.pop %v3833
  %v3835 = vmul.f32 %v3831, 1.442695
  %v3836 = vpow.pop %v3835
  %v3837 = vmul.f32 %v3832, 1.442695
  %v3838 = vpow.pop %v3837
  %v3839 = vadd.f32 %v3834, 1.0
  %v3840 = vadd.f32 %v3836, 1.0
  %v3841 = vadd.f32 %v3838, 1.0
  %v3842 = vrcp.pop %v3839
  %v3843 = vmul.f32 %v3839, %v3842
  %v3844 = vsub.f32 1.0, %v3843
  %v3845 = vmul.f32 %v3842, %v3844
  %v3846 = vadd.f32 %v3842, %v3845
  %vm3847 = vweird.f32 %v3839
  %vm3848 = vweird.f32 %v3842
  %vm3849 = vmor %vm3847, %vm3848
  %v3850 = vsel %vm3849, %v3842, %v3846
  %v3851 = vand.u32 2147483647, %v3839
  %vm3852 = vcmp.eq.f32.partialorder %v3851, 8.507059e+37
  %v3853 = vand.u32 %v3839, 2147483648
  %v3854 = vor.u32 1.1754944e-38, %v3853
  %v3855 = vsel %vm3852, %v3854, %v3850
  %v3856 = vmul.f32 1.0, %v3855
  %v3857 = vrcp.pop %v3840
  %v3858 = vmul.f32 %v3840, %v3857
  %v3859 = vsub.f32 1.0, %v3858
  %v3860 = vmul.f32 %v3857, %v3859
  %v3861 = vadd.f32 %v3857, %v3860
  %vm3862 = vweird.f32 %v3840
  %vm3863 = vweird.f32 %v3857
  %vm3864 = vmor %vm3862, %vm3863
  %v3865 = vsel %vm3864, %v3857, %v3861
  %v3866 = vand.u32 2147483647, %v3840
  %vm3867 = vcmp.eq.f32.partialorder %v3866, 8.507059e+37
  %v3868 = vand.u32 %v3840, 2147483648
  %v3869 = vor.u32 1.1754944e-38, %v3868
  %v3870 = vsel %vm3867, %v3869, %v3865
  %v3871 = vmul.f32 1.0, %v3870
  %v3872 = vrcp.pop %v3841
  %v3873 = vmul.f32 %v3841, %v3872
  %v3874 = vsub.f32 1.0, %v3873
  %v3875 = vmul.f32 %v3872, %v3874
  %v3876 = vadd.f32 %v3872, %v3875
  %vm3877 = vweird.f32 %v3841
  %vm3878 = vweird.f32 %v3872
  %vm3879 = vmor %vm3877, %vm3878
  %v3880 = vsel %vm3879, %v3872, %v3876
  %v3881 = vand.u32 2147483647, %v3841
  %vm3882 = vcmp.eq.f32.partialorder %v3881, 8.507059e+37
  %v3883 = vand.u32 %v3841, 2147483648
  %v3884 = vor.u32 1.1754944e-38, %v3883
  %v3885 = vsel %vm3882, %v3884, %v3880
  %v3886 = vmul.f32 1.0, %v3885
  %v3887 = vtanh.pop %v3741
  %v3888 = vmul.f32 %v3871, %v3586
  %v3889 = vmul.f32 %v3856, %v3887
  %v3890 = vadd.f32 %v3888, %v3889
  %v3891 = vtanh.pop %v3890
  %v3892 = vmul.f32 %v3886, %v3891
  %v3893 = vxor.u32 %v3826, 2147483648
  %v3894 = vxor.u32 %v3827, 2147483648
  %v3895 = vxor.u32 %v3828, 2147483648
  %v3896 = vmul.f32 %v3893, 1.442695
  %v3897 = vpow.pop %v3896
  %v3898 = vmul.f32 %v3894, 1.442695
  %v3899 = vpow.pop %v3898
  %v3900 = vmul.f32 %v3895, 1.442695
  %v3901 = vpow.pop %v3900
  %v3902 = vadd.f32 %v3897, 1.0
  %v3903 = vadd.f32 %v3899, 1.0
  %v3904 = vadd.f32 %v3901, 1.0
  %v3905 = vrcp.pop %v3902
  %v3906 = vmul.f32 %v3902, %v3905
  %v3907 = vsub.f32 1.0, %v3906
  %v3908 = vmul.f32 %v3905, %v3907
  %v3909 = vadd.f32 %v3905, %v3908
  %vm3910 = vweird.f32 %v3902
  %vm3911 = vweird.f32 %v3905
  %vm3912 = vmor %vm3910, %vm3911
  %v3913 = vsel %vm3912, %v3905, %v3909
  %v3914 = vand.u32 2147483647, %v3902
  %vm3915 = vcmp.eq.f32.partialorder %v3914, 8.507059e+37
  %v3916 = vand.u32 %v3902, 2147483648
  %v3917 = vor.u32 1.1754944e-38, %v3916
  %v3918 = vsel %vm3915, %v3917, %v3913
  %v3919 = vmul.f32 1.0, %v3918
  %v3920 = vrcp.pop %v3903
  %v3921 = vmul.f32 %v3903, %v3920
  %v3922 = vsub.f32 1.0, %v3921
  %v3923 = vmul.f32 %v3920, %v3922
  %v3924 = vadd.f32 %v3920, %v3923
  %vm3925 = vweird.f32 %v3903
  %vm3926 = vweird.f32 %v3920
  %vm3927 = vmor %vm3925, %vm3926
  %v3928 = vsel %vm3927, %v3920, %v3924
  %v3929 = vand.u32 2147483647, %v3903
  %vm3930 = vcmp.eq.f32.partialorder %v3929, 8.507059e+37
  %v3931 = vand.u32 %v3903, 2147483648
  %v3932 = vor.u32 1.1754944e-38, %v3931
  %v3933 = vsel %vm3930, %v3932, %v3928
  %v3934 = vmul.f32 1.0, %v3933
  %v3935 = vrcp.pop %v3904
  %v3936 = vmul.f32 %v3904, %v3935
  %v3937 = vsub.f32 1.0, %v3936
  %v3938 = vmul.f32 %v3935, %v3937
  %v3939 = vadd.f32 %v3935, %v3938
  %vm3940 = vweird.f32 %v3904
  %vm3941 = vweird.f32 %v3935
  %vm3942 = vmor %vm3940, %vm3941
  %v3943 = vsel %vm3942, %v3935, %v3939
  %v3944 = vand.u32 2147483647, %v3904
  %vm3945 = vcmp.eq.f32.partialorder %v3944, 8.507059e+37
  %v3946 = vand.u32 %v3904, 2147483648
  %v3947 = vor.u32 1.1754944e-38, %v3946
  %v3948 = vsel %vm3945, %v3947, %v3943
  %v3949 = vmul.f32 1.0, %v3948
  %v3950 = vtanh.pop %v3829
  %v3951 = vmul.f32 %v3934, %v3649
  %v3952 = vmul.f32 %v3919, %v3950
  %v3953 = vadd.f32 %v3951, %v3952
  %v3954 = vtanh.pop %v3953
  %v3955 = vmul.f32 %v3949, %v3954
  %3956 = vst [vmem:[#allocation3 + $0x20] sm:$0xff] %v3892
  %3957 = vst [vmem:[#allocation3 + $0x28] sm:$0xff] %v3955
  %v3958 = vld [vmem:[#allocation2 + $0x140] sm:$0xff]
  %v3959 = vld [vmem:[#allocation2 + $0x148] sm:$0xff]
  %v3960 = vld [vmem:[#allocation2 + $0x150] sm:$0xff]
  %v3961 = vld [vmem:[#allocation2 + $0x158] sm:$0xff]
  %3962 = vmatpush.msra.mxu0 %v2370
  %3963 = vmatpush.msra.mxu0 %v2366
  %3964 = vmatpush.msra.mxu0 %v2362
  %3965 = vmatpush.msra.mxu0 %v2358
  %3966 = vmatpush.msra.mxu0 %v2354
  %3967 = vmatpush.msra.mxu0 %v2350
  %3968 = vmatpush.msra.mxu0 %v2346
  %3969 = vmatpush.msra.mxu0 %v2342
  %3970 = vmatpush.msra.mxu0 %v2338
  %3971 = vmatpush.msra.mxu0 %v2334
  %3972 = vmatpush.msra.mxu0 %v2330
  %3973 = vmatpush.msra.mxu0 %v2326
  %3974 = vmatpush.msra.mxu0 %v2322
  %3975 = vmatpush.msra.mxu0 %v2318
  %3976 = vmatpush.msra.mxu0 %v2314
  %3977 = vmatpush.msra.mxu0 %v2310
  %3978 = vmatmul.f32.gmra.mxu0 %v3892
  %v3979 = vpop.f32.mrf.mxu0
  %v3980 = vadd.f32 0.0, %v3979
  %3981 = vdwg.mxu0
  %3982 = vmatpush.msra.mxu0 %v2371
  %3983 = vmatpush.msra.mxu0 %v2367
  %3984 = vmatpush.msra.mxu0 %v2363
  %3985 = vmatpush.msra.mxu0 %v2359
  %3986 = vmatpush.msra.mxu0 %v2355
  %3987 = vmatpush.msra.mxu0 %v2351
  %3988 = vmatpush.msra.mxu0 %v2347
  %3989 = vmatpush.msra.mxu0 %v2343
  %3990 = vmatpush.msra.mxu0 %v2339
  %3991 = vmatpush.msra.mxu0 %v2335
  %3992 = vmatpush.msra.mxu0 %v2331
  %3993 = vmatpush.msra.mxu0 %v2327
  %3994 = vmatpush.msra.mxu0 %v2323
  %3995 = vmatpush.msra.mxu0 %v2319
  %3996 = vmatpush.msra.mxu0 %v2315
  %3997 = vmatpush.msra.mxu0 %v2311
  %3998 = vmatmul.f32.gmra.mxu0 %v3892
  %v3999 = vpop.f32.mrf.mxu0
  %v4000 = vadd.f32 0.0, %v3999
  %4001 = vdwg.mxu0
  %4002 = vmatpush.msra.mxu0 %v2372
  %4003 = vmatpush.msra.mxu0 %v2368
  %4004 = vmatpush.msra.mxu0 %v2364
  %4005 = vmatpush.msra.mxu0 %v2360
  %4006 = vmatpush.msra.mxu0 %v2356
  %4007 = vmatpush.msra.mxu0 %v2352
  %4008 = vmatpush.msra.mxu0 %v2348
  %4009 = vmatpush.msra.mxu0 %v2344
  %4010 = vmatpush.msra.mxu0 %v2340
  %4011 = vmatpush.msra.mxu0 %v2336
  %4012 = vmatpush.msra.mxu0 %v2332
  %4013 = vmatpush.msra.mxu0 %v2328
  %4014 = vmatpush.msra.mxu0 %v2324
  %4015 = vmatpush.msra.mxu0 %v2320
  %4016 = vmatpush.msra.mxu0 %v2316
  %4017 = vmatpush.msra.mxu0 %v2312
  %4018 = vmatmul.f32.gmra.mxu0 %v3892
  %v4019 = vpop.f32.mrf.mxu0
  %v4020 = vadd.f32 0.0, %v4019
  %4021 = vdwg.mxu0
  %4022 = vmatpush.msra.mxu0 %v2373
  %4023 = vmatpush.msra.mxu0 %v2369
  %4024 = vmatpush.msra.mxu0 %v2365
  %4025 = vmatpush.msra.mxu0 %v2361
  %4026 = vmatpush.msra.mxu0 %v2357
  %4027 = vmatpush.msra.mxu0 %v2353
  %4028 = vmatpush.msra.mxu0 %v2349
  %4029 = vmatpush.msra.mxu0 %v2345
  %4030 = vmatpush.msra.mxu0 %v2341
  %4031 = vmatpush.msra.mxu0 %v2337
  %4032 = vmatpush.msra.mxu0 %v2333
  %4033 = vmatpush.msra.mxu0 %v2329
  %4034 = vmatpush.msra.mxu0 %v2325
  %4035 = vmatpush.msra.mxu0 %v2321
  %4036 = vmatpush.msra.mxu0 %v2317
  %4037 = vmatpush.msra.mxu0 %v2313
  %4038 = vmatmul.f32.gmra.mxu0 %v3892
  %v4039 = vpop.f32.mrf.mxu0
  %v4040 = vadd.f32 0.0, %v4039
  %4041 = vdwg.mxu0
  %v4042 = vadd.f32 %v3958, %v3980
  %v4043 = vadd.f32 %v3959, %v4000
  %v4044 = vadd.f32 %v3960, %v4020
  %v4045 = vadd.f32 %v3961, %v4040
  %v4046 = vld [vmem:[#allocation2 + $0x120] sm:$0xff]
  %v4047 = vld [vmem:[#allocation2 + $0x128] sm:$0xff]
  %v4048 = vld [vmem:[#allocation2 + $0x130] sm:$0xff]
  %v4049 = vld [vmem:[#allocation2 + $0x138] sm:$0xff]
  %4050 = vmatpush.msra.mxu0 %v2434
  %4051 = vmatpush.msra.mxu0 %v2430
  %4052 = vmatpush.msra.mxu0 %v2426
  %4053 = vmatpush.msra.mxu0 %v2422
  %4054 = vmatpush.msra.mxu0 %v2418
  %4055 = vmatpush.msra.mxu0 %v2414
  %4056 = vmatpush.msra.mxu0 %v2410
  %4057 = vmatpush.msra.mxu0 %v2406
  %4058 = vmatpush.msra.mxu0 %v2402
  %4059 = vmatpush.msra.mxu0 %v2398
  %4060 = vmatpush.msra.mxu0 %v2394
  %4061 = vmatpush.msra.mxu0 %v2390
  %4062 = vmatpush.msra.mxu0 %v2386
  %4063 = vmatpush.msra.mxu0 %v2382
  %4064 = vmatpush.msra.mxu0 %v2378
  %4065 = vmatpush.msra.mxu0 %v2374
  %4066 = vmatmul.f32.gmra.mxu0 %v3955
  %v4067 = vpop.f32.mrf.mxu0
  %v4068 = vadd.f32 0.0, %v4067
  %4069 = vdwg.mxu0
  %4070 = vmatpush.msra.mxu0 %v2435
  %4071 = vmatpush.msra.mxu0 %v2431
  %4072 = vmatpush.msra.mxu0 %v2427
  %4073 = vmatpush.msra.mxu0 %v2423
  %4074 = vmatpush.msra.mxu0 %v2419
  %4075 = vmatpush.msra.mxu0 %v2415
  %4076 = vmatpush.msra.mxu0 %v2411
  %4077 = vmatpush.msra.mxu0 %v2407
  %4078 = vmatpush.msra.mxu0 %v2403
  %4079 = vmatpush.msra.mxu0 %v2399
  %4080 = vmatpush.msra.mxu0 %v2395
  %4081 = vmatpush.msra.mxu0 %v2391
  %4082 = vmatpush.msra.mxu0 %v2387
  %4083 = vmatpush.msra.mxu0 %v2383
  %4084 = vmatpush.msra.mxu0 %v2379
  %4085 = vmatpush.msra.mxu0 %v2375
  %4086 = vmatmul.f32.gmra.mxu0 %v3955
  %v4087 = vpop.f32.mrf.mxu0
  %v4088 = vadd.f32 0.0, %v4087
  %4089 = vdwg.mxu0
  %4090 = vmatpush.msra.mxu0 %v2436
  %4091 = vmatpush.msra.mxu0 %v2432
  %4092 = vmatpush.msra.mxu0 %v2428
  %4093 = vmatpush.msra.mxu0 %v2424
  %4094 = vmatpush.msra.mxu0 %v2420
  %4095 = vmatpush.msra.mxu0 %v2416
  %4096 = vmatpush.msra.mxu0 %v2412
  %4097 = vmatpush.msra.mxu0 %v2408
  %4098 = vmatpush.msra.mxu0 %v2404
  %4099 = vmatpush.msra.mxu0 %v2400
  %4100 = vmatpush.msra.mxu0 %v2396
  %4101 = vmatpush.msra.mxu0 %v2392
  %4102 = vmatpush.msra.mxu0 %v2388
  %4103 = vmatpush.msra.mxu0 %v2384
  %4104 = vmatpush.msra.mxu0 %v2380
  %4105 = vmatpush.msra.mxu0 %v2376
  %4106 = vmatmul.f32.gmra.mxu0 %v3955
  %v4107 = vpop.f32.mrf.mxu0
  %v4108 = vadd.f32 0.0, %v4107
  %4109 = vdwg.mxu0
  %4110 = vmatpush.msra.mxu0 %v2437
  %4111 = vmatpush.msra.mxu0 %v2433
  %4112 = vmatpush.msra.mxu0 %v2429
  %4113 = vmatpush.msra.mxu0 %v2425
  %4114 = vmatpush.msra.mxu0 %v2421
  %4115 = vmatpush.msra.mxu0 %v2417
  %4116 = vmatpush.msra.mxu0 %v2413
  %4117 = vmatpush.msra.mxu0 %v2409
  %4118 = vmatpush.msra.mxu0 %v2405
  %4119 = vmatpush.msra.mxu0 %v2401
  %4120 = vmatpush.msra.mxu0 %v2397
  %4121 = vmatpush.msra.mxu0 %v2393
  %4122 = vmatpush.msra.mxu0 %v2389
  %4123 = vmatpush.msra.mxu0 %v2385
  %4124 = vmatpush.msra.mxu0 %v2381
  %4125 = vmatpush.msra.mxu0 %v2377
  %4126 = vmatmul.f32.gmra.mxu0 %v3955
  %v4127 = vpop.f32.mrf.mxu0
  %v4128 = vadd.f32 0.0, %v4127
  %4129 = vdwg.mxu0
  %v4130 = vadd.f32 %v4046, %v4068
  %v4131 = vadd.f32 %v4047, %v4088
  %v4132 = vadd.f32 %v4048, %v4108
  %v4133 = vadd.f32 %v4049, %v4128
  %v4134 = vxor.u32 %v4042, 2147483648
  %v4135 = vxor.u32 %v4043, 2147483648
  %v4136 = vxor.u32 %v4044, 2147483648
  %v4137 = vmul.f32 %v4134, 1.442695
  %v4138 = vpow.pop %v4137
  %v4139 = vmul.f32 %v4135, 1.442695
  %v4140 = vpow.pop %v4139
  %v4141 = vmul.f32 %v4136, 1.442695
  %v4142 = vpow.pop %v4141
  %v4143 = vadd.f32 %v4138, 1.0
  %v4144 = vadd.f32 %v4140, 1.0
  %v4145 = vadd.f32 %v4142, 1.0
  %v4146 = vrcp.pop %v4143
  %v4147 = vmul.f32 %v4143, %v4146
  %v4148 = vsub.f32 1.0, %v4147
  %v4149 = vmul.f32 %v4146, %v4148
  %v4150 = vadd.f32 %v4146, %v4149
  %vm4151 = vweird.f32 %v4143
  %vm4152 = vweird.f32 %v4146
  %vm4153 = vmor %vm4151, %vm4152
  %v4154 = vsel %vm4153, %v4146, %v4150
  %v4155 = vand.u32 2147483647, %v4143
  %vm4156 = vcmp.eq.f32.partialorder %v4155, 8.507059e+37
  %v4157 = vand.u32 %v4143, 2147483648
  %v4158 = vor.u32 1.1754944e-38, %v4157
  %v4159 = vsel %vm4156, %v4158, %v4154
  %v4160 = vmul.f32 1.0, %v4159
  %v4161 = vrcp.pop %v4144
  %v4162 = vmul.f32 %v4144, %v4161
  %v4163 = vsub.f32 1.0, %v4162
  %v4164 = vmul.f32 %v4161, %v4163
  %v4165 = vadd.f32 %v4161, %v4164
  %vm4166 = vweird.f32 %v4144
  %vm4167 = vweird.f32 %v4161
  %vm4168 = vmor %vm4166, %vm4167
  %v4169 = vsel %vm4168, %v4161, %v4165
  %v4170 = vand.u32 2147483647, %v4144
  %vm4171 = vcmp.eq.f32.partialorder %v4170, 8.507059e+37
  %v4172 = vand.u32 %v4144, 2147483648
  %v4173 = vor.u32 1.1754944e-38, %v4172
  %v4174 = vsel %vm4171, %v4173, %v4169
  %v4175 = vmul.f32 1.0, %v4174
  %v4176 = vrcp.pop %v4145
  %v4177 = vmul.f32 %v4145, %v4176
  %v4178 = vsub.f32 1.0, %v4177
  %v4179 = vmul.f32 %v4176, %v4178
  %v4180 = vadd.f32 %v4176, %v4179
  %vm4181 = vweird.f32 %v4145
  %vm4182 = vweird.f32 %v4176
  %vm4183 = vmor %vm4181, %vm4182
  %v4184 = vsel %vm4183, %v4176, %v4180
  %v4185 = vand.u32 2147483647, %v4145
  %vm4186 = vcmp.eq.f32.partialorder %v4185, 8.507059e+37
  %v4187 = vand.u32 %v4145, 2147483648
  %v4188 = vor.u32 1.1754944e-38, %v4187
  %v4189 = vsel %vm4186, %v4188, %v4184
  %v4190 = vmul.f32 1.0, %v4189
  %v4191 = vtanh.pop %v4045
  %v4192 = vmul.f32 %v4175, %v3890
  %v4193 = vmul.f32 %v4160, %v4191
  %v4194 = vadd.f32 %v4192, %v4193
  %v4195 = vtanh.pop %v4194
  %v4196 = vmul.f32 %v4190, %v4195
  %v4197 = vxor.u32 %v4130, 2147483648
  %v4198 = vxor.u32 %v4131, 2147483648
  %v4199 = vxor.u32 %v4132, 2147483648
  %v4200 = vmul.f32 %v4197, 1.442695
  %v4201 = vpow.pop %v4200
  %v4202 = vmul.f32 %v4198, 1.442695
  %v4203 = vpow.pop %v4202
  %v4204 = vmul.f32 %v4199, 1.442695
  %v4205 = vpow.pop %v4204
  %v4206 = vadd.f32 %v4201, 1.0
  %v4207 = vadd.f32 %v4203, 1.0
  %v4208 = vadd.f32 %v4205, 1.0
  %v4209 = vrcp.pop %v4206
  %v4210 = vmul.f32 %v4206, %v4209
  %v4211 = vsub.f32 1.0, %v4210
  %v4212 = vmul.f32 %v4209, %v4211
  %v4213 = vadd.f32 %v4209, %v4212
  %vm4214 = vweird.f32 %v4206
  %vm4215 = vweird.f32 %v4209
  %vm4216 = vmor %vm4214, %vm4215
  %v4217 = vsel %vm4216, %v4209, %v4213
  %v4218 = vand.u32 2147483647, %v4206
  %vm4219 = vcmp.eq.f32.partialorder %v4218, 8.507059e+37
  %v4220 = vand.u32 %v4206, 2147483648
  %v4221 = vor.u32 1.1754944e-38, %v4220
  %v4222 = vsel %vm4219, %v4221, %v4217
  %v4223 = vmul.f32 1.0, %v4222
  %v4224 = vrcp.pop %v4207
  %v4225 = vmul.f32 %v4207, %v4224
  %v4226 = vsub.f32 1.0, %v4225
  %v4227 = vmul.f32 %v4224, %v4226
  %v4228 = vadd.f32 %v4224, %v4227
  %vm4229 = vweird.f32 %v4207
  %vm4230 = vweird.f32 %v4224
  %vm4231 = vmor %vm4229, %vm4230
  %v4232 = vsel %vm4231, %v4224, %v4228
  %v4233 = vand.u32 2147483647, %v4207
  %vm4234 = vcmp.eq.f32.partialorder %v4233, 8.507059e+37
  %v4235 = vand.u32 %v4207, 2147483648
  %v4236 = vor.u32 1.1754944e-38, %v4235
  %v4237 = vsel %vm4234, %v4236, %v4232
  %v4238 = vmul.f32 1.0, %v4237
  %v4239 = vrcp.pop %v4208
  %v4240 = vmul.f32 %v4208, %v4239
  %v4241 = vsub.f32 1.0, %v4240
  %v4242 = vmul.f32 %v4239, %v4241
  %v4243 = vadd.f32 %v4239, %v4242
  %vm4244 = vweird.f32 %v4208
  %vm4245 = vweird.f32 %v4239
  %vm4246 = vmor %vm4244, %vm4245
  %v4247 = vsel %vm4246, %v4239, %v4243
  %v4248 = vand.u32 2147483647, %v4208
  %vm4249 = vcmp.eq.f32.partialorder %v4248, 8.507059e+37
  %v4250 = vand.u32 %v4208, 2147483648
  %v4251 = vor.u32 1.1754944e-38, %v4250
  %v4252 = vsel %vm4249, %v4251, %v4247
  %v4253 = vmul.f32 1.0, %v4252
  %v4254 = vtanh.pop %v4133
  %v4255 = vmul.f32 %v4238, %v3953
  %v4256 = vmul.f32 %v4223, %v4254
  %v4257 = vadd.f32 %v4255, %v4256
  %v4258 = vtanh.pop %v4257
  %v4259 = vmul.f32 %v4253, %v4258
  %v4260 = vld [vmem:[#allocation3 + $0x28] sm:$0xff]
  %v4261 = vadd.f32 %v4260, %v4196
  %4262 = vst [vmem:[#allocation3 + $0x28] sm:$0xff] %v4261
  %v4263 = vld [vmem:[#allocation3 + $0x20] sm:$0xff]
  %v4264 = vadd.f32 %v4263, %v4259
  %4265 = vst [vmem:[#allocation3 + $0x20] sm:$0xff] %v4264
  %v4266 = vld [vmem:[#allocation2 + $0x180] sm:$0xff]
  %v4267 = vld [vmem:[#allocation2 + $0x188] sm:$0xff]
  %v4268 = vld [vmem:[#allocation2 + $0x190] sm:$0xff]
  %v4269 = vld [vmem:[#allocation2 + $0x198] sm:$0xff]
  %4270 = vmatpush.msra.mxu0 %v2370
  %4271 = vmatpush.msra.mxu0 %v2366
  %4272 = vmatpush.msra.mxu0 %v2362
  %4273 = vmatpush.msra.mxu0 %v2358
  %4274 = vmatpush.msra.mxu0 %v2354
  %4275 = vmatpush.msra.mxu0 %v2350
  %4276 = vmatpush.msra.mxu0 %v2346
  %4277 = vmatpush.msra.mxu0 %v2342
  %4278 = vmatpush.msra.mxu0 %v2338
  %4279 = vmatpush.msra.mxu0 %v2334
  %4280 = vmatpush.msra.mxu0 %v2330
  %4281 = vmatpush.msra.mxu0 %v2326
  %4282 = vmatpush.msra.mxu0 %v2322
  %4283 = vmatpush.msra.mxu0 %v2318
  %4284 = vmatpush.msra.mxu0 %v2314
  %4285 = vmatpush.msra.mxu0 %v2310
  %4286 = vmatmul.f32.gmra.mxu0 %v4196
  %v4287 = vpop.f32.mrf.mxu0
  %v4288 = vadd.f32 0.0, %v4287
  %4289 = vdwg.mxu0
  %4290 = vmatpush.msra.mxu0 %v2371
  %4291 = vmatpush.msra.mxu0 %v2367
  %4292 = vmatpush.msra.mxu0 %v2363
  %4293 = vmatpush.msra.mxu0 %v2359
  %4294 = vmatpush.msra.mxu0 %v2355
  %4295 = vmatpush.msra.mxu0 %v2351
  %4296 = vmatpush.msra.mxu0 %v2347
  %4297 = vmatpush.msra.mxu0 %v2343
  %4298 = vmatpush.msra.mxu0 %v2339
  %4299 = vmatpush.msra.mxu0 %v2335
  %4300 = vmatpush.msra.mxu0 %v2331
  %4301 = vmatpush.msra.mxu0 %v2327
  %4302 = vmatpush.msra.mxu0 %v2323
  %4303 = vmatpush.msra.mxu0 %v2319
  %4304 = vmatpush.msra.mxu0 %v2315
  %4305 = vmatpush.msra.mxu0 %v2311
  %4306 = vmatmul.f32.gmra.mxu0 %v4196
  %v4307 = vpop.f32.mrf.mxu0
  %v4308 = vadd.f32 0.0, %v4307
  %4309 = vdwg.mxu0
  %4310 = vmatpush.msra.mxu0 %v2372
  %4311 = vmatpush.msra.mxu0 %v2368
  %4312 = vmatpush.msra.mxu0 %v2364
  %4313 = vmatpush.msra.mxu0 %v2360
  %4314 = vmatpush.msra.mxu0 %v2356
  %4315 = vmatpush.msra.mxu0 %v2352
  %4316 = vmatpush.msra.mxu0 %v2348
  %4317 = vmatpush.msra.mxu0 %v2344
  %4318 = vmatpush.msra.mxu0 %v2340
  %4319 = vmatpush.msra.mxu0 %v2336
  %4320 = vmatpush.msra.mxu0 %v2332
  %4321 = vmatpush.msra.mxu0 %v2328
  %4322 = vmatpush.msra.mxu0 %v2324
  %4323 = vmatpush.msra.mxu0 %v2320
  %4324 = vmatpush.msra.mxu0 %v2316
  %4325 = vmatpush.msra.mxu0 %v2312
  %4326 = vmatmul.f32.gmra.mxu0 %v4196
  %v4327 = vpop.f32.mrf.mxu0
  %v4328 = vadd.f32 0.0, %v4327
  %4329 = vdwg.mxu0
  %4330 = vmatpush.msra.mxu0 %v2373
  %4331 = vmatpush.msra.mxu0 %v2369
  %4332 = vmatpush.msra.mxu0 %v2365
  %4333 = vmatpush.msra.mxu0 %v2361
  %4334 = vmatpush.msra.mxu0 %v2357
  %4335 = vmatpush.msra.mxu0 %v2353
  %4336 = vmatpush.msra.mxu0 %v2349
  %4337 = vmatpush.msra.mxu0 %v2345
  %4338 = vmatpush.msra.mxu0 %v2341
  %4339 = vmatpush.msra.mxu0 %v2337
  %4340 = vmatpush.msra.mxu0 %v2333
  %4341 = vmatpush.msra.mxu0 %v2329
  %4342 = vmatpush.msra.mxu0 %v2325
  %4343 = vmatpush.msra.mxu0 %v2321
  %4344 = vmatpush.msra.mxu0 %v2317
  %4345 = vmatpush.msra.mxu0 %v2313
  %4346 = vmatmul.f32.gmra.mxu0 %v4196
  %v4347 = vpop.f32.mrf.mxu0
  %v4348 = vadd.f32 0.0, %v4347
  %4349 = vdwg.mxu0
  %v4350 = vadd.f32 %v4266, %v4288
  %v4351 = vadd.f32 %v4267, %v4308
  %v4352 = vadd.f32 %v4268, %v4328
  %v4353 = vadd.f32 %v4269, %v4348
  %v4354 = vld [vmem:[#allocation2 + $0xe0] sm:$0xff]
  %v4355 = vld [vmem:[#allocation2 + $0xe8] sm:$0xff]
  %v4356 = vld [vmem:[#allocation2 + $0xf0] sm:$0xff]
  %v4357 = vld [vmem:[#allocation2 + $0xf8] sm:$0xff]
  %4358 = vmatpush.msra.mxu0 %v2434
  %4359 = vmatpush.msra.mxu0 %v2430
  %4360 = vmatpush.msra.mxu0 %v2426
  %4361 = vmatpush.msra.mxu0 %v2422
  %4362 = vmatpush.msra.mxu0 %v2418
  %4363 = vmatpush.msra.mxu0 %v2414
  %4364 = vmatpush.msra.mxu0 %v2410
  %4365 = vmatpush.msra.mxu0 %v2406
  %4366 = vmatpush.msra.mxu0 %v2402
  %4367 = vmatpush.msra.mxu0 %v2398
  %4368 = vmatpush.msra.mxu0 %v2394
  %4369 = vmatpush.msra.mxu0 %v2390
  %4370 = vmatpush.msra.mxu0 %v2386
  %4371 = vmatpush.msra.mxu0 %v2382
  %4372 = vmatpush.msra.mxu0 %v2378
  %4373 = vmatpush.msra.mxu0 %v2374
  %4374 = vmatmul.f32.gmra.mxu0 %v4259
  %v4375 = vpop.f32.mrf.mxu0
  %v4376 = vadd.f32 0.0, %v4375
  %4377 = vdwg.mxu0
  %4378 = vmatpush.msra.mxu0 %v2435
  %4379 = vmatpush.msra.mxu0 %v2431
  %4380 = vmatpush.msra.mxu0 %v2427
  %4381 = vmatpush.msra.mxu0 %v2423
  %4382 = vmatpush.msra.mxu0 %v2419
  %4383 = vmatpush.msra.mxu0 %v2415
  %4384 = vmatpush.msra.mxu0 %v2411
  %4385 = vmatpush.msra.mxu0 %v2407
  %4386 = vmatpush.msra.mxu0 %v2403
  %4387 = vmatpush.msra.mxu0 %v2399
  %4388 = vmatpush.msra.mxu0 %v2395
  %4389 = vmatpush.msra.mxu0 %v2391
  %4390 = vmatpush.msra.mxu0 %v2387
  %4391 = vmatpush.msra.mxu0 %v2383
  %4392 = vmatpush.msra.mxu0 %v2379
  %4393 = vmatpush.msra.mxu0 %v2375
  %4394 = vmatmul.f32.gmra.mxu0 %v4259
  %v4395 = vpop.f32.mrf.mxu0
  %v4396 = vadd.f32 0.0, %v4395
  %4397 = vdwg.mxu0
  %4398 = vmatpush.msra.mxu0 %v2436
  %4399 = vmatpush.msra.mxu0 %v2432
  %4400 = vmatpush.msra.mxu0 %v2428
  %4401 = vmatpush.msra.mxu0 %v2424
  %4402 = vmatpush.msra.mxu0 %v2420
  %4403 = vmatpush.msra.mxu0 %v2416
  %4404 = vmatpush.msra.mxu0 %v2412
  %4405 = vmatpush.msra.mxu0 %v2408
  %4406 = vmatpush.msra.mxu0 %v2404
  %4407 = vmatpush.msra.mxu0 %v2400
  %4408 = vmatpush.msra.mxu0 %v2396
  %4409 = vmatpush.msra.mxu0 %v2392
  %4410 = vmatpush.msra.mxu0 %v2388
  %4411 = vmatpush.msra.mxu0 %v2384
  %4412 = vmatpush.msra.mxu0 %v2380
  %4413 = vmatpush.msra.mxu0 %v2376
  %4414 = vmatmul.f32.gmra.mxu0 %v4259
  %v4415 = vpop.f32.mrf.mxu0
  %v4416 = vadd.f32 0.0, %v4415
  %4417 = vdwg.mxu0
  %4418 = vmatpush.msra.mxu0 %v2437
  %4419 = vmatpush.msra.mxu0 %v2433
  %4420 = vmatpush.msra.mxu0 %v2429
  %4421 = vmatpush.msra.mxu0 %v2425
  %4422 = vmatpush.msra.mxu0 %v2421
  %4423 = vmatpush.msra.mxu0 %v2417
  %4424 = vmatpush.msra.mxu0 %v2413
  %4425 = vmatpush.msra.mxu0 %v2409
  %4426 = vmatpush.msra.mxu0 %v2405
  %4427 = vmatpush.msra.mxu0 %v2401
  %4428 = vmatpush.msra.mxu0 %v2397
  %4429 = vmatpush.msra.mxu0 %v2393
  %4430 = vmatpush.msra.mxu0 %v2389
  %4431 = vmatpush.msra.mxu0 %v2385
  %4432 = vmatpush.msra.mxu0 %v2381
  %4433 = vmatpush.msra.mxu0 %v2377
  %4434 = vmatmul.f32.gmra.mxu0 %v4259
  %v4435 = vpop.f32.mrf.mxu0
  %v4436 = vadd.f32 0.0, %v4435
  %4437 = vdwg.mxu0
  %v4438 = vadd.f32 %v4354, %v4376
  %v4439 = vadd.f32 %v4355, %v4396
  %v4440 = vadd.f32 %v4356, %v4416
  %v4441 = vadd.f32 %v4357, %v4436
  %v4442 = vxor.u32 %v4350, 2147483648
  %v4443 = vxor.u32 %v4351, 2147483648
  %v4444 = vxor.u32 %v4352, 2147483648
  %v4445 = vmul.f32 %v4442, 1.442695
  %v4446 = vpow.pop %v4445
  %v4447 = vmul.f32 %v4443, 1.442695
  %v4448 = vpow.pop %v4447
  %v4449 = vmul.f32 %v4444, 1.442695
  %v4450 = vpow.pop %v4449
  %v4451 = vadd.f32 %v4446, 1.0
  %v4452 = vadd.f32 %v4448, 1.0
  %v4453 = vadd.f32 %v4450, 1.0
  %v4454 = vrcp.pop %v4451
  %v4455 = vmul.f32 %v4451, %v4454
  %v4456 = vsub.f32 1.0, %v4455
  %v4457 = vmul.f32 %v4454, %v4456
  %v4458 = vadd.f32 %v4454, %v4457
  %vm4459 = vweird.f32 %v4451
  %vm4460 = vweird.f32 %v4454
  %vm4461 = vmor %vm4459, %vm4460
  %v4462 = vsel %vm4461, %v4454, %v4458
  %v4463 = vand.u32 2147483647, %v4451
  %vm4464 = vcmp.eq.f32.partialorder %v4463, 8.507059e+37
  %v4465 = vand.u32 %v4451, 2147483648
  %v4466 = vor.u32 1.1754944e-38, %v4465
  %v4467 = vsel %vm4464, %v4466, %v4462
  %v4468 = vmul.f32 1.0, %v4467
  %v4469 = vrcp.pop %v4452
  %v4470 = vmul.f32 %v4452, %v4469
  %v4471 = vsub.f32 1.0, %v4470
  %v4472 = vmul.f32 %v4469, %v4471
  %v4473 = vadd.f32 %v4469, %v4472
  %vm4474 = vweird.f32 %v4452
  %vm4475 = vweird.f32 %v4469
  %vm4476 = vmor %vm4474, %vm4475
  %v4477 = vsel %vm4476, %v4469, %v4473
  %v4478 = vand.u32 2147483647, %v4452
  %vm4479 = vcmp.eq.f32.partialorder %v4478, 8.507059e+37
  %v4480 = vand.u32 %v4452, 2147483648
  %v4481 = vor.u32 1.1754944e-38, %v4480
  %v4482 = vsel %vm4479, %v4481, %v4477
  %v4483 = vmul.f32 1.0, %v4482
  %v4484 = vrcp.pop %v4453
  %v4485 = vmul.f32 %v4453, %v4484
  %v4486 = vsub.f32 1.0, %v4485
  %v4487 = vmul.f32 %v4484, %v4486
  %v4488 = vadd.f32 %v4484, %v4487
  %vm4489 = vweird.f32 %v4453
  %vm4490 = vweird.f32 %v4484
  %vm4491 = vmor %vm4489, %vm4490
  %v4492 = vsel %vm4491, %v4484, %v4488
  %v4493 = vand.u32 2147483647, %v4453
  %vm4494 = vcmp.eq.f32.partialorder %v4493, 8.507059e+37
  %v4495 = vand.u32 %v4453, 2147483648
  %v4496 = vor.u32 1.1754944e-38, %v4495
  %v4497 = vsel %vm4494, %v4496, %v4492
  %v4498 = vmul.f32 1.0, %v4497
  %v4499 = vtanh.pop %v4353
  %v4500 = vmul.f32 %v4483, %v4194
  %v4501 = vmul.f32 %v4468, %v4499
  %v4502 = vadd.f32 %v4500, %v4501
  %v4503 = vtanh.pop %v4502
  %v4504 = vmul.f32 %v4498, %v4503
  %v4505 = vxor.u32 %v4438, 2147483648
  %v4506 = vxor.u32 %v4439, 2147483648
  %v4507 = vxor.u32 %v4440, 2147483648
  %v4508 = vmul.f32 %v4505, 1.442695
  %v4509 = vpow.pop %v4508
  %v4510 = vmul.f32 %v4506, 1.442695
  %v4511 = vpow.pop %v4510
  %v4512 = vmul.f32 %v4507, 1.442695
  %v4513 = vpow.pop %v4512
  %v4514 = vadd.f32 %v4509, 1.0
  %v4515 = vadd.f32 %v4511, 1.0
  %v4516 = vadd.f32 %v4513, 1.0
  %v4517 = vrcp.pop %v4514
  %v4518 = vmul.f32 %v4514, %v4517
  %v4519 = vsub.f32 1.0, %v4518
  %v4520 = vmul.f32 %v4517, %v4519
  %v4521 = vadd.f32 %v4517, %v4520
  %vm4522 = vweird.f32 %v4514
  %vm4523 = vweird.f32 %v4517
  %vm4524 = vmor %vm4522, %vm4523
  %v4525 = vsel %vm4524, %v4517, %v4521
  %v4526 = vand.u32 2147483647, %v4514
  %vm4527 = vcmp.eq.f32.partialorder %v4526, 8.507059e+37
  %v4528 = vand.u32 %v4514, 2147483648
  %v4529 = vor.u32 1.1754944e-38, %v4528
  %v4530 = vsel %vm4527, %v4529, %v4525
  %v4531 = vmul.f32 1.0, %v4530
  %v4532 = vrcp.pop %v4515
  %v4533 = vmul.f32 %v4515, %v4532
  %v4534 = vsub.f32 1.0, %v4533
  %v4535 = vmul.f32 %v4532, %v4534
  %v4536 = vadd.f32 %v4532, %v4535
  %vm4537 = vweird.f32 %v4515
  %vm4538 = vweird.f32 %v4532
  %vm4539 = vmor %vm4537, %vm4538
  %v4540 = vsel %vm4539, %v4532, %v4536
  %v4541 = vand.u32 2147483647, %v4515
  %vm4542 = vcmp.eq.f32.partialorder %v4541, 8.507059e+37
  %v4543 = vand.u32 %v4515, 2147483648
  %v4544 = vor.u32 1.1754944e-38, %v4543
  %v4545 = vsel %vm4542, %v4544, %v4540
  %v4546 = vmul.f32 1.0, %v4545
  %v4547 = vrcp.pop %v4516
  %v4548 = vmul.f32 %v4516, %v4547
  %v4549 = vsub.f32 1.0, %v4548
  %v4550 = vmul.f32 %v4547, %v4549
  %v4551 = vadd.f32 %v4547, %v4550
  %vm4552 = vweird.f32 %v4516
  %vm4553 = vweird.f32 %v4547
  %vm4554 = vmor %vm4552, %vm4553
  %v4555 = vsel %vm4554, %v4547, %v4551
  %v4556 = vand.u32 2147483647, %v4516
  %vm4557 = vcmp.eq.f32.partialorder %v4556, 8.507059e+37
  %v4558 = vand.u32 %v4516, 2147483648
  %v4559 = vor.u32 1.1754944e-38, %v4558
  %v4560 = vsel %vm4557, %v4559, %v4555
  %v4561 = vmul.f32 1.0, %v4560
  %v4562 = vtanh.pop %v4441
  %v4563 = vmul.f32 %v4546, %v4257
  %v4564 = vmul.f32 %v4531, %v4562
  %v4565 = vadd.f32 %v4563, %v4564
  %v4566 = vtanh.pop %v4565
  %v4567 = vmul.f32 %v4561, %v4566
  %v4568 = vld [vmem:[#allocation3 + $0x30] sm:$0xff]
  %v4569 = vadd.f32 %v4568, %v4504
  %4570 = vst [vmem:[#allocation3 + $0x30] sm:$0xff] %v4569
  %v4571 = vld [vmem:[#allocation3 + $0x18] sm:$0xff]
  %v4572 = vadd.f32 %v4571, %v4567
  %4573 = vst [vmem:[#allocation3 + $0x18] sm:$0xff] %v4572
  %v4574 = vld [vmem:[#allocation2 + $0x1c0] sm:$0xff]
  %v4575 = vld [vmem:[#allocation2 + $0x1c8] sm:$0xff]
  %v4576 = vld [vmem:[#allocation2 + $0x1d0] sm:$0xff]
  %v4577 = vld [vmem:[#allocation2 + $0x1d8] sm:$0xff]
  %4578 = vmatpush.msra.mxu0 %v2370
  %4579 = vmatpush.msra.mxu0 %v2366
  %4580 = vmatpush.msra.mxu0 %v2362
  %4581 = vmatpush.msra.mxu0 %v2358
  %4582 = vmatpush.msra.mxu0 %v2354
  %4583 = vmatpush.msra.mxu0 %v2350
  %4584 = vmatpush.msra.mxu0 %v2346
  %4585 = vmatpush.msra.mxu0 %v2342
  %4586 = vmatpush.msra.mxu0 %v2338
  %4587 = vmatpush.msra.mxu0 %v2334
  %4588 = vmatpush.msra.mxu0 %v2330
  %4589 = vmatpush.msra.mxu0 %v2326
  %4590 = vmatpush.msra.mxu0 %v2322
  %4591 = vmatpush.msra.mxu0 %v2318
  %4592 = vmatpush.msra.mxu0 %v2314
  %4593 = vmatpush.msra.mxu0 %v2310
  %4594 = vmatmul.f32.gmra.mxu0 %v4504
  %v4595 = vpop.f32.mrf.mxu0
  %v4596 = vadd.f32 0.0, %v4595
  %4597 = vdwg.mxu0
  %4598 = vmatpush.msra.mxu0 %v2371
  %4599 = vmatpush.msra.mxu0 %v2367
  %4600 = vmatpush.msra.mxu0 %v2363
  %4601 = vmatpush.msra.mxu0 %v2359
  %4602 = vmatpush.msra.mxu0 %v2355
  %4603 = vmatpush.msra.mxu0 %v2351
  %4604 = vmatpush.msra.mxu0 %v2347
  %4605 = vmatpush.msra.mxu0 %v2343
  %4606 = vmatpush.msra.mxu0 %v2339
  %4607 = vmatpush.msra.mxu0 %v2335
  %4608 = vmatpush.msra.mxu0 %v2331
  %4609 = vmatpush.msra.mxu0 %v2327
  %4610 = vmatpush.msra.mxu0 %v2323
  %4611 = vmatpush.msra.mxu0 %v2319
  %4612 = vmatpush.msra.mxu0 %v2315
  %4613 = vmatpush.msra.mxu0 %v2311
  %4614 = vmatmul.f32.gmra.mxu0 %v4504
  %v4615 = vpop.f32.mrf.mxu0
  %v4616 = vadd.f32 0.0, %v4615
  %4617 = vdwg.mxu0
  %4618 = vmatpush.msra.mxu0 %v2372
  %4619 = vmatpush.msra.mxu0 %v2368
  %4620 = vmatpush.msra.mxu0 %v2364
  %4621 = vmatpush.msra.mxu0 %v2360
  %4622 = vmatpush.msra.mxu0 %v2356
  %4623 = vmatpush.msra.mxu0 %v2352
  %4624 = vmatpush.msra.mxu0 %v2348
  %4625 = vmatpush.msra.mxu0 %v2344
  %4626 = vmatpush.msra.mxu0 %v2340
  %4627 = vmatpush.msra.mxu0 %v2336
  %4628 = vmatpush.msra.mxu0 %v2332
  %4629 = vmatpush.msra.mxu0 %v2328
  %4630 = vmatpush.msra.mxu0 %v2324
  %4631 = vmatpush.msra.mxu0 %v2320
  %4632 = vmatpush.msra.mxu0 %v2316
  %4633 = vmatpush.msra.mxu0 %v2312
  %4634 = vmatmul.f32.gmra.mxu0 %v4504
  %v4635 = vpop.f32.mrf.mxu0
  %v4636 = vadd.f32 0.0, %v4635
  %4637 = vdwg.mxu0
  %4638 = vmatpush.msra.mxu0 %v2373
  %4639 = vmatpush.msra.mxu0 %v2369
  %4640 = vmatpush.msra.mxu0 %v2365
  %4641 = vmatpush.msra.mxu0 %v2361
  %4642 = vmatpush.msra.mxu0 %v2357
  %4643 = vmatpush.msra.mxu0 %v2353
  %4644 = vmatpush.msra.mxu0 %v2349
  %4645 = vmatpush.msra.mxu0 %v2345
  %4646 = vmatpush.msra.mxu0 %v2341
  %4647 = vmatpush.msra.mxu0 %v2337
  %4648 = vmatpush.msra.mxu0 %v2333
  %4649 = vmatpush.msra.mxu0 %v2329
  %4650 = vmatpush.msra.mxu0 %v2325
  %4651 = vmatpush.msra.mxu0 %v2321
  %4652 = vmatpush.msra.mxu0 %v2317
  %4653 = vmatpush.msra.mxu0 %v2313
  %4654 = vmatmul.f32.gmra.mxu0 %v4504
  %v4655 = vpop.f32.mrf.mxu0
  %v4656 = vadd.f32 0.0, %v4655
  %4657 = vdwg.mxu0
  %v4658 = vadd.f32 %v4574, %v4596
  %v4659 = vadd.f32 %v4575, %v4616
  %v4660 = vadd.f32 %v4576, %v4636
  %v4661 = vadd.f32 %v4577, %v4656
  %v4662 = vld [vmem:[#allocation2 + $0xa0] sm:$0xff]
  %v4663 = vld [vmem:[#allocation2 + $0xa8] sm:$0xff]
  %v4664 = vld [vmem:[#allocation2 + $0xb0] sm:$0xff]
  %v4665 = vld [vmem:[#allocation2 + $0xb8] sm:$0xff]
  %4666 = vmatpush.msra.mxu0 %v2434
  %4667 = vmatpush.msra.mxu0 %v2430
  %4668 = vmatpush.msra.mxu0 %v2426
  %4669 = vmatpush.msra.mxu0 %v2422
  %4670 = vmatpush.msra.mxu0 %v2418
  %4671 = vmatpush.msra.mxu0 %v2414
  %4672 = vmatpush.msra.mxu0 %v2410
  %4673 = vmatpush.msra.mxu0 %v2406
  %4674 = vmatpush.msra.mxu0 %v2402
  %4675 = vmatpush.msra.mxu0 %v2398
  %4676 = vmatpush.msra.mxu0 %v2394
  %4677 = vmatpush.msra.mxu0 %v2390
  %4678 = vmatpush.msra.mxu0 %v2386
  %4679 = vmatpush.msra.mxu0 %v2382
  %4680 = vmatpush.msra.mxu0 %v2378
  %4681 = vmatpush.msra.mxu0 %v2374
  %4682 = vmatmul.f32.gmra.mxu0 %v4567
  %v4683 = vpop.f32.mrf.mxu0
  %v4684 = vadd.f32 0.0, %v4683
  %4685 = vdwg.mxu0
  %4686 = vmatpush.msra.mxu0 %v2435
  %4687 = vmatpush.msra.mxu0 %v2431
  %4688 = vmatpush.msra.mxu0 %v2427
  %4689 = vmatpush.msra.mxu0 %v2423
  %4690 = vmatpush.msra.mxu0 %v2419
  %4691 = vmatpush.msra.mxu0 %v2415
  %4692 = vmatpush.msra.mxu0 %v2411
  %4693 = vmatpush.msra.mxu0 %v2407
  %4694 = vmatpush.msra.mxu0 %v2403
  %4695 = vmatpush.msra.mxu0 %v2399
  %4696 = vmatpush.msra.mxu0 %v2395
  %4697 = vmatpush.msra.mxu0 %v2391
  %4698 = vmatpush.msra.mxu0 %v2387
  %4699 = vmatpush.msra.mxu0 %v2383
  %4700 = vmatpush.msra.mxu0 %v2379
  %4701 = vmatpush.msra.mxu0 %v2375
  %4702 = vmatmul.f32.gmra.mxu0 %v4567
  %v4703 = vpop.f32.mrf.mxu0
  %v4704 = vadd.f32 0.0, %v4703
  %4705 = vdwg.mxu0
  %4706 = vmatpush.msra.mxu0 %v2436
  %4707 = vmatpush.msra.mxu0 %v2432
  %4708 = vmatpush.msra.mxu0 %v2428
  %4709 = vmatpush.msra.mxu0 %v2424
  %4710 = vmatpush.msra.mxu0 %v2420
  %4711 = vmatpush.msra.mxu0 %v2416
  %4712 = vmatpush.msra.mxu0 %v2412
  %4713 = vmatpush.msra.mxu0 %v2408
  %4714 = vmatpush.msra.mxu0 %v2404
  %4715 = vmatpush.msra.mxu0 %v2400
  %4716 = vmatpush.msra.mxu0 %v2396
  %4717 = vmatpush.msra.mxu0 %v2392
  %4718 = vmatpush.msra.mxu0 %v2388
  %4719 = vmatpush.msra.mxu0 %v2384
  %4720 = vmatpush.msra.mxu0 %v2380
  %4721 = vmatpush.msra.mxu0 %v2376
  %4722 = vmatmul.f32.gmra.mxu0 %v4567
  %v4723 = vpop.f32.mrf.mxu0
  %v4724 = vadd.f32 0.0, %v4723
  %4725 = vdwg.mxu0
  %4726 = vmatpush.msra.mxu0 %v2437
  %4727 = vmatpush.msra.mxu0 %v2433
  %4728 = vmatpush.msra.mxu0 %v2429
  %4729 = vmatpush.msra.mxu0 %v2425
  %4730 = vmatpush.msra.mxu0 %v2421
  %4731 = vmatpush.msra.mxu0 %v2417
  %4732 = vmatpush.msra.mxu0 %v2413
  %4733 = vmatpush.msra.mxu0 %v2409
  %4734 = vmatpush.msra.mxu0 %v2405
  %4735 = vmatpush.msra.mxu0 %v2401
  %4736 = vmatpush.msra.mxu0 %v2397
  %4737 = vmatpush.msra.mxu0 %v2393
  %4738 = vmatpush.msra.mxu0 %v2389
  %4739 = vmatpush.msra.mxu0 %v2385
  %4740 = vmatpush.msra.mxu0 %v2381
  %4741 = vmatpush.msra.mxu0 %v2377
  %4742 = vmatmul.f32.gmra.mxu0 %v4567
  %v4743 = vpop.f32.mrf.mxu0
  %v4744 = vadd.f32 0.0, %v4743
  %4745 = vdwg.mxu0
  %v4746 = vadd.f32 %v4662, %v4684
  %v4747 = vadd.f32 %v4663, %v4704
  %v4748 = vadd.f32 %v4664, %v4724
  %v4749 = vadd.f32 %v4665, %v4744
  %v4750 = vxor.u32 %v4658, 2147483648
  %v4751 = vxor.u32 %v4659, 2147483648
  %v4752 = vxor.u32 %v4660, 2147483648
  %v4753 = vmul.f32 %v4750, 1.442695
  %v4754 = vpow.pop %v4753
  %v4755 = vmul.f32 %v4751, 1.442695
  %v4756 = vpow.pop %v4755
  %v4757 = vmul.f32 %v4752, 1.442695
  %v4758 = vpow.pop %v4757
  %v4759 = vadd.f32 %v4754, 1.0
  %v4760 = vadd.f32 %v4756, 1.0
  %v4761 = vadd.f32 %v4758, 1.0
  %v4762 = vrcp.pop %v4759
  %v4763 = vmul.f32 %v4759, %v4762
  %v4764 = vsub.f32 1.0, %v4763
  %v4765 = vmul.f32 %v4762, %v4764
  %v4766 = vadd.f32 %v4762, %v4765
  %vm4767 = vweird.f32 %v4759
  %vm4768 = vweird.f32 %v4762
  %vm4769 = vmor %vm4767, %vm4768
  %v4770 = vsel %vm4769, %v4762, %v4766
  %v4771 = vand.u32 2147483647, %v4759
  %vm4772 = vcmp.eq.f32.partialorder %v4771, 8.507059e+37
  %v4773 = vand.u32 %v4759, 2147483648
  %v4774 = vor.u32 1.1754944e-38, %v4773
  %v4775 = vsel %vm4772, %v4774, %v4770
  %v4776 = vmul.f32 1.0, %v4775
  %v4777 = vrcp.pop %v4760
  %v4778 = vmul.f32 %v4760, %v4777
  %v4779 = vsub.f32 1.0, %v4778
  %v4780 = vmul.f32 %v4777, %v4779
  %v4781 = vadd.f32 %v4777, %v4780
  %vm4782 = vweird.f32 %v4760
  %vm4783 = vweird.f32 %v4777
  %vm4784 = vmor %vm4782, %vm4783
  %v4785 = vsel %vm4784, %v4777, %v4781
  %v4786 = vand.u32 2147483647, %v4760
  %vm4787 = vcmp.eq.f32.partialorder %v4786, 8.507059e+37
  %v4788 = vand.u32 %v4760, 2147483648
  %v4789 = vor.u32 1.1754944e-38, %v4788
  %v4790 = vsel %vm4787, %v4789, %v4785
  %v4791 = vmul.f32 1.0, %v4790
  %v4792 = vrcp.pop %v4761
  %v4793 = vmul.f32 %v4761, %v4792
  %v4794 = vsub.f32 1.0, %v4793
  %v4795 = vmul.f32 %v4792, %v4794
  %v4796 = vadd.f32 %v4792, %v4795
  %vm4797 = vweird.f32 %v4761
  %vm4798 = vweird.f32 %v4792
  %vm4799 = vmor %vm4797, %vm4798
  %v4800 = vsel %vm4799, %v4792, %v4796
  %v4801 = vand.u32 2147483647, %v4761
  %vm4802 = vcmp.eq.f32.partialorder %v4801, 8.507059e+37
  %v4803 = vand.u32 %v4761, 2147483648
  %v4804 = vor.u32 1.1754944e-38, %v4803
  %v4805 = vsel %vm4802, %v4804, %v4800
  %v4806 = vmul.f32 1.0, %v4805
  %v4807 = vtanh.pop %v4661
  %v4808 = vmul.f32 %v4791, %v4502
  %v4809 = vmul.f32 %v4776, %v4807
  %v4810 = vadd.f32 %v4808, %v4809
  %v4811 = vtanh.pop %v4810
  %v4812 = vmul.f32 %v4806, %v4811
  %v4813 = vxor.u32 %v4746, 2147483648
  %v4814 = vxor.u32 %v4747, 2147483648
  %v4815 = vxor.u32 %v4748, 2147483648
  %v4816 = vmul.f32 %v4813, 1.442695
  %v4817 = vpow.pop %v4816
  %v4818 = vmul.f32 %v4814, 1.442695
  %v4819 = vpow.pop %v4818
  %v4820 = vmul.f32 %v4815, 1.442695
  %v4821 = vpow.pop %v4820
  %v4822 = vadd.f32 %v4817, 1.0
  %v4823 = vadd.f32 %v4819, 1.0
  %v4824 = vadd.f32 %v4821, 1.0
  %v4825 = vrcp.pop %v4822
  %v4826 = vmul.f32 %v4822, %v4825
  %v4827 = vsub.f32 1.0, %v4826
  %v4828 = vmul.f32 %v4825, %v4827
  %v4829 = vadd.f32 %v4825, %v4828
  %vm4830 = vweird.f32 %v4822
  %vm4831 = vweird.f32 %v4825
  %vm4832 = vmor %vm4830, %vm4831
  %v4833 = vsel %vm4832, %v4825, %v4829
  %v4834 = vand.u32 2147483647, %v4822
  %vm4835 = vcmp.eq.f32.partialorder %v4834, 8.507059e+37
  %v4836 = vand.u32 %v4822, 2147483648
  %v4837 = vor.u32 1.1754944e-38, %v4836
  %v4838 = vsel %vm4835, %v4837, %v4833
  %v4839 = vmul.f32 1.0, %v4838
  %v4840 = vrcp.pop %v4823
  %v4841 = vmul.f32 %v4823, %v4840
  %v4842 = vsub.f32 1.0, %v4841
  %v4843 = vmul.f32 %v4840, %v4842
  %v4844 = vadd.f32 %v4840, %v4843
  %vm4845 = vweird.f32 %v4823
  %vm4846 = vweird.f32 %v4840
  %vm4847 = vmor %vm4845, %vm4846
  %v4848 = vsel %vm4847, %v4840, %v4844
  %v4849 = vand.u32 2147483647, %v4823
  %vm4850 = vcmp.eq.f32.partialorder %v4849, 8.507059e+37
  %v4851 = vand.u32 %v4823, 2147483648
  %v4852 = vor.u32 1.1754944e-38, %v4851
  %v4853 = vsel %vm4850, %v4852, %v4848
  %v4854 = vmul.f32 1.0, %v4853
  %v4855 = vrcp.pop %v4824
  %v4856 = vmul.f32 %v4824, %v4855
  %v4857 = vsub.f32 1.0, %v4856
  %v4858 = vmul.f32 %v4855, %v4857
  %v4859 = vadd.f32 %v4855, %v4858
  %vm4860 = vweird.f32 %v4824
  %vm4861 = vweird.f32 %v4855
  %vm4862 = vmor %vm4860, %vm4861
  %v4863 = vsel %vm4862, %v4855, %v4859
  %v4864 = vand.u32 2147483647, %v4824
  %vm4865 = vcmp.eq.f32.partialorder %v4864, 8.507059e+37
  %v4866 = vand.u32 %v4824, 2147483648
  %v4867 = vor.u32 1.1754944e-38, %v4866
  %v4868 = vsel %vm4865, %v4867, %v4863
  %v4869 = vmul.f32 1.0, %v4868
  %v4870 = vtanh.pop %v4749
  %v4871 = vmul.f32 %v4854, %v4565
  %v4872 = vmul.f32 %v4839, %v4870
  %v4873 = vadd.f32 %v4871, %v4872
  %v4874 = vtanh.pop %v4873
  %v4875 = vmul.f32 %v4869, %v4874
  %v4876 = vld [vmem:[#allocation3 + $0x38] sm:$0xff]
  %v4877 = vadd.f32 %v4876, %v4812
  %4878 = vst [vmem:[#allocation3 + $0x38] sm:$0xff] %v4877
  %v4879 = vld [vmem:[#allocation3 + $0x10] sm:$0xff]
  %v4880 = vadd.f32 %v4879, %v4875
  %4881 = vst [vmem:[#allocation3 + $0x10] sm:$0xff] %v4880
  %v4882 = vld [vmem:[#allocation2 + $0x200] sm:$0xff]
  %v4883 = vld [vmem:[#allocation2 + $0x208] sm:$0xff]
  %v4884 = vld [vmem:[#allocation2 + $0x210] sm:$0xff]
  %v4885 = vld [vmem:[#allocation2 + $0x218] sm:$0xff]
  %4886 = vmatpush.msra.mxu0 %v2370
  %4887 = vmatpush.msra.mxu0 %v2366
  %4888 = vmatpush.msra.mxu0 %v2362
  %4889 = vmatpush.msra.mxu0 %v2358
  %4890 = vmatpush.msra.mxu0 %v2354
  %4891 = vmatpush.msra.mxu0 %v2350
  %4892 = vmatpush.msra.mxu0 %v2346
  %4893 = vmatpush.msra.mxu0 %v2342
  %4894 = vmatpush.msra.mxu0 %v2338
  %4895 = vmatpush.msra.mxu0 %v2334
  %4896 = vmatpush.msra.mxu0 %v2330
  %4897 = vmatpush.msra.mxu0 %v2326
  %4898 = vmatpush.msra.mxu0 %v2322
  %4899 = vmatpush.msra.mxu0 %v2318
  %4900 = vmatpush.msra.mxu0 %v2314
  %4901 = vmatpush.msra.mxu0 %v2310
  %4902 = vmatmul.f32.gmra.mxu0 %v4812
  %v4903 = vpop.f32.mrf.mxu0
  %v4904 = vadd.f32 0.0, %v4903
  %4905 = vdwg.mxu0
  %4906 = vmatpush.msra.mxu0 %v2371
  %4907 = vmatpush.msra.mxu0 %v2367
  %4908 = vmatpush.msra.mxu0 %v2363
  %4909 = vmatpush.msra.mxu0 %v2359
  %4910 = vmatpush.msra.mxu0 %v2355
  %4911 = vmatpush.msra.mxu0 %v2351
  %4912 = vmatpush.msra.mxu0 %v2347
  %4913 = vmatpush.msra.mxu0 %v2343
  %4914 = vmatpush.msra.mxu0 %v2339
  %4915 = vmatpush.msra.mxu0 %v2335
  %4916 = vmatpush.msra.mxu0 %v2331
  %4917 = vmatpush.msra.mxu0 %v2327
  %4918 = vmatpush.msra.mxu0 %v2323
  %4919 = vmatpush.msra.mxu0 %v2319
  %4920 = vmatpush.msra.mxu0 %v2315
  %4921 = vmatpush.msra.mxu0 %v2311
  %4922 = vmatmul.f32.gmra.mxu0 %v4812
  %v4923 = vpop.f32.mrf.mxu0
  %v4924 = vadd.f32 0.0, %v4923
  %4925 = vdwg.mxu0
  %4926 = vmatpush.msra.mxu0 %v2372
  %4927 = vmatpush.msra.mxu0 %v2368
  %4928 = vmatpush.msra.mxu0 %v2364
  %4929 = vmatpush.msra.mxu0 %v2360
  %4930 = vmatpush.msra.mxu0 %v2356
  %4931 = vmatpush.msra.mxu0 %v2352
  %4932 = vmatpush.msra.mxu0 %v2348
  %4933 = vmatpush.msra.mxu0 %v2344
  %4934 = vmatpush.msra.mxu0 %v2340
  %4935 = vmatpush.msra.mxu0 %v2336
  %4936 = vmatpush.msra.mxu0 %v2332
  %4937 = vmatpush.msra.mxu0 %v2328
  %4938 = vmatpush.msra.mxu0 %v2324
  %4939 = vmatpush.msra.mxu0 %v2320
  %4940 = vmatpush.msra.mxu0 %v2316
  %4941 = vmatpush.msra.mxu0 %v2312
  %4942 = vmatmul.f32.gmra.mxu0 %v4812
  %v4943 = vpop.f32.mrf.mxu0
  %v4944 = vadd.f32 0.0, %v4943
  %4945 = vdwg.mxu0
  %4946 = vmatpush.msra.mxu0 %v2373
  %4947 = vmatpush.msra.mxu0 %v2369
  %4948 = vmatpush.msra.mxu0 %v2365
  %4949 = vmatpush.msra.mxu0 %v2361
  %4950 = vmatpush.msra.mxu0 %v2357
  %4951 = vmatpush.msra.mxu0 %v2353
  %4952 = vmatpush.msra.mxu0 %v2349
  %4953 = vmatpush.msra.mxu0 %v2345
  %4954 = vmatpush.msra.mxu0 %v2341
  %4955 = vmatpush.msra.mxu0 %v2337
  %4956 = vmatpush.msra.mxu0 %v2333
  %4957 = vmatpush.msra.mxu0 %v2329
  %4958 = vmatpush.msra.mxu0 %v2325
  %4959 = vmatpush.msra.mxu0 %v2321
  %4960 = vmatpush.msra.mxu0 %v2317
  %4961 = vmatpush.msra.mxu0 %v2313
  %4962 = vmatmul.f32.gmra.mxu0 %v4812
  %v4963 = vpop.f32.mrf.mxu0
  %v4964 = vadd.f32 0.0, %v4963
  %4965 = vdwg.mxu0
  %v4966 = vadd.f32 %v4882, %v4904
  %v4967 = vadd.f32 %v4883, %v4924
  %v4968 = vadd.f32 %v4884, %v4944
  %v4969 = vadd.f32 %v4885, %v4964
  %v4970 = vld [vmem:[#allocation2 + $0x60] sm:$0xff]
  %v4971 = vld [vmem:[#allocation2 + $0x68] sm:$0xff]
  %v4972 = vld [vmem:[#allocation2 + $0x70] sm:$0xff]
  %v4973 = vld [vmem:[#allocation2 + $0x78] sm:$0xff]
  %4974 = vmatpush.msra.mxu0 %v2434
  %4975 = vmatpush.msra.mxu0 %v2430
  %4976 = vmatpush.msra.mxu0 %v2426
  %4977 = vmatpush.msra.mxu0 %v2422
  %4978 = vmatpush.msra.mxu0 %v2418
  %4979 = vmatpush.msra.mxu0 %v2414
  %4980 = vmatpush.msra.mxu0 %v2410
  %4981 = vmatpush.msra.mxu0 %v2406
  %4982 = vmatpush.msra.mxu0 %v2402
  %4983 = vmatpush.msra.mxu0 %v2398
  %4984 = vmatpush.msra.mxu0 %v2394
  %4985 = vmatpush.msra.mxu0 %v2390
  %4986 = vmatpush.msra.mxu0 %v2386
  %4987 = vmatpush.msra.mxu0 %v2382
  %4988 = vmatpush.msra.mxu0 %v2378
  %4989 = vmatpush.msra.mxu0 %v2374
  %4990 = vmatmul.f32.gmra.mxu0 %v4875
  %v4991 = vpop.f32.mrf.mxu0
  %v4992 = vadd.f32 0.0, %v4991
  %4993 = vdwg.mxu0
  %4994 = vmatpush.msra.mxu0 %v2435
  %4995 = vmatpush.msra.mxu0 %v2431
  %4996 = vmatpush.msra.mxu0 %v2427
  %4997 = vmatpush.msra.mxu0 %v2423
  %4998 = vmatpush.msra.mxu0 %v2419
  %4999 = vmatpush.msra.mxu0 %v2415
  %5000 = vmatpush.msra.mxu0 %v2411
  %5001 = vmatpush.msra.mxu0 %v2407
  %5002 = vmatpush.msra.mxu0 %v2403
  %5003 = vmatpush.msra.mxu0 %v2399
  %5004 = vmatpush.msra.mxu0 %v2395
  %5005 = vmatpush.msra.mxu0 %v2391
  %5006 = vmatpush.msra.mxu0 %v2387
  %5007 = vmatpush.msra.mxu0 %v2383
  %5008 = vmatpush.msra.mxu0 %v2379
  %5009 = vmatpush.msra.mxu0 %v2375
  %5010 = vmatmul.f32.gmra.mxu0 %v4875
  %v5011 = vpop.f32.mrf.mxu0
  %v5012 = vadd.f32 0.0, %v5011
  %5013 = vdwg.mxu0
  %5014 = vmatpush.msra.mxu0 %v2436
  %5015 = vmatpush.msra.mxu0 %v2432
  %5016 = vmatpush.msra.mxu0 %v2428
  %5017 = vmatpush.msra.mxu0 %v2424
  %5018 = vmatpush.msra.mxu0 %v2420
  %5019 = vmatpush.msra.mxu0 %v2416
  %5020 = vmatpush.msra.mxu0 %v2412
  %5021 = vmatpush.msra.mxu0 %v2408
  %5022 = vmatpush.msra.mxu0 %v2404
  %5023 = vmatpush.msra.mxu0 %v2400
  %5024 = vmatpush.msra.mxu0 %v2396
  %5025 = vmatpush.msra.mxu0 %v2392
  %5026 = vmatpush.msra.mxu0 %v2388
  %5027 = vmatpush.msra.mxu0 %v2384
  %5028 = vmatpush.msra.mxu0 %v2380
  %5029 = vmatpush.msra.mxu0 %v2376
  %5030 = vmatmul.f32.gmra.mxu0 %v4875
  %v5031 = vpop.f32.mrf.mxu0
  %v5032 = vadd.f32 0.0, %v5031
  %5033 = vdwg.mxu0
  %5034 = vmatpush.msra.mxu0 %v2437
  %5035 = vmatpush.msra.mxu0 %v2433
  %5036 = vmatpush.msra.mxu0 %v2429
  %5037 = vmatpush.msra.mxu0 %v2425
  %5038 = vmatpush.msra.mxu0 %v2421
  %5039 = vmatpush.msra.mxu0 %v2417
  %5040 = vmatpush.msra.mxu0 %v2413
  %5041 = vmatpush.msra.mxu0 %v2409
  %5042 = vmatpush.msra.mxu0 %v2405
  %5043 = vmatpush.msra.mxu0 %v2401
  %5044 = vmatpush.msra.mxu0 %v2397
  %5045 = vmatpush.msra.mxu0 %v2393
  %5046 = vmatpush.msra.mxu0 %v2389
  %5047 = vmatpush.msra.mxu0 %v2385
  %5048 = vmatpush.msra.mxu0 %v2381
  %5049 = vmatpush.msra.mxu0 %v2377
  %5050 = vmatmul.f32.gmra.mxu0 %v4875
  %v5051 = vpop.f32.mrf.mxu0
  %v5052 = vadd.f32 0.0, %v5051
  %5053 = vdwg.mxu0
  %v5054 = vadd.f32 %v4970, %v4992
  %v5055 = vadd.f32 %v4971, %v5012
  %v5056 = vadd.f32 %v4972, %v5032
  %v5057 = vadd.f32 %v4973, %v5052
  %v5058 = vxor.u32 %v4966, 2147483648
  %v5059 = vxor.u32 %v4967, 2147483648
  %v5060 = vxor.u32 %v4968, 2147483648
  %v5061 = vmul.f32 %v5058, 1.442695
  %v5062 = vpow.pop %v5061
  %v5063 = vmul.f32 %v5059, 1.442695
  %v5064 = vpow.pop %v5063
  %v5065 = vmul.f32 %v5060, 1.442695
  %v5066 = vpow.pop %v5065
  %v5067 = vadd.f32 %v5062, 1.0
  %v5068 = vadd.f32 %v5064, 1.0
  %v5069 = vadd.f32 %v5066, 1.0
  %v5070 = vrcp.pop %v5067
  %v5071 = vmul.f32 %v5067, %v5070
  %v5072 = vsub.f32 1.0, %v5071
  %v5073 = vmul.f32 %v5070, %v5072
  %v5074 = vadd.f32 %v5070, %v5073
  %vm5075 = vweird.f32 %v5067
  %vm5076 = vweird.f32 %v5070
  %vm5077 = vmor %vm5075, %vm5076
  %v5078 = vsel %vm5077, %v5070, %v5074
  %v5079 = vand.u32 2147483647, %v5067
  %vm5080 = vcmp.eq.f32.partialorder %v5079, 8.507059e+37
  %v5081 = vand.u32 %v5067, 2147483648
  %v5082 = vor.u32 1.1754944e-38, %v5081
  %v5083 = vsel %vm5080, %v5082, %v5078
  %v5084 = vmul.f32 1.0, %v5083
  %v5085 = vrcp.pop %v5068
  %v5086 = vmul.f32 %v5068, %v5085
  %v5087 = vsub.f32 1.0, %v5086
  %v5088 = vmul.f32 %v5085, %v5087
  %v5089 = vadd.f32 %v5085, %v5088
  %vm5090 = vweird.f32 %v5068
  %vm5091 = vweird.f32 %v5085
  %vm5092 = vmor %vm5090, %vm5091
  %v5093 = vsel %vm5092, %v5085, %v5089
  %v5094 = vand.u32 2147483647, %v5068
  %vm5095 = vcmp.eq.f32.partialorder %v5094, 8.507059e+37
  %v5096 = vand.u32 %v5068, 2147483648
  %v5097 = vor.u32 1.1754944e-38, %v5096
  %v5098 = vsel %vm5095, %v5097, %v5093
  %v5099 = vmul.f32 1.0, %v5098
  %v5100 = vrcp.pop %v5069
  %v5101 = vmul.f32 %v5069, %v5100
  %v5102 = vsub.f32 1.0, %v5101
  %v5103 = vmul.f32 %v5100, %v5102
  %v5104 = vadd.f32 %v5100, %v5103
  %vm5105 = vweird.f32 %v5069
  %vm5106 = vweird.f32 %v5100
  %vm5107 = vmor %vm5105, %vm5106
  %v5108 = vsel %vm5107, %v5100, %v5104
  %v5109 = vand.u32 2147483647, %v5069
  %vm5110 = vcmp.eq.f32.partialorder %v5109, 8.507059e+37
  %v5111 = vand.u32 %v5069, 2147483648
  %v5112 = vor.u32 1.1754944e-38, %v5111
  %v5113 = vsel %vm5110, %v5112, %v5108
  %v5114 = vmul.f32 1.0, %v5113
  %v5115 = vtanh.pop %v4969
  %v5116 = vmul.f32 %v5099, %v4810
  %v5117 = vmul.f32 %v5084, %v5115
  %v5118 = vadd.f32 %v5116, %v5117
  %v5119 = vtanh.pop %v5118
  %v5120 = vmul.f32 %v5114, %v5119
  %v5121 = vxor.u32 %v5054, 2147483648
  %v5122 = vxor.u32 %v5055, 2147483648
  %v5123 = vxor.u32 %v5056, 2147483648
  %v5124 = vmul.f32 %v5121, 1.442695
  %v5125 = vpow.pop %v5124
  %v5126 = vmul.f32 %v5122, 1.442695
  %v5127 = vpow.pop %v5126
  %v5128 = vmul.f32 %v5123, 1.442695
  %v5129 = vpow.pop %v5128
  %v5130 = vadd.f32 %v5125, 1.0
  %v5131 = vadd.f32 %v5127, 1.0
  %v5132 = vadd.f32 %v5129, 1.0
  %v5133 = vrcp.pop %v5130
  %v5134 = vmul.f32 %v5130, %v5133
  %v5135 = vsub.f32 1.0, %v5134
  %v5136 = vmul.f32 %v5133, %v5135
  %v5137 = vadd.f32 %v5133, %v5136
  %vm5138 = vweird.f32 %v5130
  %vm5139 = vweird.f32 %v5133
  %vm5140 = vmor %vm5138, %vm5139
  %v5141 = vsel %vm5140, %v5133, %v5137
  %v5142 = vand.u32 2147483647, %v5130
  %vm5143 = vcmp.eq.f32.partialorder %v5142, 8.507059e+37
  %v5144 = vand.u32 %v5130, 2147483648
  %v5145 = vor.u32 1.1754944e-38, %v5144
  %v5146 = vsel %vm5143, %v5145, %v5141
  %v5147 = vmul.f32 1.0, %v5146
  %v5148 = vrcp.pop %v5131
  %v5149 = vmul.f32 %v5131, %v5148
  %v5150 = vsub.f32 1.0, %v5149
  %v5151 = vmul.f32 %v5148, %v5150
  %v5152 = vadd.f32 %v5148, %v5151
  %vm5153 = vweird.f32 %v5131
  %vm5154 = vweird.f32 %v5148
  %vm5155 = vmor %vm5153, %vm5154
  %v5156 = vsel %vm5155, %v5148, %v5152
  %v5157 = vand.u32 2147483647, %v5131
  %vm5158 = vcmp.eq.f32.partialorder %v5157, 8.507059e+37
  %v5159 = vand.u32 %v5131, 2147483648
  %v5160 = vor.u32 1.1754944e-38, %v5159
  %v5161 = vsel %vm5158, %v5160, %v5156
  %v5162 = vmul.f32 1.0, %v5161
  %v5163 = vrcp.pop %v5132
  %v5164 = vmul.f32 %v5132, %v5163
  %v5165 = vsub.f32 1.0, %v5164
  %v5166 = vmul.f32 %v5163, %v5165
  %v5167 = vadd.f32 %v5163, %v5166
  %vm5168 = vweird.f32 %v5132
  %vm5169 = vweird.f32 %v5163
  %vm5170 = vmor %vm5168, %vm5169
  %v5171 = vsel %vm5170, %v5163, %v5167
  %v5172 = vand.u32 2147483647, %v5132
  %vm5173 = vcmp.eq.f32.partialorder %v5172, 8.507059e+37
  %v5174 = vand.u32 %v5132, 2147483648
  %v5175 = vor.u32 1.1754944e-38, %v5174
  %v5176 = vsel %vm5173, %v5175, %v5171
  %v5177 = vmul.f32 1.0, %v5176
  %v5178 = vtanh.pop %v5057
  %v5179 = vmul.f32 %v5162, %v4873
  %v5180 = vmul.f32 %v5147, %v5178
  %v5181 = vadd.f32 %v5179, %v5180
  %v5182 = vtanh.pop %v5181
  %v5183 = vmul.f32 %v5177, %v5182
  %v5184 = vld [vmem:[#allocation3 + $0x40] sm:$0xff]
  %v5185 = vadd.f32 %v5184, %v5120
  %5186 = vst [vmem:[#allocation3 + $0x40] sm:$0xff] %v5185
  %v5187 = vld [vmem:[#allocation3 + $0x8] sm:$0xff]
  %v5188 = vadd.f32 %v5187, %v5183
  %5189 = vst [vmem:[#allocation3 + $0x8] sm:$0xff] %v5188
  %v5190 = vld [vmem:[#allocation2 + $0x240] sm:$0xff]
  %v5191 = vld [vmem:[#allocation2 + $0x248] sm:$0xff]
  %v5192 = vld [vmem:[#allocation2 + $0x250] sm:$0xff]
  %v5193 = vld [vmem:[#allocation2 + $0x258] sm:$0xff]
  %5194 = vmatpush.msra.mxu0 %v2370
  %5195 = vmatpush.msra.mxu0 %v2366
  %5196 = vmatpush.msra.mxu0 %v2362
  %5197 = vmatpush.msra.mxu0 %v2358
  %5198 = vmatpush.msra.mxu0 %v2354
  %5199 = vmatpush.msra.mxu0 %v2350
  %5200 = vmatpush.msra.mxu0 %v2346
  %5201 = vmatpush.msra.mxu0 %v2342
  %5202 = vmatpush.msra.mxu0 %v2338
  %5203 = vmatpush.msra.mxu0 %v2334
  %5204 = vmatpush.msra.mxu0 %v2330
  %5205 = vmatpush.msra.mxu0 %v2326
  %5206 = vmatpush.msra.mxu0 %v2322
  %5207 = vmatpush.msra.mxu0 %v2318
  %5208 = vmatpush.msra.mxu0 %v2314
  %5209 = vmatpush.msra.mxu0 %v2310
  %5210 = vmatmul.f32.gmra.mxu0 %v5120
  %v5211 = vpop.f32.mrf.mxu0
  %v5212 = vadd.f32 0.0, %v5211
  %5213 = vdwg.mxu0
  %5214 = vmatpush.msra.mxu0 %v2371
  %5215 = vmatpush.msra.mxu0 %v2367
  %5216 = vmatpush.msra.mxu0 %v2363
  %5217 = vmatpush.msra.mxu0 %v2359
  %5218 = vmatpush.msra.mxu0 %v2355
  %5219 = vmatpush.msra.mxu0 %v2351
  %5220 = vmatpush.msra.mxu0 %v2347
  %5221 = vmatpush.msra.mxu0 %v2343
  %5222 = vmatpush.msra.mxu0 %v2339
  %5223 = vmatpush.msra.mxu0 %v2335
  %5224 = vmatpush.msra.mxu0 %v2331
  %5225 = vmatpush.msra.mxu0 %v2327
  %5226 = vmatpush.msra.mxu0 %v2323
  %5227 = vmatpush.msra.mxu0 %v2319
  %5228 = vmatpush.msra.mxu0 %v2315
  %5229 = vmatpush.msra.mxu0 %v2311
  %5230 = vmatmul.f32.gmra.mxu0 %v5120
  %v5231 = vpop.f32.mrf.mxu0
  %v5232 = vadd.f32 0.0, %v5231
  %5233 = vdwg.mxu0
  %5234 = vmatpush.msra.mxu0 %v2372
  %5235 = vmatpush.msra.mxu0 %v2368
  %5236 = vmatpush.msra.mxu0 %v2364
  %5237 = vmatpush.msra.mxu0 %v2360
  %5238 = vmatpush.msra.mxu0 %v2356
  %5239 = vmatpush.msra.mxu0 %v2352
  %5240 = vmatpush.msra.mxu0 %v2348
  %5241 = vmatpush.msra.mxu0 %v2344
  %5242 = vmatpush.msra.mxu0 %v2340
  %5243 = vmatpush.msra.mxu0 %v2336
  %5244 = vmatpush.msra.mxu0 %v2332
  %5245 = vmatpush.msra.mxu0 %v2328
  %5246 = vmatpush.msra.mxu0 %v2324
  %5247 = vmatpush.msra.mxu0 %v2320
  %5248 = vmatpush.msra.mxu0 %v2316
  %5249 = vmatpush.msra.mxu0 %v2312
  %5250 = vmatmul.f32.gmra.mxu0 %v5120
  %v5251 = vpop.f32.mrf.mxu0
  %v5252 = vadd.f32 0.0, %v5251
  %5253 = vdwg.mxu0
  %5254 = vmatpush.msra.mxu0 %v2373
  %5255 = vmatpush.msra.mxu0 %v2369
  %5256 = vmatpush.msra.mxu0 %v2365
  %5257 = vmatpush.msra.mxu0 %v2361
  %5258 = vmatpush.msra.mxu0 %v2357
  %5259 = vmatpush.msra.mxu0 %v2353
  %5260 = vmatpush.msra.mxu0 %v2349
  %5261 = vmatpush.msra.mxu0 %v2345
  %5262 = vmatpush.msra.mxu0 %v2341
  %5263 = vmatpush.msra.mxu0 %v2337
  %5264 = vmatpush.msra.mxu0 %v2333
  %5265 = vmatpush.msra.mxu0 %v2329
  %5266 = vmatpush.msra.mxu0 %v2325
  %5267 = vmatpush.msra.mxu0 %v2321
  %5268 = vmatpush.msra.mxu0 %v2317
  %5269 = vmatpush.msra.mxu0 %v2313
  %5270 = vmatmul.f32.gmra.mxu0 %v5120
  %v5271 = vpop.f32.mrf.mxu0
  %v5272 = vadd.f32 0.0, %v5271
  %5273 = vdwg.mxu0
  %v5274 = vadd.f32 %v5190, %v5212
  %v5275 = vadd.f32 %v5191, %v5232
  %v5276 = vadd.f32 %v5192, %v5252
  %v5277 = vadd.f32 %v5193, %v5272
  %v5278 = vld [vmem:[#allocation2 + $0x20] sm:$0xff]
  %v5279 = vld [vmem:[#allocation2 + $0x28] sm:$0xff]
  %v5280 = vld [vmem:[#allocation2 + $0x30] sm:$0xff]
  %v5281 = vld [vmem:[#allocation2 + $0x38] sm:$0xff]
  %5282 = vmatpush.msra.mxu0 %v2434
  %5283 = vmatpush.msra.mxu0 %v2430
  %5284 = vmatpush.msra.mxu0 %v2426
  %5285 = vmatpush.msra.mxu0 %v2422
  %5286 = vmatpush.msra.mxu0 %v2418
  %5287 = vmatpush.msra.mxu0 %v2414
  %5288 = vmatpush.msra.mxu0 %v2410
  %5289 = vmatpush.msra.mxu0 %v2406
  %5290 = vmatpush.msra.mxu0 %v2402
  %5291 = vmatpush.msra.mxu0 %v2398
  %5292 = vmatpush.msra.mxu0 %v2394
  %5293 = vmatpush.msra.mxu0 %v2390
  %5294 = vmatpush.msra.mxu0 %v2386
  %5295 = vmatpush.msra.mxu0 %v2382
  %5296 = vmatpush.msra.mxu0 %v2378
  %5297 = vmatpush.msra.mxu0 %v2374
  %5298 = vmatmul.f32.gmra.mxu0 %v5183
  %v5299 = vpop.f32.mrf.mxu0
  %v5300 = vadd.f32 0.0, %v5299
  %5301 = vdwg.mxu0
  %5302 = vmatpush.msra.mxu0 %v2435
  %5303 = vmatpush.msra.mxu0 %v2431
  %5304 = vmatpush.msra.mxu0 %v2427
  %5305 = vmatpush.msra.mxu0 %v2423
  %5306 = vmatpush.msra.mxu0 %v2419
  %5307 = vmatpush.msra.mxu0 %v2415
  %5308 = vmatpush.msra.mxu0 %v2411
  %5309 = vmatpush.msra.mxu0 %v2407
  %5310 = vmatpush.msra.mxu0 %v2403
  %5311 = vmatpush.msra.mxu0 %v2399
  %5312 = vmatpush.msra.mxu0 %v2395
  %5313 = vmatpush.msra.mxu0 %v2391
  %5314 = vmatpush.msra.mxu0 %v2387
  %5315 = vmatpush.msra.mxu0 %v2383
  %5316 = vmatpush.msra.mxu0 %v2379
  %5317 = vmatpush.msra.mxu0 %v2375
  %5318 = vmatmul.f32.gmra.mxu0 %v5183
  %v5319 = vpop.f32.mrf.mxu0
  %v5320 = vadd.f32 0.0, %v5319
  %5321 = vdwg.mxu0
  %5322 = vmatpush.msra.mxu0 %v2436
  %5323 = vmatpush.msra.mxu0 %v2432
  %5324 = vmatpush.msra.mxu0 %v2428
  %5325 = vmatpush.msra.mxu0 %v2424
  %5326 = vmatpush.msra.mxu0 %v2420
  %5327 = vmatpush.msra.mxu0 %v2416
  %5328 = vmatpush.msra.mxu0 %v2412
  %5329 = vmatpush.msra.mxu0 %v2408
  %5330 = vmatpush.msra.mxu0 %v2404
  %5331 = vmatpush.msra.mxu0 %v2400
  %5332 = vmatpush.msra.mxu0 %v2396
  %5333 = vmatpush.msra.mxu0 %v2392
  %5334 = vmatpush.msra.mxu0 %v2388
  %5335 = vmatpush.msra.mxu0 %v2384
  %5336 = vmatpush.msra.mxu0 %v2380
  %5337 = vmatpush.msra.mxu0 %v2376
  %5338 = vmatmul.f32.gmra.mxu0 %v5183
  %v5339 = vpop.f32.mrf.mxu0
  %v5340 = vadd.f32 0.0, %v5339
  %5341 = vdwg.mxu0
  %5342 = vmatpush.msra.mxu0 %v2437
  %5343 = vmatpush.msra.mxu0 %v2433
  %5344 = vmatpush.msra.mxu0 %v2429
  %5345 = vmatpush.msra.mxu0 %v2425
  %5346 = vmatpush.msra.mxu0 %v2421
  %5347 = vmatpush.msra.mxu0 %v2417
  %5348 = vmatpush.msra.mxu0 %v2413
  %5349 = vmatpush.msra.mxu0 %v2409
  %5350 = vmatpush.msra.mxu0 %v2405
  %5351 = vmatpush.msra.mxu0 %v2401
  %5352 = vmatpush.msra.mxu0 %v2397
  %5353 = vmatpush.msra.mxu0 %v2393
  %5354 = vmatpush.msra.mxu0 %v2389
  %5355 = vmatpush.msra.mxu0 %v2385
  %5356 = vmatpush.msra.mxu0 %v2381
  %5357 = vmatpush.msra.mxu0 %v2377
  %5358 = vmatmul.f32.gmra.mxu0 %v5183
  %v5359 = vpop.f32.mrf.mxu0
  %v5360 = vadd.f32 0.0, %v5359
  %5361 = vdwg.mxu0
  %v5362 = vadd.f32 %v5278, %v5300
  %v5363 = vadd.f32 %v5279, %v5320
  %v5364 = vadd.f32 %v5280, %v5340
  %v5365 = vadd.f32 %v5281, %v5360
  %v5366 = vxor.u32 %v5274, 2147483648
  %v5367 = vxor.u32 %v5275, 2147483648
  %v5368 = vxor.u32 %v5276, 2147483648
  %v5369 = vmul.f32 %v5366, 1.442695
  %v5370 = vpow.pop %v5369
  %v5371 = vmul.f32 %v5367, 1.442695
  %v5372 = vpow.pop %v5371
  %v5373 = vmul.f32 %v5368, 1.442695
  %v5374 = vpow.pop %v5373
  %v5375 = vadd.f32 %v5370, 1.0
  %v5376 = vadd.f32 %v5372, 1.0
  %v5377 = vadd.f32 %v5374, 1.0
  %v5378 = vrcp.pop %v5375
  %v5379 = vmul.f32 %v5375, %v5378
  %v5380 = vsub.f32 1.0, %v5379
  %v5381 = vmul.f32 %v5378, %v5380
  %v5382 = vadd.f32 %v5378, %v5381
  %vm5383 = vweird.f32 %v5375
  %vm5384 = vweird.f32 %v5378
  %vm5385 = vmor %vm5383, %vm5384
  %v5386 = vsel %vm5385, %v5378, %v5382
  %v5387 = vand.u32 2147483647, %v5375
  %vm5388 = vcmp.eq.f32.partialorder %v5387, 8.507059e+37
  %v5389 = vand.u32 %v5375, 2147483648
  %v5390 = vor.u32 1.1754944e-38, %v5389
  %v5391 = vsel %vm5388, %v5390, %v5386
  %v5392 = vmul.f32 1.0, %v5391
  %v5393 = vrcp.pop %v5376
  %v5394 = vmul.f32 %v5376, %v5393
  %v5395 = vsub.f32 1.0, %v5394
  %v5396 = vmul.f32 %v5393, %v5395
  %v5397 = vadd.f32 %v5393, %v5396
  %vm5398 = vweird.f32 %v5376
  %vm5399 = vweird.f32 %v5393
  %vm5400 = vmor %vm5398, %vm5399
  %v5401 = vsel %vm5400, %v5393, %v5397
  %v5402 = vand.u32 2147483647, %v5376
  %vm5403 = vcmp.eq.f32.partialorder %v5402, 8.507059e+37
  %v5404 = vand.u32 %v5376, 2147483648
  %v5405 = vor.u32 1.1754944e-38, %v5404
  %v5406 = vsel %vm5403, %v5405, %v5401
  %v5407 = vmul.f32 1.0, %v5406
  %v5408 = vrcp.pop %v5377
  %v5409 = vmul.f32 %v5377, %v5408
  %v5410 = vsub.f32 1.0, %v5409
  %v5411 = vmul.f32 %v5408, %v5410
  %v5412 = vadd.f32 %v5408, %v5411
  %vm5413 = vweird.f32 %v5377
  %vm5414 = vweird.f32 %v5408
  %vm5415 = vmor %vm5413, %vm5414
  %v5416 = vsel %vm5415, %v5408, %v5412
  %v5417 = vand.u32 2147483647, %v5377
  %vm5418 = vcmp.eq.f32.partialorder %v5417, 8.507059e+37
  %v5419 = vand.u32 %v5377, 2147483648
  %v5420 = vor.u32 1.1754944e-38, %v5419
  %v5421 = vsel %vm5418, %v5420, %v5416
  %v5422 = vmul.f32 1.0, %v5421
  %v5423 = vtanh.pop %v5277
  %v5424 = vmul.f32 %v5407, %v5118
  %v5425 = vmul.f32 %v5392, %v5423
  %v5426 = vadd.f32 %v5424, %v5425
  %v5427 = vtanh.pop %v5426
  %v5428 = vmul.f32 %v5422, %v5427
  %v5429 = vxor.u32 %v5362, 2147483648
  %v5430 = vxor.u32 %v5363, 2147483648
  %v5431 = vxor.u32 %v5364, 2147483648
  %v5432 = vmul.f32 %v5429, 1.442695
  %v5433 = vpow.pop %v5432
  %v5434 = vmul.f32 %v5430, 1.442695
  %v5435 = vpow.pop %v5434
  %v5436 = vmul.f32 %v5431, 1.442695
  %v5437 = vpow.pop %v5436
  %v5438 = vadd.f32 %v5433, 1.0
  %v5439 = vadd.f32 %v5435, 1.0
  %v5440 = vadd.f32 %v5437, 1.0
  %v5441 = vrcp.pop %v5438
  %v5442 = vmul.f32 %v5438, %v5441
  %v5443 = vsub.f32 1.0, %v5442
  %v5444 = vmul.f32 %v5441, %v5443
  %v5445 = vadd.f32 %v5441, %v5444
  %vm5446 = vweird.f32 %v5438
  %vm5447 = vweird.f32 %v5441
  %vm5448 = vmor %vm5446, %vm5447
  %v5449 = vsel %vm5448, %v5441, %v5445
  %v5450 = vand.u32 2147483647, %v5438
  %vm5451 = vcmp.eq.f32.partialorder %v5450, 8.507059e+37
  %v5452 = vand.u32 %v5438, 2147483648
  %v5453 = vor.u32 1.1754944e-38, %v5452
  %v5454 = vsel %vm5451, %v5453, %v5449
  %v5455 = vmul.f32 1.0, %v5454
  %v5456 = vrcp.pop %v5439
  %v5457 = vmul.f32 %v5439, %v5456
  %v5458 = vsub.f32 1.0, %v5457
  %v5459 = vmul.f32 %v5456, %v5458
  %v5460 = vadd.f32 %v5456, %v5459
  %vm5461 = vweird.f32 %v5439
  %vm5462 = vweird.f32 %v5456
  %vm5463 = vmor %vm5461, %vm5462
  %v5464 = vsel %vm5463, %v5456, %v5460
  %v5465 = vand.u32 2147483647, %v5439
  %vm5466 = vcmp.eq.f32.partialorder %v5465, 8.507059e+37
  %v5467 = vand.u32 %v5439, 2147483648
  %v5468 = vor.u32 1.1754944e-38, %v5467
  %v5469 = vsel %vm5466, %v5468, %v5464
  %v5470 = vmul.f32 1.0, %v5469
  %v5471 = vrcp.pop %v5440
  %v5472 = vmul.f32 %v5440, %v5471
  %v5473 = vsub.f32 1.0, %v5472
  %v5474 = vmul.f32 %v5471, %v5473
  %v5475 = vadd.f32 %v5471, %v5474
  %vm5476 = vweird.f32 %v5440
  %vm5477 = vweird.f32 %v5471
  %vm5478 = vmor %vm5476, %vm5477
  %v5479 = vsel %vm5478, %v5471, %v5475
  %v5480 = vand.u32 2147483647, %v5440
  %vm5481 = vcmp.eq.f32.partialorder %v5480, 8.507059e+37
  %v5482 = vand.u32 %v5440, 2147483648
  %v5483 = vor.u32 1.1754944e-38, %v5482
  %v5484 = vsel %vm5481, %v5483, %v5479
  %v5485 = vmul.f32 1.0, %v5484
  %v5486 = vtanh.pop %v5365
  %v5487 = vmul.f32 %v5470, %v5181
  %v5488 = vmul.f32 %v5455, %v5486
  %v5489 = vadd.f32 %v5487, %v5488
  %v5490 = vtanh.pop %v5489
  %v5491 = vmul.f32 %v5485, %v5490
  %v5492 = vld [vmem:[#allocation3 + $0x48] sm:$0xff]
  %v5493 = vadd.f32 %v5492, %v5428
  %5494 = vst [vmem:[#allocation3 + $0x48] sm:$0xff] %v5493
  %v5495 = vld [vmem:[#allocation3] sm:$0xff]
  %v5496 = vadd.f32 %v5495, %v5491
  %5497 = vst [vmem:[#allocation3] sm:$0xff] %v5496
  %s5498 = smul.u32 8, 16
  %s5499 = smul.u32 %s5498, 8
  %s5500 = sshll.u32 %s5499, 4
  %5501 = dma.done [#allocation7], %s5500
  %s5502 = smul.u32 %s5498, 4
  %s5503 = sshll.u32 %s5502, 4
  %5504 = dma.done %s304, %s5503
  %s5505 = sshll.u32 %s5502, 4
  %5506 = dma.done %s449, %s5505
  %v5507 = vld [vmem:[#allocation3] sm:$0xff]
  %v5508 = vld [vmem:[#allocation3 + $0x8] sm:$0xff]
  %v5509 = vld [vmem:[#allocation3 + $0x10] sm:$0xff]
  %v5510 = vld [vmem:[#allocation3 + $0x18] sm:$0xff]
  %v5511 = vld [vmem:[#allocation3 + $0x20] sm:$0xff]
  %v5512 = vld [vmem:[#allocation3 + $0x28] sm:$0xff]
  %v5513 = vld [vmem:[#allocation3 + $0x30] sm:$0xff]
  %v5514 = vld [vmem:[#allocation3 + $0x38] sm:$0xff]
  %v5515 = vld [vmem:[#allocation3 + $0x40] sm:$0xff]
  %v5516 = vld [vmem:[#allocation3 + $0x48] sm:$0xff]
  %v5517 = vld [vmem:[#allocation4] sm:$0xff]
  %v5518 = vld [vmem:[#allocation4 + $0x8] sm:$0xff]
  %v5519 = vld [vmem:[#allocation4 + $0x10] sm:$0xff]
  %v5520 = vld [vmem:[#allocation4 + $0x18] sm:$0xff]
  %v5521 = vld [vmem:[#allocation4 + $0x20] sm:$0xff]
  %v5522 = vld [vmem:[#allocation4 + $0x28] sm:$0xff]
  %v5523 = vld [vmem:[#allocation4 + $0x30] sm:$0xff]
  %v5524 = vld [vmem:[#allocation4 + $0x38] sm:$0xff]
  %v5525 = vld [vmem:[#allocation4 + $0x40] sm:$0xff]
  %v5526 = vld [vmem:[#allocation4 + $0x48] sm:$0xff]
  %v5527 = vld [vmem:[#allocation4 + $0x50] sm:$0xff]
  %v5528 = vld [vmem:[#allocation4 + $0x58] sm:$0xff]
  %v5529 = vld [vmem:[#allocation4 + $0x60] sm:$0xff]
  %v5530 = vld [vmem:[#allocation4 + $0x68] sm:$0xff]
  %v5531 = vld [vmem:[#allocation4 + $0x70] sm:$0xff]
  %v5532 = vld [vmem:[#allocation4 + $0x78] sm:$0xff]
  %v5533 = vld [vmem:[#allocation4 + $0x80] sm:$0xff]
  %v5534 = vld [vmem:[#allocation4 + $0x88] sm:$0xff]
  %v5535 = vld [vmem:[#allocation4 + $0x90] sm:$0xff]
  %v5536 = vld [vmem:[#allocation4 + $0x98] sm:$0xff]
  %v5537 = vld [vmem:[#allocation4 + $0xa0] sm:$0xff]
  %v5538 = vld [vmem:[#allocation4 + $0xa8] sm:$0xff]
  %v5539 = vld [vmem:[#allocation4 + $0xb0] sm:$0xff]
  %v5540 = vld [vmem:[#allocation4 + $0xb8] sm:$0xff]
  %v5541 = vld [vmem:[#allocation4 + $0xc0] sm:$0xff]
  %v5542 = vld [vmem:[#allocation4 + $0xc8] sm:$0xff]
  %v5543 = vld [vmem:[#allocation4 + $0xd0] sm:$0xff]
  %v5544 = vld [vmem:[#allocation4 + $0xd8] sm:$0xff]
  %v5545 = vld [vmem:[#allocation4 + $0xe0] sm:$0xff]
  %v5546 = vld [vmem:[#allocation4 + $0xe8] sm:$0xff]
  %v5547 = vld [vmem:[#allocation4 + $0xf0] sm:$0xff]
  %v5548 = vld [vmem:[#allocation4 + $0xf8] sm:$0xff]
  %v5549 = vld [vmem:[#allocation4 + $0x100] sm:$0xff]
  %v5550 = vld [vmem:[#allocation4 + $0x108] sm:$0xff]
  %v5551 = vld [vmem:[#allocation4 + $0x110] sm:$0xff]
  %v5552 = vld [vmem:[#allocation4 + $0x118] sm:$0xff]
  %v5553 = vld [vmem:[#allocation4 + $0x120] sm:$0xff]
  %v5554 = vld [vmem:[#allocation4 + $0x128] sm:$0xff]
  %v5555 = vld [vmem:[#allocation4 + $0x130] sm:$0xff]
  %v5556 = vld [vmem:[#allocation4 + $0x138] sm:$0xff]
  %v5557 = vld [vmem:[#allocation4 + $0x140] sm:$0xff]
  %v5558 = vld [vmem:[#allocation4 + $0x148] sm:$0xff]
  %v5559 = vld [vmem:[#allocation4 + $0x150] sm:$0xff]
  %v5560 = vld [vmem:[#allocation4 + $0x158] sm:$0xff]
  %v5561 = vld [vmem:[#allocation4 + $0x160] sm:$0xff]
  %v5562 = vld [vmem:[#allocation4 + $0x168] sm:$0xff]
  %v5563 = vld [vmem:[#allocation4 + $0x170] sm:$0xff]
  %v5564 = vld [vmem:[#allocation4 + $0x178] sm:$0xff]
  %v5565 = vld [vmem:[#allocation4 + $0x180] sm:$0xff]
  %v5566 = vld [vmem:[#allocation4 + $0x188] sm:$0xff]
  %v5567 = vld [vmem:[#allocation4 + $0x190] sm:$0xff]
  %v5568 = vld [vmem:[#allocation4 + $0x198] sm:$0xff]
  %v5569 = vld [vmem:[#allocation4 + $0x1a0] sm:$0xff]
  %v5570 = vld [vmem:[#allocation4 + $0x1a8] sm:$0xff]
  %v5571 = vld [vmem:[#allocation4 + $0x1b0] sm:$0xff]
  %v5572 = vld [vmem:[#allocation4 + $0x1b8] sm:$0xff]
  %v5573 = vld [vmem:[#allocation4 + $0x1c0] sm:$0xff]
  %v5574 = vld [vmem:[#allocation4 + $0x1c8] sm:$0xff]
  %v5575 = vld [vmem:[#allocation4 + $0x1d0] sm:$0xff]
  %v5576 = vld [vmem:[#allocation4 + $0x1d8] sm:$0xff]
  %v5577 = vld [vmem:[#allocation4 + $0x1e0] sm:$0xff]
  %v5578 = vld [vmem:[#allocation4 + $0x1e8] sm:$0xff]
  %v5579 = vld [vmem:[#allocation4 + $0x1f0] sm:$0xff]
  %v5580 = vld [vmem:[#allocation4 + $0x1f8] sm:$0xff]
  %v5581 = vld [vmem:[#allocation4 + $0x200] sm:$0xff]
  %v5582 = vld [vmem:[#allocation4 + $0x208] sm:$0xff]
  %v5583 = vld [vmem:[#allocation4 + $0x210] sm:$0xff]
  %v5584 = vld [vmem:[#allocation4 + $0x218] sm:$0xff]
  %v5585 = vld [vmem:[#allocation4 + $0x220] sm:$0xff]
  %v5586 = vld [vmem:[#allocation4 + $0x228] sm:$0xff]
  %v5587 = vld [vmem:[#allocation4 + $0x230] sm:$0xff]
  %v5588 = vld [vmem:[#allocation4 + $0x238] sm:$0xff]
  %v5589 = vld [vmem:[#allocation4 + $0x240] sm:$0xff]
  %v5590 = vld [vmem:[#allocation4 + $0x248] sm:$0xff]
  %v5591 = vld [vmem:[#allocation4 + $0x250] sm:$0xff]
  %v5592 = vld [vmem:[#allocation4 + $0x258] sm:$0xff]
  %v5593 = vld [vmem:[#allocation4 + $0x260] sm:$0xff]
  %v5594 = vld [vmem:[#allocation4 + $0x268] sm:$0xff]
  %v5595 = vld [vmem:[#allocation4 + $0x270] sm:$0xff]
  %v5596 = vld [vmem:[#allocation4 + $0x278] sm:$0xff]
  %v5597 = vld [vmem:[#allocation4 + $0x280] sm:$0xff]
  %v5598 = vld [vmem:[#allocation4 + $0x288] sm:$0xff]
  %v5599 = vld [vmem:[#allocation4 + $0x290] sm:$0xff]
  %v5600 = vld [vmem:[#allocation4 + $0x298] sm:$0xff]
  %v5601 = vld [vmem:[#allocation4 + $0x2a0] sm:$0xff]
  %v5602 = vld [vmem:[#allocation4 + $0x2a8] sm:$0xff]
  %v5603 = vld [vmem:[#allocation4 + $0x2b0] sm:$0xff]
  %v5604 = vld [vmem:[#allocation4 + $0x2b8] sm:$0xff]
  %v5605 = vld [vmem:[#allocation4 + $0x2c0] sm:$0xff]
  %v5606 = vld [vmem:[#allocation4 + $0x2c8] sm:$0xff]
  %v5607 = vld [vmem:[#allocation4 + $0x2d0] sm:$0xff]
  %v5608 = vld [vmem:[#allocation4 + $0x2d8] sm:$0xff]
  %v5609 = vld [vmem:[#allocation4 + $0x2e0] sm:$0xff]
  %v5610 = vld [vmem:[#allocation4 + $0x2e8] sm:$0xff]
  %v5611 = vld [vmem:[#allocation4 + $0x2f0] sm:$0xff]
  %v5612 = vld [vmem:[#allocation4 + $0x2f8] sm:$0xff]
  %v5613 = vld [vmem:[#allocation4 + $0x300] sm:$0xff]
  %v5614 = vld [vmem:[#allocation4 + $0x308] sm:$0xff]
  %v5615 = vld [vmem:[#allocation4 + $0x310] sm:$0xff]
  %v5616 = vld [vmem:[#allocation4 + $0x318] sm:$0xff]
  %v5617 = vld [vmem:[#allocation4 + $0x320] sm:$0xff]
  %v5618 = vld [vmem:[#allocation4 + $0x328] sm:$0xff]
  %v5619 = vld [vmem:[#allocation4 + $0x330] sm:$0xff]
  %v5620 = vld [vmem:[#allocation4 + $0x338] sm:$0xff]
  %v5621 = vld [vmem:[#allocation4 + $0x340] sm:$0xff]
  %v5622 = vld [vmem:[#allocation4 + $0x348] sm:$0xff]
  %v5623 = vld [vmem:[#allocation4 + $0x350] sm:$0xff]
  %v5624 = vld [vmem:[#allocation4 + $0x358] sm:$0xff]
  %v5625 = vld [vmem:[#allocation4 + $0x360] sm:$0xff]
  %v5626 = vld [vmem:[#allocation4 + $0x368] sm:$0xff]
  %v5627 = vld [vmem:[#allocation4 + $0x370] sm:$0xff]
  %v5628 = vld [vmem:[#allocation4 + $0x378] sm:$0xff]
  %v5629 = vld [vmem:[#allocation4 + $0x380] sm:$0xff]
  %v5630 = vld [vmem:[#allocation4 + $0x388] sm:$0xff]
  %v5631 = vld [vmem:[#allocation4 + $0x390] sm:$0xff]
  %v5632 = vld [vmem:[#allocation4 + $0x398] sm:$0xff]
  %v5633 = vld [vmem:[#allocation4 + $0x3a0] sm:$0xff]
  %v5634 = vld [vmem:[#allocation4 + $0x3a8] sm:$0xff]
  %v5635 = vld [vmem:[#allocation4 + $0x3b0] sm:$0xff]
  %v5636 = vld [vmem:[#allocation4 + $0x3b8] sm:$0xff]
  %v5637 = vld [vmem:[#allocation4 + $0x3c0] sm:$0xff]
  %v5638 = vld [vmem:[#allocation4 + $0x3c8] sm:$0xff]
  %v5639 = vld [vmem:[#allocation4 + $0x3d0] sm:$0xff]
  %v5640 = vld [vmem:[#allocation4 + $0x3d8] sm:$0xff]
  %v5641 = vld [vmem:[#allocation4 + $0x3e0] sm:$0xff]
  %v5642 = vld [vmem:[#allocation4 + $0x3e8] sm:$0xff]
  %v5643 = vld [vmem:[#allocation4 + $0x3f0] sm:$0xff]
  %v5644 = vld [vmem:[#allocation4 + $0x3f8] sm:$0xff]
  %v5645 = vld [vmem:[%s7] sm:$0xff]
  %v5647 = vperm.slane %v5645, 0
  %v5648 = vperm.slane %v5645, 1
  %v5649 = vperm.slane %v5645, 2
  %v5650 = vperm.slane %v5645, 3
  %v5651 = vperm.slane %v5645, 4
  %v5652 = vperm.slane %v5645, 5
  %v5653 = vperm.slane %v5645, 6
  %v5654 = vperm.slane %v5645, 7
  %5663 = vmatpush.msra.mxu0 %v5637
  %5664 = vmatpush.msra.mxu0 %v5629
  %5665 = vmatpush.msra.mxu0 %v5621
  %5666 = vmatpush.msra.mxu0 %v5613
  %5667 = vmatpush.msra.mxu0 %v5605
  %5668 = vmatpush.msra.mxu0 %v5597
  %5669 = vmatpush.msra.mxu0 %v5589
  %5670 = vmatpush.msra.mxu0 %v5581
  %5671 = vmatpush.msra.mxu0 %v5573
  %5672 = vmatpush.msra.mxu0 %v5565
  %5673 = vmatpush.msra.mxu0 %v5557
  %5674 = vmatpush.msra.mxu0 %v5549
  %5675 = vmatpush.msra.mxu0 %v5541
  %5676 = vmatpush.msra.mxu0 %v5533
  %5677 = vmatpush.msra.mxu0 %v5525
  %5678 = vmatpush.msra.mxu0 %v5517
  %5679 = vmatmul.f32.gmra.mxu0 %v5507
  %v5680 = vpop.f32.mrf.mxu0
  %v5681 = vadd.f32 %v5647, %v5680
  %5682 = vmatmul.f32.gmra.mxu0 %v5508
  %v5683 = vpop.f32.mrf.mxu0
  %v5684 = vadd.f32 %v5647, %v5683
  %5685 = vmatmul.f32.gmra.mxu0 %v5509
  %v5686 = vpop.f32.mrf.mxu0
  %v5687 = vadd.f32 %v5647, %v5686
  %5688 = vmatmul.f32.gmra.mxu0 %v5510
  %v5689 = vpop.f32.mrf.mxu0
  %v5690 = vadd.f32 %v5647, %v5689
  %5691 = vmatmul.f32.gmra.mxu0 %v5511
  %v5692 = vpop.f32.mrf.mxu0
  %v5693 = vadd.f32 %v5647, %v5692
  %5694 = vmatmul.f32.gmra.mxu0 %v5512
  %v5695 = vpop.f32.mrf.mxu0
  %v5696 = vadd.f32 %v5647, %v5695
  %5697 = vmatmul.f32.gmra.mxu0 %v5513
  %v5698 = vpop.f32.mrf.mxu0
  %v5699 = vadd.f32 %v5647, %v5698
  %5700 = vmatmul.f32.gmra.mxu0 %v5514
  %v5701 = vpop.f32.mrf.mxu0
  %v5702 = vadd.f32 %v5647, %v5701
  %5703 = vmatmul.f32.gmra.mxu0 %v5515
  %v5704 = vpop.f32.mrf.mxu0
  %v5705 = vadd.f32 %v5647, %v5704
  %5706 = vmatmul.f32.gmra.mxu0 %v5516
  %v5707 = vpop.f32.mrf.mxu0
  %v5708 = vadd.f32 %v5647, %v5707
  %5709 = vdwg.mxu0
  %5710 = vmatpush.msra.mxu0 %v5638
  %5711 = vmatpush.msra.mxu0 %v5630
  %5712 = vmatpush.msra.mxu0 %v5622
  %5713 = vmatpush.msra.mxu0 %v5614
  %5714 = vmatpush.msra.mxu0 %v5606
  %5715 = vmatpush.msra.mxu0 %v5598
  %5716 = vmatpush.msra.mxu0 %v5590
  %5717 = vmatpush.msra.mxu0 %v5582
  %5718 = vmatpush.msra.mxu0 %v5574
  %5719 = vmatpush.msra.mxu0 %v5566
  %5720 = vmatpush.msra.mxu0 %v5558
  %5721 = vmatpush.msra.mxu0 %v5550
  %5722 = vmatpush.msra.mxu0 %v5542
  %5723 = vmatpush.msra.mxu0 %v5534
  %5724 = vmatpush.msra.mxu0 %v5526
  %5725 = vmatpush.msra.mxu0 %v5518
  %5726 = vmatmul.f32.gmra.mxu0 %v5507
  %v5727 = vpop.f32.mrf.mxu0
  %v5728 = vadd.f32 %v5648, %v5727
  %5729 = vmatmul.f32.gmra.mxu0 %v5508
  %v5730 = vpop.f32.mrf.mxu0
  %v5731 = vadd.f32 %v5648, %v5730
  %5732 = vmatmul.f32.gmra.mxu0 %v5509
  %v5733 = vpop.f32.mrf.mxu0
  %v5734 = vadd.f32 %v5648, %v5733
  %5735 = vmatmul.f32.gmra.mxu0 %v5510
  %v5736 = vpop.f32.mrf.mxu0
  %v5737 = vadd.f32 %v5648, %v5736
  %5738 = vmatmul.f32.gmra.mxu0 %v5511
  %v5739 = vpop.f32.mrf.mxu0
  %v5740 = vadd.f32 %v5648, %v5739
  %5741 = vmatmul.f32.gmra.mxu0 %v5512
  %v5742 = vpop.f32.mrf.mxu0
  %v5743 = vadd.f32 %v5648, %v5742
  %5744 = vmatmul.f32.gmra.mxu0 %v5513
  %v5745 = vpop.f32.mrf.mxu0
  %v5746 = vadd.f32 %v5648, %v5745
  %5747 = vmatmul.f32.gmra.mxu0 %v5514
  %v5748 = vpop.f32.mrf.mxu0
  %v5749 = vadd.f32 %v5648, %v5748
  %5750 = vmatmul.f32.gmra.mxu0 %v5515
  %v5751 = vpop.f32.mrf.mxu0
  %v5752 = vadd.f32 %v5648, %v5751
  %5753 = vmatmul.f32.gmra.mxu0 %v5516
  %v5754 = vpop.f32.mrf.mxu0
  %v5755 = vadd.f32 %v5648, %v5754
  %5756 = vdwg.mxu0
  %5757 = vmatpush.msra.mxu0 %v5639
  %5758 = vmatpush.msra.mxu0 %v5631
  %5759 = vmatpush.msra.mxu0 %v5623
  %5760 = vmatpush.msra.mxu0 %v5615
  %5761 = vmatpush.msra.mxu0 %v5607
  %5762 = vmatpush.msra.mxu0 %v5599
  %5763 = vmatpush.msra.mxu0 %v5591
  %5764 = vmatpush.msra.mxu0 %v5583
  %5765 = vmatpush.msra.mxu0 %v5575
  %5766 = vmatpush.msra.mxu0 %v5567
  %5767 = vmatpush.msra.mxu0 %v5559
  %5768 = vmatpush.msra.mxu0 %v5551
  %5769 = vmatpush.msra.mxu0 %v5543
  %5770 = vmatpush.msra.mxu0 %v5535
  %5771 = vmatpush.msra.mxu0 %v5527
  %5772 = vmatpush.msra.mxu0 %v5519
  %5773 = vmatmul.f32.gmra.mxu0 %v5507
  %v5774 = vpop.f32.mrf.mxu0
  %v5775 = vadd.f32 %v5649, %v5774
  %5776 = vmatmul.f32.gmra.mxu0 %v5508
  %v5777 = vpop.f32.mrf.mxu0
  %v5778 = vadd.f32 %v5649, %v5777
  %5779 = vmatmul.f32.gmra.mxu0 %v5509
  %v5780 = vpop.f32.mrf.mxu0
  %v5781 = vadd.f32 %v5649, %v5780
  %5782 = vmatmul.f32.gmra.mxu0 %v5510
  %v5783 = vpop.f32.mrf.mxu0
  %v5784 = vadd.f32 %v5649, %v5783
  %5785 = vmatmul.f32.gmra.mxu0 %v5511
  %v5786 = vpop.f32.mrf.mxu0
  %v5787 = vadd.f32 %v5649, %v5786
  %5788 = vmatmul.f32.gmra.mxu0 %v5512
  %v5789 = vpop.f32.mrf.mxu0
  %v5790 = vadd.f32 %v5649, %v5789
  %5791 = vmatmul.f32.gmra.mxu0 %v5513
  %v5792 = vpop.f32.mrf.mxu0
  %v5793 = vadd.f32 %v5649, %v5792
  %5794 = vmatmul.f32.gmra.mxu0 %v5514
  %v5795 = vpop.f32.mrf.mxu0
  %v5796 = vadd.f32 %v5649, %v5795
  %5797 = vmatmul.f32.gmra.mxu0 %v5515
  %v5798 = vpop.f32.mrf.mxu0
  %v5799 = vadd.f32 %v5649, %v5798
  %5800 = vmatmul.f32.gmra.mxu0 %v5516
  %v5801 = vpop.f32.mrf.mxu0
  %v5802 = vadd.f32 %v5649, %v5801
  %5803 = vdwg.mxu0
  %5804 = vmatpush.msra.mxu0 %v5640
  %5805 = vmatpush.msra.mxu0 %v5632
  %5806 = vmatpush.msra.mxu0 %v5624
  %5807 = vmatpush.msra.mxu0 %v5616
  %5808 = vmatpush.msra.mxu0 %v5608
  %5809 = vmatpush.msra.mxu0 %v5600
  %5810 = vmatpush.msra.mxu0 %v5592
  %5811 = vmatpush.msra.mxu0 %v5584
  %5812 = vmatpush.msra.mxu0 %v5576
  %5813 = vmatpush.msra.mxu0 %v5568
  %5814 = vmatpush.msra.mxu0 %v5560
  %5815 = vmatpush.msra.mxu0 %v5552
  %5816 = vmatpush.msra.mxu0 %v5544
  %5817 = vmatpush.msra.mxu0 %v5536
  %5818 = vmatpush.msra.mxu0 %v5528
  %5819 = vmatpush.msra.mxu0 %v5520
  %5820 = vmatmul.f32.gmra.mxu0 %v5507
  %v5821 = vpop.f32.mrf.mxu0
  %v5822 = vadd.f32 %v5650, %v5821
  %5823 = vmatmul.f32.gmra.mxu0 %v5508
  %v5824 = vpop.f32.mrf.mxu0
  %v5825 = vadd.f32 %v5650, %v5824
  %5826 = vmatmul.f32.gmra.mxu0 %v5509
  %v5827 = vpop.f32.mrf.mxu0
  %v5828 = vadd.f32 %v5650, %v5827
  %5829 = vmatmul.f32.gmra.mxu0 %v5510
  %v5830 = vpop.f32.mrf.mxu0
  %v5831 = vadd.f32 %v5650, %v5830
  %5832 = vmatmul.f32.gmra.mxu0 %v5511
  %v5833 = vpop.f32.mrf.mxu0
  %v5834 = vadd.f32 %v5650, %v5833
  %5835 = vmatmul.f32.gmra.mxu0 %v5512
  %v5836 = vpop.f32.mrf.mxu0
  %v5837 = vadd.f32 %v5650, %v5836
  %5838 = vmatmul.f32.gmra.mxu0 %v5513
  %v5839 = vpop.f32.mrf.mxu0
  %v5840 = vadd.f32 %v5650, %v5839
  %5841 = vmatmul.f32.gmra.mxu0 %v5514
  %v5842 = vpop.f32.mrf.mxu0
  %v5843 = vadd.f32 %v5650, %v5842
  %5844 = vmatmul.f32.gmra.mxu0 %v5515
  %v5845 = vpop.f32.mrf.mxu0
  %v5846 = vadd.f32 %v5650, %v5845
  %5847 = vmatmul.f32.gmra.mxu0 %v5516
  %v5848 = vpop.f32.mrf.mxu0
  %v5849 = vadd.f32 %v5650, %v5848
  %5850 = vdwg.mxu0
  %5851 = vmatpush.msra.mxu0 %v5641
  %5852 = vmatpush.msra.mxu0 %v5633
  %5853 = vmatpush.msra.mxu0 %v5625
  %5854 = vmatpush.msra.mxu0 %v5617
  %5855 = vmatpush.msra.mxu0 %v5609
  %5856 = vmatpush.msra.mxu0 %v5601
  %5857 = vmatpush.msra.mxu0 %v5593
  %5858 = vmatpush.msra.mxu0 %v5585
  %5859 = vmatpush.msra.mxu0 %v5577
  %5860 = vmatpush.msra.mxu0 %v5569
  %5861 = vmatpush.msra.mxu0 %v5561
  %5862 = vmatpush.msra.mxu0 %v5553
  %5863 = vmatpush.msra.mxu0 %v5545
  %5864 = vmatpush.msra.mxu0 %v5537
  %5865 = vmatpush.msra.mxu0 %v5529
  %5866 = vmatpush.msra.mxu0 %v5521
  %5867 = vmatmul.f32.gmra.mxu0 %v5507
  %v5868 = vpop.f32.mrf.mxu0
  %v5869 = vadd.f32 %v5651, %v5868
  %5870 = vmatmul.f32.gmra.mxu0 %v5508
  %v5871 = vpop.f32.mrf.mxu0
  %v5872 = vadd.f32 %v5651, %v5871
  %5873 = vmatmul.f32.gmra.mxu0 %v5509
  %v5874 = vpop.f32.mrf.mxu0
  %v5875 = vadd.f32 %v5651, %v5874
  %5876 = vmatmul.f32.gmra.mxu0 %v5510
  %v5877 = vpop.f32.mrf.mxu0
  %v5878 = vadd.f32 %v5651, %v5877
  %5879 = vmatmul.f32.gmra.mxu0 %v5511
  %v5880 = vpop.f32.mrf.mxu0
  %v5881 = vadd.f32 %v5651, %v5880
  %5882 = vmatmul.f32.gmra.mxu0 %v5512
  %v5883 = vpop.f32.mrf.mxu0
  %v5884 = vadd.f32 %v5651, %v5883
  %5885 = vmatmul.f32.gmra.mxu0 %v5513
  %v5886 = vpop.f32.mrf.mxu0
  %v5887 = vadd.f32 %v5651, %v5886
  %5888 = vmatmul.f32.gmra.mxu0 %v5514
  %v5889 = vpop.f32.mrf.mxu0
  %v5890 = vadd.f32 %v5651, %v5889
  %5891 = vmatmul.f32.gmra.mxu0 %v5515
  %v5892 = vpop.f32.mrf.mxu0
  %v5893 = vadd.f32 %v5651, %v5892
  %5894 = vmatmul.f32.gmra.mxu0 %v5516
  %v5895 = vpop.f32.mrf.mxu0
  %v5896 = vadd.f32 %v5651, %v5895
  %5897 = vdwg.mxu0
  %5898 = vmatpush.msra.mxu0 %v5642
  %5899 = vmatpush.msra.mxu0 %v5634
  %5900 = vmatpush.msra.mxu0 %v5626
  %5901 = vmatpush.msra.mxu0 %v5618
  %5902 = vmatpush.msra.mxu0 %v5610
  %5903 = vmatpush.msra.mxu0 %v5602
  %5904 = vmatpush.msra.mxu0 %v5594
  %5905 = vmatpush.msra.mxu0 %v5586
  %5906 = vmatpush.msra.mxu0 %v5578
  %5907 = vmatpush.msra.mxu0 %v5570
  %5908 = vmatpush.msra.mxu0 %v5562
  %5909 = vmatpush.msra.mxu0 %v5554
  %5910 = vmatpush.msra.mxu0 %v5546
  %5911 = vmatpush.msra.mxu0 %v5538
  %5912 = vmatpush.msra.mxu0 %v5530
  %5913 = vmatpush.msra.mxu0 %v5522
  %5914 = vmatmul.f32.gmra.mxu0 %v5507
  %v5915 = vpop.f32.mrf.mxu0
  %v5916 = vadd.f32 %v5652, %v5915
  %5917 = vmatmul.f32.gmra.mxu0 %v5508
  %v5918 = vpop.f32.mrf.mxu0
  %v5919 = vadd.f32 %v5652, %v5918
  %5920 = vmatmul.f32.gmra.mxu0 %v5509
  %v5921 = vpop.f32.mrf.mxu0
  %v5922 = vadd.f32 %v5652, %v5921
  %5923 = vmatmul.f32.gmra.mxu0 %v5510
  %v5924 = vpop.f32.mrf.mxu0
  %v5925 = vadd.f32 %v5652, %v5924
  %5926 = vmatmul.f32.gmra.mxu0 %v5511
  %v5927 = vpop.f32.mrf.mxu0
  %v5928 = vadd.f32 %v5652, %v5927
  %5929 = vmatmul.f32.gmra.mxu0 %v5512
  %v5930 = vpop.f32.mrf.mxu0
  %v5931 = vadd.f32 %v5652, %v5930
  %5932 = vmatmul.f32.gmra.mxu0 %v5513
  %v5933 = vpop.f32.mrf.mxu0
  %v5934 = vadd.f32 %v5652, %v5933
  %5935 = vmatmul.f32.gmra.mxu0 %v5514
  %v5936 = vpop.f32.mrf.mxu0
  %v5937 = vadd.f32 %v5652, %v5936
  %5938 = vmatmul.f32.gmra.mxu0 %v5515
  %v5939 = vpop.f32.mrf.mxu0
  %v5940 = vadd.f32 %v5652, %v5939
  %5941 = vmatmul.f32.gmra.mxu0 %v5516
  %v5942 = vpop.f32.mrf.mxu0
  %v5943 = vadd.f32 %v5652, %v5942
  %5944 = vdwg.mxu0
  %5945 = vmatpush.msra.mxu0 %v5643
  %5946 = vmatpush.msra.mxu0 %v5635
  %5947 = vmatpush.msra.mxu0 %v5627
  %5948 = vmatpush.msra.mxu0 %v5619
  %5949 = vmatpush.msra.mxu0 %v5611
  %5950 = vmatpush.msra.mxu0 %v5603
  %5951 = vmatpush.msra.mxu0 %v5595
  %5952 = vmatpush.msra.mxu0 %v5587
  %5953 = vmatpush.msra.mxu0 %v5579
  %5954 = vmatpush.msra.mxu0 %v5571
  %5955 = vmatpush.msra.mxu0 %v5563
  %5956 = vmatpush.msra.mxu0 %v5555
  %5957 = vmatpush.msra.mxu0 %v5547
  %5958 = vmatpush.msra.mxu0 %v5539
  %5959 = vmatpush.msra.mxu0 %v5531
  %5960 = vmatpush.msra.mxu0 %v5523
  %5961 = vmatmul.f32.gmra.mxu0 %v5507
  %v5962 = vpop.f32.mrf.mxu0
  %v5963 = vadd.f32 %v5653, %v5962
  %5964 = vmatmul.f32.gmra.mxu0 %v5508
  %v5965 = vpop.f32.mrf.mxu0
  %v5966 = vadd.f32 %v5653, %v5965
  %5967 = vmatmul.f32.gmra.mxu0 %v5509
  %v5968 = vpop.f32.mrf.mxu0
  %v5969 = vadd.f32 %v5653, %v5968
  %5970 = vmatmul.f32.gmra.mxu0 %v5510
  %v5971 = vpop.f32.mrf.mxu0
  %v5972 = vadd.f32 %v5653, %v5971
  %5973 = vmatmul.f32.gmra.mxu0 %v5511
  %v5974 = vpop.f32.mrf.mxu0
  %v5975 = vadd.f32 %v5653, %v5974
  %5976 = vmatmul.f32.gmra.mxu0 %v5512
  %v5977 = vpop.f32.mrf.mxu0
  %v5978 = vadd.f32 %v5653, %v5977
  %5979 = vmatmul.f32.gmra.mxu0 %v5513
  %v5980 = vpop.f32.mrf.mxu0
  %v5981 = vadd.f32 %v5653, %v5980
  %5982 = vmatmul.f32.gmra.mxu0 %v5514
  %v5983 = vpop.f32.mrf.mxu0
  %v5984 = vadd.f32 %v5653, %v5983
  %5985 = vmatmul.f32.gmra.mxu0 %v5515
  %v5986 = vpop.f32.mrf.mxu0
  %v5987 = vadd.f32 %v5653, %v5986
  %5988 = vmatmul.f32.gmra.mxu0 %v5516
  %v5989 = vpop.f32.mrf.mxu0
  %v5990 = vadd.f32 %v5653, %v5989
  %5991 = vdwg.mxu0
  %5992 = vmatpush.msra.mxu0 %v5644
  %5993 = vmatpush.msra.mxu0 %v5636
  %5994 = vmatpush.msra.mxu0 %v5628
  %5995 = vmatpush.msra.mxu0 %v5620
  %5996 = vmatpush.msra.mxu0 %v5612
  %5997 = vmatpush.msra.mxu0 %v5604
  %5998 = vmatpush.msra.mxu0 %v5596
  %5999 = vmatpush.msra.mxu0 %v5588
  %6000 = vmatpush.msra.mxu0 %v5580
  %6001 = vmatpush.msra.mxu0 %v5572
  %6002 = vmatpush.msra.mxu0 %v5564
  %6003 = vmatpush.msra.mxu0 %v5556
  %6004 = vmatpush.msra.mxu0 %v5548
  %6005 = vmatpush.msra.mxu0 %v5540
  %6006 = vmatpush.msra.mxu0 %v5532
  %6007 = vmatpush.msra.mxu0 %v5524
  %6008 = vmatmul.f32.gmra.mxu0 %v5507
  %v6009 = vpop.f32.mrf.mxu0
  %v6010 = vadd.f32 %v5654, %v6009
  %6011 = vmatmul.f32.gmra.mxu0 %v5508
  %v6012 = vpop.f32.mrf.mxu0
  %v6013 = vadd.f32 %v5654, %v6012
  %6014 = vmatmul.f32.gmra.mxu0 %v5509
  %v6015 = vpop.f32.mrf.mxu0
  %v6016 = vadd.f32 %v5654, %v6015
  %6017 = vmatmul.f32.gmra.mxu0 %v5510
  %v6018 = vpop.f32.mrf.mxu0
  %v6019 = vadd.f32 %v5654, %v6018
  %6020 = vmatmul.f32.gmra.mxu0 %v5511
  %v6021 = vpop.f32.mrf.mxu0
  %v6022 = vadd.f32 %v5654, %v6021
  %6023 = vmatmul.f32.gmra.mxu0 %v5512
  %v6024 = vpop.f32.mrf.mxu0
  %v6025 = vadd.f32 %v5654, %v6024
  %6026 = vmatmul.f32.gmra.mxu0 %v5513
  %v6027 = vpop.f32.mrf.mxu0
  %v6028 = vadd.f32 %v5654, %v6027
  %6029 = vmatmul.f32.gmra.mxu0 %v5514
  %v6030 = vpop.f32.mrf.mxu0
  %v6031 = vadd.f32 %v5654, %v6030
  %6032 = vmatmul.f32.gmra.mxu0 %v5515
  %v6033 = vpop.f32.mrf.mxu0
  %v6034 = vadd.f32 %v5654, %v6033
  %6035 = vmatmul.f32.gmra.mxu0 %v5516
  %v6036 = vpop.f32.mrf.mxu0
  %v6037 = vadd.f32 %v5654, %v6036
  %6038 = vdwg.mxu0
  %6039 = vst [vmem:[#allocation2] sm:$0xff] %v5681
  %6040 = vst [vmem:[#allocation2 + $0x8] sm:$0xff] %v5728
  %6041 = vst [vmem:[#allocation2 + $0x10] sm:$0xff] %v5775
  %6042 = vst [vmem:[#allocation2 + $0x18] sm:$0xff] %v5822
  %6043 = vst [vmem:[#allocation2 + $0x20] sm:$0xff] %v5869
  %6044 = vst [vmem:[#allocation2 + $0x28] sm:$0xff] %v5916
  %6045 = vst [vmem:[#allocation2 + $0x30] sm:$0xff] %v5963
  %6046 = vst [vmem:[#allocation2 + $0x38] sm:$0xff] %v6010
  %6047 = vst [vmem:[#allocation2 + $0x40] sm:$0xff] %v5684
  %6048 = vst [vmem:[#allocation2 + $0x48] sm:$0xff] %v5731
  %6049 = vst [vmem:[#allocation2 + $0x50] sm:$0xff] %v5778
  %6050 = vst [vmem:[#allocation2 + $0x58] sm:$0xff] %v5825
  %6051 = vst [vmem:[#allocation2 + $0x60] sm:$0xff] %v5872
  %6052 = vst [vmem:[#allocation2 + $0x68] sm:$0xff] %v5919
  %6053 = vst [vmem:[#allocation2 + $0x70] sm:$0xff] %v5966
  %6054 = vst [vmem:[#allocation2 + $0x78] sm:$0xff] %v6013
  %6055 = vst [vmem:[#allocation2 + $0x80] sm:$0xff] %v5687
  %6056 = vst [vmem:[#allocation2 + $0x88] sm:$0xff] %v5734
  %6057 = vst [vmem:[#allocation2 + $0x90] sm:$0xff] %v5781
  %6058 = vst [vmem:[#allocation2 + $0x98] sm:$0xff] %v5828
  %6059 = vst [vmem:[#allocation2 + $0xa0] sm:$0xff] %v5875
  %6060 = vst [vmem:[#allocation2 + $0xa8] sm:$0xff] %v5922
  %6061 = vst [vmem:[#allocation2 + $0xb0] sm:$0xff] %v5969
  %6062 = vst [vmem:[#allocation2 + $0xb8] sm:$0xff] %v6016
  %6063 = vst [vmem:[#allocation2 + $0xc0] sm:$0xff] %v5690
  %6064 = vst [vmem:[#allocation2 + $0xc8] sm:$0xff] %v5737
  %6065 = vst [vmem:[#allocation2 + $0xd0] sm:$0xff] %v5784
  %6066 = vst [vmem:[#allocation2 + $0xd8] sm:$0xff] %v5831
  %6067 = vst [vmem:[#allocation2 + $0xe0] sm:$0xff] %v5878
  %6068 = vst [vmem:[#allocation2 + $0xe8] sm:$0xff] %v5925
  %6069 = vst [vmem:[#allocation2 + $0xf0] sm:$0xff] %v5972
  %6070 = vst [vmem:[#allocation2 + $0xf8] sm:$0xff] %v6019
  %6071 = vst [vmem:[#allocation2 + $0x100] sm:$0xff] %v5693
  %6072 = vst [vmem:[#allocation2 + $0x108] sm:$0xff] %v5740
  %6073 = vst [vmem:[#allocation2 + $0x110] sm:$0xff] %v5787
  %6074 = vst [vmem:[#allocation2 + $0x118] sm:$0xff] %v5834
  %6075 = vst [vmem:[#allocation2 + $0x120] sm:$0xff] %v5881
  %6076 = vst [vmem:[#allocation2 + $0x128] sm:$0xff] %v5928
  %6077 = vst [vmem:[#allocation2 + $0x130] sm:$0xff] %v5975
  %6078 = vst [vmem:[#allocation2 + $0x138] sm:$0xff] %v6022
  %6079 = vst [vmem:[#allocation2 + $0x140] sm:$0xff] %v5696
  %6080 = vst [vmem:[#allocation2 + $0x148] sm:$0xff] %v5743
  %6081 = vst [vmem:[#allocation2 + $0x150] sm:$0xff] %v5790
  %6082 = vst [vmem:[#allocation2 + $0x158] sm:$0xff] %v5837
  %6083 = vst [vmem:[#allocation2 + $0x160] sm:$0xff] %v5884
  %6084 = vst [vmem:[#allocation2 + $0x168] sm:$0xff] %v5931
  %6085 = vst [vmem:[#allocation2 + $0x170] sm:$0xff] %v5978
  %6086 = vst [vmem:[#allocation2 + $0x178] sm:$0xff] %v6025
  %6087 = vst [vmem:[#allocation2 + $0x180] sm:$0xff] %v5699
  %6088 = vst [vmem:[#allocation2 + $0x188] sm:$0xff] %v5746
  %6089 = vst [vmem:[#allocation2 + $0x190] sm:$0xff] %v5793
  %6090 = vst [vmem:[#allocation2 + $0x198] sm:$0xff] %v5840
  %6091 = vst [vmem:[#allocation2 + $0x1a0] sm:$0xff] %v5887
  %6092 = vst [vmem:[#allocation2 + $0x1a8] sm:$0xff] %v5934
  %6093 = vst [vmem:[#allocation2 + $0x1b0] sm:$0xff] %v5981
  %6094 = vst [vmem:[#allocation2 + $0x1b8] sm:$0xff] %v6028
  %6095 = vst [vmem:[#allocation2 + $0x1c0] sm:$0xff] %v5702
  %6096 = vst [vmem:[#allocation2 + $0x1c8] sm:$0xff] %v5749
  %6097 = vst [vmem:[#allocation2 + $0x1d0] sm:$0xff] %v5796
  %6098 = vst [vmem:[#allocation2 + $0x1d8] sm:$0xff] %v5843
  %6099 = vst [vmem:[#allocation2 + $0x1e0] sm:$0xff] %v5890
  %6100 = vst [vmem:[#allocation2 + $0x1e8] sm:$0xff] %v5937
  %6101 = vst [vmem:[#allocation2 + $0x1f0] sm:$0xff] %v5984
  %6102 = vst [vmem:[#allocation2 + $0x1f8] sm:$0xff] %v6031
  %6103 = vst [vmem:[#allocation2 + $0x200] sm:$0xff] %v5705
  %6104 = vst [vmem:[#allocation2 + $0x208] sm:$0xff] %v5752
  %6105 = vst [vmem:[#allocation2 + $0x210] sm:$0xff] %v5799
  %6106 = vst [vmem:[#allocation2 + $0x218] sm:$0xff] %v5846
  %6107 = vst [vmem:[#allocation2 + $0x220] sm:$0xff] %v5893
  %6108 = vst [vmem:[#allocation2 + $0x228] sm:$0xff] %v5940
  %6109 = vst [vmem:[#allocation2 + $0x230] sm:$0xff] %v5987
  %6110 = vst [vmem:[#allocation2 + $0x238] sm:$0xff] %v6034
  %6111 = vst [vmem:[#allocation2 + $0x240] sm:$0xff] %v5708
  %6112 = vst [vmem:[#allocation2 + $0x248] sm:$0xff] %v5755
  %6113 = vst [vmem:[#allocation2 + $0x250] sm:$0xff] %v5802
  %6114 = vst [vmem:[#allocation2 + $0x258] sm:$0xff] %v5849
  %6115 = vst [vmem:[#allocation2 + $0x260] sm:$0xff] %v5896
  %6116 = vst [vmem:[#allocation2 + $0x268] sm:$0xff] %v5943
  %6117 = vst [vmem:[#allocation2 + $0x270] sm:$0xff] %v5990
  %6118 = vst [vmem:[#allocation2 + $0x278] sm:$0xff] %v6037
  %v6119 = vld [vmem:[#allocation5] sm:$0xff]
  %v6120 = vld [vmem:[#allocation5 + $0x8] sm:$0xff]
  %v6121 = vld [vmem:[#allocation5 + $0x10] sm:$0xff]
  %v6122 = vld [vmem:[#allocation5 + $0x18] sm:$0xff]
  %v6123 = vld [vmem:[#allocation5 + $0x20] sm:$0xff]
  %v6124 = vld [vmem:[#allocation5 + $0x28] sm:$0xff]
  %v6125 = vld [vmem:[#allocation5 + $0x30] sm:$0xff]
  %v6126 = vld [vmem:[#allocation5 + $0x38] sm:$0xff]
  %v6127 = vld [vmem:[#allocation5 + $0x40] sm:$0xff]
  %v6128 = vld [vmem:[#allocation5 + $0x48] sm:$0xff]
  %v6129 = vld [vmem:[#allocation5 + $0x50] sm:$0xff]
  %v6130 = vld [vmem:[#allocation5 + $0x58] sm:$0xff]
  %v6131 = vld [vmem:[#allocation5 + $0x60] sm:$0xff]
  %v6132 = vld [vmem:[#allocation5 + $0x68] sm:$0xff]
  %v6133 = vld [vmem:[#allocation5 + $0x70] sm:$0xff]
  %v6134 = vld [vmem:[#allocation5 + $0x78] sm:$0xff]
  %v6135 = vld [vmem:[#allocation5 + $0x80] sm:$0xff]
  %v6136 = vld [vmem:[#allocation5 + $0x88] sm:$0xff]
  %v6137 = vld [vmem:[#allocation5 + $0x90] sm:$0xff]
  %v6138 = vld [vmem:[#allocation5 + $0x98] sm:$0xff]
  %v6139 = vld [vmem:[#allocation5 + $0xa0] sm:$0xff]
  %v6140 = vld [vmem:[#allocation5 + $0xa8] sm:$0xff]
  %v6141 = vld [vmem:[#allocation5 + $0xb0] sm:$0xff]
  %v6142 = vld [vmem:[#allocation5 + $0xb8] sm:$0xff]
  %v6143 = vld [vmem:[#allocation5 + $0xc0] sm:$0xff]
  %v6144 = vld [vmem:[#allocation5 + $0xc8] sm:$0xff]
  %v6145 = vld [vmem:[#allocation5 + $0xd0] sm:$0xff]
  %v6146 = vld [vmem:[#allocation5 + $0xd8] sm:$0xff]
  %v6147 = vld [vmem:[#allocation5 + $0xe0] sm:$0xff]
  %v6148 = vld [vmem:[#allocation5 + $0xe8] sm:$0xff]
  %v6149 = vld [vmem:[#allocation5 + $0xf0] sm:$0xff]
  %v6150 = vld [vmem:[#allocation5 + $0xf8] sm:$0xff]
  %v6151 = vld [vmem:[#allocation5 + $0x100] sm:$0xff]
  %v6152 = vld [vmem:[#allocation5 + $0x108] sm:$0xff]
  %v6153 = vld [vmem:[#allocation5 + $0x110] sm:$0xff]
  %v6154 = vld [vmem:[#allocation5 + $0x118] sm:$0xff]
  %v6155 = vld [vmem:[#allocation5 + $0x120] sm:$0xff]
  %v6156 = vld [vmem:[#allocation5 + $0x128] sm:$0xff]
  %v6157 = vld [vmem:[#allocation5 + $0x130] sm:$0xff]
  %v6158 = vld [vmem:[#allocation5 + $0x138] sm:$0xff]
  %v6159 = vld [vmem:[#allocation5 + $0x140] sm:$0xff]
  %v6160 = vld [vmem:[#allocation5 + $0x148] sm:$0xff]
  %v6161 = vld [vmem:[#allocation5 + $0x150] sm:$0xff]
  %v6162 = vld [vmem:[#allocation5 + $0x158] sm:$0xff]
  %v6163 = vld [vmem:[#allocation5 + $0x160] sm:$0xff]
  %v6164 = vld [vmem:[#allocation5 + $0x168] sm:$0xff]
  %v6165 = vld [vmem:[#allocation5 + $0x170] sm:$0xff]
  %v6166 = vld [vmem:[#allocation5 + $0x178] sm:$0xff]
  %v6167 = vld [vmem:[#allocation5 + $0x180] sm:$0xff]
  %v6168 = vld [vmem:[#allocation5 + $0x188] sm:$0xff]
  %v6169 = vld [vmem:[#allocation5 + $0x190] sm:$0xff]
  %v6170 = vld [vmem:[#allocation5 + $0x198] sm:$0xff]
  %v6171 = vld [vmem:[#allocation5 + $0x1a0] sm:$0xff]
  %v6172 = vld [vmem:[#allocation5 + $0x1a8] sm:$0xff]
  %v6173 = vld [vmem:[#allocation5 + $0x1b0] sm:$0xff]
  %v6174 = vld [vmem:[#allocation5 + $0x1b8] sm:$0xff]
  %v6175 = vld [vmem:[#allocation5 + $0x1c0] sm:$0xff]
  %v6176 = vld [vmem:[#allocation5 + $0x1c8] sm:$0xff]
  %v6177 = vld [vmem:[#allocation5 + $0x1d0] sm:$0xff]
  %v6178 = vld [vmem:[#allocation5 + $0x1d8] sm:$0xff]
  %v6179 = vld [vmem:[#allocation5 + $0x1e0] sm:$0xff]
  %v6180 = vld [vmem:[#allocation5 + $0x1e8] sm:$0xff]
  %v6181 = vld [vmem:[#allocation5 + $0x1f0] sm:$0xff]
  %v6182 = vld [vmem:[#allocation5 + $0x1f8] sm:$0xff]
  %v6183 = vld [vmem:[#allocation6] sm:$0xff]
  %v6184 = vld [vmem:[#allocation6 + $0x8] sm:$0xff]
  %v6185 = vld [vmem:[#allocation6 + $0x10] sm:$0xff]
  %v6186 = vld [vmem:[#allocation6 + $0x18] sm:$0xff]
  %v6187 = vld [vmem:[#allocation6 + $0x20] sm:$0xff]
  %v6188 = vld [vmem:[#allocation6 + $0x28] sm:$0xff]
  %v6189 = vld [vmem:[#allocation6 + $0x30] sm:$0xff]
  %v6190 = vld [vmem:[#allocation6 + $0x38] sm:$0xff]
  %v6191 = vld [vmem:[#allocation6 + $0x40] sm:$0xff]
  %v6192 = vld [vmem:[#allocation6 + $0x48] sm:$0xff]
  %v6193 = vld [vmem:[#allocation6 + $0x50] sm:$0xff]
  %v6194 = vld [vmem:[#allocation6 + $0x58] sm:$0xff]
  %v6195 = vld [vmem:[#allocation6 + $0x60] sm:$0xff]
  %v6196 = vld [vmem:[#allocation6 + $0x68] sm:$0xff]
  %v6197 = vld [vmem:[#allocation6 + $0x70] sm:$0xff]
  %v6198 = vld [vmem:[#allocation6 + $0x78] sm:$0xff]
  %v6199 = vld [vmem:[#allocation6 + $0x80] sm:$0xff]
  %v6200 = vld [vmem:[#allocation6 + $0x88] sm:$0xff]
  %v6201 = vld [vmem:[#allocation6 + $0x90] sm:$0xff]
  %v6202 = vld [vmem:[#allocation6 + $0x98] sm:$0xff]
  %v6203 = vld [vmem:[#allocation6 + $0xa0] sm:$0xff]
  %v6204 = vld [vmem:[#allocation6 + $0xa8] sm:$0xff]
  %v6205 = vld [vmem:[#allocation6 + $0xb0] sm:$0xff]
  %v6206 = vld [vmem:[#allocation6 + $0xb8] sm:$0xff]
  %v6207 = vld [vmem:[#allocation6 + $0xc0] sm:$0xff]
  %v6208 = vld [vmem:[#allocation6 + $0xc8] sm:$0xff]
  %v6209 = vld [vmem:[#allocation6 + $0xd0] sm:$0xff]
  %v6210 = vld [vmem:[#allocation6 + $0xd8] sm:$0xff]
  %v6211 = vld [vmem:[#allocation6 + $0xe0] sm:$0xff]
  %v6212 = vld [vmem:[#allocation6 + $0xe8] sm:$0xff]
  %v6213 = vld [vmem:[#allocation6 + $0xf0] sm:$0xff]
  %v6214 = vld [vmem:[#allocation6 + $0xf8] sm:$0xff]
  %v6215 = vld [vmem:[#allocation6 + $0x100] sm:$0xff]
  %v6216 = vld [vmem:[#allocation6 + $0x108] sm:$0xff]
  %v6217 = vld [vmem:[#allocation6 + $0x110] sm:$0xff]
  %v6218 = vld [vmem:[#allocation6 + $0x118] sm:$0xff]
  %v6219 = vld [vmem:[#allocation6 + $0x120] sm:$0xff]
  %v6220 = vld [vmem:[#allocation6 + $0x128] sm:$0xff]
  %v6221 = vld [vmem:[#allocation6 + $0x130] sm:$0xff]
  %v6222 = vld [vmem:[#allocation6 + $0x138] sm:$0xff]
  %v6223 = vld [vmem:[#allocation6 + $0x140] sm:$0xff]
  %v6224 = vld [vmem:[#allocation6 + $0x148] sm:$0xff]
  %v6225 = vld [vmem:[#allocation6 + $0x150] sm:$0xff]
  %v6226 = vld [vmem:[#allocation6 + $0x158] sm:$0xff]
  %v6227 = vld [vmem:[#allocation6 + $0x160] sm:$0xff]
  %v6228 = vld [vmem:[#allocation6 + $0x168] sm:$0xff]
  %v6229 = vld [vmem:[#allocation6 + $0x170] sm:$0xff]
  %v6230 = vld [vmem:[#allocation6 + $0x178] sm:$0xff]
  %v6231 = vld [vmem:[#allocation6 + $0x180] sm:$0xff]
  %v6232 = vld [vmem:[#allocation6 + $0x188] sm:$0xff]
  %v6233 = vld [vmem:[#allocation6 + $0x190] sm:$0xff]
  %v6234 = vld [vmem:[#allocation6 + $0x198] sm:$0xff]
  %v6235 = vld [vmem:[#allocation6 + $0x1a0] sm:$0xff]
  %v6236 = vld [vmem:[#allocation6 + $0x1a8] sm:$0xff]
  %v6237 = vld [vmem:[#allocation6 + $0x1b0] sm:$0xff]
  %v6238 = vld [vmem:[#allocation6 + $0x1b8] sm:$0xff]
  %v6239 = vld [vmem:[#allocation6 + $0x1c0] sm:$0xff]
  %v6240 = vld [vmem:[#allocation6 + $0x1c8] sm:$0xff]
  %v6241 = vld [vmem:[#allocation6 + $0x1d0] sm:$0xff]
  %v6242 = vld [vmem:[#allocation6 + $0x1d8] sm:$0xff]
  %v6243 = vld [vmem:[#allocation6 + $0x1e0] sm:$0xff]
  %v6244 = vld [vmem:[#allocation6 + $0x1e8] sm:$0xff]
  %v6245 = vld [vmem:[#allocation6 + $0x1f0] sm:$0xff]
  %v6246 = vld [vmem:[#allocation6 + $0x1f8] sm:$0xff]
  %v6247 = vld [vmem:[#allocation2] sm:$0xff]
  %v6248 = vld [vmem:[#allocation2 + $0x8] sm:$0xff]
  %v6249 = vld [vmem:[#allocation2 + $0x10] sm:$0xff]
  %v6250 = vld [vmem:[#allocation2 + $0x18] sm:$0xff]
  %6251 = vmatpush.msra.mxu0 %v6179
  %6252 = vmatpush.msra.mxu0 %v6175
  %6253 = vmatpush.msra.mxu0 %v6171
  %6254 = vmatpush.msra.mxu0 %v6167
  %6255 = vmatpush.msra.mxu0 %v6163
  %6256 = vmatpush.msra.mxu0 %v6159
  %6257 = vmatpush.msra.mxu0 %v6155
  %6258 = vmatpush.msra.mxu0 %v6151
  %6259 = vmatpush.msra.mxu0 %v6147
  %6260 = vmatpush.msra.mxu0 %v6143
  %6261 = vmatpush.msra.mxu0 %v6139
  %6262 = vmatpush.msra.mxu0 %v6135
  %6263 = vmatpush.msra.mxu0 %v6131
  %6264 = vmatpush.msra.mxu0 %v6127
  %6265 = vmatpush.msra.mxu0 %v6123
  %6266 = vmatpush.msra.mxu0 %v6119
  %6267 = vmatmul.f32.gmra.mxu0 0.0
  %v6268 = vpop.f32.mrf.mxu0
  %v6269 = vadd.f32 0.0, %v6268
  %6270 = vdwg.mxu0
  %6271 = vmatpush.msra.mxu0 %v6180
  %6272 = vmatpush.msra.mxu0 %v6176
  %6273 = vmatpush.msra.mxu0 %v6172
  %6274 = vmatpush.msra.mxu0 %v6168
  %6275 = vmatpush.msra.mxu0 %v6164
  %6276 = vmatpush.msra.mxu0 %v6160
  %6277 = vmatpush.msra.mxu0 %v6156
  %6278 = vmatpush.msra.mxu0 %v6152
  %6279 = vmatpush.msra.mxu0 %v6148
  %6280 = vmatpush.msra.mxu0 %v6144
  %6281 = vmatpush.msra.mxu0 %v6140
  %6282 = vmatpush.msra.mxu0 %v6136
  %6283 = vmatpush.msra.mxu0 %v6132
  %6284 = vmatpush.msra.mxu0 %v6128
  %6285 = vmatpush.msra.mxu0 %v6124
  %6286 = vmatpush.msra.mxu0 %v6120
  %6287 = vmatmul.f32.gmra.mxu0 0.0
  %v6288 = vpop.f32.mrf.mxu0
  %v6289 = vadd.f32 0.0, %v6288
  %6290 = vdwg.mxu0
  %6291 = vmatpush.msra.mxu0 %v6181
  %6292 = vmatpush.msra.mxu0 %v6177
  %6293 = vmatpush.msra.mxu0 %v6173
  %6294 = vmatpush.msra.mxu0 %v6169
  %6295 = vmatpush.msra.mxu0 %v6165
  %6296 = vmatpush.msra.mxu0 %v6161
  %6297 = vmatpush.msra.mxu0 %v6157
  %6298 = vmatpush.msra.mxu0 %v6153
  %6299 = vmatpush.msra.mxu0 %v6149
  %6300 = vmatpush.msra.mxu0 %v6145
  %6301 = vmatpush.msra.mxu0 %v6141
  %6302 = vmatpush.msra.mxu0 %v6137
  %6303 = vmatpush.msra.mxu0 %v6133
  %6304 = vmatpush.msra.mxu0 %v6129
  %6305 = vmatpush.msra.mxu0 %v6125
  %6306 = vmatpush.msra.mxu0 %v6121
  %6307 = vmatmul.f32.gmra.mxu0 0.0
  %v6308 = vpop.f32.mrf.mxu0
  %v6309 = vadd.f32 0.0, %v6308
  %6310 = vdwg.mxu0
  %6311 = vmatpush.msra.mxu0 %v6182
  %6312 = vmatpush.msra.mxu0 %v6178
  %6313 = vmatpush.msra.mxu0 %v6174
  %6314 = vmatpush.msra.mxu0 %v6170
  %6315 = vmatpush.msra.mxu0 %v6166
  %6316 = vmatpush.msra.mxu0 %v6162
  %6317 = vmatpush.msra.mxu0 %v6158
  %6318 = vmatpush.msra.mxu0 %v6154
  %6319 = vmatpush.msra.mxu0 %v6150
  %6320 = vmatpush.msra.mxu0 %v6146
  %6321 = vmatpush.msra.mxu0 %v6142
  %6322 = vmatpush.msra.mxu0 %v6138
  %6323 = vmatpush.msra.mxu0 %v6134
  %6324 = vmatpush.msra.mxu0 %v6130
  %6325 = vmatpush.msra.mxu0 %v6126
  %6326 = vmatpush.msra.mxu0 %v6122
  %6327 = vmatmul.f32.gmra.mxu0 0.0
  %v6328 = vpop.f32.mrf.mxu0
  %v6329 = vadd.f32 0.0, %v6328
  %6330 = vdwg.mxu0
  %v6331 = vadd.f32 %v6247, %v6269
  %v6332 = vadd.f32 %v6248, %v6289
  %v6333 = vadd.f32 %v6249, %v6309
  %v6334 = vadd.f32 %v6250, %v6329
  %v6335 = vld [vmem:[#allocation2 + $0x260] sm:$0xff]
  %v6336 = vld [vmem:[#allocation2 + $0x268] sm:$0xff]
  %v6337 = vld [vmem:[#allocation2 + $0x270] sm:$0xff]
  %v6338 = vld [vmem:[#allocation2 + $0x278] sm:$0xff]
  %6339 = vmatpush.msra.mxu0 %v6243
  %6340 = vmatpush.msra.mxu0 %v6239
  %6341 = vmatpush.msra.mxu0 %v6235
  %6342 = vmatpush.msra.mxu0 %v6231
  %6343 = vmatpush.msra.mxu0 %v6227
  %6344 = vmatpush.msra.mxu0 %v6223
  %6345 = vmatpush.msra.mxu0 %v6219
  %6346 = vmatpush.msra.mxu0 %v6215
  %6347 = vmatpush.msra.mxu0 %v6211
  %6348 = vmatpush.msra.mxu0 %v6207
  %6349 = vmatpush.msra.mxu0 %v6203
  %6350 = vmatpush.msra.mxu0 %v6199
  %6351 = vmatpush.msra.mxu0 %v6195
  %6352 = vmatpush.msra.mxu0 %v6191
  %6353 = vmatpush.msra.mxu0 %v6187
  %6354 = vmatpush.msra.mxu0 %v6183
  %6355 = vmatmul.f32.gmra.mxu0 0.0
  %v6356 = vpop.f32.mrf.mxu0
  %v6357 = vadd.f32 0.0, %v6356
  %6358 = vdwg.mxu0
  %6359 = vmatpush.msra.mxu0 %v6244
  %6360 = vmatpush.msra.mxu0 %v6240
  %6361 = vmatpush.msra.mxu0 %v6236
  %6362 = vmatpush.msra.mxu0 %v6232
  %6363 = vmatpush.msra.mxu0 %v6228
  %6364 = vmatpush.msra.mxu0 %v6224
  %6365 = vmatpush.msra.mxu0 %v6220
  %6366 = vmatpush.msra.mxu0 %v6216
  %6367 = vmatpush.msra.mxu0 %v6212
  %6368 = vmatpush.msra.mxu0 %v6208
  %6369 = vmatpush.msra.mxu0 %v6204
  %6370 = vmatpush.msra.mxu0 %v6200
  %6371 = vmatpush.msra.mxu0 %v6196
  %6372 = vmatpush.msra.mxu0 %v6192
  %6373 = vmatpush.msra.mxu0 %v6188
  %6374 = vmatpush.msra.mxu0 %v6184
  %6375 = vmatmul.f32.gmra.mxu0 0.0
  %v6376 = vpop.f32.mrf.mxu0
  %v6377 = vadd.f32 0.0, %v6376
  %6378 = vdwg.mxu0
  %6379 = vmatpush.msra.mxu0 %v6245
  %6380 = vmatpush.msra.mxu0 %v6241
  %6381 = vmatpush.msra.mxu0 %v6237
  %6382 = vmatpush.msra.mxu0 %v6233
  %6383 = vmatpush.msra.mxu0 %v6229
  %6384 = vmatpush.msra.mxu0 %v6225
  %6385 = vmatpush.msra.mxu0 %v6221
  %6386 = vmatpush.msra.mxu0 %v6217
  %6387 = vmatpush.msra.mxu0 %v6213
  %6388 = vmatpush.msra.mxu0 %v6209
  %6389 = vmatpush.msra.mxu0 %v6205
  %6390 = vmatpush.msra.mxu0 %v6201
  %6391 = vmatpush.msra.mxu0 %v6197
  %6392 = vmatpush.msra.mxu0 %v6193
  %6393 = vmatpush.msra.mxu0 %v6189
  %6394 = vmatpush.msra.mxu0 %v6185
  %6395 = vmatmul.f32.gmra.mxu0 0.0
  %v6396 = vpop.f32.mrf.mxu0
  %v6397 = vadd.f32 0.0, %v6396
  %6398 = vdwg.mxu0
  %6399 = vmatpush.msra.mxu0 %v6246
  %6400 = vmatpush.msra.mxu0 %v6242
  %6401 = vmatpush.msra.mxu0 %v6238
  %6402 = vmatpush.msra.mxu0 %v6234
  %6403 = vmatpush.msra.mxu0 %v6230
  %6404 = vmatpush.msra.mxu0 %v6226
  %6405 = vmatpush.msra.mxu0 %v6222
  %6406 = vmatpush.msra.mxu0 %v6218
  %6407 = vmatpush.msra.mxu0 %v6214
  %6408 = vmatpush.msra.mxu0 %v6210
  %6409 = vmatpush.msra.mxu0 %v6206
  %6410 = vmatpush.msra.mxu0 %v6202
  %6411 = vmatpush.msra.mxu0 %v6198
  %6412 = vmatpush.msra.mxu0 %v6194
  %6413 = vmatpush.msra.mxu0 %v6190
  %6414 = vmatpush.msra.mxu0 %v6186
  %6415 = vmatmul.f32.gmra.mxu0 0.0
  %v6416 = vpop.f32.mrf.mxu0
  %v6417 = vadd.f32 0.0, %v6416
  %6418 = vdwg.mxu0
  %v6419 = vadd.f32 %v6335, %v6357
  %v6420 = vadd.f32 %v6336, %v6377
  %v6421 = vadd.f32 %v6337, %v6397
  %v6422 = vadd.f32 %v6338, %v6417
  %v6423 = vxor.u32 %v6331, 2147483648
  %v6424 = vxor.u32 %v6332, 2147483648
  %v6425 = vxor.u32 %v6333, 2147483648
  %v6426 = vmul.f32 %v6423, 1.442695
  %v6427 = vpow.pop %v6426
  %v6428 = vmul.f32 %v6424, 1.442695
  %v6429 = vpow.pop %v6428
  %v6430 = vmul.f32 %v6425, 1.442695
  %v6431 = vpow.pop %v6430
  %v6432 = vadd.f32 %v6427, 1.0
  %v6433 = vadd.f32 %v6429, 1.0
  %v6434 = vadd.f32 %v6431, 1.0
  %v6435 = vrcp.pop %v6432
  %v6436 = vmul.f32 %v6432, %v6435
  %v6437 = vsub.f32 1.0, %v6436
  %v6438 = vmul.f32 %v6435, %v6437
  %v6439 = vadd.f32 %v6435, %v6438
  %vm6440 = vweird.f32 %v6432
  %vm6441 = vweird.f32 %v6435
  %vm6442 = vmor %vm6440, %vm6441
  %v6443 = vsel %vm6442, %v6435, %v6439
  %v6444 = vand.u32 2147483647, %v6432
  %vm6445 = vcmp.eq.f32.partialorder %v6444, 8.507059e+37
  %v6446 = vand.u32 %v6432, 2147483648
  %v6447 = vor.u32 1.1754944e-38, %v6446
  %v6448 = vsel %vm6445, %v6447, %v6443
  %v6449 = vmul.f32 1.0, %v6448
  %v6450 = vrcp.pop %v6433
  %v6451 = vmul.f32 %v6433, %v6450
  %v6452 = vsub.f32 1.0, %v6451
  %v6453 = vmul.f32 %v6450, %v6452
  %v6454 = vadd.f32 %v6450, %v6453
  %vm6455 = vweird.f32 %v6433
  %vm6456 = vweird.f32 %v6450
  %vm6457 = vmor %vm6455, %vm6456
  %v6458 = vsel %vm6457, %v6450, %v6454
  %v6459 = vand.u32 2147483647, %v6433
  %vm6460 = vcmp.eq.f32.partialorder %v6459, 8.507059e+37
  %v6461 = vand.u32 %v6433, 2147483648
  %v6462 = vor.u32 1.1754944e-38, %v6461
  %v6463 = vsel %vm6460, %v6462, %v6458
  %v6464 = vmul.f32 1.0, %v6463
  %v6465 = vrcp.pop %v6434
  %v6466 = vmul.f32 %v6434, %v6465
  %v6467 = vsub.f32 1.0, %v6466
  %v6468 = vmul.f32 %v6465, %v6467
  %v6469 = vadd.f32 %v6465, %v6468
  %vm6470 = vweird.f32 %v6434
  %vm6471 = vweird.f32 %v6465
  %vm6472 = vmor %vm6470, %vm6471
  %v6473 = vsel %vm6472, %v6465, %v6469
  %v6474 = vand.u32 2147483647, %v6434
  %vm6475 = vcmp.eq.f32.partialorder %v6474, 8.507059e+37
  %v6476 = vand.u32 %v6434, 2147483648
  %v6477 = vor.u32 1.1754944e-38, %v6476
  %v6478 = vsel %vm6475, %v6477, %v6473
  %v6479 = vmul.f32 1.0, %v6478
  %v6480 = vtanh.pop %v6334
  %v6481 = vmul.f32 %v6464, 0.0
  %v6482 = vmul.f32 %v6449, %v6480
  %v6483 = vadd.f32 %v6481, %v6482
  %v6484 = vtanh.pop %v6483
  %v6485 = vmul.f32 %v6479, %v6484
  %v6486 = vxor.u32 %v6419, 2147483648
  %v6487 = vxor.u32 %v6420, 2147483648
  %v6488 = vxor.u32 %v6421, 2147483648
  %v6489 = vmul.f32 %v6486, 1.442695
  %v6490 = vpow.pop %v6489
  %v6491 = vmul.f32 %v6487, 1.442695
  %v6492 = vpow.pop %v6491
  %v6493 = vmul.f32 %v6488, 1.442695
  %v6494 = vpow.pop %v6493
  %v6495 = vadd.f32 %v6490, 1.0
  %v6496 = vadd.f32 %v6492, 1.0
  %v6497 = vadd.f32 %v6494, 1.0
  %v6498 = vrcp.pop %v6495
  %v6499 = vmul.f32 %v6495, %v6498
  %v6500 = vsub.f32 1.0, %v6499
  %v6501 = vmul.f32 %v6498, %v6500
  %v6502 = vadd.f32 %v6498, %v6501
  %vm6503 = vweird.f32 %v6495
  %vm6504 = vweird.f32 %v6498
  %vm6505 = vmor %vm6503, %vm6504
  %v6506 = vsel %vm6505, %v6498, %v6502
  %v6507 = vand.u32 2147483647, %v6495
  %vm6508 = vcmp.eq.f32.partialorder %v6507, 8.507059e+37
  %v6509 = vand.u32 %v6495, 2147483648
  %v6510 = vor.u32 1.1754944e-38, %v6509
  %v6511 = vsel %vm6508, %v6510, %v6506
  %v6512 = vmul.f32 1.0, %v6511
  %v6513 = vrcp.pop %v6496
  %v6514 = vmul.f32 %v6496, %v6513
  %v6515 = vsub.f32 1.0, %v6514
  %v6516 = vmul.f32 %v6513, %v6515
  %v6517 = vadd.f32 %v6513, %v6516
  %vm6518 = vweird.f32 %v6496
  %vm6519 = vweird.f32 %v6513
  %vm6520 = vmor %vm6518, %vm6519
  %v6521 = vsel %vm6520, %v6513, %v6517
  %v6522 = vand.u32 2147483647, %v6496
  %vm6523 = vcmp.eq.f32.partialorder %v6522, 8.507059e+37
  %v6524 = vand.u32 %v6496, 2147483648
  %v6525 = vor.u32 1.1754944e-38, %v6524
  %v6526 = vsel %vm6523, %v6525, %v6521
  %v6527 = vmul.f32 1.0, %v6526
  %v6528 = vrcp.pop %v6497
  %v6529 = vmul.f32 %v6497, %v6528
  %v6530 = vsub.f32 1.0, %v6529
  %v6531 = vmul.f32 %v6528, %v6530
  %v6532 = vadd.f32 %v6528, %v6531
  %vm6533 = vweird.f32 %v6497
  %vm6534 = vweird.f32 %v6528
  %vm6535 = vmor %vm6533, %vm6534
  %v6536 = vsel %vm6535, %v6528, %v6532
  %v6537 = vand.u32 2147483647, %v6497
  %vm6538 = vcmp.eq.f32.partialorder %v6537, 8.507059e+37
  %v6539 = vand.u32 %v6497, 2147483648
  %v6540 = vor.u32 1.1754944e-38, %v6539
  %v6541 = vsel %vm6538, %v6540, %v6536
  %v6542 = vmul.f32 1.0, %v6541
  %v6543 = vtanh.pop %v6422
  %v6544 = vmul.f32 %v6527, 0.0
  %v6545 = vmul.f32 %v6512, %v6543
  %v6546 = vadd.f32 %v6544, %v6545
  %v6547 = vtanh.pop %v6546
  %v6548 = vmul.f32 %v6542, %v6547
  %6549 = vst [vmem:[%s11] sm:$0xff] %v6485
  %6550 = vst [vmem:[%s11 + $0x48] sm:$0xff] %v6548
  %v6551 = vld [vmem:[#allocation2 + $0x40] sm:$0xff]
  %v6552 = vld [vmem:[#allocation2 + $0x48] sm:$0xff]
  %v6553 = vld [vmem:[#allocation2 + $0x50] sm:$0xff]
  %v6554 = vld [vmem:[#allocation2 + $0x58] sm:$0xff]
  %6555 = vmatpush.msra.mxu0 %v6179
  %6556 = vmatpush.msra.mxu0 %v6175
  %6557 = vmatpush.msra.mxu0 %v6171
  %6558 = vmatpush.msra.mxu0 %v6167
  %6559 = vmatpush.msra.mxu0 %v6163
  %6560 = vmatpush.msra.mxu0 %v6159
  %6561 = vmatpush.msra.mxu0 %v6155
  %6562 = vmatpush.msra.mxu0 %v6151
  %6563 = vmatpush.msra.mxu0 %v6147
  %6564 = vmatpush.msra.mxu0 %v6143
  %6565 = vmatpush.msra.mxu0 %v6139
  %6566 = vmatpush.msra.mxu0 %v6135
  %6567 = vmatpush.msra.mxu0 %v6131
  %6568 = vmatpush.msra.mxu0 %v6127
  %6569 = vmatpush.msra.mxu0 %v6123
  %6570 = vmatpush.msra.mxu0 %v6119
  %6571 = vmatmul.f32.gmra.mxu0 %v6485
  %v6572 = vpop.f32.mrf.mxu0
  %v6573 = vadd.f32 0.0, %v6572
  %6574 = vdwg.mxu0
  %6575 = vmatpush.msra.mxu0 %v6180
  %6576 = vmatpush.msra.mxu0 %v6176
  %6577 = vmatpush.msra.mxu0 %v6172
  %6578 = vmatpush.msra.mxu0 %v6168
  %6579 = vmatpush.msra.mxu0 %v6164
  %6580 = vmatpush.msra.mxu0 %v6160
  %6581 = vmatpush.msra.mxu0 %v6156
  %6582 = vmatpush.msra.mxu0 %v6152
  %6583 = vmatpush.msra.mxu0 %v6148
  %6584 = vmatpush.msra.mxu0 %v6144
  %6585 = vmatpush.msra.mxu0 %v6140
  %6586 = vmatpush.msra.mxu0 %v6136
  %6587 = vmatpush.msra.mxu0 %v6132
  %6588 = vmatpush.msra.mxu0 %v6128
  %6589 = vmatpush.msra.mxu0 %v6124
  %6590 = vmatpush.msra.mxu0 %v6120
  %6591 = vmatmul.f32.gmra.mxu0 %v6485
  %v6592 = vpop.f32.mrf.mxu0
  %v6593 = vadd.f32 0.0, %v6592
  %6594 = vdwg.mxu0
  %6595 = vmatpush.msra.mxu0 %v6181
  %6596 = vmatpush.msra.mxu0 %v6177
  %6597 = vmatpush.msra.mxu0 %v6173
  %6598 = vmatpush.msra.mxu0 %v6169
  %6599 = vmatpush.msra.mxu0 %v6165
  %6600 = vmatpush.msra.mxu0 %v6161
  %6601 = vmatpush.msra.mxu0 %v6157
  %6602 = vmatpush.msra.mxu0 %v6153
  %6603 = vmatpush.msra.mxu0 %v6149
  %6604 = vmatpush.msra.mxu0 %v6145
  %6605 = vmatpush.msra.mxu0 %v6141
  %6606 = vmatpush.msra.mxu0 %v6137
  %6607 = vmatpush.msra.mxu0 %v6133
  %6608 = vmatpush.msra.mxu0 %v6129
  %6609 = vmatpush.msra.mxu0 %v6125
  %6610 = vmatpush.msra.mxu0 %v6121
  %6611 = vmatmul.f32.gmra.mxu0 %v6485
  %v6612 = vpop.f32.mrf.mxu0
  %v6613 = vadd.f32 0.0, %v6612
  %6614 = vdwg.mxu0
  %6615 = vmatpush.msra.mxu0 %v6182
  %6616 = vmatpush.msra.mxu0 %v6178
  %6617 = vmatpush.msra.mxu0 %v6174
  %6618 = vmatpush.msra.mxu0 %v6170
  %6619 = vmatpush.msra.mxu0 %v6166
  %6620 = vmatpush.msra.mxu0 %v6162
  %6621 = vmatpush.msra.mxu0 %v6158
  %6622 = vmatpush.msra.mxu0 %v6154
  %6623 = vmatpush.msra.mxu0 %v6150
  %6624 = vmatpush.msra.mxu0 %v6146
  %6625 = vmatpush.msra.mxu0 %v6142
  %6626 = vmatpush.msra.mxu0 %v6138
  %6627 = vmatpush.msra.mxu0 %v6134
  %6628 = vmatpush.msra.mxu0 %v6130
  %6629 = vmatpush.msra.mxu0 %v6126
  %6630 = vmatpush.msra.mxu0 %v6122
  %6631 = vmatmul.f32.gmra.mxu0 %v6485
  %v6632 = vpop.f32.mrf.mxu0
  %v6633 = vadd.f32 0.0, %v6632
  %6634 = vdwg.mxu0
  %v6635 = vadd.f32 %v6551, %v6573
  %v6636 = vadd.f32 %v6552, %v6593
  %v6637 = vadd.f32 %v6553, %v6613
  %v6638 = vadd.f32 %v6554, %v6633
  %v6639 = vld [vmem:[#allocation2 + $0x220] sm:$0xff]
  %v6640 = vld [vmem:[#allocation2 + $0x228] sm:$0xff]
  %v6641 = vld [vmem:[#allocation2 + $0x230] sm:$0xff]
  %v6642 = vld [vmem:[#allocation2 + $0x238] sm:$0xff]
  %6643 = vmatpush.msra.mxu0 %v6243
  %6644 = vmatpush.msra.mxu0 %v6239
  %6645 = vmatpush.msra.mxu0 %v6235
  %6646 = vmatpush.msra.mxu0 %v6231
  %6647 = vmatpush.msra.mxu0 %v6227
  %6648 = vmatpush.msra.mxu0 %v6223
  %6649 = vmatpush.msra.mxu0 %v6219
  %6650 = vmatpush.msra.mxu0 %v6215
  %6651 = vmatpush.msra.mxu0 %v6211
  %6652 = vmatpush.msra.mxu0 %v6207
  %6653 = vmatpush.msra.mxu0 %v6203
  %6654 = vmatpush.msra.mxu0 %v6199
  %6655 = vmatpush.msra.mxu0 %v6195
  %6656 = vmatpush.msra.mxu0 %v6191
  %6657 = vmatpush.msra.mxu0 %v6187
  %6658 = vmatpush.msra.mxu0 %v6183
  %6659 = vmatmul.f32.gmra.mxu0 %v6548
  %v6660 = vpop.f32.mrf.mxu0
  %v6661 = vadd.f32 0.0, %v6660
  %6662 = vdwg.mxu0
  %6663 = vmatpush.msra.mxu0 %v6244
  %6664 = vmatpush.msra.mxu0 %v6240
  %6665 = vmatpush.msra.mxu0 %v6236
  %6666 = vmatpush.msra.mxu0 %v6232
  %6667 = vmatpush.msra.mxu0 %v6228
  %6668 = vmatpush.msra.mxu0 %v6224
  %6669 = vmatpush.msra.mxu0 %v6220
  %6670 = vmatpush.msra.mxu0 %v6216
  %6671 = vmatpush.msra.mxu0 %v6212
  %6672 = vmatpush.msra.mxu0 %v6208
  %6673 = vmatpush.msra.mxu0 %v6204
  %6674 = vmatpush.msra.mxu0 %v6200
  %6675 = vmatpush.msra.mxu0 %v6196
  %6676 = vmatpush.msra.mxu0 %v6192
  %6677 = vmatpush.msra.mxu0 %v6188
  %6678 = vmatpush.msra.mxu0 %v6184
  %6679 = vmatmul.f32.gmra.mxu0 %v6548
  %v6680 = vpop.f32.mrf.mxu0
  %v6681 = vadd.f32 0.0, %v6680
  %6682 = vdwg.mxu0
  %6683 = vmatpush.msra.mxu0 %v6245
  %6684 = vmatpush.msra.mxu0 %v6241
  %6685 = vmatpush.msra.mxu0 %v6237
  %6686 = vmatpush.msra.mxu0 %v6233
  %6687 = vmatpush.msra.mxu0 %v6229
  %6688 = vmatpush.msra.mxu0 %v6225
  %6689 = vmatpush.msra.mxu0 %v6221
  %6690 = vmatpush.msra.mxu0 %v6217
  %6691 = vmatpush.msra.mxu0 %v6213
  %6692 = vmatpush.msra.mxu0 %v6209
  %6693 = vmatpush.msra.mxu0 %v6205
  %6694 = vmatpush.msra.mxu0 %v6201
  %6695 = vmatpush.msra.mxu0 %v6197
  %6696 = vmatpush.msra.mxu0 %v6193
  %6697 = vmatpush.msra.mxu0 %v6189
  %6698 = vmatpush.msra.mxu0 %v6185
  %6699 = vmatmul.f32.gmra.mxu0 %v6548
  %v6700 = vpop.f32.mrf.mxu0
  %v6701 = vadd.f32 0.0, %v6700
  %6702 = vdwg.mxu0
  %6703 = vmatpush.msra.mxu0 %v6246
  %6704 = vmatpush.msra.mxu0 %v6242
  %6705 = vmatpush.msra.mxu0 %v6238
  %6706 = vmatpush.msra.mxu0 %v6234
  %6707 = vmatpush.msra.mxu0 %v6230
  %6708 = vmatpush.msra.mxu0 %v6226
  %6709 = vmatpush.msra.mxu0 %v6222
  %6710 = vmatpush.msra.mxu0 %v6218
  %6711 = vmatpush.msra.mxu0 %v6214
  %6712 = vmatpush.msra.mxu0 %v6210
  %6713 = vmatpush.msra.mxu0 %v6206
  %6714 = vmatpush.msra.mxu0 %v6202
  %6715 = vmatpush.msra.mxu0 %v6198
  %6716 = vmatpush.msra.mxu0 %v6194
  %6717 = vmatpush.msra.mxu0 %v6190
  %6718 = vmatpush.msra.mxu0 %v6186
  %6719 = vmatmul.f32.gmra.mxu0 %v6548
  %v6720 = vpop.f32.mrf.mxu0
  %v6721 = vadd.f32 0.0, %v6720
  %6722 = vdwg.mxu0
  %v6723 = vadd.f32 %v6639, %v6661
  %v6724 = vadd.f32 %v6640, %v6681
  %v6725 = vadd.f32 %v6641, %v6701
  %v6726 = vadd.f32 %v6642, %v6721
  %v6727 = vxor.u32 %v6635, 2147483648
  %v6728 = vxor.u32 %v6636, 2147483648
  %v6729 = vxor.u32 %v6637, 2147483648
  %v6730 = vmul.f32 %v6727, 1.442695
  %v6731 = vpow.pop %v6730
  %v6732 = vmul.f32 %v6728, 1.442695
  %v6733 = vpow.pop %v6732
  %v6734 = vmul.f32 %v6729, 1.442695
  %v6735 = vpow.pop %v6734
  %v6736 = vadd.f32 %v6731, 1.0
  %v6737 = vadd.f32 %v6733, 1.0
  %v6738 = vadd.f32 %v6735, 1.0
  %v6739 = vrcp.pop %v6736
  %v6740 = vmul.f32 %v6736, %v6739
  %v6741 = vsub.f32 1.0, %v6740
  %v6742 = vmul.f32 %v6739, %v6741
  %v6743 = vadd.f32 %v6739, %v6742
  %vm6744 = vweird.f32 %v6736
  %vm6745 = vweird.f32 %v6739
  %vm6746 = vmor %vm6744, %vm6745
  %v6747 = vsel %vm6746, %v6739, %v6743
  %v6748 = vand.u32 2147483647, %v6736
  %vm6749 = vcmp.eq.f32.partialorder %v6748, 8.507059e+37
  %v6750 = vand.u32 %v6736, 2147483648
  %v6751 = vor.u32 1.1754944e-38, %v6750
  %v6752 = vsel %vm6749, %v6751, %v6747
  %v6753 = vmul.f32 1.0, %v6752
  %v6754 = vrcp.pop %v6737
  %v6755 = vmul.f32 %v6737, %v6754
  %v6756 = vsub.f32 1.0, %v6755
  %v6757 = vmul.f32 %v6754, %v6756
  %v6758 = vadd.f32 %v6754, %v6757
  %vm6759 = vweird.f32 %v6737
  %vm6760 = vweird.f32 %v6754
  %vm6761 = vmor %vm6759, %vm6760
  %v6762 = vsel %vm6761, %v6754, %v6758
  %v6763 = vand.u32 2147483647, %v6737
  %vm6764 = vcmp.eq.f32.partialorder %v6763, 8.507059e+37
  %v6765 = vand.u32 %v6737, 2147483648
  %v6766 = vor.u32 1.1754944e-38, %v6765
  %v6767 = vsel %vm6764, %v6766, %v6762
  %v6768 = vmul.f32 1.0, %v6767
  %v6769 = vrcp.pop %v6738
  %v6770 = vmul.f32 %v6738, %v6769
  %v6771 = vsub.f32 1.0, %v6770
  %v6772 = vmul.f32 %v6769, %v6771
  %v6773 = vadd.f32 %v6769, %v6772
  %vm6774 = vweird.f32 %v6738
  %vm6775 = vweird.f32 %v6769
  %vm6776 = vmor %vm6774, %vm6775
  %v6777 = vsel %vm6776, %v6769, %v6773
  %v6778 = vand.u32 2147483647, %v6738
  %vm6779 = vcmp.eq.f32.partialorder %v6778, 8.507059e+37
  %v6780 = vand.u32 %v6738, 2147483648
  %v6781 = vor.u32 1.1754944e-38, %v6780
  %v6782 = vsel %vm6779, %v6781, %v6777
  %v6783 = vmul.f32 1.0, %v6782
  %v6784 = vtanh.pop %v6638
  %v6785 = vmul.f32 %v6768, %v6483
  %v6786 = vmul.f32 %v6753, %v6784
  %v6787 = vadd.f32 %v6785, %v6786
  %v6788 = vtanh.pop %v6787
  %v6789 = vmul.f32 %v6783, %v6788
  %v6790 = vxor.u32 %v6723, 2147483648
  %v6791 = vxor.u32 %v6724, 2147483648
  %v6792 = vxor.u32 %v6725, 2147483648
  %v6793 = vmul.f32 %v6790, 1.442695
  %v6794 = vpow.pop %v6793
  %v6795 = vmul.f32 %v6791, 1.442695
  %v6796 = vpow.pop %v6795
  %v6797 = vmul.f32 %v6792, 1.442695
  %v6798 = vpow.pop %v6797
  %v6799 = vadd.f32 %v6794, 1.0
  %v6800 = vadd.f32 %v6796, 1.0
  %v6801 = vadd.f32 %v6798, 1.0
  %v6802 = vrcp.pop %v6799
  %v6803 = vmul.f32 %v6799, %v6802
  %v6804 = vsub.f32 1.0, %v6803
  %v6805 = vmul.f32 %v6802, %v6804
  %v6806 = vadd.f32 %v6802, %v6805
  %vm6807 = vweird.f32 %v6799
  %vm6808 = vweird.f32 %v6802
  %vm6809 = vmor %vm6807, %vm6808
  %v6810 = vsel %vm6809, %v6802, %v6806
  %v6811 = vand.u32 2147483647, %v6799
  %vm6812 = vcmp.eq.f32.partialorder %v6811, 8.507059e+37
  %v6813 = vand.u32 %v6799, 2147483648
  %v6814 = vor.u32 1.1754944e-38, %v6813
  %v6815 = vsel %vm6812, %v6814, %v6810
  %v6816 = vmul.f32 1.0, %v6815
  %v6817 = vrcp.pop %v6800
  %v6818 = vmul.f32 %v6800, %v6817
  %v6819 = vsub.f32 1.0, %v6818
  %v6820 = vmul.f32 %v6817, %v6819
  %v6821 = vadd.f32 %v6817, %v6820
  %vm6822 = vweird.f32 %v6800
  %vm6823 = vweird.f32 %v6817
  %vm6824 = vmor %vm6822, %vm6823
  %v6825 = vsel %vm6824, %v6817, %v6821
  %v6826 = vand.u32 2147483647, %v6800
  %vm6827 = vcmp.eq.f32.partialorder %v6826, 8.507059e+37
  %v6828 = vand.u32 %v6800, 2147483648
  %v6829 = vor.u32 1.1754944e-38, %v6828
  %v6830 = vsel %vm6827, %v6829, %v6825
  %v6831 = vmul.f32 1.0, %v6830
  %v6832 = vrcp.pop %v6801
  %v6833 = vmul.f32 %v6801, %v6832
  %v6834 = vsub.f32 1.0, %v6833
  %v6835 = vmul.f32 %v6832, %v6834
  %v6836 = vadd.f32 %v6832, %v6835
  %vm6837 = vweird.f32 %v6801
  %vm6838 = vweird.f32 %v6832
  %vm6839 = vmor %vm6837, %vm6838
  %v6840 = vsel %vm6839, %v6832, %v6836
  %v6841 = vand.u32 2147483647, %v6801
  %vm6842 = vcmp.eq.f32.partialorder %v6841, 8.507059e+37
  %v6843 = vand.u32 %v6801, 2147483648
  %v6844 = vor.u32 1.1754944e-38, %v6843
  %v6845 = vsel %vm6842, %v6844, %v6840
  %v6846 = vmul.f32 1.0, %v6845
  %v6847 = vtanh.pop %v6726
  %v6848 = vmul.f32 %v6831, %v6546
  %v6849 = vmul.f32 %v6816, %v6847
  %v6850 = vadd.f32 %v6848, %v6849
  %v6851 = vtanh.pop %v6850
  %v6852 = vmul.f32 %v6846, %v6851
  %6853 = vst [vmem:[%s11 + $0x8] sm:$0xff] %v6789
  %6854 = vst [vmem:[%s11 + $0x40] sm:$0xff] %v6852
  %v6855 = vld [vmem:[#allocation2 + $0x80] sm:$0xff]
  %v6856 = vld [vmem:[#allocation2 + $0x88] sm:$0xff]
  %v6857 = vld [vmem:[#allocation2 + $0x90] sm:$0xff]
  %v6858 = vld [vmem:[#allocation2 + $0x98] sm:$0xff]
  %6859 = vmatpush.msra.mxu0 %v6179
  %6860 = vmatpush.msra.mxu0 %v6175
  %6861 = vmatpush.msra.mxu0 %v6171
  %6862 = vmatpush.msra.mxu0 %v6167
  %6863 = vmatpush.msra.mxu0 %v6163
  %6864 = vmatpush.msra.mxu0 %v6159
  %6865 = vmatpush.msra.mxu0 %v6155
  %6866 = vmatpush.msra.mxu0 %v6151
  %6867 = vmatpush.msra.mxu0 %v6147
  %6868 = vmatpush.msra.mxu0 %v6143
  %6869 = vmatpush.msra.mxu0 %v6139
  %6870 = vmatpush.msra.mxu0 %v6135
  %6871 = vmatpush.msra.mxu0 %v6131
  %6872 = vmatpush.msra.mxu0 %v6127
  %6873 = vmatpush.msra.mxu0 %v6123
  %6874 = vmatpush.msra.mxu0 %v6119
  %6875 = vmatmul.f32.gmra.mxu0 %v6789
  %v6876 = vpop.f32.mrf.mxu0
  %v6877 = vadd.f32 0.0, %v6876
  %6878 = vdwg.mxu0
  %6879 = vmatpush.msra.mxu0 %v6180
  %6880 = vmatpush.msra.mxu0 %v6176
  %6881 = vmatpush.msra.mxu0 %v6172
  %6882 = vmatpush.msra.mxu0 %v6168
  %6883 = vmatpush.msra.mxu0 %v6164
  %6884 = vmatpush.msra.mxu0 %v6160
  %6885 = vmatpush.msra.mxu0 %v6156
  %6886 = vmatpush.msra.mxu0 %v6152
  %6887 = vmatpush.msra.mxu0 %v6148
  %6888 = vmatpush.msra.mxu0 %v6144
  %6889 = vmatpush.msra.mxu0 %v6140
  %6890 = vmatpush.msra.mxu0 %v6136
  %6891 = vmatpush.msra.mxu0 %v6132
  %6892 = vmatpush.msra.mxu0 %v6128
  %6893 = vmatpush.msra.mxu0 %v6124
  %6894 = vmatpush.msra.mxu0 %v6120
  %6895 = vmatmul.f32.gmra.mxu0 %v6789
  %v6896 = vpop.f32.mrf.mxu0
  %v6897 = vadd.f32 0.0, %v6896
  %6898 = vdwg.mxu0
  %6899 = vmatpush.msra.mxu0 %v6181
  %6900 = vmatpush.msra.mxu0 %v6177
  %6901 = vmatpush.msra.mxu0 %v6173
  %6902 = vmatpush.msra.mxu0 %v6169
  %6903 = vmatpush.msra.mxu0 %v6165
  %6904 = vmatpush.msra.mxu0 %v6161
  %6905 = vmatpush.msra.mxu0 %v6157
  %6906 = vmatpush.msra.mxu0 %v6153
  %6907 = vmatpush.msra.mxu0 %v6149
  %6908 = vmatpush.msra.mxu0 %v6145
  %6909 = vmatpush.msra.mxu0 %v6141
  %6910 = vmatpush.msra.mxu0 %v6137
  %6911 = vmatpush.msra.mxu0 %v6133
  %6912 = vmatpush.msra.mxu0 %v6129
  %6913 = vmatpush.msra.mxu0 %v6125
  %6914 = vmatpush.msra.mxu0 %v6121
  %6915 = vmatmul.f32.gmra.mxu0 %v6789
  %v6916 = vpop.f32.mrf.mxu0
  %v6917 = vadd.f32 0.0, %v6916
  %6918 = vdwg.mxu0
  %6919 = vmatpush.msra.mxu0 %v6182
  %6920 = vmatpush.msra.mxu0 %v6178
  %6921 = vmatpush.msra.mxu0 %v6174
  %6922 = vmatpush.msra.mxu0 %v6170
  %6923 = vmatpush.msra.mxu0 %v6166
  %6924 = vmatpush.msra.mxu0 %v6162
  %6925 = vmatpush.msra.mxu0 %v6158
  %6926 = vmatpush.msra.mxu0 %v6154
  %6927 = vmatpush.msra.mxu0 %v6150
  %6928 = vmatpush.msra.mxu0 %v6146
  %6929 = vmatpush.msra.mxu0 %v6142
  %6930 = vmatpush.msra.mxu0 %v6138
  %6931 = vmatpush.msra.mxu0 %v6134
  %6932 = vmatpush.msra.mxu0 %v6130
  %6933 = vmatpush.msra.mxu0 %v6126
  %6934 = vmatpush.msra.mxu0 %v6122
  %6935 = vmatmul.f32.gmra.mxu0 %v6789
  %v6936 = vpop.f32.mrf.mxu0
  %v6937 = vadd.f32 0.0, %v6936
  %6938 = vdwg.mxu0
  %v6939 = vadd.f32 %v6855, %v6877
  %v6940 = vadd.f32 %v6856, %v6897
  %v6941 = vadd.f32 %v6857, %v6917
  %v6942 = vadd.f32 %v6858, %v6937
  %v6943 = vld [vmem:[#allocation2 + $0x1e0] sm:$0xff]
  %v6944 = vld [vmem:[#allocation2 + $0x1e8] sm:$0xff]
  %v6945 = vld [vmem:[#allocation2 + $0x1f0] sm:$0xff]
  %v6946 = vld [vmem:[#allocation2 + $0x1f8] sm:$0xff]
  %6947 = vmatpush.msra.mxu0 %v6243
  %6948 = vmatpush.msra.mxu0 %v6239
  %6949 = vmatpush.msra.mxu0 %v6235
  %6950 = vmatpush.msra.mxu0 %v6231
  %6951 = vmatpush.msra.mxu0 %v6227
  %6952 = vmatpush.msra.mxu0 %v6223
  %6953 = vmatpush.msra.mxu0 %v6219
  %6954 = vmatpush.msra.mxu0 %v6215
  %6955 = vmatpush.msra.mxu0 %v6211
  %6956 = vmatpush.msra.mxu0 %v6207
  %6957 = vmatpush.msra.mxu0 %v6203
  %6958 = vmatpush.msra.mxu0 %v6199
  %6959 = vmatpush.msra.mxu0 %v6195
  %6960 = vmatpush.msra.mxu0 %v6191
  %6961 = vmatpush.msra.mxu0 %v6187
  %6962 = vmatpush.msra.mxu0 %v6183
  %6963 = vmatmul.f32.gmra.mxu0 %v6852
  %v6964 = vpop.f32.mrf.mxu0
  %v6965 = vadd.f32 0.0, %v6964
  %6966 = vdwg.mxu0
  %6967 = vmatpush.msra.mxu0 %v6244
  %6968 = vmatpush.msra.mxu0 %v6240
  %6969 = vmatpush.msra.mxu0 %v6236
  %6970 = vmatpush.msra.mxu0 %v6232
  %6971 = vmatpush.msra.mxu0 %v6228
  %6972 = vmatpush.msra.mxu0 %v6224
  %6973 = vmatpush.msra.mxu0 %v6220
  %6974 = vmatpush.msra.mxu0 %v6216
  %6975 = vmatpush.msra.mxu0 %v6212
  %6976 = vmatpush.msra.mxu0 %v6208
  %6977 = vmatpush.msra.mxu0 %v6204
  %6978 = vmatpush.msra.mxu0 %v6200
  %6979 = vmatpush.msra.mxu0 %v6196
  %6980 = vmatpush.msra.mxu0 %v6192
  %6981 = vmatpush.msra.mxu0 %v6188
  %6982 = vmatpush.msra.mxu0 %v6184
  %6983 = vmatmul.f32.gmra.mxu0 %v6852
  %v6984 = vpop.f32.mrf.mxu0
  %v6985 = vadd.f32 0.0, %v6984
  %6986 = vdwg.mxu0
  %6987 = vmatpush.msra.mxu0 %v6245
  %6988 = vmatpush.msra.mxu0 %v6241
  %6989 = vmatpush.msra.mxu0 %v6237
  %6990 = vmatpush.msra.mxu0 %v6233
  %6991 = vmatpush.msra.mxu0 %v6229
  %6992 = vmatpush.msra.mxu0 %v6225
  %6993 = vmatpush.msra.mxu0 %v6221
  %6994 = vmatpush.msra.mxu0 %v6217
  %6995 = vmatpush.msra.mxu0 %v6213
  %6996 = vmatpush.msra.mxu0 %v6209
  %6997 = vmatpush.msra.mxu0 %v6205
  %6998 = vmatpush.msra.mxu0 %v6201
  %6999 = vmatpush.msra.mxu0 %v6197
  %7000 = vmatpush.msra.mxu0 %v6193
  %7001 = vmatpush.msra.mxu0 %v6189
  %7002 = vmatpush.msra.mxu0 %v6185
  %7003 = vmatmul.f32.gmra.mxu0 %v6852
  %v7004 = vpop.f32.mrf.mxu0
  %v7005 = vadd.f32 0.0, %v7004
  %7006 = vdwg.mxu0
  %7007 = vmatpush.msra.mxu0 %v6246
  %7008 = vmatpush.msra.mxu0 %v6242
  %7009 = vmatpush.msra.mxu0 %v6238
  %7010 = vmatpush.msra.mxu0 %v6234
  %7011 = vmatpush.msra.mxu0 %v6230
  %7012 = vmatpush.msra.mxu0 %v6226
  %7013 = vmatpush.msra.mxu0 %v6222
  %7014 = vmatpush.msra.mxu0 %v6218
  %7015 = vmatpush.msra.mxu0 %v6214
  %7016 = vmatpush.msra.mxu0 %v6210
  %7017 = vmatpush.msra.mxu0 %v6206
  %7018 = vmatpush.msra.mxu0 %v6202
  %7019 = vmatpush.msra.mxu0 %v6198
  %7020 = vmatpush.msra.mxu0 %v6194
  %7021 = vmatpush.msra.mxu0 %v6190
  %7022 = vmatpush.msra.mxu0 %v6186
  %7023 = vmatmul.f32.gmra.mxu0 %v6852
  %v7024 = vpop.f32.mrf.mxu0
  %v7025 = vadd.f32 0.0, %v7024
  %7026 = vdwg.mxu0
  %v7027 = vadd.f32 %v6943, %v6965
  %v7028 = vadd.f32 %v6944, %v6985
  %v7029 = vadd.f32 %v6945, %v7005
  %v7030 = vadd.f32 %v6946, %v7025
  %v7031 = vxor.u32 %v6939, 2147483648
  %v7032 = vxor.u32 %v6940, 2147483648
  %v7033 = vxor.u32 %v6941, 2147483648
  %v7034 = vmul.f32 %v7031, 1.442695
  %v7035 = vpow.pop %v7034
  %v7036 = vmul.f32 %v7032, 1.442695
  %v7037 = vpow.pop %v7036
  %v7038 = vmul.f32 %v7033, 1.442695
  %v7039 = vpow.pop %v7038
  %v7040 = vadd.f32 %v7035, 1.0
  %v7041 = vadd.f32 %v7037, 1.0
  %v7042 = vadd.f32 %v7039, 1.0
  %v7043 = vrcp.pop %v7040
  %v7044 = vmul.f32 %v7040, %v7043
  %v7045 = vsub.f32 1.0, %v7044
  %v7046 = vmul.f32 %v7043, %v7045
  %v7047 = vadd.f32 %v7043, %v7046
  %vm7048 = vweird.f32 %v7040
  %vm7049 = vweird.f32 %v7043
  %vm7050 = vmor %vm7048, %vm7049
  %v7051 = vsel %vm7050, %v7043, %v7047
  %v7052 = vand.u32 2147483647, %v7040
  %vm7053 = vcmp.eq.f32.partialorder %v7052, 8.507059e+37
  %v7054 = vand.u32 %v7040, 2147483648
  %v7055 = vor.u32 1.1754944e-38, %v7054
  %v7056 = vsel %vm7053, %v7055, %v7051
  %v7057 = vmul.f32 1.0, %v7056
  %v7058 = vrcp.pop %v7041
  %v7059 = vmul.f32 %v7041, %v7058
  %v7060 = vsub.f32 1.0, %v7059
  %v7061 = vmul.f32 %v7058, %v7060
  %v7062 = vadd.f32 %v7058, %v7061
  %vm7063 = vweird.f32 %v7041
  %vm7064 = vweird.f32 %v7058
  %vm7065 = vmor %vm7063, %vm7064
  %v7066 = vsel %vm7065, %v7058, %v7062
  %v7067 = vand.u32 2147483647, %v7041
  %vm7068 = vcmp.eq.f32.partialorder %v7067, 8.507059e+37
  %v7069 = vand.u32 %v7041, 2147483648
  %v7070 = vor.u32 1.1754944e-38, %v7069
  %v7071 = vsel %vm7068, %v7070, %v7066
  %v7072 = vmul.f32 1.0, %v7071
  %v7073 = vrcp.pop %v7042
  %v7074 = vmul.f32 %v7042, %v7073
  %v7075 = vsub.f32 1.0, %v7074
  %v7076 = vmul.f32 %v7073, %v7075
  %v7077 = vadd.f32 %v7073, %v7076
  %vm7078 = vweird.f32 %v7042
  %vm7079 = vweird.f32 %v7073
  %vm7080 = vmor %vm7078, %vm7079
  %v7081 = vsel %vm7080, %v7073, %v7077
  %v7082 = vand.u32 2147483647, %v7042
  %vm7083 = vcmp.eq.f32.partialorder %v7082, 8.507059e+37
  %v7084 = vand.u32 %v7042, 2147483648
  %v7085 = vor.u32 1.1754944e-38, %v7084
  %v7086 = vsel %vm7083, %v7085, %v7081
  %v7087 = vmul.f32 1.0, %v7086
  %v7088 = vtanh.pop %v6942
  %v7089 = vmul.f32 %v7072, %v6787
  %v7090 = vmul.f32 %v7057, %v7088
  %v7091 = vadd.f32 %v7089, %v7090
  %v7092 = vtanh.pop %v7091
  %v7093 = vmul.f32 %v7087, %v7092
  %v7094 = vxor.u32 %v7027, 2147483648
  %v7095 = vxor.u32 %v7028, 2147483648
  %v7096 = vxor.u32 %v7029, 2147483648
  %v7097 = vmul.f32 %v7094, 1.442695
  %v7098 = vpow.pop %v7097
  %v7099 = vmul.f32 %v7095, 1.442695
  %v7100 = vpow.pop %v7099
  %v7101 = vmul.f32 %v7096, 1.442695
  %v7102 = vpow.pop %v7101
  %v7103 = vadd.f32 %v7098, 1.0
  %v7104 = vadd.f32 %v7100, 1.0
  %v7105 = vadd.f32 %v7102, 1.0
  %v7106 = vrcp.pop %v7103
  %v7107 = vmul.f32 %v7103, %v7106
  %v7108 = vsub.f32 1.0, %v7107
  %v7109 = vmul.f32 %v7106, %v7108
  %v7110 = vadd.f32 %v7106, %v7109
  %vm7111 = vweird.f32 %v7103
  %vm7112 = vweird.f32 %v7106
  %vm7113 = vmor %vm7111, %vm7112
  %v7114 = vsel %vm7113, %v7106, %v7110
  %v7115 = vand.u32 2147483647, %v7103
  %vm7116 = vcmp.eq.f32.partialorder %v7115, 8.507059e+37
  %v7117 = vand.u32 %v7103, 2147483648
  %v7118 = vor.u32 1.1754944e-38, %v7117
  %v7119 = vsel %vm7116, %v7118, %v7114
  %v7120 = vmul.f32 1.0, %v7119
  %v7121 = vrcp.pop %v7104
  %v7122 = vmul.f32 %v7104, %v7121
  %v7123 = vsub.f32 1.0, %v7122
  %v7124 = vmul.f32 %v7121, %v7123
  %v7125 = vadd.f32 %v7121, %v7124
  %vm7126 = vweird.f32 %v7104
  %vm7127 = vweird.f32 %v7121
  %vm7128 = vmor %vm7126, %vm7127
  %v7129 = vsel %vm7128, %v7121, %v7125
  %v7130 = vand.u32 2147483647, %v7104
  %vm7131 = vcmp.eq.f32.partialorder %v7130, 8.507059e+37
  %v7132 = vand.u32 %v7104, 2147483648
  %v7133 = vor.u32 1.1754944e-38, %v7132
  %v7134 = vsel %vm7131, %v7133, %v7129
  %v7135 = vmul.f32 1.0, %v7134
  %v7136 = vrcp.pop %v7105
  %v7137 = vmul.f32 %v7105, %v7136
  %v7138 = vsub.f32 1.0, %v7137
  %v7139 = vmul.f32 %v7136, %v7138
  %v7140 = vadd.f32 %v7136, %v7139
  %vm7141 = vweird.f32 %v7105
  %vm7142 = vweird.f32 %v7136
  %vm7143 = vmor %vm7141, %vm7142
  %v7144 = vsel %vm7143, %v7136, %v7140
  %v7145 = vand.u32 2147483647, %v7105
  %vm7146 = vcmp.eq.f32.partialorder %v7145, 8.507059e+37
  %v7147 = vand.u32 %v7105, 2147483648
  %v7148 = vor.u32 1.1754944e-38, %v7147
  %v7149 = vsel %vm7146, %v7148, %v7144
  %v7150 = vmul.f32 1.0, %v7149
  %v7151 = vtanh.pop %v7030
  %v7152 = vmul.f32 %v7135, %v6850
  %v7153 = vmul.f32 %v7120, %v7151
  %v7154 = vadd.f32 %v7152, %v7153
  %v7155 = vtanh.pop %v7154
  %v7156 = vmul.f32 %v7150, %v7155
  %7157 = vst [vmem:[%s11 + $0x10] sm:$0xff] %v7093
  %7158 = vst [vmem:[%s11 + $0x38] sm:$0xff] %v7156
  %v7159 = vld [vmem:[#allocation2 + $0xc0] sm:$0xff]
  %v7160 = vld [vmem:[#allocation2 + $0xc8] sm:$0xff]
  %v7161 = vld [vmem:[#allocation2 + $0xd0] sm:$0xff]
  %v7162 = vld [vmem:[#allocation2 + $0xd8] sm:$0xff]
  %7163 = vmatpush.msra.mxu0 %v6179
  %7164 = vmatpush.msra.mxu0 %v6175
  %7165 = vmatpush.msra.mxu0 %v6171
  %7166 = vmatpush.msra.mxu0 %v6167
  %7167 = vmatpush.msra.mxu0 %v6163
  %7168 = vmatpush.msra.mxu0 %v6159
  %7169 = vmatpush.msra.mxu0 %v6155
  %7170 = vmatpush.msra.mxu0 %v6151
  %7171 = vmatpush.msra.mxu0 %v6147
  %7172 = vmatpush.msra.mxu0 %v6143
  %7173 = vmatpush.msra.mxu0 %v6139
  %7174 = vmatpush.msra.mxu0 %v6135
  %7175 = vmatpush.msra.mxu0 %v6131
  %7176 = vmatpush.msra.mxu0 %v6127
  %7177 = vmatpush.msra.mxu0 %v6123
  %7178 = vmatpush.msra.mxu0 %v6119
  %7179 = vmatmul.f32.gmra.mxu0 %v7093
  %v7180 = vpop.f32.mrf.mxu0
  %v7181 = vadd.f32 0.0, %v7180
  %7182 = vdwg.mxu0
  %7183 = vmatpush.msra.mxu0 %v6180
  %7184 = vmatpush.msra.mxu0 %v6176
  %7185 = vmatpush.msra.mxu0 %v6172
  %7186 = vmatpush.msra.mxu0 %v6168
  %7187 = vmatpush.msra.mxu0 %v6164
  %7188 = vmatpush.msra.mxu0 %v6160
  %7189 = vmatpush.msra.mxu0 %v6156
  %7190 = vmatpush.msra.mxu0 %v6152
  %7191 = vmatpush.msra.mxu0 %v6148
  %7192 = vmatpush.msra.mxu0 %v6144
  %7193 = vmatpush.msra.mxu0 %v6140
  %7194 = vmatpush.msra.mxu0 %v6136
  %7195 = vmatpush.msra.mxu0 %v6132
  %7196 = vmatpush.msra.mxu0 %v6128
  %7197 = vmatpush.msra.mxu0 %v6124
  %7198 = vmatpush.msra.mxu0 %v6120
  %7199 = vmatmul.f32.gmra.mxu0 %v7093
  %v7200 = vpop.f32.mrf.mxu0
  %v7201 = vadd.f32 0.0, %v7200
  %7202 = vdwg.mxu0
  %7203 = vmatpush.msra.mxu0 %v6181
  %7204 = vmatpush.msra.mxu0 %v6177
  %7205 = vmatpush.msra.mxu0 %v6173
  %7206 = vmatpush.msra.mxu0 %v6169
  %7207 = vmatpush.msra.mxu0 %v6165
  %7208 = vmatpush.msra.mxu0 %v6161
  %7209 = vmatpush.msra.mxu0 %v6157
  %7210 = vmatpush.msra.mxu0 %v6153
  %7211 = vmatpush.msra.mxu0 %v6149
  %7212 = vmatpush.msra.mxu0 %v6145
  %7213 = vmatpush.msra.mxu0 %v6141
  %7214 = vmatpush.msra.mxu0 %v6137
  %7215 = vmatpush.msra.mxu0 %v6133
  %7216 = vmatpush.msra.mxu0 %v6129
  %7217 = vmatpush.msra.mxu0 %v6125
  %7218 = vmatpush.msra.mxu0 %v6121
  %7219 = vmatmul.f32.gmra.mxu0 %v7093
  %v7220 = vpop.f32.mrf.mxu0
  %v7221 = vadd.f32 0.0, %v7220
  %7222 = vdwg.mxu0
  %7223 = vmatpush.msra.mxu0 %v6182
  %7224 = vmatpush.msra.mxu0 %v6178
  %7225 = vmatpush.msra.mxu0 %v6174
  %7226 = vmatpush.msra.mxu0 %v6170
  %7227 = vmatpush.msra.mxu0 %v6166
  %7228 = vmatpush.msra.mxu0 %v6162
  %7229 = vmatpush.msra.mxu0 %v6158
  %7230 = vmatpush.msra.mxu0 %v6154
  %7231 = vmatpush.msra.mxu0 %v6150
  %7232 = vmatpush.msra.mxu0 %v6146
  %7233 = vmatpush.msra.mxu0 %v6142
  %7234 = vmatpush.msra.mxu0 %v6138
  %7235 = vmatpush.msra.mxu0 %v6134
  %7236 = vmatpush.msra.mxu0 %v6130
  %7237 = vmatpush.msra.mxu0 %v6126
  %7238 = vmatpush.msra.mxu0 %v6122
  %7239 = vmatmul.f32.gmra.mxu0 %v7093
  %v7240 = vpop.f32.mrf.mxu0
  %v7241 = vadd.f32 0.0, %v7240
  %7242 = vdwg.mxu0
  %v7243 = vadd.f32 %v7159, %v7181
  %v7244 = vadd.f32 %v7160, %v7201
  %v7245 = vadd.f32 %v7161, %v7221
  %v7246 = vadd.f32 %v7162, %v7241
  %v7247 = vld [vmem:[#allocation2 + $0x1a0] sm:$0xff]
  %v7248 = vld [vmem:[#allocation2 + $0x1a8] sm:$0xff]
  %v7249 = vld [vmem:[#allocation2 + $0x1b0] sm:$0xff]
  %v7250 = vld [vmem:[#allocation2 + $0x1b8] sm:$0xff]
  %7251 = vmatpush.msra.mxu0 %v6243
  %7252 = vmatpush.msra.mxu0 %v6239
  %7253 = vmatpush.msra.mxu0 %v6235
  %7254 = vmatpush.msra.mxu0 %v6231
  %7255 = vmatpush.msra.mxu0 %v6227
  %7256 = vmatpush.msra.mxu0 %v6223
  %7257 = vmatpush.msra.mxu0 %v6219
  %7258 = vmatpush.msra.mxu0 %v6215
  %7259 = vmatpush.msra.mxu0 %v6211
  %7260 = vmatpush.msra.mxu0 %v6207
  %7261 = vmatpush.msra.mxu0 %v6203
  %7262 = vmatpush.msra.mxu0 %v6199
  %7263 = vmatpush.msra.mxu0 %v6195
  %7264 = vmatpush.msra.mxu0 %v6191
  %7265 = vmatpush.msra.mxu0 %v6187
  %7266 = vmatpush.msra.mxu0 %v6183
  %7267 = vmatmul.f32.gmra.mxu0 %v7156
  %v7268 = vpop.f32.mrf.mxu0
  %v7269 = vadd.f32 0.0, %v7268
  %7270 = vdwg.mxu0
  %7271 = vmatpush.msra.mxu0 %v6244
  %7272 = vmatpush.msra.mxu0 %v6240
  %7273 = vmatpush.msra.mxu0 %v6236
  %7274 = vmatpush.msra.mxu0 %v6232
  %7275 = vmatpush.msra.mxu0 %v6228
  %7276 = vmatpush.msra.mxu0 %v6224
  %7277 = vmatpush.msra.mxu0 %v6220
  %7278 = vmatpush.msra.mxu0 %v6216
  %7279 = vmatpush.msra.mxu0 %v6212
  %7280 = vmatpush.msra.mxu0 %v6208
  %7281 = vmatpush.msra.mxu0 %v6204
  %7282 = vmatpush.msra.mxu0 %v6200
  %7283 = vmatpush.msra.mxu0 %v6196
  %7284 = vmatpush.msra.mxu0 %v6192
  %7285 = vmatpush.msra.mxu0 %v6188
  %7286 = vmatpush.msra.mxu0 %v6184
  %7287 = vmatmul.f32.gmra.mxu0 %v7156
  %v7288 = vpop.f32.mrf.mxu0
  %v7289 = vadd.f32 0.0, %v7288
  %7290 = vdwg.mxu0
  %7291 = vmatpush.msra.mxu0 %v6245
  %7292 = vmatpush.msra.mxu0 %v6241
  %7293 = vmatpush.msra.mxu0 %v6237
  %7294 = vmatpush.msra.mxu0 %v6233
  %7295 = vmatpush.msra.mxu0 %v6229
  %7296 = vmatpush.msra.mxu0 %v6225
  %7297 = vmatpush.msra.mxu0 %v6221
  %7298 = vmatpush.msra.mxu0 %v6217
  %7299 = vmatpush.msra.mxu0 %v6213
  %7300 = vmatpush.msra.mxu0 %v6209
  %7301 = vmatpush.msra.mxu0 %v6205
  %7302 = vmatpush.msra.mxu0 %v6201
  %7303 = vmatpush.msra.mxu0 %v6197
  %7304 = vmatpush.msra.mxu0 %v6193
  %7305 = vmatpush.msra.mxu0 %v6189
  %7306 = vmatpush.msra.mxu0 %v6185
  %7307 = vmatmul.f32.gmra.mxu0 %v7156
  %v7308 = vpop.f32.mrf.mxu0
  %v7309 = vadd.f32 0.0, %v7308
  %7310 = vdwg.mxu0
  %7311 = vmatpush.msra.mxu0 %v6246
  %7312 = vmatpush.msra.mxu0 %v6242
  %7313 = vmatpush.msra.mxu0 %v6238
  %7314 = vmatpush.msra.mxu0 %v6234
  %7315 = vmatpush.msra.mxu0 %v6230
  %7316 = vmatpush.msra.mxu0 %v6226
  %7317 = vmatpush.msra.mxu0 %v6222
  %7318 = vmatpush.msra.mxu0 %v6218
  %7319 = vmatpush.msra.mxu0 %v6214
  %7320 = vmatpush.msra.mxu0 %v6210
  %7321 = vmatpush.msra.mxu0 %v6206
  %7322 = vmatpush.msra.mxu0 %v6202
  %7323 = vmatpush.msra.mxu0 %v6198
  %7324 = vmatpush.msra.mxu0 %v6194
  %7325 = vmatpush.msra.mxu0 %v6190
  %7326 = vmatpush.msra.mxu0 %v6186
  %7327 = vmatmul.f32.gmra.mxu0 %v7156
  %v7328 = vpop.f32.mrf.mxu0
  %v7329 = vadd.f32 0.0, %v7328
  %7330 = vdwg.mxu0
  %v7331 = vadd.f32 %v7247, %v7269
  %v7332 = vadd.f32 %v7248, %v7289
  %v7333 = vadd.f32 %v7249, %v7309
  %v7334 = vadd.f32 %v7250, %v7329
  %v7335 = vxor.u32 %v7243, 2147483648
  %v7336 = vxor.u32 %v7244, 2147483648
  %v7337 = vxor.u32 %v7245, 2147483648
  %v7338 = vmul.f32 %v7335, 1.442695
  %v7339 = vpow.pop %v7338
  %v7340 = vmul.f32 %v7336, 1.442695
  %v7341 = vpow.pop %v7340
  %v7342 = vmul.f32 %v7337, 1.442695
  %v7343 = vpow.pop %v7342
  %v7344 = vadd.f32 %v7339, 1.0
  %v7345 = vadd.f32 %v7341, 1.0
  %v7346 = vadd.f32 %v7343, 1.0
  %v7347 = vrcp.pop %v7344
  %v7348 = vmul.f32 %v7344, %v7347
  %v7349 = vsub.f32 1.0, %v7348
  %v7350 = vmul.f32 %v7347, %v7349
  %v7351 = vadd.f32 %v7347, %v7350
  %vm7352 = vweird.f32 %v7344
  %vm7353 = vweird.f32 %v7347
  %vm7354 = vmor %vm7352, %vm7353
  %v7355 = vsel %vm7354, %v7347, %v7351
  %v7356 = vand.u32 2147483647, %v7344
  %vm7357 = vcmp.eq.f32.partialorder %v7356, 8.507059e+37
  %v7358 = vand.u32 %v7344, 2147483648
  %v7359 = vor.u32 1.1754944e-38, %v7358
  %v7360 = vsel %vm7357, %v7359, %v7355
  %v7361 = vmul.f32 1.0, %v7360
  %v7362 = vrcp.pop %v7345
  %v7363 = vmul.f32 %v7345, %v7362
  %v7364 = vsub.f32 1.0, %v7363
  %v7365 = vmul.f32 %v7362, %v7364
  %v7366 = vadd.f32 %v7362, %v7365
  %vm7367 = vweird.f32 %v7345
  %vm7368 = vweird.f32 %v7362
  %vm7369 = vmor %vm7367, %vm7368
  %v7370 = vsel %vm7369, %v7362, %v7366
  %v7371 = vand.u32 2147483647, %v7345
  %vm7372 = vcmp.eq.f32.partialorder %v7371, 8.507059e+37
  %v7373 = vand.u32 %v7345, 2147483648
  %v7374 = vor.u32 1.1754944e-38, %v7373
  %v7375 = vsel %vm7372, %v7374, %v7370
  %v7376 = vmul.f32 1.0, %v7375
  %v7377 = vrcp.pop %v7346
  %v7378 = vmul.f32 %v7346, %v7377
  %v7379 = vsub.f32 1.0, %v7378
  %v7380 = vmul.f32 %v7377, %v7379
  %v7381 = vadd.f32 %v7377, %v7380
  %vm7382 = vweird.f32 %v7346
  %vm7383 = vweird.f32 %v7377
  %vm7384 = vmor %vm7382, %vm7383
  %v7385 = vsel %vm7384, %v7377, %v7381
  %v7386 = vand.u32 2147483647, %v7346
  %vm7387 = vcmp.eq.f32.partialorder %v7386, 8.507059e+37
  %v7388 = vand.u32 %v7346, 2147483648
  %v7389 = vor.u32 1.1754944e-38, %v7388
  %v7390 = vsel %vm7387, %v7389, %v7385
  %v7391 = vmul.f32 1.0, %v7390
  %v7392 = vtanh.pop %v7246
  %v7393 = vmul.f32 %v7376, %v7091
  %v7394 = vmul.f32 %v7361, %v7392
  %v7395 = vadd.f32 %v7393, %v7394
  %v7396 = vtanh.pop %v7395
  %v7397 = vmul.f32 %v7391, %v7396
  %v7398 = vxor.u32 %v7331, 2147483648
  %v7399 = vxor.u32 %v7332, 2147483648
  %v7400 = vxor.u32 %v7333, 2147483648
  %v7401 = vmul.f32 %v7398, 1.442695
  %v7402 = vpow.pop %v7401
  %v7403 = vmul.f32 %v7399, 1.442695
  %v7404 = vpow.pop %v7403
  %v7405 = vmul.f32 %v7400, 1.442695
  %v7406 = vpow.pop %v7405
  %v7407 = vadd.f32 %v7402, 1.0
  %v7408 = vadd.f32 %v7404, 1.0
  %v7409 = vadd.f32 %v7406, 1.0
  %v7410 = vrcp.pop %v7407
  %v7411 = vmul.f32 %v7407, %v7410
  %v7412 = vsub.f32 1.0, %v7411
  %v7413 = vmul.f32 %v7410, %v7412
  %v7414 = vadd.f32 %v7410, %v7413
  %vm7415 = vweird.f32 %v7407
  %vm7416 = vweird.f32 %v7410
  %vm7417 = vmor %vm7415, %vm7416
  %v7418 = vsel %vm7417, %v7410, %v7414
  %v7419 = vand.u32 2147483647, %v7407
  %vm7420 = vcmp.eq.f32.partialorder %v7419, 8.507059e+37
  %v7421 = vand.u32 %v7407, 2147483648
  %v7422 = vor.u32 1.1754944e-38, %v7421
  %v7423 = vsel %vm7420, %v7422, %v7418
  %v7424 = vmul.f32 1.0, %v7423
  %v7425 = vrcp.pop %v7408
  %v7426 = vmul.f32 %v7408, %v7425
  %v7427 = vsub.f32 1.0, %v7426
  %v7428 = vmul.f32 %v7425, %v7427
  %v7429 = vadd.f32 %v7425, %v7428
  %vm7430 = vweird.f32 %v7408
  %vm7431 = vweird.f32 %v7425
  %vm7432 = vmor %vm7430, %vm7431
  %v7433 = vsel %vm7432, %v7425, %v7429
  %v7434 = vand.u32 2147483647, %v7408
  %vm7435 = vcmp.eq.f32.partialorder %v7434, 8.507059e+37
  %v7436 = vand.u32 %v7408, 2147483648
  %v7437 = vor.u32 1.1754944e-38, %v7436
  %v7438 = vsel %vm7435, %v7437, %v7433
  %v7439 = vmul.f32 1.0, %v7438
  %v7440 = vrcp.pop %v7409
  %v7441 = vmul.f32 %v7409, %v7440
  %v7442 = vsub.f32 1.0, %v7441
  %v7443 = vmul.f32 %v7440, %v7442
  %v7444 = vadd.f32 %v7440, %v7443
  %vm7445 = vweird.f32 %v7409
  %vm7446 = vweird.f32 %v7440
  %vm7447 = vmor %vm7445, %vm7446
  %v7448 = vsel %vm7447, %v7440, %v7444
  %v7449 = vand.u32 2147483647, %v7409
  %vm7450 = vcmp.eq.f32.partialorder %v7449, 8.507059e+37
  %v7451 = vand.u32 %v7409, 2147483648
  %v7452 = vor.u32 1.1754944e-38, %v7451
  %v7453 = vsel %vm7450, %v7452, %v7448
  %v7454 = vmul.f32 1.0, %v7453
  %v7455 = vtanh.pop %v7334
  %v7456 = vmul.f32 %v7439, %v7154
  %v7457 = vmul.f32 %v7424, %v7455
  %v7458 = vadd.f32 %v7456, %v7457
  %v7459 = vtanh.pop %v7458
  %v7460 = vmul.f32 %v7454, %v7459
  %7461 = vst [vmem:[%s11 + $0x18] sm:$0xff] %v7397
  %7462 = vst [vmem:[%s11 + $0x30] sm:$0xff] %v7460
  %v7463 = vld [vmem:[#allocation2 + $0x100] sm:$0xff]
  %v7464 = vld [vmem:[#allocation2 + $0x108] sm:$0xff]
  %v7465 = vld [vmem:[#allocation2 + $0x110] sm:$0xff]
  %v7466 = vld [vmem:[#allocation2 + $0x118] sm:$0xff]
  %7467 = vmatpush.msra.mxu0 %v6179
  %7468 = vmatpush.msra.mxu0 %v6175
  %7469 = vmatpush.msra.mxu0 %v6171
  %7470 = vmatpush.msra.mxu0 %v6167
  %7471 = vmatpush.msra.mxu0 %v6163
  %7472 = vmatpush.msra.mxu0 %v6159
  %7473 = vmatpush.msra.mxu0 %v6155
  %7474 = vmatpush.msra.mxu0 %v6151
  %7475 = vmatpush.msra.mxu0 %v6147
  %7476 = vmatpush.msra.mxu0 %v6143
  %7477 = vmatpush.msra.mxu0 %v6139
  %7478 = vmatpush.msra.mxu0 %v6135
  %7479 = vmatpush.msra.mxu0 %v6131
  %7480 = vmatpush.msra.mxu0 %v6127
  %7481 = vmatpush.msra.mxu0 %v6123
  %7482 = vmatpush.msra.mxu0 %v6119
  %7483 = vmatmul.f32.gmra.mxu0 %v7397
  %v7484 = vpop.f32.mrf.mxu0
  %v7485 = vadd.f32 0.0, %v7484
  %7486 = vdwg.mxu0
  %7487 = vmatpush.msra.mxu0 %v6180
  %7488 = vmatpush.msra.mxu0 %v6176
  %7489 = vmatpush.msra.mxu0 %v6172
  %7490 = vmatpush.msra.mxu0 %v6168
  %7491 = vmatpush.msra.mxu0 %v6164
  %7492 = vmatpush.msra.mxu0 %v6160
  %7493 = vmatpush.msra.mxu0 %v6156
  %7494 = vmatpush.msra.mxu0 %v6152
  %7495 = vmatpush.msra.mxu0 %v6148
  %7496 = vmatpush.msra.mxu0 %v6144
  %7497 = vmatpush.msra.mxu0 %v6140
  %7498 = vmatpush.msra.mxu0 %v6136
  %7499 = vmatpush.msra.mxu0 %v6132
  %7500 = vmatpush.msra.mxu0 %v6128
  %7501 = vmatpush.msra.mxu0 %v6124
  %7502 = vmatpush.msra.mxu0 %v6120
  %7503 = vmatmul.f32.gmra.mxu0 %v7397
  %v7504 = vpop.f32.mrf.mxu0
  %v7505 = vadd.f32 0.0, %v7504
  %7506 = vdwg.mxu0
  %7507 = vmatpush.msra.mxu0 %v6181
  %7508 = vmatpush.msra.mxu0 %v6177
  %7509 = vmatpush.msra.mxu0 %v6173
  %7510 = vmatpush.msra.mxu0 %v6169
  %7511 = vmatpush.msra.mxu0 %v6165
  %7512 = vmatpush.msra.mxu0 %v6161
  %7513 = vmatpush.msra.mxu0 %v6157
  %7514 = vmatpush.msra.mxu0 %v6153
  %7515 = vmatpush.msra.mxu0 %v6149
  %7516 = vmatpush.msra.mxu0 %v6145
  %7517 = vmatpush.msra.mxu0 %v6141
  %7518 = vmatpush.msra.mxu0 %v6137
  %7519 = vmatpush.msra.mxu0 %v6133
  %7520 = vmatpush.msra.mxu0 %v6129
  %7521 = vmatpush.msra.mxu0 %v6125
  %7522 = vmatpush.msra.mxu0 %v6121
  %7523 = vmatmul.f32.gmra.mxu0 %v7397
  %v7524 = vpop.f32.mrf.mxu0
  %v7525 = vadd.f32 0.0, %v7524
  %7526 = vdwg.mxu0
  %7527 = vmatpush.msra.mxu0 %v6182
  %7528 = vmatpush.msra.mxu0 %v6178
  %7529 = vmatpush.msra.mxu0 %v6174
  %7530 = vmatpush.msra.mxu0 %v6170
  %7531 = vmatpush.msra.mxu0 %v6166
  %7532 = vmatpush.msra.mxu0 %v6162
  %7533 = vmatpush.msra.mxu0 %v6158
  %7534 = vmatpush.msra.mxu0 %v6154
  %7535 = vmatpush.msra.mxu0 %v6150
  %7536 = vmatpush.msra.mxu0 %v6146
  %7537 = vmatpush.msra.mxu0 %v6142
  %7538 = vmatpush.msra.mxu0 %v6138
  %7539 = vmatpush.msra.mxu0 %v6134
  %7540 = vmatpush.msra.mxu0 %v6130
  %7541 = vmatpush.msra.mxu0 %v6126
  %7542 = vmatpush.msra.mxu0 %v6122
  %7543 = vmatmul.f32.gmra.mxu0 %v7397
  %v7544 = vpop.f32.mrf.mxu0
  %v7545 = vadd.f32 0.0, %v7544
  %7546 = vdwg.mxu0
  %v7547 = vadd.f32 %v7463, %v7485
  %v7548 = vadd.f32 %v7464, %v7505
  %v7549 = vadd.f32 %v7465, %v7525
  %v7550 = vadd.f32 %v7466, %v7545
  %v7551 = vld [vmem:[#allocation2 + $0x160] sm:$0xff]
  %v7552 = vld [vmem:[#allocation2 + $0x168] sm:$0xff]
  %v7553 = vld [vmem:[#allocation2 + $0x170] sm:$0xff]
  %v7554 = vld [vmem:[#allocation2 + $0x178] sm:$0xff]
  %7555 = vmatpush.msra.mxu0 %v6243
  %7556 = vmatpush.msra.mxu0 %v6239
  %7557 = vmatpush.msra.mxu0 %v6235
  %7558 = vmatpush.msra.mxu0 %v6231
  %7559 = vmatpush.msra.mxu0 %v6227
  %7560 = vmatpush.msra.mxu0 %v6223
  %7561 = vmatpush.msra.mxu0 %v6219
  %7562 = vmatpush.msra.mxu0 %v6215
  %7563 = vmatpush.msra.mxu0 %v6211
  %7564 = vmatpush.msra.mxu0 %v6207
  %7565 = vmatpush.msra.mxu0 %v6203
  %7566 = vmatpush.msra.mxu0 %v6199
  %7567 = vmatpush.msra.mxu0 %v6195
  %7568 = vmatpush.msra.mxu0 %v6191
  %7569 = vmatpush.msra.mxu0 %v6187
  %7570 = vmatpush.msra.mxu0 %v6183
  %7571 = vmatmul.f32.gmra.mxu0 %v7460
  %v7572 = vpop.f32.mrf.mxu0
  %v7573 = vadd.f32 0.0, %v7572
  %7574 = vdwg.mxu0
  %7575 = vmatpush.msra.mxu0 %v6244
  %7576 = vmatpush.msra.mxu0 %v6240
  %7577 = vmatpush.msra.mxu0 %v6236
  %7578 = vmatpush.msra.mxu0 %v6232
  %7579 = vmatpush.msra.mxu0 %v6228
  %7580 = vmatpush.msra.mxu0 %v6224
  %7581 = vmatpush.msra.mxu0 %v6220
  %7582 = vmatpush.msra.mxu0 %v6216
  %7583 = vmatpush.msra.mxu0 %v6212
  %7584 = vmatpush.msra.mxu0 %v6208
  %7585 = vmatpush.msra.mxu0 %v6204
  %7586 = vmatpush.msra.mxu0 %v6200
  %7587 = vmatpush.msra.mxu0 %v6196
  %7588 = vmatpush.msra.mxu0 %v6192
  %7589 = vmatpush.msra.mxu0 %v6188
  %7590 = vmatpush.msra.mxu0 %v6184
  %7591 = vmatmul.f32.gmra.mxu0 %v7460
  %v7592 = vpop.f32.mrf.mxu0
  %v7593 = vadd.f32 0.0, %v7592
  %7594 = vdwg.mxu0
  %7595 = vmatpush.msra.mxu0 %v6245
  %7596 = vmatpush.msra.mxu0 %v6241
  %7597 = vmatpush.msra.mxu0 %v6237
  %7598 = vmatpush.msra.mxu0 %v6233
  %7599 = vmatpush.msra.mxu0 %v6229
  %7600 = vmatpush.msra.mxu0 %v6225
  %7601 = vmatpush.msra.mxu0 %v6221
  %7602 = vmatpush.msra.mxu0 %v6217
  %7603 = vmatpush.msra.mxu0 %v6213
  %7604 = vmatpush.msra.mxu0 %v6209
  %7605 = vmatpush.msra.mxu0 %v6205
  %7606 = vmatpush.msra.mxu0 %v6201
  %7607 = vmatpush.msra.mxu0 %v6197
  %7608 = vmatpush.msra.mxu0 %v6193
  %7609 = vmatpush.msra.mxu0 %v6189
  %7610 = vmatpush.msra.mxu0 %v6185
  %7611 = vmatmul.f32.gmra.mxu0 %v7460
  %v7612 = vpop.f32.mrf.mxu0
  %v7613 = vadd.f32 0.0, %v7612
  %7614 = vdwg.mxu0
  %7615 = vmatpush.msra.mxu0 %v6246
  %7616 = vmatpush.msra.mxu0 %v6242
  %7617 = vmatpush.msra.mxu0 %v6238
  %7618 = vmatpush.msra.mxu0 %v6234
  %7619 = vmatpush.msra.mxu0 %v6230
  %7620 = vmatpush.msra.mxu0 %v6226
  %7621 = vmatpush.msra.mxu0 %v6222
  %7622 = vmatpush.msra.mxu0 %v6218
  %7623 = vmatpush.msra.mxu0 %v6214
  %7624 = vmatpush.msra.mxu0 %v6210
  %7625 = vmatpush.msra.mxu0 %v6206
  %7626 = vmatpush.msra.mxu0 %v6202
  %7627 = vmatpush.msra.mxu0 %v6198
  %7628 = vmatpush.msra.mxu0 %v6194
  %7629 = vmatpush.msra.mxu0 %v6190
  %7630 = vmatpush.msra.mxu0 %v6186
  %7631 = vmatmul.f32.gmra.mxu0 %v7460
  %v7632 = vpop.f32.mrf.mxu0
  %v7633 = vadd.f32 0.0, %v7632
  %7634 = vdwg.mxu0
  %v7635 = vadd.f32 %v7551, %v7573
  %v7636 = vadd.f32 %v7552, %v7593
  %v7637 = vadd.f32 %v7553, %v7613
  %v7638 = vadd.f32 %v7554, %v7633
  %v7639 = vxor.u32 %v7547, 2147483648
  %v7640 = vxor.u32 %v7548, 2147483648
  %v7641 = vxor.u32 %v7549, 2147483648
  %v7642 = vmul.f32 %v7639, 1.442695
  %v7643 = vpow.pop %v7642
  %v7644 = vmul.f32 %v7640, 1.442695
  %v7645 = vpow.pop %v7644
  %v7646 = vmul.f32 %v7641, 1.442695
  %v7647 = vpow.pop %v7646
  %v7648 = vadd.f32 %v7643, 1.0
  %v7649 = vadd.f32 %v7645, 1.0
  %v7650 = vadd.f32 %v7647, 1.0
  %v7651 = vrcp.pop %v7648
  %v7652 = vmul.f32 %v7648, %v7651
  %v7653 = vsub.f32 1.0, %v7652
  %v7654 = vmul.f32 %v7651, %v7653
  %v7655 = vadd.f32 %v7651, %v7654
  %vm7656 = vweird.f32 %v7648
  %vm7657 = vweird.f32 %v7651
  %vm7658 = vmor %vm7656, %vm7657
  %v7659 = vsel %vm7658, %v7651, %v7655
  %v7660 = vand.u32 2147483647, %v7648
  %vm7661 = vcmp.eq.f32.partialorder %v7660, 8.507059e+37
  %v7662 = vand.u32 %v7648, 2147483648
  %v7663 = vor.u32 1.1754944e-38, %v7662
  %v7664 = vsel %vm7661, %v7663, %v7659
  %v7665 = vmul.f32 1.0, %v7664
  %v7666 = vrcp.pop %v7649
  %v7667 = vmul.f32 %v7649, %v7666
  %v7668 = vsub.f32 1.0, %v7667
  %v7669 = vmul.f32 %v7666, %v7668
  %v7670 = vadd.f32 %v7666, %v7669
  %vm7671 = vweird.f32 %v7649
  %vm7672 = vweird.f32 %v7666
  %vm7673 = vmor %vm7671, %vm7672
  %v7674 = vsel %vm7673, %v7666, %v7670
  %v7675 = vand.u32 2147483647, %v7649
  %vm7676 = vcmp.eq.f32.partialorder %v7675, 8.507059e+37
  %v7677 = vand.u32 %v7649, 2147483648
  %v7678 = vor.u32 1.1754944e-38, %v7677
  %v7679 = vsel %vm7676, %v7678, %v7674
  %v7680 = vmul.f32 1.0, %v7679
  %v7681 = vrcp.pop %v7650
  %v7682 = vmul.f32 %v7650, %v7681
  %v7683 = vsub.f32 1.0, %v7682
  %v7684 = vmul.f32 %v7681, %v7683
  %v7685 = vadd.f32 %v7681, %v7684
  %vm7686 = vweird.f32 %v7650
  %vm7687 = vweird.f32 %v7681
  %vm7688 = vmor %vm7686, %vm7687
  %v7689 = vsel %vm7688, %v7681, %v7685
  %v7690 = vand.u32 2147483647, %v7650
  %vm7691 = vcmp.eq.f32.partialorder %v7690, 8.507059e+37
  %v7692 = vand.u32 %v7650, 2147483648
  %v7693 = vor.u32 1.1754944e-38, %v7692
  %v7694 = vsel %vm7691, %v7693, %v7689
  %v7695 = vmul.f32 1.0, %v7694
  %v7696 = vtanh.pop %v7550
  %v7697 = vmul.f32 %v7680, %v7395
  %v7698 = vmul.f32 %v7665, %v7696
  %v7699 = vadd.f32 %v7697, %v7698
  %v7700 = vtanh.pop %v7699
  %v7701 = vmul.f32 %v7695, %v7700
  %v7702 = vxor.u32 %v7635, 2147483648
  %v7703 = vxor.u32 %v7636, 2147483648
  %v7704 = vxor.u32 %v7637, 2147483648
  %v7705 = vmul.f32 %v7702, 1.442695
  %v7706 = vpow.pop %v7705
  %v7707 = vmul.f32 %v7703, 1.442695
  %v7708 = vpow.pop %v7707
  %v7709 = vmul.f32 %v7704, 1.442695
  %v7710 = vpow.pop %v7709
  %v7711 = vadd.f32 %v7706, 1.0
  %v7712 = vadd.f32 %v7708, 1.0
  %v7713 = vadd.f32 %v7710, 1.0
  %v7714 = vrcp.pop %v7711
  %v7715 = vmul.f32 %v7711, %v7714
  %v7716 = vsub.f32 1.0, %v7715
  %v7717 = vmul.f32 %v7714, %v7716
  %v7718 = vadd.f32 %v7714, %v7717
  %vm7719 = vweird.f32 %v7711
  %vm7720 = vweird.f32 %v7714
  %vm7721 = vmor %vm7719, %vm7720
  %v7722 = vsel %vm7721, %v7714, %v7718
  %v7723 = vand.u32 2147483647, %v7711
  %vm7724 = vcmp.eq.f32.partialorder %v7723, 8.507059e+37
  %v7725 = vand.u32 %v7711, 2147483648
  %v7726 = vor.u32 1.1754944e-38, %v7725
  %v7727 = vsel %vm7724, %v7726, %v7722
  %v7728 = vmul.f32 1.0, %v7727
  %v7729 = vrcp.pop %v7712
  %v7730 = vmul.f32 %v7712, %v7729
  %v7731 = vsub.f32 1.0, %v7730
  %v7732 = vmul.f32 %v7729, %v7731
  %v7733 = vadd.f32 %v7729, %v7732
  %vm7734 = vweird.f32 %v7712
  %vm7735 = vweird.f32 %v7729
  %vm7736 = vmor %vm7734, %vm7735
  %v7737 = vsel %vm7736, %v7729, %v7733
  %v7738 = vand.u32 2147483647, %v7712
  %vm7739 = vcmp.eq.f32.partialorder %v7738, 8.507059e+37
  %v7740 = vand.u32 %v7712, 2147483648
  %v7741 = vor.u32 1.1754944e-38, %v7740
  %v7742 = vsel %vm7739, %v7741, %v7737
  %v7743 = vmul.f32 1.0, %v7742
  %v7744 = vrcp.pop %v7713
  %v7745 = vmul.f32 %v7713, %v7744
  %v7746 = vsub.f32 1.0, %v7745
  %v7747 = vmul.f32 %v7744, %v7746
  %v7748 = vadd.f32 %v7744, %v7747
  %vm7749 = vweird.f32 %v7713
  %vm7750 = vweird.f32 %v7744
  %vm7751 = vmor %vm7749, %vm7750
  %v7752 = vsel %vm7751, %v7744, %v7748
  %v7753 = vand.u32 2147483647, %v7713
  %vm7754 = vcmp.eq.f32.partialorder %v7753, 8.507059e+37
  %v7755 = vand.u32 %v7713, 2147483648
  %v7756 = vor.u32 1.1754944e-38, %v7755
  %v7757 = vsel %vm7754, %v7756, %v7752
  %v7758 = vmul.f32 1.0, %v7757
  %v7759 = vtanh.pop %v7638
  %v7760 = vmul.f32 %v7743, %v7458
  %v7761 = vmul.f32 %v7728, %v7759
  %v7762 = vadd.f32 %v7760, %v7761
  %v7763 = vtanh.pop %v7762
  %v7764 = vmul.f32 %v7758, %v7763
  %7765 = vst [vmem:[%s11 + $0x20] sm:$0xff] %v7701
  %7766 = vst [vmem:[%s11 + $0x28] sm:$0xff] %v7764
  %v7767 = vld [vmem:[#allocation2 + $0x140] sm:$0xff]
  %v7768 = vld [vmem:[#allocation2 + $0x148] sm:$0xff]
  %v7769 = vld [vmem:[#allocation2 + $0x150] sm:$0xff]
  %v7770 = vld [vmem:[#allocation2 + $0x158] sm:$0xff]
  %7771 = vmatpush.msra.mxu0 %v6179
  %7772 = vmatpush.msra.mxu0 %v6175
  %7773 = vmatpush.msra.mxu0 %v6171
  %7774 = vmatpush.msra.mxu0 %v6167
  %7775 = vmatpush.msra.mxu0 %v6163
  %7776 = vmatpush.msra.mxu0 %v6159
  %7777 = vmatpush.msra.mxu0 %v6155
  %7778 = vmatpush.msra.mxu0 %v6151
  %7779 = vmatpush.msra.mxu0 %v6147
  %7780 = vmatpush.msra.mxu0 %v6143
  %7781 = vmatpush.msra.mxu0 %v6139
  %7782 = vmatpush.msra.mxu0 %v6135
  %7783 = vmatpush.msra.mxu0 %v6131
  %7784 = vmatpush.msra.mxu0 %v6127
  %7785 = vmatpush.msra.mxu0 %v6123
  %7786 = vmatpush.msra.mxu0 %v6119
  %7787 = vmatmul.f32.gmra.mxu0 %v7701
  %v7788 = vpop.f32.mrf.mxu0
  %v7789 = vadd.f32 0.0, %v7788
  %7790 = vdwg.mxu0
  %7791 = vmatpush.msra.mxu0 %v6180
  %7792 = vmatpush.msra.mxu0 %v6176
  %7793 = vmatpush.msra.mxu0 %v6172
  %7794 = vmatpush.msra.mxu0 %v6168
  %7795 = vmatpush.msra.mxu0 %v6164
  %7796 = vmatpush.msra.mxu0 %v6160
  %7797 = vmatpush.msra.mxu0 %v6156
  %7798 = vmatpush.msra.mxu0 %v6152
  %7799 = vmatpush.msra.mxu0 %v6148
  %7800 = vmatpush.msra.mxu0 %v6144
  %7801 = vmatpush.msra.mxu0 %v6140
  %7802 = vmatpush.msra.mxu0 %v6136
  %7803 = vmatpush.msra.mxu0 %v6132
  %7804 = vmatpush.msra.mxu0 %v6128
  %7805 = vmatpush.msra.mxu0 %v6124
  %7806 = vmatpush.msra.mxu0 %v6120
  %7807 = vmatmul.f32.gmra.mxu0 %v7701
  %v7808 = vpop.f32.mrf.mxu0
  %v7809 = vadd.f32 0.0, %v7808
  %7810 = vdwg.mxu0
  %7811 = vmatpush.msra.mxu0 %v6181
  %7812 = vmatpush.msra.mxu0 %v6177
  %7813 = vmatpush.msra.mxu0 %v6173
  %7814 = vmatpush.msra.mxu0 %v6169
  %7815 = vmatpush.msra.mxu0 %v6165
  %7816 = vmatpush.msra.mxu0 %v6161
  %7817 = vmatpush.msra.mxu0 %v6157
  %7818 = vmatpush.msra.mxu0 %v6153
  %7819 = vmatpush.msra.mxu0 %v6149
  %7820 = vmatpush.msra.mxu0 %v6145
  %7821 = vmatpush.msra.mxu0 %v6141
  %7822 = vmatpush.msra.mxu0 %v6137
  %7823 = vmatpush.msra.mxu0 %v6133
  %7824 = vmatpush.msra.mxu0 %v6129
  %7825 = vmatpush.msra.mxu0 %v6125
  %7826 = vmatpush.msra.mxu0 %v6121
  %7827 = vmatmul.f32.gmra.mxu0 %v7701
  %v7828 = vpop.f32.mrf.mxu0
  %v7829 = vadd.f32 0.0, %v7828
  %7830 = vdwg.mxu0
  %7831 = vmatpush.msra.mxu0 %v6182
  %7832 = vmatpush.msra.mxu0 %v6178
  %7833 = vmatpush.msra.mxu0 %v6174
  %7834 = vmatpush.msra.mxu0 %v6170
  %7835 = vmatpush.msra.mxu0 %v6166
  %7836 = vmatpush.msra.mxu0 %v6162
  %7837 = vmatpush.msra.mxu0 %v6158
  %7838 = vmatpush.msra.mxu0 %v6154
  %7839 = vmatpush.msra.mxu0 %v6150
  %7840 = vmatpush.msra.mxu0 %v6146
  %7841 = vmatpush.msra.mxu0 %v6142
  %7842 = vmatpush.msra.mxu0 %v6138
  %7843 = vmatpush.msra.mxu0 %v6134
  %7844 = vmatpush.msra.mxu0 %v6130
  %7845 = vmatpush.msra.mxu0 %v6126
  %7846 = vmatpush.msra.mxu0 %v6122
  %7847 = vmatmul.f32.gmra.mxu0 %v7701
  %v7848 = vpop.f32.mrf.mxu0
  %v7849 = vadd.f32 0.0, %v7848
  %7850 = vdwg.mxu0
  %v7851 = vadd.f32 %v7767, %v7789
  %v7852 = vadd.f32 %v7768, %v7809
  %v7853 = vadd.f32 %v7769, %v7829
  %v7854 = vadd.f32 %v7770, %v7849
  %v7855 = vld [vmem:[#allocation2 + $0x120] sm:$0xff]
  %v7856 = vld [vmem:[#allocation2 + $0x128] sm:$0xff]
  %v7857 = vld [vmem:[#allocation2 + $0x130] sm:$0xff]
  %v7858 = vld [vmem:[#allocation2 + $0x138] sm:$0xff]
  %7859 = vmatpush.msra.mxu0 %v6243
  %7860 = vmatpush.msra.mxu0 %v6239
  %7861 = vmatpush.msra.mxu0 %v6235
  %7862 = vmatpush.msra.mxu0 %v6231
  %7863 = vmatpush.msra.mxu0 %v6227
  %7864 = vmatpush.msra.mxu0 %v6223
  %7865 = vmatpush.msra.mxu0 %v6219
  %7866 = vmatpush.msra.mxu0 %v6215
  %7867 = vmatpush.msra.mxu0 %v6211
  %7868 = vmatpush.msra.mxu0 %v6207
  %7869 = vmatpush.msra.mxu0 %v6203
  %7870 = vmatpush.msra.mxu0 %v6199
  %7871 = vmatpush.msra.mxu0 %v6195
  %7872 = vmatpush.msra.mxu0 %v6191
  %7873 = vmatpush.msra.mxu0 %v6187
  %7874 = vmatpush.msra.mxu0 %v6183
  %7875 = vmatmul.f32.gmra.mxu0 %v7764
  %v7876 = vpop.f32.mrf.mxu0
  %v7877 = vadd.f32 0.0, %v7876
  %7878 = vdwg.mxu0
  %7879 = vmatpush.msra.mxu0 %v6244
  %7880 = vmatpush.msra.mxu0 %v6240
  %7881 = vmatpush.msra.mxu0 %v6236
  %7882 = vmatpush.msra.mxu0 %v6232
  %7883 = vmatpush.msra.mxu0 %v6228
  %7884 = vmatpush.msra.mxu0 %v6224
  %7885 = vmatpush.msra.mxu0 %v6220
  %7886 = vmatpush.msra.mxu0 %v6216
  %7887 = vmatpush.msra.mxu0 %v6212
  %7888 = vmatpush.msra.mxu0 %v6208
  %7889 = vmatpush.msra.mxu0 %v6204
  %7890 = vmatpush.msra.mxu0 %v6200
  %7891 = vmatpush.msra.mxu0 %v6196
  %7892 = vmatpush.msra.mxu0 %v6192
  %7893 = vmatpush.msra.mxu0 %v6188
  %7894 = vmatpush.msra.mxu0 %v6184
  %7895 = vmatmul.f32.gmra.mxu0 %v7764
  %v7896 = vpop.f32.mrf.mxu0
  %v7897 = vadd.f32 0.0, %v7896
  %7898 = vdwg.mxu0
  %7899 = vmatpush.msra.mxu0 %v6245
  %7900 = vmatpush.msra.mxu0 %v6241
  %7901 = vmatpush.msra.mxu0 %v6237
  %7902 = vmatpush.msra.mxu0 %v6233
  %7903 = vmatpush.msra.mxu0 %v6229
  %7904 = vmatpush.msra.mxu0 %v6225
  %7905 = vmatpush.msra.mxu0 %v6221
  %7906 = vmatpush.msra.mxu0 %v6217
  %7907 = vmatpush.msra.mxu0 %v6213
  %7908 = vmatpush.msra.mxu0 %v6209
  %7909 = vmatpush.msra.mxu0 %v6205
  %7910 = vmatpush.msra.mxu0 %v6201
  %7911 = vmatpush.msra.mxu0 %v6197
  %7912 = vmatpush.msra.mxu0 %v6193
  %7913 = vmatpush.msra.mxu0 %v6189
  %7914 = vmatpush.msra.mxu0 %v6185
  %7915 = vmatmul.f32.gmra.mxu0 %v7764
  %v7916 = vpop.f32.mrf.mxu0
  %v7917 = vadd.f32 0.0, %v7916
  %7918 = vdwg.mxu0
  %7919 = vmatpush.msra.mxu0 %v6246
  %7920 = vmatpush.msra.mxu0 %v6242
  %7921 = vmatpush.msra.mxu0 %v6238
  %7922 = vmatpush.msra.mxu0 %v6234
  %7923 = vmatpush.msra.mxu0 %v6230
  %7924 = vmatpush.msra.mxu0 %v6226
  %7925 = vmatpush.msra.mxu0 %v6222
  %7926 = vmatpush.msra.mxu0 %v6218
  %7927 = vmatpush.msra.mxu0 %v6214
  %7928 = vmatpush.msra.mxu0 %v6210
  %7929 = vmatpush.msra.mxu0 %v6206
  %7930 = vmatpush.msra.mxu0 %v6202
  %7931 = vmatpush.msra.mxu0 %v6198
  %7932 = vmatpush.msra.mxu0 %v6194
  %7933 = vmatpush.msra.mxu0 %v6190
  %7934 = vmatpush.msra.mxu0 %v6186
  %7935 = vmatmul.f32.gmra.mxu0 %v7764
  %v7936 = vpop.f32.mrf.mxu0
  %v7937 = vadd.f32 0.0, %v7936
  %7938 = vdwg.mxu0
  %v7939 = vadd.f32 %v7855, %v7877
  %v7940 = vadd.f32 %v7856, %v7897
  %v7941 = vadd.f32 %v7857, %v7917
  %v7942 = vadd.f32 %v7858, %v7937
  %v7943 = vxor.u32 %v7851, 2147483648
  %v7944 = vxor.u32 %v7852, 2147483648
  %v7945 = vxor.u32 %v7853, 2147483648
  %v7946 = vmul.f32 %v7943, 1.442695
  %v7947 = vpow.pop %v7946
  %v7948 = vmul.f32 %v7944, 1.442695
  %v7949 = vpow.pop %v7948
  %v7950 = vmul.f32 %v7945, 1.442695
  %v7951 = vpow.pop %v7950
  %v7952 = vadd.f32 %v7947, 1.0
  %v7953 = vadd.f32 %v7949, 1.0
  %v7954 = vadd.f32 %v7951, 1.0
  %v7955 = vrcp.pop %v7952
  %v7956 = vmul.f32 %v7952, %v7955
  %v7957 = vsub.f32 1.0, %v7956
  %v7958 = vmul.f32 %v7955, %v7957
  %v7959 = vadd.f32 %v7955, %v7958
  %vm7960 = vweird.f32 %v7952
  %vm7961 = vweird.f32 %v7955
  %vm7962 = vmor %vm7960, %vm7961
  %v7963 = vsel %vm7962, %v7955, %v7959
  %v7964 = vand.u32 2147483647, %v7952
  %vm7965 = vcmp.eq.f32.partialorder %v7964, 8.507059e+37
  %v7966 = vand.u32 %v7952, 2147483648
  %v7967 = vor.u32 1.1754944e-38, %v7966
  %v7968 = vsel %vm7965, %v7967, %v7963
  %v7969 = vmul.f32 1.0, %v7968
  %v7970 = vrcp.pop %v7953
  %v7971 = vmul.f32 %v7953, %v7970
  %v7972 = vsub.f32 1.0, %v7971
  %v7973 = vmul.f32 %v7970, %v7972
  %v7974 = vadd.f32 %v7970, %v7973
  %vm7975 = vweird.f32 %v7953
  %vm7976 = vweird.f32 %v7970
  %vm7977 = vmor %vm7975, %vm7976
  %v7978 = vsel %vm7977, %v7970, %v7974
  %v7979 = vand.u32 2147483647, %v7953
  %vm7980 = vcmp.eq.f32.partialorder %v7979, 8.507059e+37
  %v7981 = vand.u32 %v7953, 2147483648
  %v7982 = vor.u32 1.1754944e-38, %v7981
  %v7983 = vsel %vm7980, %v7982, %v7978
  %v7984 = vmul.f32 1.0, %v7983
  %v7985 = vrcp.pop %v7954
  %v7986 = vmul.f32 %v7954, %v7985
  %v7987 = vsub.f32 1.0, %v7986
  %v7988 = vmul.f32 %v7985, %v7987
  %v7989 = vadd.f32 %v7985, %v7988
  %vm7990 = vweird.f32 %v7954
  %vm7991 = vweird.f32 %v7985
  %vm7992 = vmor %vm7990, %vm7991
  %v7993 = vsel %vm7992, %v7985, %v7989
  %v7994 = vand.u32 2147483647, %v7954
  %vm7995 = vcmp.eq.f32.partialorder %v7994, 8.507059e+37
  %v7996 = vand.u32 %v7954, 2147483648
  %v7997 = vor.u32 1.1754944e-38, %v7996
  %v7998 = vsel %vm7995, %v7997, %v7993
  %v7999 = vmul.f32 1.0, %v7998
  %v8000 = vtanh.pop %v7854
  %v8001 = vmul.f32 %v7984, %v7699
  %v8002 = vmul.f32 %v7969, %v8000
  %v8003 = vadd.f32 %v8001, %v8002
  %v8004 = vtanh.pop %v8003
  %v8005 = vmul.f32 %v7999, %v8004
  %v8006 = vxor.u32 %v7939, 2147483648
  %v8007 = vxor.u32 %v7940, 2147483648
  %v8008 = vxor.u32 %v7941, 2147483648
  %v8009 = vmul.f32 %v8006, 1.442695
  %v8010 = vpow.pop %v8009
  %v8011 = vmul.f32 %v8007, 1.442695
  %v8012 = vpow.pop %v8011
  %v8013 = vmul.f32 %v8008, 1.442695
  %v8014 = vpow.pop %v8013
  %v8015 = vadd.f32 %v8010, 1.0
  %v8016 = vadd.f32 %v8012, 1.0
  %v8017 = vadd.f32 %v8014, 1.0
  %v8018 = vrcp.pop %v8015
  %v8019 = vmul.f32 %v8015, %v8018
  %v8020 = vsub.f32 1.0, %v8019
  %v8021 = vmul.f32 %v8018, %v8020
  %v8022 = vadd.f32 %v8018, %v8021
  %vm8023 = vweird.f32 %v8015
  %vm8024 = vweird.f32 %v8018
  %vm8025 = vmor %vm8023, %vm8024
  %v8026 = vsel %vm8025, %v8018, %v8022
  %v8027 = vand.u32 2147483647, %v8015
  %vm8028 = vcmp.eq.f32.partialorder %v8027, 8.507059e+37
  %v8029 = vand.u32 %v8015, 2147483648
  %v8030 = vor.u32 1.1754944e-38, %v8029
  %v8031 = vsel %vm8028, %v8030, %v8026
  %v8032 = vmul.f32 1.0, %v8031
  %v8033 = vrcp.pop %v8016
  %v8034 = vmul.f32 %v8016, %v8033
  %v8035 = vsub.f32 1.0, %v8034
  %v8036 = vmul.f32 %v8033, %v8035
  %v8037 = vadd.f32 %v8033, %v8036
  %vm8038 = vweird.f32 %v8016
  %vm8039 = vweird.f32 %v8033
  %vm8040 = vmor %vm8038, %vm8039
  %v8041 = vsel %vm8040, %v8033, %v8037
  %v8042 = vand.u32 2147483647, %v8016
  %vm8043 = vcmp.eq.f32.partialorder %v8042, 8.507059e+37
  %v8044 = vand.u32 %v8016, 2147483648
  %v8045 = vor.u32 1.1754944e-38, %v8044
  %v8046 = vsel %vm8043, %v8045, %v8041
  %v8047 = vmul.f32 1.0, %v8046
  %v8048 = vrcp.pop %v8017
  %v8049 = vmul.f32 %v8017, %v8048
  %v8050 = vsub.f32 1.0, %v8049
  %v8051 = vmul.f32 %v8048, %v8050
  %v8052 = vadd.f32 %v8048, %v8051
  %vm8053 = vweird.f32 %v8017
  %vm8054 = vweird.f32 %v8048
  %vm8055 = vmor %vm8053, %vm8054
  %v8056 = vsel %vm8055, %v8048, %v8052
  %v8057 = vand.u32 2147483647, %v8017
  %vm8058 = vcmp.eq.f32.partialorder %v8057, 8.507059e+37
  %v8059 = vand.u32 %v8017, 2147483648
  %v8060 = vor.u32 1.1754944e-38, %v8059
  %v8061 = vsel %vm8058, %v8060, %v8056
  %v8062 = vmul.f32 1.0, %v8061
  %v8063 = vtanh.pop %v7942
  %v8064 = vmul.f32 %v8047, %v7762
  %v8065 = vmul.f32 %v8032, %v8063
  %v8066 = vadd.f32 %v8064, %v8065
  %v8067 = vtanh.pop %v8066
  %v8068 = vmul.f32 %v8062, %v8067
  %v8069 = vld [vmem:[%s11 + $0x28] sm:$0xff]
  %v8070 = vadd.f32 %v8069, %v8005
  %8071 = vst [vmem:[%s11 + $0x28] sm:$0xff] %v8070
  %v8072 = vld [vmem:[%s11 + $0x20] sm:$0xff]
  %v8073 = vadd.f32 %v8072, %v8068
  %8074 = vst [vmem:[%s11 + $0x20] sm:$0xff] %v8073
  %v8075 = vld [vmem:[#allocation2 + $0x180] sm:$0xff]
  %v8076 = vld [vmem:[#allocation2 + $0x188] sm:$0xff]
  %v8077 = vld [vmem:[#allocation2 + $0x190] sm:$0xff]
  %v8078 = vld [vmem:[#allocation2 + $0x198] sm:$0xff]
  %8079 = vmatpush.msra.mxu0 %v6179
  %8080 = vmatpush.msra.mxu0 %v6175
  %8081 = vmatpush.msra.mxu0 %v6171
  %8082 = vmatpush.msra.mxu0 %v6167
  %8083 = vmatpush.msra.mxu0 %v6163
  %8084 = vmatpush.msra.mxu0 %v6159
  %8085 = vmatpush.msra.mxu0 %v6155
  %8086 = vmatpush.msra.mxu0 %v6151
  %8087 = vmatpush.msra.mxu0 %v6147
  %8088 = vmatpush.msra.mxu0 %v6143
  %8089 = vmatpush.msra.mxu0 %v6139
  %8090 = vmatpush.msra.mxu0 %v6135
  %8091 = vmatpush.msra.mxu0 %v6131
  %8092 = vmatpush.msra.mxu0 %v6127
  %8093 = vmatpush.msra.mxu0 %v6123
  %8094 = vmatpush.msra.mxu0 %v6119
  %8095 = vmatmul.f32.gmra.mxu0 %v8005
  %v8096 = vpop.f32.mrf.mxu0
  %v8097 = vadd.f32 0.0, %v8096
  %8098 = vdwg.mxu0
  %8099 = vmatpush.msra.mxu0 %v6180
  %8100 = vmatpush.msra.mxu0 %v6176
  %8101 = vmatpush.msra.mxu0 %v6172
  %8102 = vmatpush.msra.mxu0 %v6168
  %8103 = vmatpush.msra.mxu0 %v6164
  %8104 = vmatpush.msra.mxu0 %v6160
  %8105 = vmatpush.msra.mxu0 %v6156
  %8106 = vmatpush.msra.mxu0 %v6152
  %8107 = vmatpush.msra.mxu0 %v6148
  %8108 = vmatpush.msra.mxu0 %v6144
  %8109 = vmatpush.msra.mxu0 %v6140
  %8110 = vmatpush.msra.mxu0 %v6136
  %8111 = vmatpush.msra.mxu0 %v6132
  %8112 = vmatpush.msra.mxu0 %v6128
  %8113 = vmatpush.msra.mxu0 %v6124
  %8114 = vmatpush.msra.mxu0 %v6120
  %8115 = vmatmul.f32.gmra.mxu0 %v8005
  %v8116 = vpop.f32.mrf.mxu0
  %v8117 = vadd.f32 0.0, %v8116
  %8118 = vdwg.mxu0
  %8119 = vmatpush.msra.mxu0 %v6181
  %8120 = vmatpush.msra.mxu0 %v6177
  %8121 = vmatpush.msra.mxu0 %v6173
  %8122 = vmatpush.msra.mxu0 %v6169
  %8123 = vmatpush.msra.mxu0 %v6165
  %8124 = vmatpush.msra.mxu0 %v6161
  %8125 = vmatpush.msra.mxu0 %v6157
  %8126 = vmatpush.msra.mxu0 %v6153
  %8127 = vmatpush.msra.mxu0 %v6149
  %8128 = vmatpush.msra.mxu0 %v6145
  %8129 = vmatpush.msra.mxu0 %v6141
  %8130 = vmatpush.msra.mxu0 %v6137
  %8131 = vmatpush.msra.mxu0 %v6133
  %8132 = vmatpush.msra.mxu0 %v6129
  %8133 = vmatpush.msra.mxu0 %v6125
  %8134 = vmatpush.msra.mxu0 %v6121
  %8135 = vmatmul.f32.gmra.mxu0 %v8005
  %v8136 = vpop.f32.mrf.mxu0
  %v8137 = vadd.f32 0.0, %v8136
  %8138 = vdwg.mxu0
  %8139 = vmatpush.msra.mxu0 %v6182
  %8140 = vmatpush.msra.mxu0 %v6178
  %8141 = vmatpush.msra.mxu0 %v6174
  %8142 = vmatpush.msra.mxu0 %v6170
  %8143 = vmatpush.msra.mxu0 %v6166
  %8144 = vmatpush.msra.mxu0 %v6162
  %8145 = vmatpush.msra.mxu0 %v6158
  %8146 = vmatpush.msra.mxu0 %v6154
  %8147 = vmatpush.msra.mxu0 %v6150
  %8148 = vmatpush.msra.mxu0 %v6146
  %8149 = vmatpush.msra.mxu0 %v6142
  %8150 = vmatpush.msra.mxu0 %v6138
  %8151 = vmatpush.msra.mxu0 %v6134
  %8152 = vmatpush.msra.mxu0 %v6130
  %8153 = vmatpush.msra.mxu0 %v6126
  %8154 = vmatpush.msra.mxu0 %v6122
  %8155 = vmatmul.f32.gmra.mxu0 %v8005
  %v8156 = vpop.f32.mrf.mxu0
  %v8157 = vadd.f32 0.0, %v8156
  %8158 = vdwg.mxu0
  %v8159 = vadd.f32 %v8075, %v8097
  %v8160 = vadd.f32 %v8076, %v8117
  %v8161 = vadd.f32 %v8077, %v8137
  %v8162 = vadd.f32 %v8078, %v8157
  %v8163 = vld [vmem:[#allocation2 + $0xe0] sm:$0xff]
  %v8164 = vld [vmem:[#allocation2 + $0xe8] sm:$0xff]
  %v8165 = vld [vmem:[#allocation2 + $0xf0] sm:$0xff]
  %v8166 = vld [vmem:[#allocation2 + $0xf8] sm:$0xff]
  %8167 = vmatpush.msra.mxu0 %v6243
  %8168 = vmatpush.msra.mxu0 %v6239
  %8169 = vmatpush.msra.mxu0 %v6235
  %8170 = vmatpush.msra.mxu0 %v6231
  %8171 = vmatpush.msra.mxu0 %v6227
  %8172 = vmatpush.msra.mxu0 %v6223
  %8173 = vmatpush.msra.mxu0 %v6219
  %8174 = vmatpush.msra.mxu0 %v6215
  %8175 = vmatpush.msra.mxu0 %v6211
  %8176 = vmatpush.msra.mxu0 %v6207
  %8177 = vmatpush.msra.mxu0 %v6203
  %8178 = vmatpush.msra.mxu0 %v6199
  %8179 = vmatpush.msra.mxu0 %v6195
  %8180 = vmatpush.msra.mxu0 %v6191
  %8181 = vmatpush.msra.mxu0 %v6187
  %8182 = vmatpush.msra.mxu0 %v6183
  %8183 = vmatmul.f32.gmra.mxu0 %v8068
  %v8184 = vpop.f32.mrf.mxu0
  %v8185 = vadd.f32 0.0, %v8184
  %8186 = vdwg.mxu0
  %8187 = vmatpush.msra.mxu0 %v6244
  %8188 = vmatpush.msra.mxu0 %v6240
  %8189 = vmatpush.msra.mxu0 %v6236
  %8190 = vmatpush.msra.mxu0 %v6232
  %8191 = vmatpush.msra.mxu0 %v6228
  %8192 = vmatpush.msra.mxu0 %v6224
  %8193 = vmatpush.msra.mxu0 %v6220
  %8194 = vmatpush.msra.mxu0 %v6216
  %8195 = vmatpush.msra.mxu0 %v6212
  %8196 = vmatpush.msra.mxu0 %v6208
  %8197 = vmatpush.msra.mxu0 %v6204
  %8198 = vmatpush.msra.mxu0 %v6200
  %8199 = vmatpush.msra.mxu0 %v6196
  %8200 = vmatpush.msra.mxu0 %v6192
  %8201 = vmatpush.msra.mxu0 %v6188
  %8202 = vmatpush.msra.mxu0 %v6184
  %8203 = vmatmul.f32.gmra.mxu0 %v8068
  %v8204 = vpop.f32.mrf.mxu0
  %v8205 = vadd.f32 0.0, %v8204
  %8206 = vdwg.mxu0
  %8207 = vmatpush.msra.mxu0 %v6245
  %8208 = vmatpush.msra.mxu0 %v6241
  %8209 = vmatpush.msra.mxu0 %v6237
  %8210 = vmatpush.msra.mxu0 %v6233
  %8211 = vmatpush.msra.mxu0 %v6229
  %8212 = vmatpush.msra.mxu0 %v6225
  %8213 = vmatpush.msra.mxu0 %v6221
  %8214 = vmatpush.msra.mxu0 %v6217
  %8215 = vmatpush.msra.mxu0 %v6213
  %8216 = vmatpush.msra.mxu0 %v6209
  %8217 = vmatpush.msra.mxu0 %v6205
  %8218 = vmatpush.msra.mxu0 %v6201
  %8219 = vmatpush.msra.mxu0 %v6197
  %8220 = vmatpush.msra.mxu0 %v6193
  %8221 = vmatpush.msra.mxu0 %v6189
  %8222 = vmatpush.msra.mxu0 %v6185
  %8223 = vmatmul.f32.gmra.mxu0 %v8068
  %v8224 = vpop.f32.mrf.mxu0
  %v8225 = vadd.f32 0.0, %v8224
  %8226 = vdwg.mxu0
  %8227 = vmatpush.msra.mxu0 %v6246
  %8228 = vmatpush.msra.mxu0 %v6242
  %8229 = vmatpush.msra.mxu0 %v6238
  %8230 = vmatpush.msra.mxu0 %v6234
  %8231 = vmatpush.msra.mxu0 %v6230
  %8232 = vmatpush.msra.mxu0 %v6226
  %8233 = vmatpush.msra.mxu0 %v6222
  %8234 = vmatpush.msra.mxu0 %v6218
  %8235 = vmatpush.msra.mxu0 %v6214
  %8236 = vmatpush.msra.mxu0 %v6210
  %8237 = vmatpush.msra.mxu0 %v6206
  %8238 = vmatpush.msra.mxu0 %v6202
  %8239 = vmatpush.msra.mxu0 %v6198
  %8240 = vmatpush.msra.mxu0 %v6194
  %8241 = vmatpush.msra.mxu0 %v6190
  %8242 = vmatpush.msra.mxu0 %v6186
  %8243 = vmatmul.f32.gmra.mxu0 %v8068
  %v8244 = vpop.f32.mrf.mxu0
  %v8245 = vadd.f32 0.0, %v8244
  %8246 = vdwg.mxu0
  %v8247 = vadd.f32 %v8163, %v8185
  %v8248 = vadd.f32 %v8164, %v8205
  %v8249 = vadd.f32 %v8165, %v8225
  %v8250 = vadd.f32 %v8166, %v8245
  %v8251 = vxor.u32 %v8159, 2147483648
  %v8252 = vxor.u32 %v8160, 2147483648
  %v8253 = vxor.u32 %v8161, 2147483648
  %v8254 = vmul.f32 %v8251, 1.442695
  %v8255 = vpow.pop %v8254
  %v8256 = vmul.f32 %v8252, 1.442695
  %v8257 = vpow.pop %v8256
  %v8258 = vmul.f32 %v8253, 1.442695
  %v8259 = vpow.pop %v8258
  %v8260 = vadd.f32 %v8255, 1.0
  %v8261 = vadd.f32 %v8257, 1.0
  %v8262 = vadd.f32 %v8259, 1.0
  %v8263 = vrcp.pop %v8260
  %v8264 = vmul.f32 %v8260, %v8263
  %v8265 = vsub.f32 1.0, %v8264
  %v8266 = vmul.f32 %v8263, %v8265
  %v8267 = vadd.f32 %v8263, %v8266
  %vm8268 = vweird.f32 %v8260
  %vm8269 = vweird.f32 %v8263
  %vm8270 = vmor %vm8268, %vm8269
  %v8271 = vsel %vm8270, %v8263, %v8267
  %v8272 = vand.u32 2147483647, %v8260
  %vm8273 = vcmp.eq.f32.partialorder %v8272, 8.507059e+37
  %v8274 = vand.u32 %v8260, 2147483648
  %v8275 = vor.u32 1.1754944e-38, %v8274
  %v8276 = vsel %vm8273, %v8275, %v8271
  %v8277 = vmul.f32 1.0, %v8276
  %v8278 = vrcp.pop %v8261
  %v8279 = vmul.f32 %v8261, %v8278
  %v8280 = vsub.f32 1.0, %v8279
  %v8281 = vmul.f32 %v8278, %v8280
  %v8282 = vadd.f32 %v8278, %v8281
  %vm8283 = vweird.f32 %v8261
  %vm8284 = vweird.f32 %v8278
  %vm8285 = vmor %vm8283, %vm8284
  %v8286 = vsel %vm8285, %v8278, %v8282
  %v8287 = vand.u32 2147483647, %v8261
  %vm8288 = vcmp.eq.f32.partialorder %v8287, 8.507059e+37
  %v8289 = vand.u32 %v8261, 2147483648
  %v8290 = vor.u32 1.1754944e-38, %v8289
  %v8291 = vsel %vm8288, %v8290, %v8286
  %v8292 = vmul.f32 1.0, %v8291
  %v8293 = vrcp.pop %v8262
  %v8294 = vmul.f32 %v8262, %v8293
  %v8295 = vsub.f32 1.0, %v8294
  %v8296 = vmul.f32 %v8293, %v8295
  %v8297 = vadd.f32 %v8293, %v8296
  %vm8298 = vweird.f32 %v8262
  %vm8299 = vweird.f32 %v8293
  %vm8300 = vmor %vm8298, %vm8299
  %v8301 = vsel %vm8300, %v8293, %v8297
  %v8302 = vand.u32 2147483647, %v8262
  %vm8303 = vcmp.eq.f32.partialorder %v8302, 8.507059e+37
  %v8304 = vand.u32 %v8262, 2147483648
  %v8305 = vor.u32 1.1754944e-38, %v8304
  %v8306 = vsel %vm8303, %v8305, %v8301
  %v8307 = vmul.f32 1.0, %v8306
  %v8308 = vtanh.pop %v8162
  %v8309 = vmul.f32 %v8292, %v8003
  %v8310 = vmul.f32 %v8277, %v8308
  %v8311 = vadd.f32 %v8309, %v8310
  %v8312 = vtanh.pop %v8311
  %v8313 = vmul.f32 %v8307, %v8312
  %v8314 = vxor.u32 %v8247, 2147483648
  %v8315 = vxor.u32 %v8248, 2147483648
  %v8316 = vxor.u32 %v8249, 2147483648
  %v8317 = vmul.f32 %v8314, 1.442695
  %v8318 = vpow.pop %v8317
  %v8319 = vmul.f32 %v8315, 1.442695
  %v8320 = vpow.pop %v8319
  %v8321 = vmul.f32 %v8316, 1.442695
  %v8322 = vpow.pop %v8321
  %v8323 = vadd.f32 %v8318, 1.0
  %v8324 = vadd.f32 %v8320, 1.0
  %v8325 = vadd.f32 %v8322, 1.0
  %v8326 = vrcp.pop %v8323
  %v8327 = vmul.f32 %v8323, %v8326
  %v8328 = vsub.f32 1.0, %v8327
  %v8329 = vmul.f32 %v8326, %v8328
  %v8330 = vadd.f32 %v8326, %v8329
  %vm8331 = vweird.f32 %v8323
  %vm8332 = vweird.f32 %v8326
  %vm8333 = vmor %vm8331, %vm8332
  %v8334 = vsel %vm8333, %v8326, %v8330
  %v8335 = vand.u32 2147483647, %v8323
  %vm8336 = vcmp.eq.f32.partialorder %v8335, 8.507059e+37
  %v8337 = vand.u32 %v8323, 2147483648
  %v8338 = vor.u32 1.1754944e-38, %v8337
  %v8339 = vsel %vm8336, %v8338, %v8334
  %v8340 = vmul.f32 1.0, %v8339
  %v8341 = vrcp.pop %v8324
  %v8342 = vmul.f32 %v8324, %v8341
  %v8343 = vsub.f32 1.0, %v8342
  %v8344 = vmul.f32 %v8341, %v8343
  %v8345 = vadd.f32 %v8341, %v8344
  %vm8346 = vweird.f32 %v8324
  %vm8347 = vweird.f32 %v8341
  %vm8348 = vmor %vm8346, %vm8347
  %v8349 = vsel %vm8348, %v8341, %v8345
  %v8350 = vand.u32 2147483647, %v8324
  %vm8351 = vcmp.eq.f32.partialorder %v8350, 8.507059e+37
  %v8352 = vand.u32 %v8324, 2147483648
  %v8353 = vor.u32 1.1754944e-38, %v8352
  %v8354 = vsel %vm8351, %v8353, %v8349
  %v8355 = vmul.f32 1.0, %v8354
  %v8356 = vrcp.pop %v8325
  %v8357 = vmul.f32 %v8325, %v8356
  %v8358 = vsub.f32 1.0, %v8357
  %v8359 = vmul.f32 %v8356, %v8358
  %v8360 = vadd.f32 %v8356, %v8359
  %vm8361 = vweird.f32 %v8325
  %vm8362 = vweird.f32 %v8356
  %vm8363 = vmor %vm8361, %vm8362
  %v8364 = vsel %vm8363, %v8356, %v8360
  %v8365 = vand.u32 2147483647, %v8325
  %vm8366 = vcmp.eq.f32.partialorder %v8365, 8.507059e+37
  %v8367 = vand.u32 %v8325, 2147483648
  %v8368 = vor.u32 1.1754944e-38, %v8367
  %v8369 = vsel %vm8366, %v8368, %v8364
  %v8370 = vmul.f32 1.0, %v8369
  %v8371 = vtanh.pop %v8250
  %v8372 = vmul.f32 %v8355, %v8066
  %v8373 = vmul.f32 %v8340, %v8371
  %v8374 = vadd.f32 %v8372, %v8373
  %v8375 = vtanh.pop %v8374
  %v8376 = vmul.f32 %v8370, %v8375
  %v8377 = vld [vmem:[%s11 + $0x30] sm:$0xff]
  %v8378 = vadd.f32 %v8377, %v8313
  %8379 = vst [vmem:[%s11 + $0x30] sm:$0xff] %v8378
  %v8380 = vld [vmem:[%s11 + $0x18] sm:$0xff]
  %v8381 = vadd.f32 %v8380, %v8376
  %8382 = vst [vmem:[%s11 + $0x18] sm:$0xff] %v8381
  %v8383 = vld [vmem:[#allocation2 + $0x1c0] sm:$0xff]
  %v8384 = vld [vmem:[#allocation2 + $0x1c8] sm:$0xff]
  %v8385 = vld [vmem:[#allocation2 + $0x1d0] sm:$0xff]
  %v8386 = vld [vmem:[#allocation2 + $0x1d8] sm:$0xff]
  %8387 = vmatpush.msra.mxu0 %v6179
  %8388 = vmatpush.msra.mxu0 %v6175
  %8389 = vmatpush.msra.mxu0 %v6171
  %8390 = vmatpush.msra.mxu0 %v6167
  %8391 = vmatpush.msra.mxu0 %v6163
  %8392 = vmatpush.msra.mxu0 %v6159
  %8393 = vmatpush.msra.mxu0 %v6155
  %8394 = vmatpush.msra.mxu0 %v6151
  %8395 = vmatpush.msra.mxu0 %v6147
  %8396 = vmatpush.msra.mxu0 %v6143
  %8397 = vmatpush.msra.mxu0 %v6139
  %8398 = vmatpush.msra.mxu0 %v6135
  %8399 = vmatpush.msra.mxu0 %v6131
  %8400 = vmatpush.msra.mxu0 %v6127
  %8401 = vmatpush.msra.mxu0 %v6123
  %8402 = vmatpush.msra.mxu0 %v6119
  %8403 = vmatmul.f32.gmra.mxu0 %v8313
  %v8404 = vpop.f32.mrf.mxu0
  %v8405 = vadd.f32 0.0, %v8404
  %8406 = vdwg.mxu0
  %8407 = vmatpush.msra.mxu0 %v6180
  %8408 = vmatpush.msra.mxu0 %v6176
  %8409 = vmatpush.msra.mxu0 %v6172
  %8410 = vmatpush.msra.mxu0 %v6168
  %8411 = vmatpush.msra.mxu0 %v6164
  %8412 = vmatpush.msra.mxu0 %v6160
  %8413 = vmatpush.msra.mxu0 %v6156
  %8414 = vmatpush.msra.mxu0 %v6152
  %8415 = vmatpush.msra.mxu0 %v6148
  %8416 = vmatpush.msra.mxu0 %v6144
  %8417 = vmatpush.msra.mxu0 %v6140
  %8418 = vmatpush.msra.mxu0 %v6136
  %8419 = vmatpush.msra.mxu0 %v6132
  %8420 = vmatpush.msra.mxu0 %v6128
  %8421 = vmatpush.msra.mxu0 %v6124
  %8422 = vmatpush.msra.mxu0 %v6120
  %8423 = vmatmul.f32.gmra.mxu0 %v8313
  %v8424 = vpop.f32.mrf.mxu0
  %v8425 = vadd.f32 0.0, %v8424
  %8426 = vdwg.mxu0
  %8427 = vmatpush.msra.mxu0 %v6181
  %8428 = vmatpush.msra.mxu0 %v6177
  %8429 = vmatpush.msra.mxu0 %v6173
  %8430 = vmatpush.msra.mxu0 %v6169
  %8431 = vmatpush.msra.mxu0 %v6165
  %8432 = vmatpush.msra.mxu0 %v6161
  %8433 = vmatpush.msra.mxu0 %v6157
  %8434 = vmatpush.msra.mxu0 %v6153
  %8435 = vmatpush.msra.mxu0 %v6149
  %8436 = vmatpush.msra.mxu0 %v6145
  %8437 = vmatpush.msra.mxu0 %v6141
  %8438 = vmatpush.msra.mxu0 %v6137
  %8439 = vmatpush.msra.mxu0 %v6133
  %8440 = vmatpush.msra.mxu0 %v6129
  %8441 = vmatpush.msra.mxu0 %v6125
  %8442 = vmatpush.msra.mxu0 %v6121
  %8443 = vmatmul.f32.gmra.mxu0 %v8313
  %v8444 = vpop.f32.mrf.mxu0
  %v8445 = vadd.f32 0.0, %v8444
  %8446 = vdwg.mxu0
  %8447 = vmatpush.msra.mxu0 %v6182
  %8448 = vmatpush.msra.mxu0 %v6178
  %8449 = vmatpush.msra.mxu0 %v6174
  %8450 = vmatpush.msra.mxu0 %v6170
  %8451 = vmatpush.msra.mxu0 %v6166
  %8452 = vmatpush.msra.mxu0 %v6162
  %8453 = vmatpush.msra.mxu0 %v6158
  %8454 = vmatpush.msra.mxu0 %v6154
  %8455 = vmatpush.msra.mxu0 %v6150
  %8456 = vmatpush.msra.mxu0 %v6146
  %8457 = vmatpush.msra.mxu0 %v6142
  %8458 = vmatpush.msra.mxu0 %v6138
  %8459 = vmatpush.msra.mxu0 %v6134
  %8460 = vmatpush.msra.mxu0 %v6130
  %8461 = vmatpush.msra.mxu0 %v6126
  %8462 = vmatpush.msra.mxu0 %v6122
  %8463 = vmatmul.f32.gmra.mxu0 %v8313
  %v8464 = vpop.f32.mrf.mxu0
  %v8465 = vadd.f32 0.0, %v8464
  %8466 = vdwg.mxu0
  %v8467 = vadd.f32 %v8383, %v8405
  %v8468 = vadd.f32 %v8384, %v8425
  %v8469 = vadd.f32 %v8385, %v8445
  %v8470 = vadd.f32 %v8386, %v8465
  %v8471 = vld [vmem:[#allocation2 + $0xa0] sm:$0xff]
  %v8472 = vld [vmem:[#allocation2 + $0xa8] sm:$0xff]
  %v8473 = vld [vmem:[#allocation2 + $0xb0] sm:$0xff]
  %v8474 = vld [vmem:[#allocation2 + $0xb8] sm:$0xff]
  %8475 = vmatpush.msra.mxu0 %v6243
  %8476 = vmatpush.msra.mxu0 %v6239
  %8477 = vmatpush.msra.mxu0 %v6235
  %8478 = vmatpush.msra.mxu0 %v6231
  %8479 = vmatpush.msra.mxu0 %v6227
  %8480 = vmatpush.msra.mxu0 %v6223
  %8481 = vmatpush.msra.mxu0 %v6219
  %8482 = vmatpush.msra.mxu0 %v6215
  %8483 = vmatpush.msra.mxu0 %v6211
  %8484 = vmatpush.msra.mxu0 %v6207
  %8485 = vmatpush.msra.mxu0 %v6203
  %8486 = vmatpush.msra.mxu0 %v6199
  %8487 = vmatpush.msra.mxu0 %v6195
  %8488 = vmatpush.msra.mxu0 %v6191
  %8489 = vmatpush.msra.mxu0 %v6187
  %8490 = vmatpush.msra.mxu0 %v6183
  %8491 = vmatmul.f32.gmra.mxu0 %v8376
  %v8492 = vpop.f32.mrf.mxu0
  %v8493 = vadd.f32 0.0, %v8492
  %8494 = vdwg.mxu0
  %8495 = vmatpush.msra.mxu0 %v6244
  %8496 = vmatpush.msra.mxu0 %v6240
  %8497 = vmatpush.msra.mxu0 %v6236
  %8498 = vmatpush.msra.mxu0 %v6232
  %8499 = vmatpush.msra.mxu0 %v6228
  %8500 = vmatpush.msra.mxu0 %v6224
  %8501 = vmatpush.msra.mxu0 %v6220
  %8502 = vmatpush.msra.mxu0 %v6216
  %8503 = vmatpush.msra.mxu0 %v6212
  %8504 = vmatpush.msra.mxu0 %v6208
  %8505 = vmatpush.msra.mxu0 %v6204
  %8506 = vmatpush.msra.mxu0 %v6200
  %8507 = vmatpush.msra.mxu0 %v6196
  %8508 = vmatpush.msra.mxu0 %v6192
  %8509 = vmatpush.msra.mxu0 %v6188
  %8510 = vmatpush.msra.mxu0 %v6184
  %8511 = vmatmul.f32.gmra.mxu0 %v8376
  %v8512 = vpop.f32.mrf.mxu0
  %v8513 = vadd.f32 0.0, %v8512
  %8514 = vdwg.mxu0
  %8515 = vmatpush.msra.mxu0 %v6245
  %8516 = vmatpush.msra.mxu0 %v6241
  %8517 = vmatpush.msra.mxu0 %v6237
  %8518 = vmatpush.msra.mxu0 %v6233
  %8519 = vmatpush.msra.mxu0 %v6229
  %8520 = vmatpush.msra.mxu0 %v6225
  %8521 = vmatpush.msra.mxu0 %v6221
  %8522 = vmatpush.msra.mxu0 %v6217
  %8523 = vmatpush.msra.mxu0 %v6213
  %8524 = vmatpush.msra.mxu0 %v6209
  %8525 = vmatpush.msra.mxu0 %v6205
  %8526 = vmatpush.msra.mxu0 %v6201
  %8527 = vmatpush.msra.mxu0 %v6197
  %8528 = vmatpush.msra.mxu0 %v6193
  %8529 = vmatpush.msra.mxu0 %v6189
  %8530 = vmatpush.msra.mxu0 %v6185
  %8531 = vmatmul.f32.gmra.mxu0 %v8376
  %v8532 = vpop.f32.mrf.mxu0
  %v8533 = vadd.f32 0.0, %v8532
  %8534 = vdwg.mxu0
  %8535 = vmatpush.msra.mxu0 %v6246
  %8536 = vmatpush.msra.mxu0 %v6242
  %8537 = vmatpush.msra.mxu0 %v6238
  %8538 = vmatpush.msra.mxu0 %v6234
  %8539 = vmatpush.msra.mxu0 %v6230
  %8540 = vmatpush.msra.mxu0 %v6226
  %8541 = vmatpush.msra.mxu0 %v6222
  %8542 = vmatpush.msra.mxu0 %v6218
  %8543 = vmatpush.msra.mxu0 %v6214
  %8544 = vmatpush.msra.mxu0 %v6210
  %8545 = vmatpush.msra.mxu0 %v6206
  %8546 = vmatpush.msra.mxu0 %v6202
  %8547 = vmatpush.msra.mxu0 %v6198
  %8548 = vmatpush.msra.mxu0 %v6194
  %8549 = vmatpush.msra.mxu0 %v6190
  %8550 = vmatpush.msra.mxu0 %v6186
  %8551 = vmatmul.f32.gmra.mxu0 %v8376
  %v8552 = vpop.f32.mrf.mxu0
  %v8553 = vadd.f32 0.0, %v8552
  %8554 = vdwg.mxu0
  %v8555 = vadd.f32 %v8471, %v8493
  %v8556 = vadd.f32 %v8472, %v8513
  %v8557 = vadd.f32 %v8473, %v8533
  %v8558 = vadd.f32 %v8474, %v8553
  %v8559 = vxor.u32 %v8467, 2147483648
  %v8560 = vxor.u32 %v8468, 2147483648
  %v8561 = vxor.u32 %v8469, 2147483648
  %v8562 = vmul.f32 %v8559, 1.442695
  %v8563 = vpow.pop %v8562
  %v8564 = vmul.f32 %v8560, 1.442695
  %v8565 = vpow.pop %v8564
  %v8566 = vmul.f32 %v8561, 1.442695
  %v8567 = vpow.pop %v8566
  %v8568 = vadd.f32 %v8563, 1.0
  %v8569 = vadd.f32 %v8565, 1.0
  %v8570 = vadd.f32 %v8567, 1.0
  %v8571 = vrcp.pop %v8568
  %v8572 = vmul.f32 %v8568, %v8571
  %v8573 = vsub.f32 1.0, %v8572
  %v8574 = vmul.f32 %v8571, %v8573
  %v8575 = vadd.f32 %v8571, %v8574
  %vm8576 = vweird.f32 %v8568
  %vm8577 = vweird.f32 %v8571
  %vm8578 = vmor %vm8576, %vm8577
  %v8579 = vsel %vm8578, %v8571, %v8575
  %v8580 = vand.u32 2147483647, %v8568
  %vm8581 = vcmp.eq.f32.partialorder %v8580, 8.507059e+37
  %v8582 = vand.u32 %v8568, 2147483648
  %v8583 = vor.u32 1.1754944e-38, %v8582
  %v8584 = vsel %vm8581, %v8583, %v8579
  %v8585 = vmul.f32 1.0, %v8584
  %v8586 = vrcp.pop %v8569
  %v8587 = vmul.f32 %v8569, %v8586
  %v8588 = vsub.f32 1.0, %v8587
  %v8589 = vmul.f32 %v8586, %v8588
  %v8590 = vadd.f32 %v8586, %v8589
  %vm8591 = vweird.f32 %v8569
  %vm8592 = vweird.f32 %v8586
  %vm8593 = vmor %vm8591, %vm8592
  %v8594 = vsel %vm8593, %v8586, %v8590
  %v8595 = vand.u32 2147483647, %v8569
  %vm8596 = vcmp.eq.f32.partialorder %v8595, 8.507059e+37
  %v8597 = vand.u32 %v8569, 2147483648
  %v8598 = vor.u32 1.1754944e-38, %v8597
  %v8599 = vsel %vm8596, %v8598, %v8594
  %v8600 = vmul.f32 1.0, %v8599
  %v8601 = vrcp.pop %v8570
  %v8602 = vmul.f32 %v8570, %v8601
  %v8603 = vsub.f32 1.0, %v8602
  %v8604 = vmul.f32 %v8601, %v8603
  %v8605 = vadd.f32 %v8601, %v8604
  %vm8606 = vweird.f32 %v8570
  %vm8607 = vweird.f32 %v8601
  %vm8608 = vmor %vm8606, %vm8607
  %v8609 = vsel %vm8608, %v8601, %v8605
  %v8610 = vand.u32 2147483647, %v8570
  %vm8611 = vcmp.eq.f32.partialorder %v8610, 8.507059e+37
  %v8612 = vand.u32 %v8570, 2147483648
  %v8613 = vor.u32 1.1754944e-38, %v8612
  %v8614 = vsel %vm8611, %v8613, %v8609
  %v8615 = vmul.f32 1.0, %v8614
  %v8616 = vtanh.pop %v8470
  %v8617 = vmul.f32 %v8600, %v8311
  %v8618 = vmul.f32 %v8585, %v8616
  %v8619 = vadd.f32 %v8617, %v8618
  %v8620 = vtanh.pop %v8619
  %v8621 = vmul.f32 %v8615, %v8620
  %v8622 = vxor.u32 %v8555, 2147483648
  %v8623 = vxor.u32 %v8556, 2147483648
  %v8624 = vxor.u32 %v8557, 2147483648
  %v8625 = vmul.f32 %v8622, 1.442695
  %v8626 = vpow.pop %v8625
  %v8627 = vmul.f32 %v8623, 1.442695
  %v8628 = vpow.pop %v8627
  %v8629 = vmul.f32 %v8624, 1.442695
  %v8630 = vpow.pop %v8629
  %v8631 = vadd.f32 %v8626, 1.0
  %v8632 = vadd.f32 %v8628, 1.0
  %v8633 = vadd.f32 %v8630, 1.0
  %v8634 = vrcp.pop %v8631
  %v8635 = vmul.f32 %v8631, %v8634
  %v8636 = vsub.f32 1.0, %v8635
  %v8637 = vmul.f32 %v8634, %v8636
  %v8638 = vadd.f32 %v8634, %v8637
  %vm8639 = vweird.f32 %v8631
  %vm8640 = vweird.f32 %v8634
  %vm8641 = vmor %vm8639, %vm8640
  %v8642 = vsel %vm8641, %v8634, %v8638
  %v8643 = vand.u32 2147483647, %v8631
  %vm8644 = vcmp.eq.f32.partialorder %v8643, 8.507059e+37
  %v8645 = vand.u32 %v8631, 2147483648
  %v8646 = vor.u32 1.1754944e-38, %v8645
  %v8647 = vsel %vm8644, %v8646, %v8642
  %v8648 = vmul.f32 1.0, %v8647
  %v8649 = vrcp.pop %v8632
  %v8650 = vmul.f32 %v8632, %v8649
  %v8651 = vsub.f32 1.0, %v8650
  %v8652 = vmul.f32 %v8649, %v8651
  %v8653 = vadd.f32 %v8649, %v8652
  %vm8654 = vweird.f32 %v8632
  %vm8655 = vweird.f32 %v8649
  %vm8656 = vmor %vm8654, %vm8655
  %v8657 = vsel %vm8656, %v8649, %v8653
  %v8658 = vand.u32 2147483647, %v8632
  %vm8659 = vcmp.eq.f32.partialorder %v8658, 8.507059e+37
  %v8660 = vand.u32 %v8632, 2147483648
  %v8661 = vor.u32 1.1754944e-38, %v8660
  %v8662 = vsel %vm8659, %v8661, %v8657
  %v8663 = vmul.f32 1.0, %v8662
  %v8664 = vrcp.pop %v8633
  %v8665 = vmul.f32 %v8633, %v8664
  %v8666 = vsub.f32 1.0, %v8665
  %v8667 = vmul.f32 %v8664, %v8666
  %v8668 = vadd.f32 %v8664, %v8667
  %vm8669 = vweird.f32 %v8633
  %vm8670 = vweird.f32 %v8664
  %vm8671 = vmor %vm8669, %vm8670
  %v8672 = vsel %vm8671, %v8664, %v8668
  %v8673 = vand.u32 2147483647, %v8633
  %vm8674 = vcmp.eq.f32.partialorder %v8673, 8.507059e+37
  %v8675 = vand.u32 %v8633, 2147483648
  %v8676 = vor.u32 1.1754944e-38, %v8675
  %v8677 = vsel %vm8674, %v8676, %v8672
  %v8678 = vmul.f32 1.0, %v8677
  %v8679 = vtanh.pop %v8558
  %v8680 = vmul.f32 %v8663, %v8374
  %v8681 = vmul.f32 %v8648, %v8679
  %v8682 = vadd.f32 %v8680, %v8681
  %v8683 = vtanh.pop %v8682
  %v8684 = vmul.f32 %v8678, %v8683
  %v8685 = vld [vmem:[%s11 + $0x38] sm:$0xff]
  %v8686 = vadd.f32 %v8685, %v8621
  %8687 = vst [vmem:[%s11 + $0x38] sm:$0xff] %v8686
  %v8688 = vld [vmem:[%s11 + $0x10] sm:$0xff]
  %v8689 = vadd.f32 %v8688, %v8684
  %8690 = vst [vmem:[%s11 + $0x10] sm:$0xff] %v8689
  %v8691 = vld [vmem:[#allocation2 + $0x200] sm:$0xff]
  %v8692 = vld [vmem:[#allocation2 + $0x208] sm:$0xff]
  %v8693 = vld [vmem:[#allocation2 + $0x210] sm:$0xff]
  %v8694 = vld [vmem:[#allocation2 + $0x218] sm:$0xff]
  %8695 = vmatpush.msra.mxu0 %v6179
  %8696 = vmatpush.msra.mxu0 %v6175
  %8697 = vmatpush.msra.mxu0 %v6171
  %8698 = vmatpush.msra.mxu0 %v6167
  %8699 = vmatpush.msra.mxu0 %v6163
  %8700 = vmatpush.msra.mxu0 %v6159
  %8701 = vmatpush.msra.mxu0 %v6155
  %8702 = vmatpush.msra.mxu0 %v6151
  %8703 = vmatpush.msra.mxu0 %v6147
  %8704 = vmatpush.msra.mxu0 %v6143
  %8705 = vmatpush.msra.mxu0 %v6139
  %8706 = vmatpush.msra.mxu0 %v6135
  %8707 = vmatpush.msra.mxu0 %v6131
  %8708 = vmatpush.msra.mxu0 %v6127
  %8709 = vmatpush.msra.mxu0 %v6123
  %8710 = vmatpush.msra.mxu0 %v6119
  %8711 = vmatmul.f32.gmra.mxu0 %v8621
  %v8712 = vpop.f32.mrf.mxu0
  %v8713 = vadd.f32 0.0, %v8712
  %8714 = vdwg.mxu0
  %8715 = vmatpush.msra.mxu0 %v6180
  %8716 = vmatpush.msra.mxu0 %v6176
  %8717 = vmatpush.msra.mxu0 %v6172
  %8718 = vmatpush.msra.mxu0 %v6168
  %8719 = vmatpush.msra.mxu0 %v6164
  %8720 = vmatpush.msra.mxu0 %v6160
  %8721 = vmatpush.msra.mxu0 %v6156
  %8722 = vmatpush.msra.mxu0 %v6152
  %8723 = vmatpush.msra.mxu0 %v6148
  %8724 = vmatpush.msra.mxu0 %v6144
  %8725 = vmatpush.msra.mxu0 %v6140
  %8726 = vmatpush.msra.mxu0 %v6136
  %8727 = vmatpush.msra.mxu0 %v6132
  %8728 = vmatpush.msra.mxu0 %v6128
  %8729 = vmatpush.msra.mxu0 %v6124
  %8730 = vmatpush.msra.mxu0 %v6120
  %8731 = vmatmul.f32.gmra.mxu0 %v8621
  %v8732 = vpop.f32.mrf.mxu0
  %v8733 = vadd.f32 0.0, %v8732
  %8734 = vdwg.mxu0
  %8735 = vmatpush.msra.mxu0 %v6181
  %8736 = vmatpush.msra.mxu0 %v6177
  %8737 = vmatpush.msra.mxu0 %v6173
  %8738 = vmatpush.msra.mxu0 %v6169
  %8739 = vmatpush.msra.mxu0 %v6165
  %8740 = vmatpush.msra.mxu0 %v6161
  %8741 = vmatpush.msra.mxu0 %v6157
  %8742 = vmatpush.msra.mxu0 %v6153
  %8743 = vmatpush.msra.mxu0 %v6149
  %8744 = vmatpush.msra.mxu0 %v6145
  %8745 = vmatpush.msra.mxu0 %v6141
  %8746 = vmatpush.msra.mxu0 %v6137
  %8747 = vmatpush.msra.mxu0 %v6133
  %8748 = vmatpush.msra.mxu0 %v6129
  %8749 = vmatpush.msra.mxu0 %v6125
  %8750 = vmatpush.msra.mxu0 %v6121
  %8751 = vmatmul.f32.gmra.mxu0 %v8621
  %v8752 = vpop.f32.mrf.mxu0
  %v8753 = vadd.f32 0.0, %v8752
  %8754 = vdwg.mxu0
  %8755 = vmatpush.msra.mxu0 %v6182
  %8756 = vmatpush.msra.mxu0 %v6178
  %8757 = vmatpush.msra.mxu0 %v6174
  %8758 = vmatpush.msra.mxu0 %v6170
  %8759 = vmatpush.msra.mxu0 %v6166
  %8760 = vmatpush.msra.mxu0 %v6162
  %8761 = vmatpush.msra.mxu0 %v6158
  %8762 = vmatpush.msra.mxu0 %v6154
  %8763 = vmatpush.msra.mxu0 %v6150
  %8764 = vmatpush.msra.mxu0 %v6146
  %8765 = vmatpush.msra.mxu0 %v6142
  %8766 = vmatpush.msra.mxu0 %v6138
  %8767 = vmatpush.msra.mxu0 %v6134
  %8768 = vmatpush.msra.mxu0 %v6130
  %8769 = vmatpush.msra.mxu0 %v6126
  %8770 = vmatpush.msra.mxu0 %v6122
  %8771 = vmatmul.f32.gmra.mxu0 %v8621
  %v8772 = vpop.f32.mrf.mxu0
  %v8773 = vadd.f32 0.0, %v8772
  %8774 = vdwg.mxu0
  %v8775 = vadd.f32 %v8691, %v8713
  %v8776 = vadd.f32 %v8692, %v8733
  %v8777 = vadd.f32 %v8693, %v8753
  %v8778 = vadd.f32 %v8694, %v8773
  %v8779 = vld [vmem:[#allocation2 + $0x60] sm:$0xff]
  %v8780 = vld [vmem:[#allocation2 + $0x68] sm:$0xff]
  %v8781 = vld [vmem:[#allocation2 + $0x70] sm:$0xff]
  %v8782 = vld [vmem:[#allocation2 + $0x78] sm:$0xff]
  %8783 = vmatpush.msra.mxu0 %v6243
  %8784 = vmatpush.msra.mxu0 %v6239
  %8785 = vmatpush.msra.mxu0 %v6235
  %8786 = vmatpush.msra.mxu0 %v6231
  %8787 = vmatpush.msra.mxu0 %v6227
  %8788 = vmatpush.msra.mxu0 %v6223
  %8789 = vmatpush.msra.mxu0 %v6219
  %8790 = vmatpush.msra.mxu0 %v6215
  %8791 = vmatpush.msra.mxu0 %v6211
  %8792 = vmatpush.msra.mxu0 %v6207
  %8793 = vmatpush.msra.mxu0 %v6203
  %8794 = vmatpush.msra.mxu0 %v6199
  %8795 = vmatpush.msra.mxu0 %v6195
  %8796 = vmatpush.msra.mxu0 %v6191
  %8797 = vmatpush.msra.mxu0 %v6187
  %8798 = vmatpush.msra.mxu0 %v6183
  %8799 = vmatmul.f32.gmra.mxu0 %v8684
  %v8800 = vpop.f32.mrf.mxu0
  %v8801 = vadd.f32 0.0, %v8800
  %8802 = vdwg.mxu0
  %8803 = vmatpush.msra.mxu0 %v6244
  %8804 = vmatpush.msra.mxu0 %v6240
  %8805 = vmatpush.msra.mxu0 %v6236
  %8806 = vmatpush.msra.mxu0 %v6232
  %8807 = vmatpush.msra.mxu0 %v6228
  %8808 = vmatpush.msra.mxu0 %v6224
  %8809 = vmatpush.msra.mxu0 %v6220
  %8810 = vmatpush.msra.mxu0 %v6216
  %8811 = vmatpush.msra.mxu0 %v6212
  %8812 = vmatpush.msra.mxu0 %v6208
  %8813 = vmatpush.msra.mxu0 %v6204
  %8814 = vmatpush.msra.mxu0 %v6200
  %8815 = vmatpush.msra.mxu0 %v6196
  %8816 = vmatpush.msra.mxu0 %v6192
  %8817 = vmatpush.msra.mxu0 %v6188
  %8818 = vmatpush.msra.mxu0 %v6184
  %8819 = vmatmul.f32.gmra.mxu0 %v8684
  %v8820 = vpop.f32.mrf.mxu0
  %v8821 = vadd.f32 0.0, %v8820
  %8822 = vdwg.mxu0
  %8823 = vmatpush.msra.mxu0 %v6245
  %8824 = vmatpush.msra.mxu0 %v6241
  %8825 = vmatpush.msra.mxu0 %v6237
  %8826 = vmatpush.msra.mxu0 %v6233
  %8827 = vmatpush.msra.mxu0 %v6229
  %8828 = vmatpush.msra.mxu0 %v6225
  %8829 = vmatpush.msra.mxu0 %v6221
  %8830 = vmatpush.msra.mxu0 %v6217
  %8831 = vmatpush.msra.mxu0 %v6213
  %8832 = vmatpush.msra.mxu0 %v6209
  %8833 = vmatpush.msra.mxu0 %v6205
  %8834 = vmatpush.msra.mxu0 %v6201
  %8835 = vmatpush.msra.mxu0 %v6197
  %8836 = vmatpush.msra.mxu0 %v6193
  %8837 = vmatpush.msra.mxu0 %v6189
  %8838 = vmatpush.msra.mxu0 %v6185
  %8839 = vmatmul.f32.gmra.mxu0 %v8684
  %v8840 = vpop.f32.mrf.mxu0
  %v8841 = vadd.f32 0.0, %v8840
  %8842 = vdwg.mxu0
  %8843 = vmatpush.msra.mxu0 %v6246
  %8844 = vmatpush.msra.mxu0 %v6242
  %8845 = vmatpush.msra.mxu0 %v6238
  %8846 = vmatpush.msra.mxu0 %v6234
  %8847 = vmatpush.msra.mxu0 %v6230
  %8848 = vmatpush.msra.mxu0 %v6226
  %8849 = vmatpush.msra.mxu0 %v6222
  %8850 = vmatpush.msra.mxu0 %v6218
  %8851 = vmatpush.msra.mxu0 %v6214
  %8852 = vmatpush.msra.mxu0 %v6210
  %8853 = vmatpush.msra.mxu0 %v6206
  %8854 = vmatpush.msra.mxu0 %v6202
  %8855 = vmatpush.msra.mxu0 %v6198
  %8856 = vmatpush.msra.mxu0 %v6194
  %8857 = vmatpush.msra.mxu0 %v6190
  %8858 = vmatpush.msra.mxu0 %v6186
  %8859 = vmatmul.f32.gmra.mxu0 %v8684
  %v8860 = vpop.f32.mrf.mxu0
  %v8861 = vadd.f32 0.0, %v8860
  %8862 = vdwg.mxu0
  %v8863 = vadd.f32 %v8779, %v8801
  %v8864 = vadd.f32 %v8780, %v8821
  %v8865 = vadd.f32 %v8781, %v8841
  %v8866 = vadd.f32 %v8782, %v8861
  %v8867 = vxor.u32 %v8775, 2147483648
  %v8868 = vxor.u32 %v8776, 2147483648
  %v8869 = vxor.u32 %v8777, 2147483648
  %v8870 = vmul.f32 %v8867, 1.442695
  %v8871 = vpow.pop %v8870
  %v8872 = vmul.f32 %v8868, 1.442695
  %v8873 = vpow.pop %v8872
  %v8874 = vmul.f32 %v8869, 1.442695
  %v8875 = vpow.pop %v8874
  %v8876 = vadd.f32 %v8871, 1.0
  %v8877 = vadd.f32 %v8873, 1.0
  %v8878 = vadd.f32 %v8875, 1.0
  %v8879 = vrcp.pop %v8876
  %v8880 = vmul.f32 %v8876, %v8879
  %v8881 = vsub.f32 1.0, %v8880
  %v8882 = vmul.f32 %v8879, %v8881
  %v8883 = vadd.f32 %v8879, %v8882
  %vm8884 = vweird.f32 %v8876
  %vm8885 = vweird.f32 %v8879
  %vm8886 = vmor %vm8884, %vm8885
  %v8887 = vsel %vm8886, %v8879, %v8883
  %v8888 = vand.u32 2147483647, %v8876
  %vm8889 = vcmp.eq.f32.partialorder %v8888, 8.507059e+37
  %v8890 = vand.u32 %v8876, 2147483648
  %v8891 = vor.u32 1.1754944e-38, %v8890
  %v8892 = vsel %vm8889, %v8891, %v8887
  %v8893 = vmul.f32 1.0, %v8892
  %v8894 = vrcp.pop %v8877
  %v8895 = vmul.f32 %v8877, %v8894
  %v8896 = vsub.f32 1.0, %v8895
  %v8897 = vmul.f32 %v8894, %v8896
  %v8898 = vadd.f32 %v8894, %v8897
  %vm8899 = vweird.f32 %v8877
  %vm8900 = vweird.f32 %v8894
  %vm8901 = vmor %vm8899, %vm8900
  %v8902 = vsel %vm8901, %v8894, %v8898
  %v8903 = vand.u32 2147483647, %v8877
  %vm8904 = vcmp.eq.f32.partialorder %v8903, 8.507059e+37
  %v8905 = vand.u32 %v8877, 2147483648
  %v8906 = vor.u32 1.1754944e-38, %v8905
  %v8907 = vsel %vm8904, %v8906, %v8902
  %v8908 = vmul.f32 1.0, %v8907
  %v8909 = vrcp.pop %v8878
  %v8910 = vmul.f32 %v8878, %v8909
  %v8911 = vsub.f32 1.0, %v8910
  %v8912 = vmul.f32 %v8909, %v8911
  %v8913 = vadd.f32 %v8909, %v8912
  %vm8914 = vweird.f32 %v8878
  %vm8915 = vweird.f32 %v8909
  %vm8916 = vmor %vm8914, %vm8915
  %v8917 = vsel %vm8916, %v8909, %v8913
  %v8918 = vand.u32 2147483647, %v8878
  %vm8919 = vcmp.eq.f32.partialorder %v8918, 8.507059e+37
  %v8920 = vand.u32 %v8878, 2147483648
  %v8921 = vor.u32 1.1754944e-38, %v8920
  %v8922 = vsel %vm8919, %v8921, %v8917
  %v8923 = vmul.f32 1.0, %v8922
  %v8924 = vtanh.pop %v8778
  %v8925 = vmul.f32 %v8908, %v8619
  %v8926 = vmul.f32 %v8893, %v8924
  %v8927 = vadd.f32 %v8925, %v8926
  %v8928 = vtanh.pop %v8927
  %v8929 = vmul.f32 %v8923, %v8928
  %v8930 = vxor.u32 %v8863, 2147483648
  %v8931 = vxor.u32 %v8864, 2147483648
  %v8932 = vxor.u32 %v8865, 2147483648
  %v8933 = vmul.f32 %v8930, 1.442695
  %v8934 = vpow.pop %v8933
  %v8935 = vmul.f32 %v8931, 1.442695
  %v8936 = vpow.pop %v8935
  %v8937 = vmul.f32 %v8932, 1.442695
  %v8938 = vpow.pop %v8937
  %v8939 = vadd.f32 %v8934, 1.0
  %v8940 = vadd.f32 %v8936, 1.0
  %v8941 = vadd.f32 %v8938, 1.0
  %v8942 = vrcp.pop %v8939
  %v8943 = vmul.f32 %v8939, %v8942
  %v8944 = vsub.f32 1.0, %v8943
  %v8945 = vmul.f32 %v8942, %v8944
  %v8946 = vadd.f32 %v8942, %v8945
  %vm8947 = vweird.f32 %v8939
  %vm8948 = vweird.f32 %v8942
  %vm8949 = vmor %vm8947, %vm8948
  %v8950 = vsel %vm8949, %v8942, %v8946
  %v8951 = vand.u32 2147483647, %v8939
  %vm8952 = vcmp.eq.f32.partialorder %v8951, 8.507059e+37
  %v8953 = vand.u32 %v8939, 2147483648
  %v8954 = vor.u32 1.1754944e-38, %v8953
  %v8955 = vsel %vm8952, %v8954, %v8950
  %v8956 = vmul.f32 1.0, %v8955
  %v8957 = vrcp.pop %v8940
  %v8958 = vmul.f32 %v8940, %v8957
  %v8959 = vsub.f32 1.0, %v8958
  %v8960 = vmul.f32 %v8957, %v8959
  %v8961 = vadd.f32 %v8957, %v8960
  %vm8962 = vweird.f32 %v8940
  %vm8963 = vweird.f32 %v8957
  %vm8964 = vmor %vm8962, %vm8963
  %v8965 = vsel %vm8964, %v8957, %v8961
  %v8966 = vand.u32 2147483647, %v8940
  %vm8967 = vcmp.eq.f32.partialorder %v8966, 8.507059e+37
  %v8968 = vand.u32 %v8940, 2147483648
  %v8969 = vor.u32 1.1754944e-38, %v8968
  %v8970 = vsel %vm8967, %v8969, %v8965
  %v8971 = vmul.f32 1.0, %v8970
  %v8972 = vrcp.pop %v8941
  %v8973 = vmul.f32 %v8941, %v8972
  %v8974 = vsub.f32 1.0, %v8973
  %v8975 = vmul.f32 %v8972, %v8974
  %v8976 = vadd.f32 %v8972, %v8975
  %vm8977 = vweird.f32 %v8941
  %vm8978 = vweird.f32 %v8972
  %vm8979 = vmor %vm8977, %vm8978
  %v8980 = vsel %vm8979, %v8972, %v8976
  %v8981 = vand.u32 2147483647, %v8941
  %vm8982 = vcmp.eq.f32.partialorder %v8981, 8.507059e+37
  %v8983 = vand.u32 %v8941, 2147483648
  %v8984 = vor.u32 1.1754944e-38, %v8983
  %v8985 = vsel %vm8982, %v8984, %v8980
  %v8986 = vmul.f32 1.0, %v8985
  %v8987 = vtanh.pop %v8866
  %v8988 = vmul.f32 %v8971, %v8682
  %v8989 = vmul.f32 %v8956, %v8987
  %v8990 = vadd.f32 %v8988, %v8989
  %v8991 = vtanh.pop %v8990
  %v8992 = vmul.f32 %v8986, %v8991
  %v8993 = vld [vmem:[%s11 + $0x40] sm:$0xff]
  %v8994 = vadd.f32 %v8993, %v8929
  %8995 = vst [vmem:[%s11 + $0x40] sm:$0xff] %v8994
  %v8996 = vld [vmem:[%s11 + $0x8] sm:$0xff]
  %v8997 = vadd.f32 %v8996, %v8992
  %8998 = vst [vmem:[%s11 + $0x8] sm:$0xff] %v8997
  %v8999 = vld [vmem:[#allocation2 + $0x240] sm:$0xff]
  %v9000 = vld [vmem:[#allocation2 + $0x248] sm:$0xff]
  %v9001 = vld [vmem:[#allocation2 + $0x250] sm:$0xff]
  %v9002 = vld [vmem:[#allocation2 + $0x258] sm:$0xff]
  %9003 = vmatpush.msra.mxu0 %v6179
  %9004 = vmatpush.msra.mxu0 %v6175
  %9005 = vmatpush.msra.mxu0 %v6171
  %9006 = vmatpush.msra.mxu0 %v6167
  %9007 = vmatpush.msra.mxu0 %v6163
  %9008 = vmatpush.msra.mxu0 %v6159
  %9009 = vmatpush.msra.mxu0 %v6155
  %9010 = vmatpush.msra.mxu0 %v6151
  %9011 = vmatpush.msra.mxu0 %v6147
  %9012 = vmatpush.msra.mxu0 %v6143
  %9013 = vmatpush.msra.mxu0 %v6139
  %9014 = vmatpush.msra.mxu0 %v6135
  %9015 = vmatpush.msra.mxu0 %v6131
  %9016 = vmatpush.msra.mxu0 %v6127
  %9017 = vmatpush.msra.mxu0 %v6123
  %9018 = vmatpush.msra.mxu0 %v6119
  %9019 = vmatmul.f32.gmra.mxu0 %v8929
  %v9020 = vpop.f32.mrf.mxu0
  %v9021 = vadd.f32 0.0, %v9020
  %9022 = vdwg.mxu0
  %9023 = vmatpush.msra.mxu0 %v6180
  %9024 = vmatpush.msra.mxu0 %v6176
  %9025 = vmatpush.msra.mxu0 %v6172
  %9026 = vmatpush.msra.mxu0 %v6168
  %9027 = vmatpush.msra.mxu0 %v6164
  %9028 = vmatpush.msra.mxu0 %v6160
  %9029 = vmatpush.msra.mxu0 %v6156
  %9030 = vmatpush.msra.mxu0 %v6152
  %9031 = vmatpush.msra.mxu0 %v6148
  %9032 = vmatpush.msra.mxu0 %v6144
  %9033 = vmatpush.msra.mxu0 %v6140
  %9034 = vmatpush.msra.mxu0 %v6136
  %9035 = vmatpush.msra.mxu0 %v6132
  %9036 = vmatpush.msra.mxu0 %v6128
  %9037 = vmatpush.msra.mxu0 %v6124
  %9038 = vmatpush.msra.mxu0 %v6120
  %9039 = vmatmul.f32.gmra.mxu0 %v8929
  %v9040 = vpop.f32.mrf.mxu0
  %v9041 = vadd.f32 0.0, %v9040
  %9042 = vdwg.mxu0
  %9043 = vmatpush.msra.mxu0 %v6181
  %9044 = vmatpush.msra.mxu0 %v6177
  %9045 = vmatpush.msra.mxu0 %v6173
  %9046 = vmatpush.msra.mxu0 %v6169
  %9047 = vmatpush.msra.mxu0 %v6165
  %9048 = vmatpush.msra.mxu0 %v6161
  %9049 = vmatpush.msra.mxu0 %v6157
  %9050 = vmatpush.msra.mxu0 %v6153
  %9051 = vmatpush.msra.mxu0 %v6149
  %9052 = vmatpush.msra.mxu0 %v6145
  %9053 = vmatpush.msra.mxu0 %v6141
  %9054 = vmatpush.msra.mxu0 %v6137
  %9055 = vmatpush.msra.mxu0 %v6133
  %9056 = vmatpush.msra.mxu0 %v6129
  %9057 = vmatpush.msra.mxu0 %v6125
  %9058 = vmatpush.msra.mxu0 %v6121
  %9059 = vmatmul.f32.gmra.mxu0 %v8929
  %v9060 = vpop.f32.mrf.mxu0
  %v9061 = vadd.f32 0.0, %v9060
  %9062 = vdwg.mxu0
  %9063 = vmatpush.msra.mxu0 %v6182
  %9064 = vmatpush.msra.mxu0 %v6178
  %9065 = vmatpush.msra.mxu0 %v6174
  %9066 = vmatpush.msra.mxu0 %v6170
  %9067 = vmatpush.msra.mxu0 %v6166
  %9068 = vmatpush.msra.mxu0 %v6162
  %9069 = vmatpush.msra.mxu0 %v6158
  %9070 = vmatpush.msra.mxu0 %v6154
  %9071 = vmatpush.msra.mxu0 %v6150
  %9072 = vmatpush.msra.mxu0 %v6146
  %9073 = vmatpush.msra.mxu0 %v6142
  %9074 = vmatpush.msra.mxu0 %v6138
  %9075 = vmatpush.msra.mxu0 %v6134
  %9076 = vmatpush.msra.mxu0 %v6130
  %9077 = vmatpush.msra.mxu0 %v6126
  %9078 = vmatpush.msra.mxu0 %v6122
  %9079 = vmatmul.f32.gmra.mxu0 %v8929
  %v9080 = vpop.f32.mrf.mxu0
  %v9081 = vadd.f32 0.0, %v9080
  %9082 = vdwg.mxu0
  %v9083 = vadd.f32 %v8999, %v9021
  %v9084 = vadd.f32 %v9000, %v9041
  %v9085 = vadd.f32 %v9001, %v9061
  %v9086 = vadd.f32 %v9002, %v9081
  %v9087 = vld [vmem:[#allocation2 + $0x20] sm:$0xff]
  %v9088 = vld [vmem:[#allocation2 + $0x28] sm:$0xff]
  %v9089 = vld [vmem:[#allocation2 + $0x30] sm:$0xff]
  %v9090 = vld [vmem:[#allocation2 + $0x38] sm:$0xff]
  %9091 = vmatpush.msra.mxu0 %v6243
  %9092 = vmatpush.msra.mxu0 %v6239
  %9093 = vmatpush.msra.mxu0 %v6235
  %9094 = vmatpush.msra.mxu0 %v6231
  %9095 = vmatpush.msra.mxu0 %v6227
  %9096 = vmatpush.msra.mxu0 %v6223
  %9097 = vmatpush.msra.mxu0 %v6219
  %9098 = vmatpush.msra.mxu0 %v6215
  %9099 = vmatpush.msra.mxu0 %v6211
  %9100 = vmatpush.msra.mxu0 %v6207
  %9101 = vmatpush.msra.mxu0 %v6203
  %9102 = vmatpush.msra.mxu0 %v6199
  %9103 = vmatpush.msra.mxu0 %v6195
  %9104 = vmatpush.msra.mxu0 %v6191
  %9105 = vmatpush.msra.mxu0 %v6187
  %9106 = vmatpush.msra.mxu0 %v6183
  %9107 = vmatmul.f32.gmra.mxu0 %v8992
  %v9108 = vpop.f32.mrf.mxu0
  %v9109 = vadd.f32 0.0, %v9108
  %9110 = vdwg.mxu0
  %9111 = vmatpush.msra.mxu0 %v6244
  %9112 = vmatpush.msra.mxu0 %v6240
  %9113 = vmatpush.msra.mxu0 %v6236
  %9114 = vmatpush.msra.mxu0 %v6232
  %9115 = vmatpush.msra.mxu0 %v6228
  %9116 = vmatpush.msra.mxu0 %v6224
  %9117 = vmatpush.msra.mxu0 %v6220
  %9118 = vmatpush.msra.mxu0 %v6216
  %9119 = vmatpush.msra.mxu0 %v6212
  %9120 = vmatpush.msra.mxu0 %v6208
  %9121 = vmatpush.msra.mxu0 %v6204
  %9122 = vmatpush.msra.mxu0 %v6200
  %9123 = vmatpush.msra.mxu0 %v6196
  %9124 = vmatpush.msra.mxu0 %v6192
  %9125 = vmatpush.msra.mxu0 %v6188
  %9126 = vmatpush.msra.mxu0 %v6184
  %9127 = vmatmul.f32.gmra.mxu0 %v8992
  %v9128 = vpop.f32.mrf.mxu0
  %v9129 = vadd.f32 0.0, %v9128
  %9130 = vdwg.mxu0
  %9131 = vmatpush.msra.mxu0 %v6245
  %9132 = vmatpush.msra.mxu0 %v6241
  %9133 = vmatpush.msra.mxu0 %v6237
  %9134 = vmatpush.msra.mxu0 %v6233
  %9135 = vmatpush.msra.mxu0 %v6229
  %9136 = vmatpush.msra.mxu0 %v6225
  %9137 = vmatpush.msra.mxu0 %v6221
  %9138 = vmatpush.msra.mxu0 %v6217
  %9139 = vmatpush.msra.mxu0 %v6213
  %9140 = vmatpush.msra.mxu0 %v6209
  %9141 = vmatpush.msra.mxu0 %v6205
  %9142 = vmatpush.msra.mxu0 %v6201
  %9143 = vmatpush.msra.mxu0 %v6197
  %9144 = vmatpush.msra.mxu0 %v6193
  %9145 = vmatpush.msra.mxu0 %v6189
  %9146 = vmatpush.msra.mxu0 %v6185
  %9147 = vmatmul.f32.gmra.mxu0 %v8992
  %v9148 = vpop.f32.mrf.mxu0
  %v9149 = vadd.f32 0.0, %v9148
  %9150 = vdwg.mxu0
  %9151 = vmatpush.msra.mxu0 %v6246
  %9152 = vmatpush.msra.mxu0 %v6242
  %9153 = vmatpush.msra.mxu0 %v6238
  %9154 = vmatpush.msra.mxu0 %v6234
  %9155 = vmatpush.msra.mxu0 %v6230
  %9156 = vmatpush.msra.mxu0 %v6226
  %9157 = vmatpush.msra.mxu0 %v6222
  %9158 = vmatpush.msra.mxu0 %v6218
  %9159 = vmatpush.msra.mxu0 %v6214
  %9160 = vmatpush.msra.mxu0 %v6210
  %9161 = vmatpush.msra.mxu0 %v6206
  %9162 = vmatpush.msra.mxu0 %v6202
  %9163 = vmatpush.msra.mxu0 %v6198
  %9164 = vmatpush.msra.mxu0 %v6194
  %9165 = vmatpush.msra.mxu0 %v6190
  %9166 = vmatpush.msra.mxu0 %v6186
  %9167 = vmatmul.f32.gmra.mxu0 %v8992
  %v9168 = vpop.f32.mrf.mxu0
  %v9169 = vadd.f32 0.0, %v9168
  %9170 = vdwg.mxu0
  %v9171 = vadd.f32 %v9087, %v9109
  %v9172 = vadd.f32 %v9088, %v9129
  %v9173 = vadd.f32 %v9089, %v9149
  %v9174 = vadd.f32 %v9090, %v9169
  %v9175 = vxor.u32 %v9083, 2147483648
  %v9176 = vxor.u32 %v9084, 2147483648
  %v9177 = vxor.u32 %v9085, 2147483648
  %v9178 = vmul.f32 %v9175, 1.442695
  %v9179 = vpow.pop %v9178
  %v9180 = vmul.f32 %v9176, 1.442695
  %v9181 = vpow.pop %v9180
  %v9182 = vmul.f32 %v9177, 1.442695
  %v9183 = vpow.pop %v9182
  %v9184 = vadd.f32 %v9179, 1.0
  %v9185 = vadd.f32 %v9181, 1.0
  %v9186 = vadd.f32 %v9183, 1.0
  %v9187 = vrcp.pop %v9184
  %v9188 = vmul.f32 %v9184, %v9187
  %v9189 = vsub.f32 1.0, %v9188
  %v9190 = vmul.f32 %v9187, %v9189
  %v9191 = vadd.f32 %v9187, %v9190
  %vm9192 = vweird.f32 %v9184
  %vm9193 = vweird.f32 %v9187
  %vm9194 = vmor %vm9192, %vm9193
  %v9195 = vsel %vm9194, %v9187, %v9191
  %v9196 = vand.u32 2147483647, %v9184
  %vm9197 = vcmp.eq.f32.partialorder %v9196, 8.507059e+37
  %v9198 = vand.u32 %v9184, 2147483648
  %v9199 = vor.u32 1.1754944e-38, %v9198
  %v9200 = vsel %vm9197, %v9199, %v9195
  %v9201 = vmul.f32 1.0, %v9200
  %v9202 = vrcp.pop %v9185
  %v9203 = vmul.f32 %v9185, %v9202
  %v9204 = vsub.f32 1.0, %v9203
  %v9205 = vmul.f32 %v9202, %v9204
  %v9206 = vadd.f32 %v9202, %v9205
  %vm9207 = vweird.f32 %v9185
  %vm9208 = vweird.f32 %v9202
  %vm9209 = vmor %vm9207, %vm9208
  %v9210 = vsel %vm9209, %v9202, %v9206
  %v9211 = vand.u32 2147483647, %v9185
  %vm9212 = vcmp.eq.f32.partialorder %v9211, 8.507059e+37
  %v9213 = vand.u32 %v9185, 2147483648
  %v9214 = vor.u32 1.1754944e-38, %v9213
  %v9215 = vsel %vm9212, %v9214, %v9210
  %v9216 = vmul.f32 1.0, %v9215
  %v9217 = vrcp.pop %v9186
  %v9218 = vmul.f32 %v9186, %v9217
  %v9219 = vsub.f32 1.0, %v9218
  %v9220 = vmul.f32 %v9217, %v9219
  %v9221 = vadd.f32 %v9217, %v9220
  %vm9222 = vweird.f32 %v9186
  %vm9223 = vweird.f32 %v9217
  %vm9224 = vmor %vm9222, %vm9223
  %v9225 = vsel %vm9224, %v9217, %v9221
  %v9226 = vand.u32 2147483647, %v9186
  %vm9227 = vcmp.eq.f32.partialorder %v9226, 8.507059e+37
  %v9228 = vand.u32 %v9186, 2147483648
  %v9229 = vor.u32 1.1754944e-38, %v9228
  %v9230 = vsel %vm9227, %v9229, %v9225
  %v9231 = vmul.f32 1.0, %v9230
  %v9232 = vtanh.pop %v9086
  %v9233 = vmul.f32 %v9216, %v8927
  %v9234 = vmul.f32 %v9201, %v9232
  %v9235 = vadd.f32 %v9233, %v9234
  %v9236 = vtanh.pop %v9235
  %v9237 = vmul.f32 %v9231, %v9236
  %v9238 = vxor.u32 %v9171, 2147483648
  %v9239 = vxor.u32 %v9172, 2147483648
  %v9240 = vxor.u32 %v9173, 2147483648
  %v9241 = vmul.f32 %v9238, 1.442695
  %v9242 = vpow.pop %v9241
  %v9243 = vmul.f32 %v9239, 1.442695
  %v9244 = vpow.pop %v9243
  %v9245 = vmul.f32 %v9240, 1.442695
  %v9246 = vpow.pop %v9245
  %v9247 = vadd.f32 %v9242, 1.0
  %v9248 = vadd.f32 %v9244, 1.0
  %v9249 = vadd.f32 %v9246, 1.0
  %v9250 = vrcp.pop %v9247
  %v9251 = vmul.f32 %v9247, %v9250
  %v9252 = vsub.f32 1.0, %v9251
  %v9253 = vmul.f32 %v9250, %v9252
  %v9254 = vadd.f32 %v9250, %v9253
  %vm9255 = vweird.f32 %v9247
  %vm9256 = vweird.f32 %v9250
  %vm9257 = vmor %vm9255, %vm9256
  %v9258 = vsel %vm9257, %v9250, %v9254
  %v9259 = vand.u32 2147483647, %v9247
  %vm9260 = vcmp.eq.f32.partialorder %v9259, 8.507059e+37
  %v9261 = vand.u32 %v9247, 2147483648
  %v9262 = vor.u32 1.1754944e-38, %v9261
  %v9263 = vsel %vm9260, %v9262, %v9258
  %v9264 = vmul.f32 1.0, %v9263
  %v9265 = vrcp.pop %v9248
  %v9266 = vmul.f32 %v9248, %v9265
  %v9267 = vsub.f32 1.0, %v9266
  %v9268 = vmul.f32 %v9265, %v9267
  %v9269 = vadd.f32 %v9265, %v9268
  %vm9270 = vweird.f32 %v9248
  %vm9271 = vweird.f32 %v9265
  %vm9272 = vmor %vm9270, %vm9271
  %v9273 = vsel %vm9272, %v9265, %v9269
  %v9274 = vand.u32 2147483647, %v9248
  %vm9275 = vcmp.eq.f32.partialorder %v9274, 8.507059e+37
  %v9276 = vand.u32 %v9248, 2147483648
  %v9277 = vor.u32 1.1754944e-38, %v9276
  %v9278 = vsel %vm9275, %v9277, %v9273
  %v9279 = vmul.f32 1.0, %v9278
  %v9280 = vrcp.pop %v9249
  %v9281 = vmul.f32 %v9249, %v9280
  %v9282 = vsub.f32 1.0, %v9281
  %v9283 = vmul.f32 %v9280, %v9282
  %v9284 = vadd.f32 %v9280, %v9283
  %vm9285 = vweird.f32 %v9249
  %vm9286 = vweird.f32 %v9280
  %vm9287 = vmor %vm9285, %vm9286
  %v9288 = vsel %vm9287, %v9280, %v9284
  %v9289 = vand.u32 2147483647, %v9249
  %vm9290 = vcmp.eq.f32.partialorder %v9289, 8.507059e+37
  %v9291 = vand.u32 %v9249, 2147483648
  %v9292 = vor.u32 1.1754944e-38, %v9291
  %v9293 = vsel %vm9290, %v9292, %v9288
  %v9294 = vmul.f32 1.0, %v9293
  %v9295 = vtanh.pop %v9174
  %v9296 = vmul.f32 %v9279, %v8990
  %v9297 = vmul.f32 %v9264, %v9295
  %v9298 = vadd.f32 %v9296, %v9297
  %v9299 = vtanh.pop %v9298
  %v9300 = vmul.f32 %v9294, %v9299
  %v9301 = vld [vmem:[%s11 + $0x48] sm:$0xff]
  %v9302 = vadd.f32 %v9301, %v9237
  %9303 = vst [vmem:[%s11 + $0x48] sm:$0xff] %v9302
  %v9304 = vld [vmem:[%s11] sm:$0xff]
  %v9305 = vadd.f32 %v9304, %v9300
  %9306 = vst [vmem:[%s11] sm:$0xff] %v9305
  // Predicated region
  $region91: #{tae_encoder_forward.1} parent=0 // pred_check
    _
  $region92: #{tae_encoder_forward.1} parent=0 // pred_check_branch
    %9308 = sbr.rel (0) target = $region94
  $region93: #{tae_encoder_forward.1} parent=0 // pred_region
    _
  $region94: #{tae_encoder_forward.1} parent=0 // pred_fallthru
    _
  // Predicated region
  $region95: #{tae_encoder_forward.1} parent=0 // pred_check
    _
  $region96: #{tae_encoder_forward.1} parent=0 // pred_check_branch
    %9310 = sbr.rel (0) target = $region98
  $region97: #{tae_encoder_forward.1} parent=0 // pred_region
    _
  $region98: #{tae_encoder_forward.1} parent=0 // pred_fallthru
    _
  %9311 = vsyncmov [#allocation7]
  %s9312 = vpop.sfrf %9311
  %p9313 = scmp.eq.s32.totalorder %s9312, 0
  %p9314 = pneg %p9313
  %9316 = shalt.err (%p9314)
  %s9317 = scalar_lea.sflag [#allocation7], 1
  %9318 = vsyncmov %s9317
  %s9319 = vpop.sfrf %9318
  %p9320 = scmp.eq.s32.totalorder %s9319, 0
  %p9321 = pneg %p9320
  %9323 = shalt.err (%p9321)
  %s9324 = scalar_lea.sflag [#allocation7], 2
  %9325 = vsyncmov %s9324
  %s9326 = vpop.sfrf %9325
  %p9327 = scmp.eq.s32.totalorder %s9326, 0
  %p9328 = pneg %p9327
  %9330 = shalt.err (%p9328)

</llo_original>
